<compile_context>
chip_gen: v6e
topology: v6e:2x2x1
jax: 0.10.0
libtpu: 0.0.40
codegen_flags: <defaults>
</compile_context>

<pallas_src>
import jax
import jax.numpy as jnp
from jax.experimental import pallas as pl
from jax.experimental.pallas import tpu as pltpu


def _lstm_block_kernel(x_ref, w_ref, b_ref, wout_ref, bout_ref,
                       out_ref, h_sc, c_sc, hs_sc):
    """One grid step = BLOCK_T LSTM timesteps + one block output projection.

    x_ref   : (B, BLOCK_T, E)   embedded inputs for this time block (batch-major)
    w_ref   : (E+H, 4H)         stacked [W_ih^T ; W_hh^T]
    b_ref   : (1, 4H)           b_ih + b_hh
    wout_ref: (H, V)            W_out^T
    bout_ref: (1, V)            b_out
    out_ref : (B, BLOCK_T, V)   logits for this time block (batch-major)
    h_sc/c_sc: (B, H)           LSTM state carried across grid steps
    hs_sc   : (B, BLOCK_T, H)   per-block hidden-state staging buffer
    """
    tb = pl.program_id(0)

    @pl.when(tb == 0)
    def _():
        h_sc[...] = jnp.zeros_like(h_sc)
        c_sc[...] = jnp.zeros_like(c_sc)

    B, block_t, _ = x_ref.shape
    H = h_sc.shape[1]

    h = h_sc[...]                       # (B, H)
    c = c_sc[...]                       # (B, H)
    w = w_ref[...]                      # (E+H, 4H) -- loaded once per block
    bias = b_ref[...]                   # (1, 4H)

    # Fully-unrolled recurrence over the time block (static indices only).
    for i in range(block_t):
        x_t = x_ref[:, i, :]                            # (B, E)
        xh = jnp.concatenate([x_t, h], axis=1)          # (B, E+H)
        # PyTorch gate order i, f, g, o; single fused MXU matmul per step.
        gates = jnp.dot(xh, w, preferred_element_type=jnp.float32) + bias
        i_g = jax.nn.sigmoid(gates[:, 0 * H:1 * H])
        f_g = jax.nn.sigmoid(gates[:, 1 * H:2 * H])
        g_g = jnp.tanh(gates[:, 2 * H:3 * H])
        o_g = jax.nn.sigmoid(gates[:, 3 * H:4 * H])
        c = f_g * c + i_g * g_g
        h = o_g * jnp.tanh(c)
        hs_sc[:, i, :] = h                              # static-index store

    # Persist state for the next time block.
    h_sc[...] = h
    c_sc[...] = c

    # Block-batched output projection: one lane-dense matmul for all
    # BLOCK_T timesteps, written as a single unmasked (B, BLOCK_T, V) block.
    hs = hs_sc[...].reshape(B * block_t, H)             # contiguous merge
    logits = (jnp.dot(hs, wout_ref[...], preferred_element_type=jnp.float32)
              + bout_ref[...])                          # (B*BLOCK_T, V)
    out_ref[...] = logits.reshape(B, block_t, -1).astype(out_ref.dtype)


def resume_model_forward(tokens, params, *, block_t=8):
    """tokens: int32 [B, T]. Returns logits [B, T, V] (matches PyTorch module)."""
    emb_table = params["embedding"]          # (V, E), row 0 zeros (padding_idx=0)
    w_stack = params["w_stack_t"]            # (E+H, 4H) = [W_ih^T ; W_hh^T]
    b = params["b"]                          # (1, 4H)  = b_ih + b_hh
    w_out_t = params["w_out_t"]              # (H, V)
    b_out = params["b_out"]                  # (1, V)

    B, T = tokens.shape
    V, E = emb_table.shape
    H = w_out_t.shape[0]

    # Pad batch to a sublane multiple (8) and T to a multiple of block_t with
    # token 0 (zero embedding row).  Padded rows/steps are sliced off at the
    # end; padded timesteps come after the real ones so causal state is intact.
    B_pad = ((B + 7) // 8) * 8
    T_pad = ((T + block_t - 1) // block_t) * block_t
    tokens_p = jnp.zeros((B_pad, T_pad), tokens.dtype).at[:B, :T].set(tokens)

    # Embedding gather stays batch-major -> no activation transposes anywhere.
    x = jnp.take(emb_table, tokens_p, axis=0)            # (B_pad, T_pad, E)

    out = pl.pallas_call(
        _lstm_block_kernel,
        out_shape=jax.ShapeDtypeStruct((B_pad, T_pad, V), jnp.float32),
        grid_spec=pltpu.PrefetchScalarGridSpec(
            num_scalar_prefetch=0,
            grid=(T_pad // block_t,),
            in_specs=[
                pl.BlockSpec((B_pad, block_t, E), lambda t: (0, t, 0)),   # x block
                # Constant-index weight blocks (tiny here; for large H/V they
                # could be single-buffered via pipeline_mode=pl.Buffered(1)).
                pl.BlockSpec((E + H, 4 * H), lambda t: (0, 0)),           # W stack
                pl.BlockSpec((1, 4 * H), lambda t: (0, 0)),               # bias
                pl.BlockSpec((H, V), lambda t: (0, 0)),                   # W_out^T
                pl.BlockSpec((1, V), lambda t: (0, 0)),                   # b_out
            ],
            out_specs=pl.BlockSpec((B_pad, block_t, V), lambda t: (0, t, 0)),
            scratch_shapes=[
                pltpu.VMEM((B_pad, H), jnp.float32),            # h state
                pltpu.VMEM((B_pad, H), jnp.float32),            # c state
                pltpu.VMEM((B_pad, block_t, H), jnp.float32),   # hidden staging
            ],
        ),
        compiler_params=pltpu.CompilerParams(
            dimension_semantics=("arbitrary",),   # recurrence is serial in time
        ),
    )(x, w_stack, b, w_out_t, b_out)

    return out[:B, :T, :]


def _reference_forward(tokens, params):
    """Pure-JAX reference matching PyTorch LSTM semantics (sanity check)."""
    emb = jnp.take(params["embedding"], tokens, axis=0)       # (B, T, E)
    E = params["embedding"].shape[1]
    H = params["w_out_t"].shape[0]
    w_ih_t = params["w_stack_t"][:E]                          # (E, 4H)
    w_hh_t = params["w_stack_t"][E:]                          # (H, 4H)

    def step(carry, x_t):
        h, c = carry
        gates = x_t @ w_ih_t + h @ w_hh_t + params["b"][0]
        i = jax.nn.sigmoid(gates[:, 0 * H:1 * H])
        f = jax.nn.sigmoid(gates[:, 1 * H:2 * H])
        g = jnp.tanh(gates[:, 2 * H:3 * H])
        o = jax.nn.sigmoid(gates[:, 3 * H:4 * H])
        c = f * c + i * g
        h = o * jnp.tanh(c)
        return (h, c), h

    B = tokens.shape[0]
    h0 = jnp.zeros((B, H), jnp.float32)
    _, hs = jax.lax.scan(step, (h0, h0), jnp.transpose(emb, (1, 0, 2)))
    hs = jnp.transpose(hs, (1, 0, 2))                         # (B, T, H)
    return hs @ params["w_out_t"] + params["b_out"][0]


def make_params(key, vocab_size, embedding_dim, hidden_dim):
    ks = jax.random.split(key, 7)
    scale = 0.1
    embedding = scale * jax.random.normal(ks[0], (vocab_size, embedding_dim), jnp.float32)
    embedding = embedding.at[0].set(0.0)      # padding_idx=0 -> zero row
    w_ih = scale * jax.random.normal(ks[1], (4 * hidden_dim, embedding_dim), jnp.float32)
    w_hh = scale * jax.random.normal(ks[2], (4 * hidden_dim, hidden_dim), jnp.float32)
    b_ih = scale * jax.random.normal(ks[3], (4 * hidden_dim,), jnp.float32)
    b_hh = scale * jax.random.normal(ks[4], (4 * hidden_dim,), jnp.float32)
    w_out = scale * jax.random.normal(ks[5], (vocab_size, hidden_dim), jnp.float32)
    b_out = scale * jax.random.normal(ks[6], (vocab_size,), jnp.float32)
    return {
        "embedding": embedding,
        "w_stack_t": jnp.concatenate([w_ih.T, w_hh.T], axis=0),   # (E+H, 4H)
        "b": (b_ih + b_hh)[None, :],                              # (1, 4H)
        "w_out_t": w_out.T,                                       # (H, V)
        "b_out": b_out[None, :],                                  # (1, V)
    }


if __name__ == "__main__":
    # Module defaults imply E=128, H=256; choose V=256 so all lane dims are
    # 128-aligned. Small batch/seq as in the spec example.
    VOCAB, EMB, HID = 256, 128, 256
    B, T = 2, 16

    key = jax.random.PRNGKey(0)
    k_params, k_tok = jax.random.split(key)
    params = make_params(k_params, VOCAB, EMB, HID)
    tokens = jax.random.randint(k_tok, (B, T), 0, VOCAB, dtype=jnp.int32)

    logits = jax.jit(resume_model_forward)(tokens, params)
    logits = jax.block_until_ready(logits)

    ref = _reference_forward(tokens, params)
    assert logits.shape == (B, T, VOCAB)
    max_err = float(jnp.max(jnp.abs(logits - ref)))
    assert jnp.allclose(logits, ref, atol=2e-3, rtol=2e-3), (
        f"mismatch vs reference (max abs err {max_err})")

    print("KERNEL_OK")
</pallas_src>

<mosaic_0001>
module attributes {stable_mosaic.version = 11 : i64} {
  func.func @_lstm_block_kernel(%arg0: i32, %arg1: memref<8x8x128xf32, #tpu.memory_space<vmem>>, %arg2: memref<384x1024xf32, #tpu.memory_space<vmem>>, %arg3: memref<1x1024xf32, #tpu.memory_space<vmem>>, %arg4: memref<256x256xf32, #tpu.memory_space<vmem>>, %arg5: memref<1x256xf32, #tpu.memory_space<vmem>>, %arg6: memref<8x8x256xf32, #tpu.memory_space<vmem>>, %arg7: memref<8x256xf32, #tpu.memory_space<vmem>>, %arg8: memref<8x256xf32, #tpu.memory_space<vmem>>, %arg9: memref<8x8x256xf32, #tpu.memory_space<vmem>>) attributes {dimension_semantics = [#tpu.dimension_semantics<arbitrary>], iteration_bounds = array<i64: 2>, scalar_prefetch = 0 : i64, scratch_operands = 3 : i64, tpu.core_type = #tpu.core_type<tc>, window_params = [{transform_indices = @transform_0, window_bounds = array<i64: 8, 8, 128>}, {pipeline_mode = #tpu.pipeline_mode<synchronous>, transform_indices = @transform_1, window_bounds = array<i64: 384, 1024>}, {pipeline_mode = #tpu.pipeline_mode<synchronous>, transform_indices = @transform_2, window_bounds = array<i64: 1, 1024>}, {pipeline_mode = #tpu.pipeline_mode<synchronous>, transform_indices = @transform_3, window_bounds = array<i64: 256, 256>}, {pipeline_mode = #tpu.pipeline_mode<synchronous>, transform_indices = @transform_4, window_bounds = array<i64: 1, 256>}, {transform_indices = @transform_5, window_bounds = array<i64: 8, 8, 256>}]} {
    %c0_i32 = arith.constant 0 : i32
    %0 = arith.cmpi eq, %arg0, %c0_i32 : i32
    %1 = arith.extui %0 : i1 to i32
    %c0_i32_0 = arith.constant 0 : i32
    %2 = arith.cmpi ne, %1, %c0_i32_0 : i32
    scf.if %2 {
      %cst_95 = arith.constant 0.000000e+00 : f32
      %290 = vector.broadcast %cst_95 : f32 to vector<8x256xf32>
      %c0_96 = arith.constant 0 : index
      %c0_97 = arith.constant 0 : index
      %291 = vector.load %arg7[%c0_96, %c0_97] : memref<8x256xf32, #tpu.memory_space<vmem>>, vector<8x256xf32>
      tpu.vector_store %arg7[%c0_96, %c0_97], %290 {strides = array<i32>} : memref<8x256xf32, #tpu.memory_space<vmem>>, vector<8x256xf32>,
      %cst_98 = arith.constant 0.000000e+00 : f32
      %292 = vector.broadcast %cst_98 : f32 to vector<8x256xf32>
      %c0_99 = arith.constant 0 : index
      %c0_100 = arith.constant 0 : index
      %293 = vector.load %arg8[%c0_99, %c0_100] : memref<8x256xf32, #tpu.memory_space<vmem>>, vector<8x256xf32>
      tpu.vector_store %arg8[%c0_99, %c0_100], %292 {strides = array<i32>} : memref<8x256xf32, #tpu.memory_space<vmem>>, vector<8x256xf32>,
    } else {
    }
    %c0 = arith.constant 0 : index
    %c0_1 = arith.constant 0 : index
    %3 = vector.load %arg7[%c0, %c0_1] : memref<8x256xf32, #tpu.memory_space<vmem>>, vector<8x256xf32>
    %c0_2 = arith.constant 0 : index
    %c0_3 = arith.constant 0 : index
    %4 = vector.load %arg8[%c0_2, %c0_3] : memref<8x256xf32, #tpu.memory_space<vmem>>, vector<8x256xf32>
    %c0_4 = arith.constant 0 : index
    %c0_5 = arith.constant 0 : index
    %5 = vector.load %arg2[%c0_4, %c0_5] : memref<384x1024xf32, #tpu.memory_space<vmem>>, vector<384x1024xf32>
    %c0_6 = arith.constant 0 : index
    %c0_7 = arith.constant 0 : index
    %6 = vector.load %arg3[%c0_6, %c0_7] : memref<1x1024xf32, #tpu.memory_space<vmem>>, vector<1x1024xf32>
    %c0_8 = arith.constant 0 : index
    %c0_9 = arith.constant 0 : index
    %c0_10 = arith.constant 0 : index
    %7 = vector.load %arg1[%c0_8, %c0_9, %c0_10] : memref<8x8x128xf32, #tpu.memory_space<vmem>>, vector<8x1x128xf32>
    %8 = vector.shape_cast %7 : vector<8x1x128xf32> to vector<8x128xf32>
    %9 = tpu.concatenate %8, %3 in 1 : vector<8x128xf32>, vector<8x256xf32> -> vector<8x384xf32>
    %cst = arith.constant dense<0.000000e+00> : vector<8x1024xf32>
    %10 = tpu.matmul %9, %5, %cst {dimension_numbers = #tpu.dot_dimension_numbers<[1], [0], [0], [1], [0, 0, 1, 1], [], []>} : vector<8x384xf32>, vector<384x1024xf32>, vector<8x1024xf32> -> vector<8x1024xf32>
    %11 = vector.broadcast %6 : vector<1x1024xf32> to vector<8x1024xf32>
    %12 = arith.addf %10, %11 : vector<8x1024xf32>
    %13 = vector.extract_strided_slice %12 {offsets = [0, 0], sizes = [8, 256], strides = [1, 1]} : vector<8x1024xf32> to vector<8x256xf32>
    %14 = arith.negf %13 : vector<8x256xf32>
    %15 = math.exp %14 : vector<8x256xf32>
    %cst_11 = arith.constant 1.000000e+00 : f32
    %16 = vector.broadcast %cst_11 : f32 to vector<8x256xf32>
    %17 = arith.addf %16, %15 : vector<8x256xf32>
    %18 = arith.divf %16, %17 : vector<8x256xf32>
    %19 = vector.extract_strided_slice %12 {offsets = [0, 256], sizes = [8, 256], strides = [1, 1]} : vector<8x1024xf32> to vector<8x256xf32>
    %20 = arith.negf %19 : vector<8x256xf32>
    %21 = math.exp %20 : vector<8x256xf32>
    %cst_12 = arith.constant 1.000000e+00 : f32
    %22 = vector.broadcast %cst_12 : f32 to vector<8x256xf32>
    %23 = arith.addf %22, %21 : vector<8x256xf32>
    %24 = arith.divf %22, %23 : vector<8x256xf32>
    %25 = vector.extract_strided_slice %12 {offsets = [0, 512], sizes = [8, 256], strides = [1, 1]} : vector<8x1024xf32> to vector<8x256xf32>
    %26 = math.tanh %25 : vector<8x256xf32>
    %27 = vector.extract_strided_slice %12 {offsets = [0, 768], sizes = [8, 256], strides = [1, 1]} : vector<8x1024xf32> to vector<8x256xf32>
    %28 = arith.negf %27 : vector<8x256xf32>
    %29 = math.exp %28 : vector<8x256xf32>
    %cst_13 = arith.constant 1.000000e+00 : f32
    %30 = vector.broadcast %cst_13 : f32 to vector<8x256xf32>
    %31 = arith.addf %30, %29 : vector<8x256xf32>
    %32 = arith.divf %30, %31 : vector<8x256xf32>
    %33 = arith.mulf %24, %4 : vector<8x256xf32>
    %34 = arith.mulf %18, %26 : vector<8x256xf32>
    %35 = arith.addf %33, %34 : vector<8x256xf32>
    %36 = math.tanh %35 : vector<8x256xf32>
    %37 = arith.mulf %32, %36 : vector<8x256xf32>
    %c0_14 = arith.constant 0 : index
    %c0_15 = arith.constant 0 : index
    %c0_16 = arith.constant 0 : index
    %38 = vector.load %arg9[%c0_14, %c0_15, %c0_16] : memref<8x8x256xf32, #tpu.memory_space<vmem>>, vector<8x1x256xf32>
    %39 = vector.shape_cast %38 : vector<8x1x256xf32> to vector<8x256xf32>
    %40 = vector.shape_cast %37 : vector<8x256xf32> to vector<8x1x256xf32>
    tpu.vector_store %arg9[%c0_14, %c0_15, %c0_16], %40 {strides = array<i32>} : memref<8x8x256xf32, #tpu.memory_space<vmem>>, vector<8x1x256xf32>,
    %c0_17 = arith.constant 0 : index
    %c1 = arith.constant 1 : index
    %c0_18 = arith.constant 0 : index
    %41 = vector.load %arg1[%c0_17, %c1, %c0_18] : memref<8x8x128xf32, #tpu.memory_space<vmem>>, vector<8x1x128xf32>
    %42 = vector.shape_cast %41 : vector<8x1x128xf32> to vector<8x128xf32>
    %43 = tpu.concatenate %42, %37 in 1 : vector<8x128xf32>, vector<8x256xf32> -> vector<8x384xf32>
    %cst_19 = arith.constant dense<0.000000e+00> : vector<8x1024xf32>
    %44 = tpu.matmul %43, %5, %cst_19 {dimension_numbers = #tpu.dot_dimension_numbers<[1], [0], [0], [1], [0, 0, 1, 1], [], []>} : vector<8x384xf32>, vector<384x1024xf32>, vector<8x1024xf32> -> vector<8x1024xf32>
    %45 = vector.broadcast %6 : vector<1x1024xf32> to vector<8x1024xf32>
    %46 = arith.addf %44, %45 : vector<8x1024xf32>
    %47 = vector.extract_strided_slice %46 {offsets = [0, 0], sizes = [8, 256], strides = [1, 1]} : vector<8x1024xf32> to vector<8x256xf32>
    %48 = arith.negf %47 : vector<8x256xf32>
    %49 = math.exp %48 : vector<8x256xf32>
    %cst_20 = arith.constant 1.000000e+00 : f32
    %50 = vector.broadcast %cst_20 : f32 to vector<8x256xf32>
    %51 = arith.addf %50, %49 : vector<8x256xf32>
    %52 = arith.divf %50, %51 : vector<8x256xf32>
    %53 = vector.extract_strided_slice %46 {offsets = [0, 256], sizes = [8, 256], strides = [1, 1]} : vector<8x1024xf32> to vector<8x256xf32>
    %54 = arith.negf %53 : vector<8x256xf32>
    %55 = math.exp %54 : vector<8x256xf32>
    %cst_21 = arith.constant 1.000000e+00 : f32
    %56 = vector.broadcast %cst_21 : f32 to vector<8x256xf32>
    %57 = arith.addf %56, %55 : vector<8x256xf32>
    %58 = arith.divf %56, %57 : vector<8x256xf32>
    %59 = vector.extract_strided_slice %46 {offsets = [0, 512], sizes = [8, 256], strides = [1, 1]} : vector<8x1024xf32> to vector<8x256xf32>
    %60 = math.tanh %59 : vector<8x256xf32>
    %61 = vector.extract_strided_slice %46 {offsets = [0, 768], sizes = [8, 256], strides = [1, 1]} : vector<8x1024xf32> to vector<8x256xf32>
    %62 = arith.negf %61 : vector<8x256xf32>
    %63 = math.exp %62 : vector<8x256xf32>
    %cst_22 = arith.constant 1.000000e+00 : f32
    %64 = vector.broadcast %cst_22 : f32 to vector<8x256xf32>
    %65 = arith.addf %64, %63 : vector<8x256xf32>
    %66 = arith.divf %64, %65 : vector<8x256xf32>
    %67 = arith.mulf %58, %35 : vector<8x256xf32>
    %68 = arith.mulf %52, %60 : vector<8x256xf32>
    %69 = arith.addf %67, %68 : vector<8x256xf32>
    %70 = math.tanh %69 : vector<8x256xf32>
    %71 = arith.mulf %66, %70 : vector<8x256xf32>
    %c0_23 = arith.constant 0 : index
    %c1_24 = arith.constant 1 : index
    %c0_25 = arith.constant 0 : index
    %72 = vector.load %arg9[%c0_23, %c1_24, %c0_25] : memref<8x8x256xf32, #tpu.memory_space<vmem>>, vector<8x1x256xf32>
    %73 = vector.shape_cast %72 : vector<8x1x256xf32> to vector<8x256xf32>
    %74 = vector.shape_cast %71 : vector<8x256xf32> to vector<8x1x256xf32>
    tpu.vector_store %arg9[%c0_23, %c1_24, %c0_25], %74 {strides = array<i32>} : memref<8x8x256xf32, #tpu.memory_space<vmem>>, vector<8x1x256xf32>,
    %c0_26 = arith.constant 0 : index
    %c2 = arith.constant 2 : index
    %c0_27 = arith.constant 0 : index
    %75 = vector.load %arg1[%c0_26, %c2, %c0_27] : memref<8x8x128xf32, #tpu.memory_space<vmem>>, vector<8x1x128xf32>
    %76 = vector.shape_cast %75 : vector<8x1x128xf32> to vector<8x128xf32>
    %77 = tpu.concatenate %76, %71 in 1 : vector<8x128xf32>, vector<8x256xf32> -> vector<8x384xf32>
    %cst_28 = arith.constant dense<0.000000e+00> : vector<8x1024xf32>
    %78 = tpu.matmul %77, %5, %cst_28 {dimension_numbers = #tpu.dot_dimension_numbers<[1], [0], [0], [1], [0, 0, 1, 1], [], []>} : vector<8x384xf32>, vector<384x1024xf32>, vector<8x1024xf32> -> vector<8x1024xf32>
    %79 = vector.broadcast %6 : vector<1x1024xf32> to vector<8x1024xf32>
    %80 = arith.addf %78, %79 : vector<8x1024xf32>
    %81 = vector.extract_strided_slice %80 {offsets = [0, 0], sizes = [8, 256], strides = [1, 1]} : vector<8x1024xf32> to vector<8x256xf32>
    %82 = arith.negf %81 : vector<8x256xf32>
    %83 = math.exp %82 : vector<8x256xf32>
    %cst_29 = arith.constant 1.000000e+00 : f32
    %84 = vector.broadcast %cst_29 : f32 to vector<8x256xf32>
    %85 = arith.addf %84, %83 : vector<8x256xf32>
    %86 = arith.divf %84, %85 : vector<8x256xf32>
    %87 = vector.extract_strided_slice %80 {offsets = [0, 256], sizes = [8, 256], strides = [1, 1]} : vector<8x1024xf32> to vector<8x256xf32>
    %88 = arith.negf %87 : vector<8x256xf32>
    %89 = math.exp %88 : vector<8x256xf32>
    %cst_30 = arith.constant 1.000000e+00 : f32
    %90 = vector.broadcast %cst_30 : f32 to vector<8x256xf32>
    %91 = arith.addf %90, %89 : vector<8x256xf32>
    %92 = arith.divf %90, %91 : vector<8x256xf32>
    %93 = vector.extract_strided_slice %80 {offsets = [0, 512], sizes = [8, 256], strides = [1, 1]} : vector<8x1024xf32> to vector<8x256xf32>
    %94 = math.tanh %93 : vector<8x256xf32>
    %95 = vector.extract_strided_slice %80 {offsets = [0, 768], sizes = [8, 256], strides = [1, 1]} : vector<8x1024xf32> to vector<8x256xf32>
    %96 = arith.negf %95 : vector<8x256xf32>
    %97 = math.exp %96 : vector<8x256xf32>
    %cst_31 = arith.constant 1.000000e+00 : f32
    %98 = vector.broadcast %cst_31 : f32 to vector<8x256xf32>
    %99 = arith.addf %98, %97 : vector<8x256xf32>
    %100 = arith.divf %98, %99 : vector<8x256xf32>
    %101 = arith.mulf %92, %69 : vector<8x256xf32>
    %102 = arith.mulf %86, %94 : vector<8x256xf32>
    %103 = arith.addf %101, %102 : vector<8x256xf32>
    %104 = math.tanh %103 : vector<8x256xf32>
    %105 = arith.mulf %100, %104 : vector<8x256xf32>
    %c0_32 = arith.constant 0 : index
    %c2_33 = arith.constant 2 : index
    %c0_34 = arith.constant 0 : index
    %106 = vector.load %arg9[%c0_32, %c2_33, %c0_34] : memref<8x8x256xf32, #tpu.memory_space<vmem>>, vector<8x1x256xf32>
    %107 = vector.shape_cast %106 : vector<8x1x256xf32> to vector<8x256xf32>
    %108 = vector.shape_cast %105 : vector<8x256xf32> to vector<8x1x256xf32>
    tpu.vector_store %arg9[%c0_32, %c2_33, %c0_34], %108 {strides = array<i32>} : memref<8x8x256xf32, #tpu.memory_space<vmem>>, vector<8x1x256xf32>,
    %c0_35 = arith.constant 0 : index
    %c3 = arith.constant 3 : index
    %c0_36 = arith.constant 0 : index
    %109 = vector.load %arg1[%c0_35, %c3, %c0_36] : memref<8x8x128xf32, #tpu.memory_space<vmem>>, vector<8x1x128xf32>
    %110 = vector.shape_cast %109 : vector<8x1x128xf32> to vector<8x128xf32>
    %111 = tpu.concatenate %110, %105 in 1 : vector<8x128xf32>, vector<8x256xf32> -> vector<8x384xf32>
    %cst_37 = arith.constant dense<0.000000e+00> : vector<8x1024xf32>
    %112 = tpu.matmul %111, %5, %cst_37 {dimension_numbers = #tpu.dot_dimension_numbers<[1], [0], [0], [1], [0, 0, 1, 1], [], []>} : vector<8x384xf32>, vector<384x1024xf32>, vector<8x1024xf32> -> vector<8x1024xf32>
    %113 = vector.broadcast %6 : vector<1x1024xf32> to vector<8x1024xf32>
    %114 = arith.addf %112, %113 : vector<8x1024xf32>
    %115 = vector.extract_strided_slice %114 {offsets = [0, 0], sizes = [8, 256], strides = [1, 1]} : vector<8x1024xf32> to vector<8x256xf32>
    %116 = arith.negf %115 : vector<8x256xf32>
    %117 = math.exp %116 : vector<8x256xf32>
    %cst_38 = arith.constant 1.000000e+00 : f32
    %118 = vector.broadcast %cst_38 : f32 to vector<8x256xf32>
    %119 = arith.addf %118, %117 : vector<8x256xf32>
    %120 = arith.divf %118, %119 : vector<8x256xf32>
    %121 = vector.extract_strided_slice %114 {offsets = [0, 256], sizes = [8, 256], strides = [1, 1]} : vector<8x1024xf32> to vector<8x256xf32>
    %122 = arith.negf %121 : vector<8x256xf32>
    %123 = math.exp %122 : vector<8x256xf32>
    %cst_39 = arith.constant 1.000000e+00 : f32
    %124 = vector.broadcast %cst_39 : f32 to vector<8x256xf32>
    %125 = arith.addf %124, %123 : vector<8x256xf32>
    %126 = arith.divf %124, %125 : vector<8x256xf32>
    %127 = vector.extract_strided_slice %114 {offsets = [0, 512], sizes = [8, 256], strides = [1, 1]} : vector<8x1024xf32> to vector<8x256xf32>
    %128 = math.tanh %127 : vector<8x256xf32>
    %129 = vector.extract_strided_slice %114 {offsets = [0, 768], sizes = [8, 256], strides = [1, 1]} : vector<8x1024xf32> to vector<8x256xf32>
    %130 = arith.negf %129 : vector<8x256xf32>
    %131 = math.exp %130 : vector<8x256xf32>
    %cst_40 = arith.constant 1.000000e+00 : f32
    %132 = vector.broadcast %cst_40 : f32 to vector<8x256xf32>
    %133 = arith.addf %132, %131 : vector<8x256xf32>
    %134 = arith.divf %132, %133 : vector<8x256xf32>
    %135 = arith.mulf %126, %103 : vector<8x256xf32>
    %136 = arith.mulf %120, %128 : vector<8x256xf32>
    %137 = arith.addf %135, %136 : vector<8x256xf32>
    %138 = math.tanh %137 : vector<8x256xf32>
    %139 = arith.mulf %134, %138 : vector<8x256xf32>
    %c0_41 = arith.constant 0 : index
    %c3_42 = arith.constant 3 : index
    %c0_43 = arith.constant 0 : index
    %140 = vector.load %arg9[%c0_41, %c3_42, %c0_43] : memref<8x8x256xf32, #tpu.memory_space<vmem>>, vector<8x1x256xf32>
    %141 = vector.shape_cast %140 : vector<8x1x256xf32> to vector<8x256xf32>
    %142 = vector.shape_cast %139 : vector<8x256xf32> to vector<8x1x256xf32>
    tpu.vector_store %arg9[%c0_41, %c3_42, %c0_43], %142 {strides = array<i32>} : memref<8x8x256xf32, #tpu.memory_space<vmem>>, vector<8x1x256xf32>,
    %c0_44 = arith.constant 0 : index
    %c4 = arith.constant 4 : index
    %c0_45 = arith.constant 0 : index
    %143 = vector.load %arg1[%c0_44, %c4, %c0_45] : memref<8x8x128xf32, #tpu.memory_space<vmem>>, vector<8x1x128xf32>
    %144 = vector.shape_cast %143 : vector<8x1x128xf32> to vector<8x128xf32>
    %145 = tpu.concatenate %144, %139 in 1 : vector<8x128xf32>, vector<8x256xf32> -> vector<8x384xf32>
    %cst_46 = arith.constant dense<0.000000e+00> : vector<8x1024xf32>
    %146 = tpu.matmul %145, %5, %cst_46 {dimension_numbers = #tpu.dot_dimension_numbers<[1], [0], [0], [1], [0, 0, 1, 1], [], []>} : vector<8x384xf32>, vector<384x1024xf32>, vector<8x1024xf32> -> vector<8x1024xf32>
    %147 = vector.broadcast %6 : vector<1x1024xf32> to vector<8x1024xf32>
    %148 = arith.addf %146, %147 : vector<8x1024xf32>
    %149 = vector.extract_strided_slice %148 {offsets = [0, 0], sizes = [8, 256], strides = [1, 1]} : vector<8x1024xf32> to vector<8x256xf32>
    %150 = arith.negf %149 : vector<8x256xf32>
    %151 = math.exp %150 : vector<8x256xf32>
    %cst_47 = arith.constant 1.000000e+00 : f32
    %152 = vector.broadcast %cst_47 : f32 to vector<8x256xf32>
    %153 = arith.addf %152, %151 : vector<8x256xf32>
    %154 = arith.divf %152, %153 : vector<8x256xf32>
    %155 = vector.extract_strided_slice %148 {offsets = [0, 256], sizes = [8, 256], strides = [1, 1]} : vector<8x1024xf32> to vector<8x256xf32>
    %156 = arith.negf %155 : vector<8x256xf32>
    %157 = math.exp %156 : vector<8x256xf32>
    %cst_48 = arith.constant 1.000000e+00 : f32
    %158 = vector.broadcast %cst_48 : f32 to vector<8x256xf32>
    %159 = arith.addf %158, %157 : vector<8x256xf32>
    %160 = arith.divf %158, %159 : vector<8x256xf32>
    %161 = vector.extract_strided_slice %148 {offsets = [0, 512], sizes = [8, 256], strides = [1, 1]} : vector<8x1024xf32> to vector<8x256xf32>
    %162 = math.tanh %161 : vector<8x256xf32>
    %163 = vector.extract_strided_slice %148 {offsets = [0, 768], sizes = [8, 256], strides = [1, 1]} : vector<8x1024xf32> to vector<8x256xf32>
    %164 = arith.negf %163 : vector<8x256xf32>
    %165 = math.exp %164 : vector<8x256xf32>
    %cst_49 = arith.constant 1.000000e+00 : f32
    %166 = vector.broadcast %cst_49 : f32 to vector<8x256xf32>
    %167 = arith.addf %166, %165 : vector<8x256xf32>
    %168 = arith.divf %166, %167 : vector<8x256xf32>
    %169 = arith.mulf %160, %137 : vector<8x256xf32>
    %170 = arith.mulf %154, %162 : vector<8x256xf32>
    %171 = arith.addf %169, %170 : vector<8x256xf32>
    %172 = math.tanh %171 : vector<8x256xf32>
    %173 = arith.mulf %168, %172 : vector<8x256xf32>
    %c0_50 = arith.constant 0 : index
    %c4_51 = arith.constant 4 : index
    %c0_52 = arith.constant 0 : index
    %174 = vector.load %arg9[%c0_50, %c4_51, %c0_52] : memref<8x8x256xf32, #tpu.memory_space<vmem>>, vector<8x1x256xf32>
    %175 = vector.shape_cast %174 : vector<8x1x256xf32> to vector<8x256xf32>
    %176 = vector.shape_cast %173 : vector<8x256xf32> to vector<8x1x256xf32>
    tpu.vector_store %arg9[%c0_50, %c4_51, %c0_52], %176 {strides = array<i32>} : memref<8x8x256xf32, #tpu.memory_space<vmem>>, vector<8x1x256xf32>,
    %c0_53 = arith.constant 0 : index
    %c5 = arith.constant 5 : index
    %c0_54 = arith.constant 0 : index
    %177 = vector.load %arg1[%c0_53, %c5, %c0_54] : memref<8x8x128xf32, #tpu.memory_space<vmem>>, vector<8x1x128xf32>
    %178 = vector.shape_cast %177 : vector<8x1x128xf32> to vector<8x128xf32>
    %179 = tpu.concatenate %178, %173 in 1 : vector<8x128xf32>, vector<8x256xf32> -> vector<8x384xf32>
    %cst_55 = arith.constant dense<0.000000e+00> : vector<8x1024xf32>
    %180 = tpu.matmul %179, %5, %cst_55 {dimension_numbers = #tpu.dot_dimension_numbers<[1], [0], [0], [1], [0, 0, 1, 1], [], []>} : vector<8x384xf32>, vector<384x1024xf32>, vector<8x1024xf32> -> vector<8x1024xf32>
    %181 = vector.broadcast %6 : vector<1x1024xf32> to vector<8x1024xf32>
    %182 = arith.addf %180, %181 : vector<8x1024xf32>
    %183 = vector.extract_strided_slice %182 {offsets = [0, 0], sizes = [8, 256], strides = [1, 1]} : vector<8x1024xf32> to vector<8x256xf32>
    %184 = arith.negf %183 : vector<8x256xf32>
    %185 = math.exp %184 : vector<8x256xf32>
    %cst_56 = arith.constant 1.000000e+00 : f32
    %186 = vector.broadcast %cst_56 : f32 to vector<8x256xf32>
    %187 = arith.addf %186, %185 : vector<8x256xf32>
    %188 = arith.divf %186, %187 : vector<8x256xf32>
    %189 = vector.extract_strided_slice %182 {offsets = [0, 256], sizes = [8, 256], strides = [1, 1]} : vector<8x1024xf32> to vector<8x256xf32>
    %190 = arith.negf %189 : vector<8x256xf32>
    %191 = math.exp %190 : vector<8x256xf32>
    %cst_57 = arith.constant 1.000000e+00 : f32
    %192 = vector.broadcast %cst_57 : f32 to vector<8x256xf32>
    %193 = arith.addf %192, %191 : vector<8x256xf32>
    %194 = arith.divf %192, %193 : vector<8x256xf32>
    %195 = vector.extract_strided_slice %182 {offsets = [0, 512], sizes = [8, 256], strides = [1, 1]} : vector<8x1024xf32> to vector<8x256xf32>
    %196 = math.tanh %195 : vector<8x256xf32>
    %197 = vector.extract_strided_slice %182 {offsets = [0, 768], sizes = [8, 256], strides = [1, 1]} : vector<8x1024xf32> to vector<8x256xf32>
    %198 = arith.negf %197 : vector<8x256xf32>
    %199 = math.exp %198 : vector<8x256xf32>
    %cst_58 = arith.constant 1.000000e+00 : f32
    %200 = vector.broadcast %cst_58 : f32 to vector<8x256xf32>
    %201 = arith.addf %200, %199 : vector<8x256xf32>
    %202 = arith.divf %200, %201 : vector<8x256xf32>
    %203 = arith.mulf %194, %171 : vector<8x256xf32>
    %204 = arith.mulf %188, %196 : vector<8x256xf32>
    %205 = arith.addf %203, %204 : vector<8x256xf32>
    %206 = math.tanh %205 : vector<8x256xf32>
    %207 = arith.mulf %202, %206 : vector<8x256xf32>
    %c0_59 = arith.constant 0 : index
    %c5_60 = arith.constant 5 : index
    %c0_61 = arith.constant 0 : index
    %208 = vector.load %arg9[%c0_59, %c5_60, %c0_61] : memref<8x8x256xf32, #tpu.memory_space<vmem>>, vector<8x1x256xf32>
    %209 = vector.shape_cast %208 : vector<8x1x256xf32> to vector<8x256xf32>
    %210 = vector.shape_cast %207 : vector<8x256xf32> to vector<8x1x256xf32>
    tpu.vector_store %arg9[%c0_59, %c5_60, %c0_61], %210 {strides = array<i32>} : memref<8x8x256xf32, #tpu.memory_space<vmem>>, vector<8x1x256xf32>,
    %c0_62 = arith.constant 0 : index
    %c6 = arith.constant 6 : index
    %c0_63 = arith.constant 0 : index
    %211 = vector.load %arg1[%c0_62, %c6, %c0_63] : memref<8x8x128xf32, #tpu.memory_space<vmem>>, vector<8x1x128xf32>
    %212 = vector.shape_cast %211 : vector<8x1x128xf32> to vector<8x128xf32>
    %213 = tpu.concatenate %212, %207 in 1 : vector<8x128xf32>, vector<8x256xf32> -> vector<8x384xf32>
    %cst_64 = arith.constant dense<0.000000e+00> : vector<8x1024xf32>
    %214 = tpu.matmul %213, %5, %cst_64 {dimension_numbers = #tpu.dot_dimension_numbers<[1], [0], [0], [1], [0, 0, 1, 1], [], []>} : vector<8x384xf32>, vector<384x1024xf32>, vector<8x1024xf32> -> vector<8x1024xf32>
    %215 = vector.broadcast %6 : vector<1x1024xf32> to vector<8x1024xf32>
    %216 = arith.addf %214, %215 : vector<8x1024xf32>
    %217 = vector.extract_strided_slice %216 {offsets = [0, 0], sizes = [8, 256], strides = [1, 1]} : vector<8x1024xf32> to vector<8x256xf32>
    %218 = arith.negf %217 : vector<8x256xf32>
    %219 = math.exp %218 : vector<8x256xf32>
    %cst_65 = arith.constant 1.000000e+00 : f32
    %220 = vector.broadcast %cst_65 : f32 to vector<8x256xf32>
    %221 = arith.addf %220, %219 : vector<8x256xf32>
    %222 = arith.divf %220, %221 : vector<8x256xf32>
    %223 = vector.extract_strided_slice %216 {offsets = [0, 256], sizes = [8, 256], strides = [1, 1]} : vector<8x1024xf32> to vector<8x256xf32>
    %224 = arith.negf %223 : vector<8x256xf32>
    %225 = math.exp %224 : vector<8x256xf32>
    %cst_66 = arith.constant 1.000000e+00 : f32
    %226 = vector.broadcast %cst_66 : f32 to vector<8x256xf32>
    %227 = arith.addf %226, %225 : vector<8x256xf32>
    %228 = arith.divf %226, %227 : vector<8x256xf32>
    %229 = vector.extract_strided_slice %216 {offsets = [0, 512], sizes = [8, 256], strides = [1, 1]} : vector<8x1024xf32> to vector<8x256xf32>
    %230 = math.tanh %229 : vector<8x256xf32>
    %231 = vector.extract_strided_slice %216 {offsets = [0, 768], sizes = [8, 256], strides = [1, 1]} : vector<8x1024xf32> to vector<8x256xf32>
    %232 = arith.negf %231 : vector<8x256xf32>
    %233 = math.exp %232 : vector<8x256xf32>
    %cst_67 = arith.constant 1.000000e+00 : f32
    %234 = vector.broadcast %cst_67 : f32 to vector<8x256xf32>
    %235 = arith.addf %234, %233 : vector<8x256xf32>
    %236 = arith.divf %234, %235 : vector<8x256xf32>
    %237 = arith.mulf %228, %205 : vector<8x256xf32>
    %238 = arith.mulf %222, %230 : vector<8x256xf32>
    %239 = arith.addf %237, %238 : vector<8x256xf32>
    %240 = math.tanh %239 : vector<8x256xf32>
    %241 = arith.mulf %236, %240 : vector<8x256xf32>
    %c0_68 = arith.constant 0 : index
    %c6_69 = arith.constant 6 : index
    %c0_70 = arith.constant 0 : index
    %242 = vector.load %arg9[%c0_68, %c6_69, %c0_70] : memref<8x8x256xf32, #tpu.memory_space<vmem>>, vector<8x1x256xf32>
    %243 = vector.shape_cast %242 : vector<8x1x256xf32> to vector<8x256xf32>
    %244 = vector.shape_cast %241 : vector<8x256xf32> to vector<8x1x256xf32>
    tpu.vector_store %arg9[%c0_68, %c6_69, %c0_70], %244 {strides = array<i32>} : memref<8x8x256xf32, #tpu.memory_space<vmem>>, vector<8x1x256xf32>,
    %c0_71 = arith.constant 0 : index
    %c7 = arith.constant 7 : index
    %c0_72 = arith.constant 0 : index
    %245 = vector.load %arg1[%c0_71, %c7, %c0_72] : memref<8x8x128xf32, #tpu.memory_space<vmem>>, vector<8x1x128xf32>
    %246 = vector.shape_cast %245 : vector<8x1x128xf32> to vector<8x128xf32>
    %247 = tpu.concatenate %246, %241 in 1 : vector<8x128xf32>, vector<8x256xf32> -> vector<8x384xf32>
    %cst_73 = arith.constant dense<0.000000e+00> : vector<8x1024xf32>
    %248 = tpu.matmul %247, %5, %cst_73 {dimension_numbers = #tpu.dot_dimension_numbers<[1], [0], [0], [1], [0, 0, 1, 1], [], []>} : vector<8x384xf32>, vector<384x1024xf32>, vector<8x1024xf32> -> vector<8x1024xf32>
    %249 = vector.broadcast %6 : vector<1x1024xf32> to vector<8x1024xf32>
    %250 = arith.addf %248, %249 : vector<8x1024xf32>
    %251 = vector.extract_strided_slice %250 {offsets = [0, 0], sizes = [8, 256], strides = [1, 1]} : vector<8x1024xf32> to vector<8x256xf32>
    %252 = arith.negf %251 : vector<8x256xf32>
    %253 = math.exp %252 : vector<8x256xf32>
    %cst_74 = arith.constant 1.000000e+00 : f32
    %254 = vector.broadcast %cst_74 : f32 to vector<8x256xf32>
    %255 = arith.addf %254, %253 : vector<8x256xf32>
    %256 = arith.divf %254, %255 : vector<8x256xf32>
    %257 = vector.extract_strided_slice %250 {offsets = [0, 256], sizes = [8, 256], strides = [1, 1]} : vector<8x1024xf32> to vector<8x256xf32>
    %258 = arith.negf %257 : vector<8x256xf32>
    %259 = math.exp %258 : vector<8x256xf32>
    %cst_75 = arith.constant 1.000000e+00 : f32
    %260 = vector.broadcast %cst_75 : f32 to vector<8x256xf32>
    %261 = arith.addf %260, %259 : vector<8x256xf32>
    %262 = arith.divf %260, %261 : vector<8x256xf32>
    %263 = vector.extract_strided_slice %250 {offsets = [0, 512], sizes = [8, 256], strides = [1, 1]} : vector<8x1024xf32> to vector<8x256xf32>
    %264 = math.tanh %263 : vector<8x256xf32>
    %265 = vector.extract_strided_slice %250 {offsets = [0, 768], sizes = [8, 256], strides = [1, 1]} : vector<8x1024xf32> to vector<8x256xf32>
    %266 = arith.negf %265 : vector<8x256xf32>
    %267 = math.exp %266 : vector<8x256xf32>
    %cst_76 = arith.constant 1.000000e+00 : f32
    %268 = vector.broadcast %cst_76 : f32 to vector<8x256xf32>
    %269 = arith.addf %268, %267 : vector<8x256xf32>
    %270 = arith.divf %268, %269 : vector<8x256xf32>
    %271 = arith.mulf %262, %239 : vector<8x256xf32>
    %272 = arith.mulf %256, %264 : vector<8x256xf32>
    %273 = arith.addf %271, %272 : vector<8x256xf32>
    %274 = math.tanh %273 : vector<8x256xf32>
    %275 = arith.mulf %270, %274 : vector<8x256xf32>
    %c0_77 = arith.constant 0 : index
    %c7_78 = arith.constant 7 : index
    %c0_79 = arith.constant 0 : index
    %276 = vector.load %arg9[%c0_77, %c7_78, %c0_79] : memref<8x8x256xf32, #tpu.memory_space<vmem>>, vector<8x1x256xf32>
    %277 = vector.shape_cast %276 : vector<8x1x256xf32> to vector<8x256xf32>
    %278 = vector.shape_cast %275 : vector<8x256xf32> to vector<8x1x256xf32>
    tpu.vector_store %arg9[%c0_77, %c7_78, %c0_79], %278 {strides = array<i32>} : memref<8x8x256xf32, #tpu.memory_space<vmem>>, vector<8x1x256xf32>,
    %c0_80 = arith.constant 0 : index
    %c0_81 = arith.constant 0 : index
    %279 = vector.load %arg7[%c0_80, %c0_81] : memref<8x256xf32, #tpu.memory_space<vmem>>, vector<8x256xf32>
    tpu.vector_store %arg7[%c0_80, %c0_81], %275 {strides = array<i32>} : memref<8x256xf32, #tpu.memory_space<vmem>>, vector<8x256xf32>,
    %c0_82 = arith.constant 0 : index
    %c0_83 = arith.constant 0 : index
    %280 = vector.load %arg8[%c0_82, %c0_83] : memref<8x256xf32, #tpu.memory_space<vmem>>, vector<8x256xf32>
    tpu.vector_store %arg8[%c0_82, %c0_83], %273 {strides = array<i32>} : memref<8x256xf32, #tpu.memory_space<vmem>>, vector<8x256xf32>,
    %c0_84 = arith.constant 0 : index
    %c0_85 = arith.constant 0 : index
    %c0_86 = arith.constant 0 : index
    %281 = vector.load %arg9[%c0_84, %c0_85, %c0_86] : memref<8x8x256xf32, #tpu.memory_space<vmem>>, vector<8x8x256xf32>
    %282 = vector.shape_cast %281 : vector<8x8x256xf32> to vector<64x256xf32>
    %c0_87 = arith.constant 0 : index
    %c0_88 = arith.constant 0 : index
    %283 = vector.load %arg4[%c0_87, %c0_88] : memref<256x256xf32, #tpu.memory_space<vmem>>, vector<256x256xf32>
    %cst_89 = arith.constant dense<0.000000e+00> : vector<64x256xf32>
    %284 = tpu.matmul %282, %283, %cst_89 {dimension_numbers = #tpu.dot_dimension_numbers<[1], [0], [0], [1], [0, 0, 1, 1], [], []>} : vector<64x256xf32>, vector<256x256xf32>, vector<64x256xf32> -> vector<64x256xf32>
    %c0_90 = arith.constant 0 : index
    %c0_91 = arith.constant 0 : index
    %285 = vector.load %arg5[%c0_90, %c0_91] : memref<1x256xf32, #tpu.memory_space<vmem>>, vector<1x256xf32>
    %286 = vector.broadcast %285 : vector<1x256xf32> to vector<64x256xf32>
    %287 = arith.addf %284, %286 : vector<64x256xf32>
    %288 = vector.shape_cast %287 : vector<64x256xf32> to vector<8x8x256xf32>
    %c0_92 = arith.constant 0 : index
    %c0_93 = arith.constant 0 : index
    %c0_94 = arith.constant 0 : index
    %289 = vector.load %arg6[%c0_92, %c0_93, %c0_94] : memref<8x8x256xf32, #tpu.memory_space<vmem>>, vector<8x8x256xf32>
    tpu.vector_store %arg6[%c0_92, %c0_93, %c0_94], %288 {strides = array<i32>} : memref<8x8x256xf32, #tpu.memory_space<vmem>>, vector<8x8x256xf32>,
    return
  }
  func.func @transform_0(%arg0: i32) -> (i32, i32, i32) {
    %c0_i32 = arith.constant 0 : i32
    %c0_i32_0 = arith.constant 0 : i32
    %c0_i32_1 = arith.constant 0 : i32
    return %c0_i32, %arg0, %c0_i32_0 : i32, i32, i32
  }
  func.func @transform_1(%arg0: i32) -> (i32, i32) {
    %c0_i32 = arith.constant 0 : i32
    %c0_i32_0 = arith.constant 0 : i32
    %c0_i32_1 = arith.constant 0 : i32
    return %c0_i32, %c0_i32_0 : i32, i32
  }
  func.func @transform_2(%arg0: i32) -> (i32, i32) {
    %c0_i32 = arith.constant 0 : i32
    %c0_i32_0 = arith.constant 0 : i32
    %c0_i32_1 = arith.constant 0 : i32
    return %c0_i32, %c0_i32_0 : i32, i32
  }
  func.func @transform_3(%arg0: i32) -> (i32, i32) {
    %c0_i32 = arith.constant 0 : i32
    %c0_i32_0 = arith.constant 0 : i32
    %c0_i32_1 = arith.constant 0 : i32
    return %c0_i32, %c0_i32_0 : i32, i32
  }
  func.func @transform_4(%arg0: i32) -> (i32, i32) {
    %c0_i32 = arith.constant 0 : i32
    %c0_i32_0 = arith.constant 0 : i32
    %c0_i32_1 = arith.constant 0 : i32
    return %c0_i32, %c0_i32_0 : i32, i32
  }
  func.func @transform_5(%arg0: i32) -> (i32, i32, i32) {
    %c0_i32 = arith.constant 0 : i32
    %c0_i32_0 = arith.constant 0 : i32
    %c0_i32_1 = arith.constant 0 : i32
    return %c0_i32, %arg0, %c0_i32_0 : i32, i32, i32
  }
}

</mosaic_0001>

<llo_original>
// kernel: resume_model_forward.1
$region0: #{resume_model_forward.1}
  #allocation0 [shape = 'u32[]', space=smem, size = 0x4, offset = 0x4, fixed_abs, tag = 'smem constant byte address 0x4 - core index']
  #allocation1 [shape = 'u32[144,128]{1,0:T(1,128)}', space=vmem, size = 0x12000, scoped, tag = 'internal scratch']
  #allocation2 [shape = 'f32[8,256]{1,0:T(8,128)}', space=vmem, size = 0x2000, scoped, tag = 'scratch operand']
  #allocation3 [shape = 'f32[8,256]{1,0:T(8,128)}', space=vmem, size = 0x2000, scoped, tag = 'scratch operand']
  #allocation4 [shape = 'f32[8,8,256]{2,1,0:T(8,128)}', space=vmem, size = 0x10000, scoped, tag = 'scratch operand']
  %s0 = inlined_call_operand.vmem [shape: f32[8,16,128], index: 0, kind: input, shape index: {}]
  %s1 = inlined_call_operand.hbm [shape: f32[384,1024], index: 1, kind: input, shape index: {}]
  %s2 = inlined_call_operand.hbm [shape: f32[1,1024], index: 2, kind: input, shape index: {}]
  %s3 = inlined_call_operand.hbm [shape: f32[256,256], index: 3, kind: input, shape index: {}]
  %s4 = inlined_call_operand.hbm [shape: f32[1,256], index: 4, kind: input, shape index: {}]
  %s5 = inlined_call_operand.vmem [shape: f32[8,16,256], index: 5, kind: output, shape index: {}]
  %s6 = sld [smem:[#allocation0]]
  $region130: #{resume_model_forward.1} parent=0
    _
  %s8 = ssub.s32 1, %s6
  %s9 = scalar_select 0, %s8, %s6
  $region1: #{resume_model_forward.1} parent=0
    #allocation5 [shape = 'u8[65536]{0}', space=vmem, size = 0x10000, scoped, tag = 'input window, operand 0']
    #allocation6 [shape = 'u8[1572864]{0}', space=vmem, size = 0x180000, scoped, tag = 'input window, operand 1, single buffered']
    #allocation7 [shape = 's32[2]{0}', space=sflag, size = 0x8, scoped, tag = 'scoped memory for resume_model_forward.1']
    #allocation8 [shape = 'u8[4096]{0}', space=vmem, size = 0x1000, scoped, tag = 'input window, operand 2, single buffered']
    #allocation9 [shape = 's32[1]{0}', space=sflag, size = 0x4, scoped, tag = 'scoped memory for resume_model_forward.1']
    #allocation10 [shape = 'u8[262144]{0}', space=vmem, size = 0x40000, scoped, tag = 'input window, operand 3, single buffered']
    #allocation11 [shape = 'u8[1024]{0}', space=vmem, size = 0x400, scoped, tag = 'input window, operand 4, single buffered']
    #allocation12 [shape = 's32[1]{0}', space=sflag, size = 0x4, scoped, tag = 'scoped memory for resume_model_forward.1']
    #allocation13 [shape = 'u8[131072]{0}', space=vmem, size = 0x20000, scoped, tag = 'output window, operand 0']
    %10 = vsyncpa [#allocation7], 0
    %11 = vsyncpa [#allocation9], 0
    %12 = vsyncpa [#allocation12], 0
    loop: start=0, step=1, limit=4
    $region2: #{resume_model_forward.1} parent=1 // loop_pre_header
      _
    $region3: #{resume_model_forward.1} parent=1 // loop_header
      %s14 = sphi 0, %s18
      %p15 = scmp.ge.s32.totalorder %s14, 4
      %s24 = sphi 0, %s26
      %s27 = sphi 0, %s24
      %s28 = sphi 0, %s27
      %s44 = sphi 0, %s28
      %s48 = sphi 0, %s48
      %s50 = sphi 0, %s48
      %s51 = sphi 0, %s50
      %s65 = sphi 0, %s51
      %s69 = sphi 0, %s69
      %s71 = sphi 0, %s69
      %s72 = sphi 0, %s71
      %s86 = sphi 0, %s72
      %s90 = sphi 0, %s90
      %s92 = sphi 0, %s90
      %s93 = sphi 0, %s92
      %s107 = sphi 0, %s93
      %s111 = sphi 0, %s111
      %s113 = sphi 0, %s111
      %s114 = sphi 0, %s113
      %s128 = sphi 0, %s114
      %s134 = sphi 0, %s136
      %s137 = sphi 0, %s134
      %s138 = sphi 0, %s137
      %s154 = sphi 0, %s138
    $region4: #{resume_model_forward.1} parent=1 // loop_header_branch
      %17 = sbr.rel (%p15) target = $region8
    $region5: #{resume_model_forward.1} parent=1 // loop_body
      %s19 = ssub.s32 %s14, 1
      %s20 = ssub.s32 %s14, 2
      %s21 = sadd.s32 %s14, 1
      %s22 = ssub.s32 %s14, %s21
      %p23 = scmp.eq.s32.totalorder %s22, 0
      %s25 = sadd.s32 %s24, 1
      %s26 = scalar_select %p23, %s24, %s25
      %p29 = pneg %p23
      %p30 = scmp.eq.s32.totalorder %s14, 1
      %p31 = por %p29, %p30
      %p32 = scmp.ne.s32.totalorder %s24, %s27
      %p33 = scmp.eq.s32.totalorder %s14, 0
      %p34 = por %p32, %p33
      %p35 = scmp.ne.s32.totalorder %s24, %s27
      %p36 = scmp.eq.s32.totalorder %s19, 1
      %p37 = por %p35, %p36
      %p38 = scmp.ne.s32.totalorder %s27, %s28
      %p39 = scmp.eq.s32.totalorder %s19, 0
      %p40 = por %p38, %p39
      %p41 = scmp.ne.s32.totalorder %s27, %s28
      %p42 = scmp.eq.s32.totalorder %s20, 1
      %p43 = por %p41, %p42
      %p45 = scmp.ne.s32.totalorder %s28, %s44
      %p46 = scmp.eq.s32.totalorder %s20, 0
      %p47 = por %p45, %p46
      %s49 = sadd.s32 %s48, 1
      %p52 = scmp.eq.s32.totalorder %s14, 1
      %p53 = scmp.ne.s32.totalorder %s48, %s50
      %p54 = scmp.eq.s32.totalorder %s14, 0
      %p55 = por %p53, %p54
      %p56 = scmp.ne.s32.totalorder %s48, %s50
      %p57 = scmp.eq.s32.totalorder %s19, 1
      %p58 = por %p56, %p57
      %p59 = scmp.ne.s32.totalorder %s50, %s51
      %p60 = scmp.eq.s32.totalorder %s19, 0
      %p61 = por %p59, %p60
      %p62 = scmp.ne.s32.totalorder %s50, %s51
      %p63 = scmp.eq.s32.totalorder %s20, 1
      %p64 = por %p62, %p63
      %p66 = scmp.ne.s32.totalorder %s51, %s65
      %p67 = scmp.eq.s32.totalorder %s20, 0
      %p68 = por %p66, %p67
      %s70 = sadd.s32 %s69, 1
      %p73 = scmp.eq.s32.totalorder %s14, 1
      %p74 = scmp.ne.s32.totalorder %s69, %s71
      %p75 = scmp.eq.s32.totalorder %s14, 0
      %p76 = por %p74, %p75
      %p77 = scmp.ne.s32.totalorder %s69, %s71
      %p78 = scmp.eq.s32.totalorder %s19, 1
      %p79 = por %p77, %p78
      %p80 = scmp.ne.s32.totalorder %s71, %s72
      %p81 = scmp.eq.s32.totalorder %s19, 0
      %p82 = por %p80, %p81
      %p83 = scmp.ne.s32.totalorder %s71, %s72
      %p84 = scmp.eq.s32.totalorder %s20, 1
      %p85 = por %p83, %p84
      %p87 = scmp.ne.s32.totalorder %s72, %s86
      %p88 = scmp.eq.s32.totalorder %s20, 0
      %p89 = por %p87, %p88
      %s91 = sadd.s32 %s90, 1
      %p94 = scmp.eq.s32.totalorder %s14, 1
      %p95 = scmp.ne.s32.totalorder %s90, %s92
      %p96 = scmp.eq.s32.totalorder %s14, 0
      %p97 = por %p95, %p96
      %p98 = scmp.ne.s32.totalorder %s90, %s92
      %p99 = scmp.eq.s32.totalorder %s19, 1
      %p100 = por %p98, %p99
      %p101 = scmp.ne.s32.totalorder %s92, %s93
      %p102 = scmp.eq.s32.totalorder %s19, 0
      %p103 = por %p101, %p102
      %p104 = scmp.ne.s32.totalorder %s92, %s93
      %p105 = scmp.eq.s32.totalorder %s20, 1
      %p106 = por %p104, %p105
      %p108 = scmp.ne.s32.totalorder %s93, %s107
      %p109 = scmp.eq.s32.totalorder %s20, 0
      %p110 = por %p108, %p109
      %s112 = sadd.s32 %s111, 1
      %p115 = scmp.eq.s32.totalorder %s14, 1
      %p116 = scmp.ne.s32.totalorder %s111, %s113
      %p117 = scmp.eq.s32.totalorder %s14, 0
      %p118 = por %p116, %p117
      %p119 = scmp.ne.s32.totalorder %s111, %s113
      %p120 = scmp.eq.s32.totalorder %s19, 1
      %p121 = por %p119, %p120
      %p122 = scmp.ne.s32.totalorder %s113, %s114
      %p123 = scmp.eq.s32.totalorder %s19, 0
      %p124 = por %p122, %p123
      %p125 = scmp.ne.s32.totalorder %s113, %s114
      %p126 = scmp.eq.s32.totalorder %s20, 1
      %p127 = por %p125, %p126
      %p129 = scmp.ne.s32.totalorder %s114, %s128
      %p130 = scmp.eq.s32.totalorder %s20, 0
      %p131 = por %p129, %p130
      %s132 = ssub.s32 %s14, %s21
      %p133 = scmp.eq.s32.totalorder %s132, 0
      %s135 = sadd.s32 %s134, 1
      %s136 = scalar_select %p133, %s134, %s135
      %p139 = pneg %p133
      %p140 = scmp.eq.s32.totalorder %s14, 1
      %p141 = por %p139, %p140
      %p142 = scmp.ne.s32.totalorder %s134, %s137
      %p143 = scmp.eq.s32.totalorder %s14, 0
      %p144 = por %p142, %p143
      %p145 = scmp.ne.s32.totalorder %s134, %s137
      %p146 = scmp.eq.s32.totalorder %s19, 1
      %p147 = por %p145, %p146
      %p148 = scmp.ne.s32.totalorder %s137, %s138
      %p149 = scmp.eq.s32.totalorder %s19, 0
      %p150 = por %p148, %p149
      %p151 = scmp.ne.s32.totalorder %s137, %s138
      %p152 = scmp.eq.s32.totalorder %s20, 1
      %p153 = por %p151, %p152
      %p155 = scmp.ne.s32.totalorder %s138, %s154
      %p156 = scmp.eq.s32.totalorder %s20, 0
      %p157 = por %p155, %p156
      %p158 = scmp.le.s32.totalorder 1, %s14
      %p159 = scmp.lt.s32.totalorder %s14, 3
      %p160 = pnand %p158, %p159
      %p161 = pneg %p160
      // Predicated region
      $region9: #{resume_model_forward.1} parent=5 // pred_check
        _
      $region10: #{resume_model_forward.1} parent=5 // pred_check_branch
        %163 = sbr.rel (%p160) target = $region12
      $region11: #{resume_model_forward.1} parent=5 // pred_region
        %s164 = ssub.s32 %s14, 1
        // Predicated region
        $region13: #{resume_model_forward.1} parent=11 // pred_check
          %p165 = pneg %p61
        $region14: #{resume_model_forward.1} parent=11 // pred_check_branch
          %167 = sbr.rel (%p165) target = $region16
        $region15: #{resume_model_forward.1} parent=11 // pred_region
          %s169 = ssub.s32 49152, 49152
          %170 = vsyncadd [#allocation7], %s169
          %s171 = sshll.u32 [#allocation6], 4
          %s172 = int_to_ptr.vmem [resolvable:$true] %s171
          %177 = dma.hbm_to_vmem [thread:$0]  %s1, 49152, %s172, [#allocation7], 1024, 1024, 64
        $region16: #{resume_model_forward.1} parent=11 // pred_fallthru
          _
        // Predicated region
        $region17: #{resume_model_forward.1} parent=11 // pred_check
          %p178 = pneg %p82
        $region18: #{resume_model_forward.1} parent=11 // pred_check_branch
          %180 = sbr.rel (%p178) target = $region20
        $region19: #{resume_model_forward.1} parent=11 // pred_region
          %s182 = ssub.s32 128, 128
          %183 = vsyncadd [#allocation9], %s182
          %s185 = sshll.u32 [#allocation8], 4
          %s186 = int_to_ptr.vmem [resolvable:$true] %s185
          %188 = dma.hbm_to_vmem [thread:$0]  %s2, 128, %s186, [#allocation9]
        $region20: #{resume_model_forward.1} parent=11 // pred_fallthru
          _
        // Predicated region
        $region21: #{resume_model_forward.1} parent=11 // pred_check
          %p189 = pneg %p103
        $region22: #{resume_model_forward.1} parent=11 // pred_check_branch
          %191 = sbr.rel (%p189) target = $region24
        $region23: #{resume_model_forward.1} parent=11 // pred_region
          %s193 = ssub.s32 8192, 8192
          %194 = vsyncadd [#allocation9], %s193
          %s195 = sshll.u32 [#allocation10], 4
          %s196 = int_to_ptr.vmem [resolvable:$true] %s195
          %201 = dma.hbm_to_vmem [thread:$0]  %s3, 8192, %s196, [#allocation9], 256, 256, 16
        $region24: #{resume_model_forward.1} parent=11 // pred_fallthru
          _
        // Predicated region
        $region25: #{resume_model_forward.1} parent=11 // pred_check
          %p202 = pneg %p124
        $region26: #{resume_model_forward.1} parent=11 // pred_check_branch
          %204 = sbr.rel (%p202) target = $region28
        $region27: #{resume_model_forward.1} parent=11 // pred_region
          %s206 = ssub.s32 32, 32
          %207 = vsyncadd [#allocation12], %s206
          %s209 = sshll.u32 [#allocation11], 4
          %s210 = int_to_ptr.vmem [resolvable:$true] %s209
          %212 = dma.hbm_to_vmem [thread:$0]  %s4, 32, %s210, [#allocation12]
        $region28: #{resume_model_forward.1} parent=11 // pred_fallthru
          _
      $region12: #{resume_model_forward.1} parent=5 // pred_fallthru
        _
      %p213 = scmp.lt.s32.totalorder %s14, 2
      // Predicated region
      $region29: #{resume_model_forward.1} parent=5 // pred_check
        %p214 = pneg %p213
      $region30: #{resume_model_forward.1} parent=5 // pred_check_branch
        %216 = sbr.rel (%p214) target = $region32
      $region31: #{resume_model_forward.1} parent=5 // pred_region
        // Predicated region
        $region33: #{resume_model_forward.1} parent=31 // pred_check
          %p217 = pneg %p34
        $region34: #{resume_model_forward.1} parent=31 // pred_check_branch
          %219 = sbr.rel (%p217) target = $region36
        $region35: #{resume_model_forward.1} parent=31 // pred_region
          %s220 = sand.u32 %s24, 1
          %s221 = sand.u32 %s24, 1
          %s222 = smul.addr %s221, 64
          %s223 = scalar_lea.vmem [#allocation5], %s222
          %s224 = smul.addr %s14, 8
          %s225 = scalar_lea.vmem %s0, %s224
          // Predicated region
          $region37: #{resume_model_forward.1} parent=35 // pred_check
            _
          $region38: #{resume_model_forward.1} parent=35 // pred_check_branch
            %227 = sbr.rel (0) target = $region40
          $region39: #{resume_model_forward.1} parent=35 // pred_region
            // Predicated region
            $region41: #{resume_model_forward.1} parent=39 // pred_check
              _
            $region42: #{resume_model_forward.1} parent=39 // pred_check_branch
              %229 = sbr.rel (0) target = $region44
            $region43: #{resume_model_forward.1} parent=39 // pred_region
              // Predicated region
              $region56: #{resume_model_forward.1} parent=43 // pred_check
                _
              $region57: #{resume_model_forward.1} parent=43 // pred_check_branch
                %259 = sbr.rel (0) target = $region59
              $region58: #{resume_model_forward.1} parent=43 // pred_region
                loop: start=0, step=1, limit=1
                $region60: #{resume_model_forward.1} parent=58 // loop_pre_header
                  _
                $region61: #{resume_model_forward.1} parent=58 // loop_header
                  %s261 = sphi 0, %s265
                  %p262 = scmp.ge.s32.totalorder %s261, 1
                  %s266 = sphi %s225, %s225
                  %s267 = sphi %s223, %s223
                $region62: #{resume_model_forward.1} parent=58 // loop_header_branch
                  %264 = sbr.rel (%p262) target = $region66
                $region63: #{resume_model_forward.1} parent=58 // loop_body
                  %v268 = vld [vmem:[%s266] sm:$0xff]
                  %269 = vst [vmem:[%s267] sm:$0xff] %v268
                  %v270 = vld [vmem:[%s266 + $0x10] sm:$0xff]
                  %271 = vst [vmem:[%s267 + $0x8] sm:$0xff] %v270
                  %v272 = vld [vmem:[%s266 + $0x20] sm:$0xff]
                  %273 = vst [vmem:[%s267 + $0x10] sm:$0xff] %v272
                  %v274 = vld [vmem:[%s266 + $0x30] sm:$0xff]
                  %275 = vst [vmem:[%s267 + $0x18] sm:$0xff] %v274
                  %v276 = vld [vmem:[%s266 + $0x40] sm:$0xff]
                  %277 = vst [vmem:[%s267 + $0x20] sm:$0xff] %v276
                  %v278 = vld [vmem:[%s266 + $0x50] sm:$0xff]
                  %279 = vst [vmem:[%s267 + $0x28] sm:$0xff] %v278
                  %v280 = vld [vmem:[%s266 + $0x60] sm:$0xff]
                  %281 = vst [vmem:[%s267 + $0x30] sm:$0xff] %v280
                  %v282 = vld [vmem:[%s266 + $0x70] sm:$0xff]
                  %283 = vst [vmem:[%s267 + $0x38] sm:$0xff] %v282
                $region64: #{resume_model_forward.1} parent=58 // loop_footer
                  %s265 = sadd.s32 1, %s261
                $region65: #{resume_model_forward.1} parent=58 // loop_footer_branch
                  %260 = sbr.rel target = $region61
                $region66: #{resume_model_forward.1} parent=58 // loop_exit
                  _
              $region59: #{resume_model_forward.1} parent=43 // pred_fallthru
                _
              // Predicated region
              $region67: #{resume_model_forward.1} parent=43 // pred_check
                _
              $region68: #{resume_model_forward.1} parent=43 // pred_check_branch
                %285 = sbr.rel target = $region70
              $region69: #{resume_model_forward.1} parent=43 // pred_region
                _
              $region70: #{resume_model_forward.1} parent=43 // pred_fallthru
                _
            $region44: #{resume_model_forward.1} parent=39 // pred_fallthru
              _
            // Predicated region
            $region45: #{resume_model_forward.1} parent=39 // pred_check
              _
            $region46: #{resume_model_forward.1} parent=39 // pred_check_branch
              %231 = sbr.rel target = $region48
            $region47: #{resume_model_forward.1} parent=39 // pred_region
              %s233 = ssub.s32 256, 1
              loop: start=0, step=1, limit=1
              $region49: #{resume_model_forward.1} parent=47 // loop_pre_header
                _
              $region50: #{resume_model_forward.1} parent=47 // loop_header
                %s235 = sphi 0, %s239
                %p236 = scmp.ge.s32.totalorder %s235, 1
                %s240 = sphi %s225, %s225
                %s241 = sphi %s223, %s223
              $region51: #{resume_model_forward.1} parent=47 // loop_header_branch
                %238 = sbr.rel (%p236) target = $region55
              $region52: #{resume_model_forward.1} parent=47 // loop_body
                %v242 = vld [vmem:[%s240] sm:%s233]
                %243 = vst [vmem:[%s241] sm:%s233] %v242
                %v244 = vld [vmem:[%s240 + $0x10] sm:%s233]
                %245 = vst [vmem:[%s241 + $0x8] sm:%s233] %v244
                %v246 = vld [vmem:[%s240 + $0x20] sm:%s233]
                %247 = vst [vmem:[%s241 + $0x10] sm:%s233] %v246
                %v248 = vld [vmem:[%s240 + $0x30] sm:%s233]
                %249 = vst [vmem:[%s241 + $0x18] sm:%s233] %v248
                %v250 = vld [vmem:[%s240 + $0x40] sm:%s233]
                %251 = vst [vmem:[%s241 + $0x20] sm:%s233] %v250
                %v252 = vld [vmem:[%s240 + $0x50] sm:%s233]
                %253 = vst [vmem:[%s241 + $0x28] sm:%s233] %v252
                %v254 = vld [vmem:[%s240 + $0x60] sm:%s233]
                %255 = vst [vmem:[%s241 + $0x30] sm:%s233] %v254
                %v256 = vld [vmem:[%s240 + $0x70] sm:%s233]
                %257 = vst [vmem:[%s241 + $0x38] sm:%s233] %v256
              $region53: #{resume_model_forward.1} parent=47 // loop_footer
                %s239 = sadd.s32 1, %s235
              $region54: #{resume_model_forward.1} parent=47 // loop_footer_branch
                %234 = sbr.rel target = $region50
              $region55: #{resume_model_forward.1} parent=47 // loop_exit
                _
            $region48: #{resume_model_forward.1} parent=39 // pred_fallthru
              _
          $region40: #{resume_model_forward.1} parent=35 // pred_fallthru
            _
          %286 = vnop
        $region36: #{resume_model_forward.1} parent=31 // pred_fallthru
          _
      $region32: #{resume_model_forward.1} parent=5 // pred_fallthru
        _
      %p287 = scmp.le.s32.totalorder 1, %s14
      %p288 = scmp.lt.s32.totalorder %s14, 3
      %p289 = pnand %p287, %p288
      %p290 = pneg %p289
      // Predicated region
      $region71: #{resume_model_forward.1} parent=5 // pred_check
        _
      $region72: #{resume_model_forward.1} parent=5 // pred_check_branch
        %292 = sbr.rel (%p289) target = $region74
      $region73: #{resume_model_forward.1} parent=5 // pred_region
        %s293 = ssub.s32 %s14, 1
        %s294 = sand.u32 %s27, 1
        %s295 = sand.u32 %s27, 1
        %s296 = smul.addr %s295, 64
        %s297 = scalar_lea.vmem [#allocation5], %s296
        // Predicated region
        $region75: #{resume_model_forward.1} parent=73 // pred_check
          %p298 = pneg %p40
        $region76: #{resume_model_forward.1} parent=73 // pred_check_branch
          %300 = sbr.rel (%p298) target = $region78
        $region77: #{resume_model_forward.1} parent=73 // pred_region
          _
        $region78: #{resume_model_forward.1} parent=73 // pred_fallthru
          _
        // Predicated region
        $region79: #{resume_model_forward.1} parent=73 // pred_check
          %p301 = pneg %p61
        $region80: #{resume_model_forward.1} parent=73 // pred_check_branch
          %303 = sbr.rel (%p301) target = $region82
        $region81: #{resume_model_forward.1} parent=73 // pred_region
          %304 = dma.done [#allocation7], 49152
        $region82: #{resume_model_forward.1} parent=73 // pred_fallthru
          _
        // Predicated region
        $region83: #{resume_model_forward.1} parent=73 // pred_check
          %p305 = pneg %p82
        $region84: #{resume_model_forward.1} parent=73 // pred_check_branch
          %307 = sbr.rel (%p305) target = $region86
        $region85: #{resume_model_forward.1} parent=73 // pred_region
          %308 = dma.done [#allocation9], 128
        $region86: #{resume_model_forward.1} parent=73 // pred_fallthru
          _
        // Predicated region
        $region87: #{resume_model_forward.1} parent=73 // pred_check
          %p309 = pneg %p103
        $region88: #{resume_model_forward.1} parent=73 // pred_check_branch
          %311 = sbr.rel (%p309) target = $region90
        $region89: #{resume_model_forward.1} parent=73 // pred_region
          %312 = dma.done [#allocation9], 8192
        $region90: #{resume_model_forward.1} parent=73 // pred_fallthru
          _
        // Predicated region
        $region91: #{resume_model_forward.1} parent=73 // pred_check
          %p313 = pneg %p124
        $region92: #{resume_model_forward.1} parent=73 // pred_check_branch
          %315 = sbr.rel (%p313) target = $region94
        $region93: #{resume_model_forward.1} parent=73 // pred_region
          %316 = dma.done [#allocation12], 32
        $region94: #{resume_model_forward.1} parent=73 // pred_fallthru
          _
        %s317 = sand.u32 %s27, 1
        %s318 = sand.u32 %s27, 1
        %s319 = smul.addr %s318, 64
        %s320 = scalar_lea.vmem [#allocation5], %s319
        %p321 = pneg %p40
        %p322 = pneg %p37
        %p323 = pneg %p61
        %p324 = pneg %p58
        %p325 = pneg %p82
        %p326 = pneg %p79
        %p327 = pneg %p103
        %p328 = pneg %p100
        %p329 = pneg %p124
        %p330 = pneg %p121
        %p331 = pneg %p150
        %p332 = pneg %p147
        %s333 = sand.u32 %s137, 1
        %s334 = sand.u32 %s137, 1
        %s335 = smul.addr %s334, 128
        %s336 = scalar_lea.vmem [#allocation13], %s335
        %p337 = scmp.eq.s32.totalorder %s19, 0
        // Predicated region
        $region95: #{resume_model_forward.1} parent=73 // pred_check
          %p338 = pneg %p337
        $region96: #{resume_model_forward.1} parent=73 // pred_check_branch
          %340 = sbr.rel (%p338) target = $region98
        $region97: #{resume_model_forward.1} parent=73 // pred_region
          %341 = vst [vmem:[#allocation2] sm:$0xff] 0.0
          %342 = vst [vmem:[#allocation2 + $0x8] sm:$0xff] 0.0
          %343 = vst [vmem:[#allocation3] sm:$0xff] 0.0
          %344 = vst [vmem:[#allocation3 + $0x8] sm:$0xff] 0.0
        $region98: #{resume_model_forward.1} parent=73 // pred_fallthru
          _
        %v345 = vld [vmem:[#allocation2] sm:$0xff]
        %v346 = vld [vmem:[#allocation2 + $0x8] sm:$0xff]
        %v347 = vld [vmem:[#allocation3] sm:$0xff]
        %v348 = vld [vmem:[#allocation3 + $0x8] sm:$0xff]
        %v349 = vld [vmem:[#allocation6] sm:$0xff]
        %v350 = vld [vmem:[#allocation6 + $0x8] sm:$0xff]
        %v351 = vld [vmem:[#allocation6 + $0x10] sm:$0xff]
        %v352 = vld [vmem:[#allocation6 + $0x18] sm:$0xff]
        %v353 = vld [vmem:[#allocation6 + $0x20] sm:$0xff]
        %v354 = vld [vmem:[#allocation6 + $0x28] sm:$0xff]
        %v355 = vld [vmem:[#allocation6 + $0x30] sm:$0xff]
        %v356 = vld [vmem:[#allocation6 + $0x38] sm:$0xff]
        %v357 = vld [vmem:[#allocation6 + $0x40] sm:$0xff]
        %v358 = vld [vmem:[#allocation6 + $0x48] sm:$0xff]
        %v359 = vld [vmem:[#allocation6 + $0x50] sm:$0xff]
        %v360 = vld [vmem:[#allocation6 + $0x58] sm:$0xff]
        %v361 = vld [vmem:[#allocation6 + $0x60] sm:$0xff]
        %v362 = vld [vmem:[#allocation6 + $0x68] sm:$0xff]
        %v363 = vld [vmem:[#allocation6 + $0x70] sm:$0xff]
        %v364 = vld [vmem:[#allocation6 + $0x78] sm:$0xff]
        %v365 = vld [vmem:[#allocation6 + $0x80] sm:$0xff]
        %v366 = vld [vmem:[#allocation6 + $0x88] sm:$0xff]
        %v367 = vld [vmem:[#allocation6 + $0x90] sm:$0xff]
        %v368 = vld [vmem:[#allocation6 + $0x98] sm:$0xff]
        %v369 = vld [vmem:[#allocation6 + $0xa0] sm:$0xff]
        %v370 = vld [vmem:[#allocation6 + $0xa8] sm:$0xff]
        %v371 = vld [vmem:[#allocation6 + $0xb0] sm:$0xff]
        %v372 = vld [vmem:[#allocation6 + $0xb8] sm:$0xff]
        %v373 = vld [vmem:[#allocation6 + $0xc0] sm:$0xff]
        %v374 = vld [vmem:[#allocation6 + $0xc8] sm:$0xff]
        %v375 = vld [vmem:[#allocation6 + $0xd0] sm:$0xff]
        %v376 = vld [vmem:[#allocation6 + $0xd8] sm:$0xff]
        %v377 = vld [vmem:[#allocation6 + $0xe0] sm:$0xff]
        %v378 = vld [vmem:[#allocation6 + $0xe8] sm:$0xff]
        %v379 = vld [vmem:[#allocation6 + $0xf0] sm:$0xff]
        %v380 = vld [vmem:[#allocation6 + $0xf8] sm:$0xff]
        %v381 = vld [vmem:[#allocation6 + $0x100] sm:$0xff]
        %v382 = vld [vmem:[#allocation6 + $0x108] sm:$0xff]
        %v383 = vld [vmem:[#allocation6 + $0x110] sm:$0xff]
        %v384 = vld [vmem:[#allocation6 + $0x118] sm:$0xff]
        %v385 = vld [vmem:[#allocation6 + $0x120] sm:$0xff]
        %v386 = vld [vmem:[#allocation6 + $0x128] sm:$0xff]
        %v387 = vld [vmem:[#allocation6 + $0x130] sm:$0xff]
        %v388 = vld [vmem:[#allocation6 + $0x138] sm:$0xff]
        %v389 = vld [vmem:[#allocation6 + $0x140] sm:$0xff]
        %v390 = vld [vmem:[#allocation6 + $0x148] sm:$0xff]
        %v391 = vld [vmem:[#allocation6 + $0x150] sm:$0xff]
        %v392 = vld [vmem:[#allocation6 + $0x158] sm:$0xff]
        %v393 = vld [vmem:[#allocation6 + $0x160] sm:$0xff]
        %v394 = vld [vmem:[#allocation6 + $0x168] sm:$0xff]
        %v395 = vld [vmem:[#allocation6 + $0x170] sm:$0xff]
        %v396 = vld [vmem:[#allocation6 + $0x178] sm:$0xff]
        %v397 = vld [vmem:[#allocation6 + $0x180] sm:$0xff]
        %v398 = vld [vmem:[#allocation6 + $0x188] sm:$0xff]
        %v399 = vld [vmem:[#allocation6 + $0x190] sm:$0xff]
        %v400 = vld [vmem:[#allocation6 + $0x198] sm:$0xff]
        %v401 = vld [vmem:[#allocation6 + $0x1a0] sm:$0xff]
        %v402 = vld [vmem:[#allocation6 + $0x1a8] sm:$0xff]
        %v403 = vld [vmem:[#allocation6 + $0x1b0] sm:$0xff]
        %v404 = vld [vmem:[#allocation6 + $0x1b8] sm:$0xff]
        %v405 = vld [vmem:[#allocation6 + $0x1c0] sm:$0xff]
        %v406 = vld [vmem:[#allocation6 + $0x1c8] sm:$0xff]
        %v407 = vld [vmem:[#allocation6 + $0x1d0] sm:$0xff]
        %v408 = vld [vmem:[#allocation6 + $0x1d8] sm:$0xff]
        %v409 = vld [vmem:[#allocation6 + $0x1e0] sm:$0xff]
        %v410 = vld [vmem:[#allocation6 + $0x1e8] sm:$0xff]
        %v411 = vld [vmem:[#allocation6 + $0x1f0] sm:$0xff]
        %v412 = vld [vmem:[#allocation6 + $0x1f8] sm:$0xff]
        %v413 = vld [vmem:[#allocation6 + $0x200] sm:$0xff]
        %v414 = vld [vmem:[#allocation6 + $0x208] sm:$0xff]
        %v415 = vld [vmem:[#allocation6 + $0x210] sm:$0xff]
        %v416 = vld [vmem:[#allocation6 + $0x218] sm:$0xff]
        %v417 = vld [vmem:[#allocation6 + $0x220] sm:$0xff]
        %v418 = vld [vmem:[#allocation6 + $0x228] sm:$0xff]
        %v419 = vld [vmem:[#allocation6 + $0x230] sm:$0xff]
        %v420 = vld [vmem:[#allocation6 + $0x238] sm:$0xff]
        %v421 = vld [vmem:[#allocation6 + $0x240] sm:$0xff]
        %v422 = vld [vmem:[#allocation6 + $0x248] sm:$0xff]
        %v423 = vld [vmem:[#allocation6 + $0x250] sm:$0xff]
        %v424 = vld [vmem:[#allocation6 + $0x258] sm:$0xff]
        %v425 = vld [vmem:[#allocation6 + $0x260] sm:$0xff]
        %v426 = vld [vmem:[#allocation6 + $0x268] sm:$0xff]
        %v427 = vld [vmem:[#allocation6 + $0x270] sm:$0xff]
        %v428 = vld [vmem:[#allocation6 + $0x278] sm:$0xff]
        %v429 = vld [vmem:[#allocation6 + $0x280] sm:$0xff]
        %v430 = vld [vmem:[#allocation6 + $0x288] sm:$0xff]
        %v431 = vld [vmem:[#allocation6 + $0x290] sm:$0xff]
        %v432 = vld [vmem:[#allocation6 + $0x298] sm:$0xff]
        %v433 = vld [vmem:[#allocation6 + $0x2a0] sm:$0xff]
        %v434 = vld [vmem:[#allocation6 + $0x2a8] sm:$0xff]
        %v435 = vld [vmem:[#allocation6 + $0x2b0] sm:$0xff]
        %v436 = vld [vmem:[#allocation6 + $0x2b8] sm:$0xff]
        %v437 = vld [vmem:[#allocation6 + $0x2c0] sm:$0xff]
        %v438 = vld [vmem:[#allocation6 + $0x2c8] sm:$0xff]
        %v439 = vld [vmem:[#allocation6 + $0x2d0] sm:$0xff]
        %v440 = vld [vmem:[#allocation6 + $0x2d8] sm:$0xff]
        %v441 = vld [vmem:[#allocation6 + $0x2e0] sm:$0xff]
        %v442 = vld [vmem:[#allocation6 + $0x2e8] sm:$0xff]
        %v443 = vld [vmem:[#allocation6 + $0x2f0] sm:$0xff]
        %v444 = vld [vmem:[#allocation6 + $0x2f8] sm:$0xff]
        %v445 = vld [vmem:[#allocation6 + $0x300] sm:$0xff]
        %v446 = vld [vmem:[#allocation6 + $0x308] sm:$0xff]
        %v447 = vld [vmem:[#allocation6 + $0x310] sm:$0xff]
        %v448 = vld [vmem:[#allocation6 + $0x318] sm:$0xff]
        %v449 = vld [vmem:[#allocation6 + $0x320] sm:$0xff]
        %v450 = vld [vmem:[#allocation6 + $0x328] sm:$0xff]
        %v451 = vld [vmem:[#allocation6 + $0x330] sm:$0xff]
        %v452 = vld [vmem:[#allocation6 + $0x338] sm:$0xff]
        %v453 = vld [vmem:[#allocation6 + $0x340] sm:$0xff]
        %v454 = vld [vmem:[#allocation6 + $0x348] sm:$0xff]
        %v455 = vld [vmem:[#allocation6 + $0x350] sm:$0xff]
        %v456 = vld [vmem:[#allocation6 + $0x358] sm:$0xff]
        %v457 = vld [vmem:[#allocation6 + $0x360] sm:$0xff]
        %v458 = vld [vmem:[#allocation6 + $0x368] sm:$0xff]
        %v459 = vld [vmem:[#allocation6 + $0x370] sm:$0xff]
        %v460 = vld [vmem:[#allocation6 + $0x378] sm:$0xff]
        %v461 = vld [vmem:[#allocation6 + $0x380] sm:$0xff]
        %v462 = vld [vmem:[#allocation6 + $0x388] sm:$0xff]
        %v463 = vld [vmem:[#allocation6 + $0x390] sm:$0xff]
        %v464 = vld [vmem:[#allocation6 + $0x398] sm:$0xff]
        %v465 = vld [vmem:[#allocation6 + $0x3a0] sm:$0xff]
        %v466 = vld [vmem:[#allocation6 + $0x3a8] sm:$0xff]
        %v467 = vld [vmem:[#allocation6 + $0x3b0] sm:$0xff]
        %v468 = vld [vmem:[#allocation6 + $0x3b8] sm:$0xff]
        %v469 = vld [vmem:[#allocation6 + $0x3c0] sm:$0xff]
        %v470 = vld [vmem:[#allocation6 + $0x3c8] sm:$0xff]
        %v471 = vld [vmem:[#allocation6 + $0x3d0] sm:$0xff]
        %v472 = vld [vmem:[#allocation6 + $0x3d8] sm:$0xff]
        %v473 = vld [vmem:[#allocation6 + $0x3e0] sm:$0xff]
        %v474 = vld [vmem:[#allocation6 + $0x3e8] sm:$0xff]
        %v475 = vld [vmem:[#allocation6 + $0x3f0] sm:$0xff]
        %v476 = vld [vmem:[#allocation6 + $0x3f8] sm:$0xff]
        %v477 = vld [vmem:[#allocation6 + $0x400] sm:$0xff]
        %v478 = vld [vmem:[#allocation6 + $0x408] sm:$0xff]
        %v479 = vld [vmem:[#allocation6 + $0x410] sm:$0xff]
        %v480 = vld [vmem:[#allocation6 + $0x418] sm:$0xff]
        %v481 = vld [vmem:[#allocation6 + $0x420] sm:$0xff]
        %v482 = vld [vmem:[#allocation6 + $0x428] sm:$0xff]
        %v483 = vld [vmem:[#allocation6 + $0x430] sm:$0xff]
        %v484 = vld [vmem:[#allocation6 + $0x438] sm:$0xff]
        %v485 = vld [vmem:[#allocation6 + $0x440] sm:$0xff]
        %v486 = vld [vmem:[#allocation6 + $0x448] sm:$0xff]
        %v487 = vld [vmem:[#allocation6 + $0x450] sm:$0xff]
        %v488 = vld [vmem:[#allocation6 + $0x458] sm:$0xff]
        %v489 = vld [vmem:[#allocation6 + $0x460] sm:$0xff]
        %v490 = vld [vmem:[#allocation6 + $0x468] sm:$0xff]
        %v491 = vld [vmem:[#allocation6 + $0x470] sm:$0xff]
        %v492 = vld [vmem:[#allocation6 + $0x478] sm:$0xff]
        %v493 = vld [vmem:[#allocation6 + $0x480] sm:$0xff]
        %v494 = vld [vmem:[#allocation6 + $0x488] sm:$0xff]
        %v495 = vld [vmem:[#allocation6 + $0x490] sm:$0xff]
        %v496 = vld [vmem:[#allocation6 + $0x498] sm:$0xff]
        %v497 = vld [vmem:[#allocation6 + $0x4a0] sm:$0xff]
        %v498 = vld [vmem:[#allocation6 + $0x4a8] sm:$0xff]
        %v499 = vld [vmem:[#allocation6 + $0x4b0] sm:$0xff]
        %v500 = vld [vmem:[#allocation6 + $0x4b8] sm:$0xff]
        %v501 = vld [vmem:[#allocation6 + $0x4c0] sm:$0xff]
        %v502 = vld [vmem:[#allocation6 + $0x4c8] sm:$0xff]
        %v503 = vld [vmem:[#allocation6 + $0x4d0] sm:$0xff]
        %v504 = vld [vmem:[#allocation6 + $0x4d8] sm:$0xff]
        %v505 = vld [vmem:[#allocation6 + $0x4e0] sm:$0xff]
        %v506 = vld [vmem:[#allocation6 + $0x4e8] sm:$0xff]
        %v507 = vld [vmem:[#allocation6 + $0x4f0] sm:$0xff]
        %v508 = vld [vmem:[#allocation6 + $0x4f8] sm:$0xff]
        %v509 = vld [vmem:[#allocation6 + $0x500] sm:$0xff]
        %v510 = vld [vmem:[#allocation6 + $0x508] sm:$0xff]
        %v511 = vld [vmem:[#allocation6 + $0x510] sm:$0xff]
        %v512 = vld [vmem:[#allocation6 + $0x518] sm:$0xff]
        %v513 = vld [vmem:[#allocation6 + $0x520] sm:$0xff]
        %v514 = vld [vmem:[#allocation6 + $0x528] sm:$0xff]
        %v515 = vld [vmem:[#allocation6 + $0x530] sm:$0xff]
        %v516 = vld [vmem:[#allocation6 + $0x538] sm:$0xff]
        %v517 = vld [vmem:[#allocation6 + $0x540] sm:$0xff]
        %v518 = vld [vmem:[#allocation6 + $0x548] sm:$0xff]
        %v519 = vld [vmem:[#allocation6 + $0x550] sm:$0xff]
        %v520 = vld [vmem:[#allocation6 + $0x558] sm:$0xff]
        %v521 = vld [vmem:[#allocation6 + $0x560] sm:$0xff]
        %v522 = vld [vmem:[#allocation6 + $0x568] sm:$0xff]
        %v523 = vld [vmem:[#allocation6 + $0x570] sm:$0xff]
        %v524 = vld [vmem:[#allocation6 + $0x578] sm:$0xff]
        %v525 = vld [vmem:[#allocation6 + $0x580] sm:$0xff]
        %v526 = vld [vmem:[#allocation6 + $0x588] sm:$0xff]
        %v527 = vld [vmem:[#allocation6 + $0x590] sm:$0xff]
        %v528 = vld [vmem:[#allocation6 + $0x598] sm:$0xff]
        %v529 = vld [vmem:[#allocation6 + $0x5a0] sm:$0xff]
        %v530 = vld [vmem:[#allocation6 + $0x5a8] sm:$0xff]
        %v531 = vld [vmem:[#allocation6 + $0x5b0] sm:$0xff]
        %v532 = vld [vmem:[#allocation6 + $0x5b8] sm:$0xff]
        %v533 = vld [vmem:[#allocation6 + $0x5c0] sm:$0xff]
        %v534 = vld [vmem:[#allocation6 + $0x5c8] sm:$0xff]
        %v535 = vld [vmem:[#allocation6 + $0x5d0] sm:$0xff]
        %v536 = vld [vmem:[#allocation6 + $0x5d8] sm:$0xff]
        %v537 = vld [vmem:[#allocation6 + $0x5e0] sm:$0xff]
        %v538 = vld [vmem:[#allocation6 + $0x5e8] sm:$0xff]
        %v539 = vld [vmem:[#allocation6 + $0x5f0] sm:$0xff]
        %v540 = vld [vmem:[#allocation6 + $0x5f8] sm:$0xff]
        %v541 = vld [vmem:[#allocation6 + $0x600] sm:$0xff]
        %v542 = vld [vmem:[#allocation6 + $0x608] sm:$0xff]
        %v543 = vld [vmem:[#allocation6 + $0x610] sm:$0xff]
        %v544 = vld [vmem:[#allocation6 + $0x618] sm:$0xff]
        %v545 = vld [vmem:[#allocation6 + $0x620] sm:$0xff]
        %v546 = vld [vmem:[#allocation6 + $0x628] sm:$0xff]
        %v547 = vld [vmem:[#allocation6 + $0x630] sm:$0xff]
        %v548 = vld [vmem:[#allocation6 + $0x638] sm:$0xff]
        %v549 = vld [vmem:[#allocation6 + $0x640] sm:$0xff]
        %v550 = vld [vmem:[#allocation6 + $0x648] sm:$0xff]
        %v551 = vld [vmem:[#allocation6 + $0x650] sm:$0xff]
        %v552 = vld [vmem:[#allocation6 + $0x658] sm:$0xff]
        %v553 = vld [vmem:[#allocation6 + $0x660] sm:$0xff]
        %v554 = vld [vmem:[#allocation6 + $0x668] sm:$0xff]
        %v555 = vld [vmem:[#allocation6 + $0x670] sm:$0xff]
        %v556 = vld [vmem:[#allocation6 + $0x678] sm:$0xff]
        %v557 = vld [vmem:[#allocation6 + $0x680] sm:$0xff]
        %v558 = vld [vmem:[#allocation6 + $0x688] sm:$0xff]
        %v559 = vld [vmem:[#allocation6 + $0x690] sm:$0xff]
        %v560 = vld [vmem:[#allocation6 + $0x698] sm:$0xff]
        %v561 = vld [vmem:[#allocation6 + $0x6a0] sm:$0xff]
        %v562 = vld [vmem:[#allocation6 + $0x6a8] sm:$0xff]
        %v563 = vld [vmem:[#allocation6 + $0x6b0] sm:$0xff]
        %v564 = vld [vmem:[#allocation6 + $0x6b8] sm:$0xff]
        %v565 = vld [vmem:[#allocation6 + $0x6c0] sm:$0xff]
        %v566 = vld [vmem:[#allocation6 + $0x6c8] sm:$0xff]
        %v567 = vld [vmem:[#allocation6 + $0x6d0] sm:$0xff]
        %v568 = vld [vmem:[#allocation6 + $0x6d8] sm:$0xff]
        %v569 = vld [vmem:[#allocation6 + $0x6e0] sm:$0xff]
        %v570 = vld [vmem:[#allocation6 + $0x6e8] sm:$0xff]
        %v571 = vld [vmem:[#allocation6 + $0x6f0] sm:$0xff]
        %v572 = vld [vmem:[#allocation6 + $0x6f8] sm:$0xff]
        %v573 = vld [vmem:[#allocation6 + $0x700] sm:$0xff]
        %v574 = vld [vmem:[#allocation6 + $0x708] sm:$0xff]
        %v575 = vld [vmem:[#allocation6 + $0x710] sm:$0xff]
        %v576 = vld [vmem:[#allocation6 + $0x718] sm:$0xff]
        %v577 = vld [vmem:[#allocation6 + $0x720] sm:$0xff]
        %v578 = vld [vmem:[#allocation6 + $0x728] sm:$0xff]
        %v579 = vld [vmem:[#allocation6 + $0x730] sm:$0xff]
        %v580 = vld [vmem:[#allocation6 + $0x738] sm:$0xff]
        %v581 = vld [vmem:[#allocation6 + $0x740] sm:$0xff]
        %v582 = vld [vmem:[#allocation6 + $0x748] sm:$0xff]
        %v583 = vld [vmem:[#allocation6 + $0x750] sm:$0xff]
        %v584 = vld [vmem:[#allocation6 + $0x758] sm:$0xff]
        %v585 = vld [vmem:[#allocation6 + $0x760] sm:$0xff]
        %v586 = vld [vmem:[#allocation6 + $0x768] sm:$0xff]
        %v587 = vld [vmem:[#allocation6 + $0x770] sm:$0xff]
        %v588 = vld [vmem:[#allocation6 + $0x778] sm:$0xff]
        %v589 = vld [vmem:[#allocation6 + $0x780] sm:$0xff]
        %v590 = vld [vmem:[#allocation6 + $0x788] sm:$0xff]
        %v591 = vld [vmem:[#allocation6 + $0x790] sm:$0xff]
        %v592 = vld [vmem:[#allocation6 + $0x798] sm:$0xff]
        %v593 = vld [vmem:[#allocation6 + $0x7a0] sm:$0xff]
        %v594 = vld [vmem:[#allocation6 + $0x7a8] sm:$0xff]
        %v595 = vld [vmem:[#allocation6 + $0x7b0] sm:$0xff]
        %v596 = vld [vmem:[#allocation6 + $0x7b8] sm:$0xff]
        %v597 = vld [vmem:[#allocation6 + $0x7c0] sm:$0xff]
        %v598 = vld [vmem:[#allocation6 + $0x7c8] sm:$0xff]
        %v599 = vld [vmem:[#allocation6 + $0x7d0] sm:$0xff]
        %v600 = vld [vmem:[#allocation6 + $0x7d8] sm:$0xff]
        %v601 = vld [vmem:[#allocation6 + $0x7e0] sm:$0xff]
        %v602 = vld [vmem:[#allocation6 + $0x7e8] sm:$0xff]
        %v603 = vld [vmem:[#allocation6 + $0x7f0] sm:$0xff]
        %v604 = vld [vmem:[#allocation6 + $0x7f8] sm:$0xff]
        %v605 = vld [vmem:[#allocation6 + $0x800] sm:$0xff]
        %v606 = vld [vmem:[#allocation6 + $0x808] sm:$0xff]
        %v607 = vld [vmem:[#allocation6 + $0x810] sm:$0xff]
        %v608 = vld [vmem:[#allocation6 + $0x818] sm:$0xff]
        %v609 = vld [vmem:[#allocation6 + $0x820] sm:$0xff]
        %v610 = vld [vmem:[#allocation6 + $0x828] sm:$0xff]
        %v611 = vld [vmem:[#allocation6 + $0x830] sm:$0xff]
        %v612 = vld [vmem:[#allocation6 + $0x838] sm:$0xff]
        %v613 = vld [vmem:[#allocation6 + $0x840] sm:$0xff]
        %v614 = vld [vmem:[#allocation6 + $0x848] sm:$0xff]
        %v615 = vld [vmem:[#allocation6 + $0x850] sm:$0xff]
        %v616 = vld [vmem:[#allocation6 + $0x858] sm:$0xff]
        %v617 = vld [vmem:[#allocation6 + $0x860] sm:$0xff]
        %v618 = vld [vmem:[#allocation6 + $0x868] sm:$0xff]
        %v619 = vld [vmem:[#allocation6 + $0x870] sm:$0xff]
        %v620 = vld [vmem:[#allocation6 + $0x878] sm:$0xff]
        %v621 = vld [vmem:[#allocation6 + $0x880] sm:$0xff]
        %v622 = vld [vmem:[#allocation6 + $0x888] sm:$0xff]
        %v623 = vld [vmem:[#allocation6 + $0x890] sm:$0xff]
        %v624 = vld [vmem:[#allocation6 + $0x898] sm:$0xff]
        %v625 = vld [vmem:[#allocation6 + $0x8a0] sm:$0xff]
        %v626 = vld [vmem:[#allocation6 + $0x8a8] sm:$0xff]
        %v627 = vld [vmem:[#allocation6 + $0x8b0] sm:$0xff]
        %v628 = vld [vmem:[#allocation6 + $0x8b8] sm:$0xff]
        %v629 = vld [vmem:[#allocation6 + $0x8c0] sm:$0xff]
        %v630 = vld [vmem:[#allocation6 + $0x8c8] sm:$0xff]
        %v631 = vld [vmem:[#allocation6 + $0x8d0] sm:$0xff]
        %v632 = vld [vmem:[#allocation6 + $0x8d8] sm:$0xff]
        %v633 = vld [vmem:[#allocation6 + $0x8e0] sm:$0xff]
        %v634 = vld [vmem:[#allocation6 + $0x8e8] sm:$0xff]
        %v635 = vld [vmem:[#allocation6 + $0x8f0] sm:$0xff]
        %v636 = vld [vmem:[#allocation6 + $0x8f8] sm:$0xff]
        %v637 = vld [vmem:[#allocation6 + $0x900] sm:$0xff]
        %v638 = vld [vmem:[#allocation6 + $0x908] sm:$0xff]
        %v639 = vld [vmem:[#allocation6 + $0x910] sm:$0xff]
        %v640 = vld [vmem:[#allocation6 + $0x918] sm:$0xff]
        %v641 = vld [vmem:[#allocation6 + $0x920] sm:$0xff]
        %v642 = vld [vmem:[#allocation6 + $0x928] sm:$0xff]
        %v643 = vld [vmem:[#allocation6 + $0x930] sm:$0xff]
        %v644 = vld [vmem:[#allocation6 + $0x938] sm:$0xff]
        %v645 = vld [vmem:[#allocation6 + $0x940] sm:$0xff]
        %v646 = vld [vmem:[#allocation6 + $0x948] sm:$0xff]
        %v647 = vld [vmem:[#allocation6 + $0x950] sm:$0xff]
        %v648 = vld [vmem:[#allocation6 + $0x958] sm:$0xff]
        %v649 = vld [vmem:[#allocation6 + $0x960] sm:$0xff]
        %v650 = vld [vmem:[#allocation6 + $0x968] sm:$0xff]
        %v651 = vld [vmem:[#allocation6 + $0x970] sm:$0xff]
        %v652 = vld [vmem:[#allocation6 + $0x978] sm:$0xff]
        %v653 = vld [vmem:[#allocation6 + $0x980] sm:$0xff]
        %v654 = vld [vmem:[#allocation6 + $0x988] sm:$0xff]
        %v655 = vld [vmem:[#allocation6 + $0x990] sm:$0xff]
        %v656 = vld [vmem:[#allocation6 + $0x998] sm:$0xff]
        %v657 = vld [vmem:[#allocation6 + $0x9a0] sm:$0xff]
        %v658 = vld [vmem:[#allocation6 + $0x9a8] sm:$0xff]
        %v659 = vld [vmem:[#allocation6 + $0x9b0] sm:$0xff]
        %v660 = vld [vmem:[#allocation6 + $0x9b8] sm:$0xff]
        %v661 = vld [vmem:[#allocation6 + $0x9c0] sm:$0xff]
        %v662 = vld [vmem:[#allocation6 + $0x9c8] sm:$0xff]
        %v663 = vld [vmem:[#allocation6 + $0x9d0] sm:$0xff]
        %v664 = vld [vmem:[#allocation6 + $0x9d8] sm:$0xff]
        %v665 = vld [vmem:[#allocation6 + $0x9e0] sm:$0xff]
        %v666 = vld [vmem:[#allocation6 + $0x9e8] sm:$0xff]
        %v667 = vld [vmem:[#allocation6 + $0x9f0] sm:$0xff]
        %v668 = vld [vmem:[#allocation6 + $0x9f8] sm:$0xff]
        %v669 = vld [vmem:[#allocation6 + $0xa00] sm:$0xff]
        %v670 = vld [vmem:[#allocation6 + $0xa08] sm:$0xff]
        %v671 = vld [vmem:[#allocation6 + $0xa10] sm:$0xff]
        %v672 = vld [vmem:[#allocation6 + $0xa18] sm:$0xff]
        %v673 = vld [vmem:[#allocation6 + $0xa20] sm:$0xff]
        %v674 = vld [vmem:[#allocation6 + $0xa28] sm:$0xff]
        %v675 = vld [vmem:[#allocation6 + $0xa30] sm:$0xff]
        %v676 = vld [vmem:[#allocation6 + $0xa38] sm:$0xff]
        %v677 = vld [vmem:[#allocation6 + $0xa40] sm:$0xff]
        %v678 = vld [vmem:[#allocation6 + $0xa48] sm:$0xff]
        %v679 = vld [vmem:[#allocation6 + $0xa50] sm:$0xff]
        %v680 = vld [vmem:[#allocation6 + $0xa58] sm:$0xff]
        %v681 = vld [vmem:[#allocation6 + $0xa60] sm:$0xff]
        %v682 = vld [vmem:[#allocation6 + $0xa68] sm:$0xff]
        %v683 = vld [vmem:[#allocation6 + $0xa70] sm:$0xff]
        %v684 = vld [vmem:[#allocation6 + $0xa78] sm:$0xff]
        %v685 = vld [vmem:[#allocation6 + $0xa80] sm:$0xff]
        %v686 = vld [vmem:[#allocation6 + $0xa88] sm:$0xff]
        %v687 = vld [vmem:[#allocation6 + $0xa90] sm:$0xff]
        %v688 = vld [vmem:[#allocation6 + $0xa98] sm:$0xff]
        %v689 = vld [vmem:[#allocation6 + $0xaa0] sm:$0xff]
        %v690 = vld [vmem:[#allocation6 + $0xaa8] sm:$0xff]
        %v691 = vld [vmem:[#allocation6 + $0xab0] sm:$0xff]
        %v692 = vld [vmem:[#allocation6 + $0xab8] sm:$0xff]
        %v693 = vld [vmem:[#allocation6 + $0xac0] sm:$0xff]
        %v694 = vld [vmem:[#allocation6 + $0xac8] sm:$0xff]
        %v695 = vld [vmem:[#allocation6 + $0xad0] sm:$0xff]
        %v696 = vld [vmem:[#allocation6 + $0xad8] sm:$0xff]
        %v697 = vld [vmem:[#allocation6 + $0xae0] sm:$0xff]
        %v698 = vld [vmem:[#allocation6 + $0xae8] sm:$0xff]
        %v699 = vld [vmem:[#allocation6 + $0xaf0] sm:$0xff]
        %v700 = vld [vmem:[#allocation6 + $0xaf8] sm:$0xff]
        %v701 = vld [vmem:[#allocation6 + $0xb00] sm:$0xff]
        %v702 = vld [vmem:[#allocation6 + $0xb08] sm:$0xff]
        %v703 = vld [vmem:[#allocation6 + $0xb10] sm:$0xff]
        %v704 = vld [vmem:[#allocation6 + $0xb18] sm:$0xff]
        %v705 = vld [vmem:[#allocation6 + $0xb20] sm:$0xff]
        %v706 = vld [vmem:[#allocation6 + $0xb28] sm:$0xff]
        %v707 = vld [vmem:[#allocation6 + $0xb30] sm:$0xff]
        %v708 = vld [vmem:[#allocation6 + $0xb38] sm:$0xff]
        %v709 = vld [vmem:[#allocation6 + $0xb40] sm:$0xff]
        %v710 = vld [vmem:[#allocation6 + $0xb48] sm:$0xff]
        %v711 = vld [vmem:[#allocation6 + $0xb50] sm:$0xff]
        %v712 = vld [vmem:[#allocation6 + $0xb58] sm:$0xff]
        %v713 = vld [vmem:[#allocation6 + $0xb60] sm:$0xff]
        %v714 = vld [vmem:[#allocation6 + $0xb68] sm:$0xff]
        %v715 = vld [vmem:[#allocation6 + $0xb70] sm:$0xff]
        %v716 = vld [vmem:[#allocation6 + $0xb78] sm:$0xff]
        %v717 = vld [vmem:[#allocation6 + $0xb80] sm:$0xff]
        %v718 = vld [vmem:[#allocation6 + $0xb88] sm:$0xff]
        %v719 = vld [vmem:[#allocation6 + $0xb90] sm:$0xff]
        %v720 = vld [vmem:[#allocation6 + $0xb98] sm:$0xff]
        %v721 = vld [vmem:[#allocation6 + $0xba0] sm:$0xff]
        %v722 = vld [vmem:[#allocation6 + $0xba8] sm:$0xff]
        %v723 = vld [vmem:[#allocation6 + $0xbb0] sm:$0xff]
        %v724 = vld [vmem:[#allocation6 + $0xbb8] sm:$0xff]
        %v725 = vld [vmem:[#allocation6 + $0xbc0] sm:$0xff]
        %v726 = vld [vmem:[#allocation6 + $0xbc8] sm:$0xff]
        %v727 = vld [vmem:[#allocation6 + $0xbd0] sm:$0xff]
        %v728 = vld [vmem:[#allocation6 + $0xbd8] sm:$0xff]
        %v729 = vld [vmem:[#allocation6 + $0xbe0] sm:$0xff]
        %v730 = vld [vmem:[#allocation6 + $0xbe8] sm:$0xff]
        %v731 = vld [vmem:[#allocation6 + $0xbf0] sm:$0xff]
        %v732 = vld [vmem:[#allocation6 + $0xbf8] sm:$0xff]
        %v733 = vld [vmem:[#allocation8] sm:$0xff]
        %v734 = vld [vmem:[%s297] sm:$0x1]
        %v735 = vld [vmem:[%s297 + $0x8] sm:$0x1]
        %v736 = vld [vmem:[%s297 + $0x10] sm:$0x1]
        %v737 = vld [vmem:[%s297 + $0x18] sm:$0x1]
        %v738 = vld [vmem:[%s297 + $0x20] sm:$0x1]
        %v739 = vld [vmem:[%s297 + $0x28] sm:$0x1]
        %v740 = vld [vmem:[%s297 + $0x30] sm:$0x1]
        %v741 = vld [vmem:[%s297 + $0x38] sm:$0x1]
        %v750 = vrot.slane %v735, 7
        %vm751 = vcmask 1041409
        %v752 = vsel %vm751, %v750, %v734
        %v753 = vrot.slane %v736, 6
        %vm754 = vcmask 1042434
        %v755 = vsel %vm754, %v753, %v752
        %v756 = vrot.slane %v737, 5
        %vm757 = vcmask 1043459
        %v758 = vsel %vm757, %v756, %v755
        %v759 = vrot.slane %v738, 4
        %vm760 = vcmask 1044484
        %v761 = vsel %vm760, %v759, %v758
        %v762 = vrot.slane %v739, 3
        %vm763 = vcmask 1045509
        %v764 = vsel %vm763, %v762, %v761
        %v765 = vrot.slane %v740, 2
        %vm766 = vcmask 1046534
        %v767 = vsel %vm766, %v765, %v764
        %v768 = vrot.slane %v741, 1
        %vm769 = vcmask 1047559
        %v770 = vsel %vm769, %v768, %v767
        %v773 = vlaneseq
        %v774 = vshrl.u32 %v773, 7
        %v775 = vsub.s32 0, %v774
        %v776 = vrot.slane %v733, %v775
        %v777 = vlaneseq
        %v778 = vshrl.u32 %v777, 7
        %v779 = vsub.s32 1, %v778
        %v780 = vrot.slane %v733, %v779
        %v781 = vlaneseq
        %v782 = vshrl.u32 %v781, 7
        %v783 = vsub.s32 2, %v782
        %v784 = vrot.slane %v733, %v783
        %v785 = vlaneseq
        %v786 = vshrl.u32 %v785, 7
        %v787 = vsub.s32 3, %v786
        %v788 = vrot.slane %v733, %v787
        %v789 = vlaneseq
        %v790 = vshrl.u32 %v789, 7
        %v791 = vsub.s32 4, %v790
        %v792 = vrot.slane %v733, %v791
        %v793 = vlaneseq
        %v794 = vshrl.u32 %v793, 7
        %v795 = vsub.s32 5, %v794
        %v796 = vrot.slane %v733, %v795
        %v797 = vlaneseq
        %v798 = vshrl.u32 %v797, 7
        %v799 = vsub.s32 6, %v798
        %v800 = vrot.slane %v733, %v799
        %v801 = vlaneseq
        %v802 = vshrl.u32 %v801, 7
        %v803 = vsub.s32 7, %v802
        %v804 = vrot.slane %v733, %v803
        %813 = vmatprep.subr.mxu0 %v470
        %814 = vmatpush1.msra.mxu0 %v469
        %815 = vmatprep.subr.mxu0 %v462
        %816 = vmatpush1.msra.mxu0 %v461
        %817 = vmatprep.subr.mxu0 %v454
        %818 = vmatpush1.msra.mxu0 %v453
        %819 = vmatprep.subr.mxu0 %v446
        %820 = vmatpush1.msra.mxu0 %v445
        %821 = vmatprep.subr.mxu0 %v438
        %822 = vmatpush1.msra.mxu0 %v437
        %823 = vmatprep.subr.mxu0 %v430
        %824 = vmatpush1.msra.mxu0 %v429
        %825 = vmatprep.subr.mxu0 %v422
        %826 = vmatpush1.msra.mxu0 %v421
        %827 = vmatprep.subr.mxu0 %v414
        %828 = vmatpush1.msra.mxu0 %v413
        %829 = vmatprep.subr.mxu0 %v406
        %830 = vmatpush1.msra.mxu0 %v405
        %831 = vmatprep.subr.mxu0 %v398
        %832 = vmatpush1.msra.mxu0 %v397
        %833 = vmatprep.subr.mxu0 %v390
        %834 = vmatpush1.msra.mxu0 %v389
        %835 = vmatprep.subr.mxu0 %v382
        %836 = vmatpush1.msra.mxu0 %v381
        %837 = vmatprep.subr.mxu0 %v374
        %838 = vmatpush1.msra.mxu0 %v373
        %839 = vmatprep.subr.mxu0 %v366
        %840 = vmatpush1.msra.mxu0 %v365
        %841 = vmatprep.subr.mxu0 %v358
        %842 = vmatpush1.msra.mxu0 %v357
        %843 = vmatprep.subr.mxu0 %v350
        %844 = vmatpush1.msra.mxu0 %v349
        %845 = vmatprep.subr.mxu0 %v598
        %846 = vmatpush2.msra.mxu0 %v597
        %847 = vmatprep.subr.mxu0 %v590
        %848 = vmatpush2.msra.mxu0 %v589
        %849 = vmatprep.subr.mxu0 %v582
        %850 = vmatpush2.msra.mxu0 %v581
        %851 = vmatprep.subr.mxu0 %v574
        %852 = vmatpush2.msra.mxu0 %v573
        %853 = vmatprep.subr.mxu0 %v566
        %854 = vmatpush2.msra.mxu0 %v565
        %855 = vmatprep.subr.mxu0 %v558
        %856 = vmatpush2.msra.mxu0 %v557
        %857 = vmatprep.subr.mxu0 %v550
        %858 = vmatpush2.msra.mxu0 %v549
        %859 = vmatprep.subr.mxu0 %v542
        %860 = vmatpush2.msra.mxu0 %v541
        %861 = vmatprep.subr.mxu0 %v534
        %862 = vmatpush2.msra.mxu0 %v533
        %863 = vmatprep.subr.mxu0 %v526
        %864 = vmatpush2.msra.mxu0 %v525
        %865 = vmatprep.subr.mxu0 %v518
        %866 = vmatpush2.msra.mxu0 %v517
        %867 = vmatprep.subr.mxu0 %v510
        %868 = vmatpush2.msra.mxu0 %v509
        %869 = vmatprep.subr.mxu0 %v502
        %870 = vmatpush2.msra.mxu0 %v501
        %871 = vmatprep.subr.mxu0 %v494
        %872 = vmatpush2.msra.mxu0 %v493
        %873 = vmatprep.subr.mxu0 %v486
        %874 = vmatpush2.msra.mxu0 %v485
        %875 = vmatprep.subr.mxu0 %v478
        %876 = vmatpush2.msra.mxu0 %v477
        %877 = vmatprep.mubr.f32.mxu0 %v345
        %878 = vmatmul.mubr.f32.gmra.mxu0 %v770
        %v879 = vpop.f32.mrf.mxu0
        %v880 = vadd.f32 %v776, %v879
        %v881 = vpop.f32.mrf.mxu0
        %v882 = vadd.f32 %v780, %v881
        %883 = vdwg.mxu0
        %884 = vmatprep.subr.mxu0 %v726
        %885 = vmatpush1.msra.mxu0 %v725
        %886 = vmatprep.subr.mxu0 %v718
        %887 = vmatpush1.msra.mxu0 %v717
        %888 = vmatprep.subr.mxu0 %v710
        %889 = vmatpush1.msra.mxu0 %v709
        %890 = vmatprep.subr.mxu0 %v702
        %891 = vmatpush1.msra.mxu0 %v701
        %892 = vmatprep.subr.mxu0 %v694
        %893 = vmatpush1.msra.mxu0 %v693
        %894 = vmatprep.subr.mxu0 %v686
        %895 = vmatpush1.msra.mxu0 %v685
        %896 = vmatprep.subr.mxu0 %v678
        %897 = vmatpush1.msra.mxu0 %v677
        %898 = vmatprep.subr.mxu0 %v670
        %899 = vmatpush1.msra.mxu0 %v669
        %900 = vmatprep.subr.mxu0 %v662
        %901 = vmatpush1.msra.mxu0 %v661
        %902 = vmatprep.subr.mxu0 %v654
        %903 = vmatpush1.msra.mxu0 %v653
        %904 = vmatprep.subr.mxu0 %v646
        %905 = vmatpush1.msra.mxu0 %v645
        %906 = vmatprep.subr.mxu0 %v638
        %907 = vmatpush1.msra.mxu0 %v637
        %908 = vmatprep.subr.mxu0 %v630
        %909 = vmatpush1.msra.mxu0 %v629
        %910 = vmatprep.subr.mxu0 %v622
        %911 = vmatpush1.msra.mxu0 %v621
        %912 = vmatprep.subr.mxu0 %v614
        %913 = vmatpush1.msra.mxu0 %v613
        %914 = vmatprep.subr.mxu0 %v606
        %915 = vmatpush1.msra.mxu0 %v605
        %916 = vmatprep.subr.mxu0 0.0
        %917 = vmatpush2.msra.mxu0 0.0
        %918 = vmatprep.subr.mxu0 0.0
        %919 = vmatpush2.msra.mxu0 0.0
        %920 = vmatprep.subr.mxu0 0.0
        %921 = vmatpush2.msra.mxu0 0.0
        %922 = vmatprep.subr.mxu0 0.0
        %923 = vmatpush2.msra.mxu0 0.0
        %924 = vmatprep.subr.mxu0 0.0
        %925 = vmatpush2.msra.mxu0 0.0
        %926 = vmatprep.subr.mxu0 0.0
        %927 = vmatpush2.msra.mxu0 0.0
        %928 = vmatprep.subr.mxu0 0.0
        %929 = vmatpush2.msra.mxu0 0.0
        %930 = vmatprep.subr.mxu0 0.0
        %931 = vmatpush2.msra.mxu0 0.0
        %932 = vmatprep.subr.mxu0 0.0
        %933 = vmatpush2.msra.mxu0 0.0
        %934 = vmatprep.subr.mxu0 0.0
        %935 = vmatpush2.msra.mxu0 0.0
        %936 = vmatprep.subr.mxu0 0.0
        %937 = vmatpush2.msra.mxu0 0.0
        %938 = vmatprep.subr.mxu0 0.0
        %939 = vmatpush2.msra.mxu0 0.0
        %940 = vmatprep.subr.mxu0 0.0
        %941 = vmatpush2.msra.mxu0 0.0
        %942 = vmatprep.subr.mxu0 0.0
        %943 = vmatpush2.msra.mxu0 0.0
        %944 = vmatprep.subr.mxu0 0.0
        %945 = vmatpush2.msra.mxu0 0.0
        %946 = vmatprep.subr.mxu0 0.0
        %947 = vmatpush2.msra.mxu0 0.0
        %948 = vmatprep.mubr.f32.mxu0 0.0
        %949 = vmatmul.mubr.f32.gmra.mxu0 %v346
        %v950 = vpop.f32.mrf.mxu0
        %v951 = vadd.f32 %v880, %v950
        %v952 = vpop.f32.mrf.mxu0
        %v953 = vadd.f32 %v882, %v952
        %954 = vdwg.mxu0
        %955 = vmatprep.subr.mxu0 %v472
        %956 = vmatpush1.msra.mxu0 %v471
        %957 = vmatprep.subr.mxu0 %v464
        %958 = vmatpush1.msra.mxu0 %v463
        %959 = vmatprep.subr.mxu0 %v456
        %960 = vmatpush1.msra.mxu0 %v455
        %961 = vmatprep.subr.mxu0 %v448
        %962 = vmatpush1.msra.mxu0 %v447
        %963 = vmatprep.subr.mxu0 %v440
        %964 = vmatpush1.msra.mxu0 %v439
        %965 = vmatprep.subr.mxu0 %v432
        %966 = vmatpush1.msra.mxu0 %v431
        %967 = vmatprep.subr.mxu0 %v424
        %968 = vmatpush1.msra.mxu0 %v423
        %969 = vmatprep.subr.mxu0 %v416
        %970 = vmatpush1.msra.mxu0 %v415
        %971 = vmatprep.subr.mxu0 %v408
        %972 = vmatpush1.msra.mxu0 %v407
        %973 = vmatprep.subr.mxu0 %v400
        %974 = vmatpush1.msra.mxu0 %v399
        %975 = vmatprep.subr.mxu0 %v392
        %976 = vmatpush1.msra.mxu0 %v391
        %977 = vmatprep.subr.mxu0 %v384
        %978 = vmatpush1.msra.mxu0 %v383
        %979 = vmatprep.subr.mxu0 %v376
        %980 = vmatpush1.msra.mxu0 %v375
        %981 = vmatprep.subr.mxu0 %v368
        %982 = vmatpush1.msra.mxu0 %v367
        %983 = vmatprep.subr.mxu0 %v360
        %984 = vmatpush1.msra.mxu0 %v359
        %985 = vmatprep.subr.mxu0 %v352
        %986 = vmatpush1.msra.mxu0 %v351
        %987 = vmatprep.subr.mxu0 %v600
        %988 = vmatpush2.msra.mxu0 %v599
        %989 = vmatprep.subr.mxu0 %v592
        %990 = vmatpush2.msra.mxu0 %v591
        %991 = vmatprep.subr.mxu0 %v584
        %992 = vmatpush2.msra.mxu0 %v583
        %993 = vmatprep.subr.mxu0 %v576
        %994 = vmatpush2.msra.mxu0 %v575
        %995 = vmatprep.subr.mxu0 %v568
        %996 = vmatpush2.msra.mxu0 %v567
        %997 = vmatprep.subr.mxu0 %v560
        %998 = vmatpush2.msra.mxu0 %v559
        %999 = vmatprep.subr.mxu0 %v552
        %1000 = vmatpush2.msra.mxu0 %v551
        %1001 = vmatprep.subr.mxu0 %v544
        %1002 = vmatpush2.msra.mxu0 %v543
        %1003 = vmatprep.subr.mxu0 %v536
        %1004 = vmatpush2.msra.mxu0 %v535
        %1005 = vmatprep.subr.mxu0 %v528
        %1006 = vmatpush2.msra.mxu0 %v527
        %1007 = vmatprep.subr.mxu0 %v520
        %1008 = vmatpush2.msra.mxu0 %v519
        %1009 = vmatprep.subr.mxu0 %v512
        %1010 = vmatpush2.msra.mxu0 %v511
        %1011 = vmatprep.subr.mxu0 %v504
        %1012 = vmatpush2.msra.mxu0 %v503
        %1013 = vmatprep.subr.mxu0 %v496
        %1014 = vmatpush2.msra.mxu0 %v495
        %1015 = vmatprep.subr.mxu0 %v488
        %1016 = vmatpush2.msra.mxu0 %v487
        %1017 = vmatprep.subr.mxu0 %v480
        %1018 = vmatpush2.msra.mxu0 %v479
        %1019 = vmatprep.mubr.f32.mxu0 %v345
        %1020 = vmatmul.mubr.f32.gmra.mxu0 %v770
        %v1021 = vpop.f32.mrf.mxu0
        %v1022 = vadd.f32 %v784, %v1021
        %v1023 = vpop.f32.mrf.mxu0
        %v1024 = vadd.f32 %v788, %v1023
        %1025 = vdwg.mxu0
        %1026 = vmatprep.subr.mxu0 %v728
        %1027 = vmatpush1.msra.mxu0 %v727
        %1028 = vmatprep.subr.mxu0 %v720
        %1029 = vmatpush1.msra.mxu0 %v719
        %1030 = vmatprep.subr.mxu0 %v712
        %1031 = vmatpush1.msra.mxu0 %v711
        %1032 = vmatprep.subr.mxu0 %v704
        %1033 = vmatpush1.msra.mxu0 %v703
        %1034 = vmatprep.subr.mxu0 %v696
        %1035 = vmatpush1.msra.mxu0 %v695
        %1036 = vmatprep.subr.mxu0 %v688
        %1037 = vmatpush1.msra.mxu0 %v687
        %1038 = vmatprep.subr.mxu0 %v680
        %1039 = vmatpush1.msra.mxu0 %v679
        %1040 = vmatprep.subr.mxu0 %v672
        %1041 = vmatpush1.msra.mxu0 %v671
        %1042 = vmatprep.subr.mxu0 %v664
        %1043 = vmatpush1.msra.mxu0 %v663
        %1044 = vmatprep.subr.mxu0 %v656
        %1045 = vmatpush1.msra.mxu0 %v655
        %1046 = vmatprep.subr.mxu0 %v648
        %1047 = vmatpush1.msra.mxu0 %v647
        %1048 = vmatprep.subr.mxu0 %v640
        %1049 = vmatpush1.msra.mxu0 %v639
        %1050 = vmatprep.subr.mxu0 %v632
        %1051 = vmatpush1.msra.mxu0 %v631
        %1052 = vmatprep.subr.mxu0 %v624
        %1053 = vmatpush1.msra.mxu0 %v623
        %1054 = vmatprep.subr.mxu0 %v616
        %1055 = vmatpush1.msra.mxu0 %v615
        %1056 = vmatprep.subr.mxu0 %v608
        %1057 = vmatpush1.msra.mxu0 %v607
        %1058 = vmatprep.subr.mxu0 0.0
        %1059 = vmatpush2.msra.mxu0 0.0
        %1060 = vmatprep.subr.mxu0 0.0
        %1061 = vmatpush2.msra.mxu0 0.0
        %1062 = vmatprep.subr.mxu0 0.0
        %1063 = vmatpush2.msra.mxu0 0.0
        %1064 = vmatprep.subr.mxu0 0.0
        %1065 = vmatpush2.msra.mxu0 0.0
        %1066 = vmatprep.subr.mxu0 0.0
        %1067 = vmatpush2.msra.mxu0 0.0
        %1068 = vmatprep.subr.mxu0 0.0
        %1069 = vmatpush2.msra.mxu0 0.0
        %1070 = vmatprep.subr.mxu0 0.0
        %1071 = vmatpush2.msra.mxu0 0.0
        %1072 = vmatprep.subr.mxu0 0.0
        %1073 = vmatpush2.msra.mxu0 0.0
        %1074 = vmatprep.subr.mxu0 0.0
        %1075 = vmatpush2.msra.mxu0 0.0
        %1076 = vmatprep.subr.mxu0 0.0
        %1077 = vmatpush2.msra.mxu0 0.0
        %1078 = vmatprep.subr.mxu0 0.0
        %1079 = vmatpush2.msra.mxu0 0.0
        %1080 = vmatprep.subr.mxu0 0.0
        %1081 = vmatpush2.msra.mxu0 0.0
        %1082 = vmatprep.subr.mxu0 0.0
        %1083 = vmatpush2.msra.mxu0 0.0
        %1084 = vmatprep.subr.mxu0 0.0
        %1085 = vmatpush2.msra.mxu0 0.0
        %1086 = vmatprep.subr.mxu0 0.0
        %1087 = vmatpush2.msra.mxu0 0.0
        %1088 = vmatprep.subr.mxu0 0.0
        %1089 = vmatpush2.msra.mxu0 0.0
        %1090 = vmatprep.mubr.f32.mxu0 0.0
        %1091 = vmatmul.mubr.f32.gmra.mxu0 %v346
        %v1092 = vpop.f32.mrf.mxu0
        %v1093 = vadd.f32 %v1022, %v1092
        %v1094 = vpop.f32.mrf.mxu0
        %v1095 = vadd.f32 %v1024, %v1094
        %1096 = vdwg.mxu0
        %1097 = vmatprep.subr.mxu0 %v474
        %1098 = vmatpush1.msra.mxu0 %v473
        %1099 = vmatprep.subr.mxu0 %v466
        %1100 = vmatpush1.msra.mxu0 %v465
        %1101 = vmatprep.subr.mxu0 %v458
        %1102 = vmatpush1.msra.mxu0 %v457
        %1103 = vmatprep.subr.mxu0 %v450
        %1104 = vmatpush1.msra.mxu0 %v449
        %1105 = vmatprep.subr.mxu0 %v442
        %1106 = vmatpush1.msra.mxu0 %v441
        %1107 = vmatprep.subr.mxu0 %v434
        %1108 = vmatpush1.msra.mxu0 %v433
        %1109 = vmatprep.subr.mxu0 %v426
        %1110 = vmatpush1.msra.mxu0 %v425
        %1111 = vmatprep.subr.mxu0 %v418
        %1112 = vmatpush1.msra.mxu0 %v417
        %1113 = vmatprep.subr.mxu0 %v410
        %1114 = vmatpush1.msra.mxu0 %v409
        %1115 = vmatprep.subr.mxu0 %v402
        %1116 = vmatpush1.msra.mxu0 %v401
        %1117 = vmatprep.subr.mxu0 %v394
        %1118 = vmatpush1.msra.mxu0 %v393
        %1119 = vmatprep.subr.mxu0 %v386
        %1120 = vmatpush1.msra.mxu0 %v385
        %1121 = vmatprep.subr.mxu0 %v378
        %1122 = vmatpush1.msra.mxu0 %v377
        %1123 = vmatprep.subr.mxu0 %v370
        %1124 = vmatpush1.msra.mxu0 %v369
        %1125 = vmatprep.subr.mxu0 %v362
        %1126 = vmatpush1.msra.mxu0 %v361
        %1127 = vmatprep.subr.mxu0 %v354
        %1128 = vmatpush1.msra.mxu0 %v353
        %1129 = vmatprep.subr.mxu0 %v602
        %1130 = vmatpush2.msra.mxu0 %v601
        %1131 = vmatprep.subr.mxu0 %v594
        %1132 = vmatpush2.msra.mxu0 %v593
        %1133 = vmatprep.subr.mxu0 %v586
        %1134 = vmatpush2.msra.mxu0 %v585
        %1135 = vmatprep.subr.mxu0 %v578
        %1136 = vmatpush2.msra.mxu0 %v577
        %1137 = vmatprep.subr.mxu0 %v570
        %1138 = vmatpush2.msra.mxu0 %v569
        %1139 = vmatprep.subr.mxu0 %v562
        %1140 = vmatpush2.msra.mxu0 %v561
        %1141 = vmatprep.subr.mxu0 %v554
        %1142 = vmatpush2.msra.mxu0 %v553
        %1143 = vmatprep.subr.mxu0 %v546
        %1144 = vmatpush2.msra.mxu0 %v545
        %1145 = vmatprep.subr.mxu0 %v538
        %1146 = vmatpush2.msra.mxu0 %v537
        %1147 = vmatprep.subr.mxu0 %v530
        %1148 = vmatpush2.msra.mxu0 %v529
        %1149 = vmatprep.subr.mxu0 %v522
        %1150 = vmatpush2.msra.mxu0 %v521
        %1151 = vmatprep.subr.mxu0 %v514
        %1152 = vmatpush2.msra.mxu0 %v513
        %1153 = vmatprep.subr.mxu0 %v506
        %1154 = vmatpush2.msra.mxu0 %v505
        %1155 = vmatprep.subr.mxu0 %v498
        %1156 = vmatpush2.msra.mxu0 %v497
        %1157 = vmatprep.subr.mxu0 %v490
        %1158 = vmatpush2.msra.mxu0 %v489
        %1159 = vmatprep.subr.mxu0 %v482
        %1160 = vmatpush2.msra.mxu0 %v481
        %1161 = vmatprep.mubr.f32.mxu0 %v345
        %1162 = vmatmul.mubr.f32.gmra.mxu0 %v770
        %v1163 = vpop.f32.mrf.mxu0
        %v1164 = vadd.f32 %v792, %v1163
        %v1165 = vpop.f32.mrf.mxu0
        %v1166 = vadd.f32 %v796, %v1165
        %1167 = vdwg.mxu0
        %1168 = vmatprep.subr.mxu0 %v730
        %1169 = vmatpush1.msra.mxu0 %v729
        %1170 = vmatprep.subr.mxu0 %v722
        %1171 = vmatpush1.msra.mxu0 %v721
        %1172 = vmatprep.subr.mxu0 %v714
        %1173 = vmatpush1.msra.mxu0 %v713
        %1174 = vmatprep.subr.mxu0 %v706
        %1175 = vmatpush1.msra.mxu0 %v705
        %1176 = vmatprep.subr.mxu0 %v698
        %1177 = vmatpush1.msra.mxu0 %v697
        %1178 = vmatprep.subr.mxu0 %v690
        %1179 = vmatpush1.msra.mxu0 %v689
        %1180 = vmatprep.subr.mxu0 %v682
        %1181 = vmatpush1.msra.mxu0 %v681
        %1182 = vmatprep.subr.mxu0 %v674
        %1183 = vmatpush1.msra.mxu0 %v673
        %1184 = vmatprep.subr.mxu0 %v666
        %1185 = vmatpush1.msra.mxu0 %v665
        %1186 = vmatprep.subr.mxu0 %v658
        %1187 = vmatpush1.msra.mxu0 %v657
        %1188 = vmatprep.subr.mxu0 %v650
        %1189 = vmatpush1.msra.mxu0 %v649
        %1190 = vmatprep.subr.mxu0 %v642
        %1191 = vmatpush1.msra.mxu0 %v641
        %1192 = vmatprep.subr.mxu0 %v634
        %1193 = vmatpush1.msra.mxu0 %v633
        %1194 = vmatprep.subr.mxu0 %v626
        %1195 = vmatpush1.msra.mxu0 %v625
        %1196 = vmatprep.subr.mxu0 %v618
        %1197 = vmatpush1.msra.mxu0 %v617
        %1198 = vmatprep.subr.mxu0 %v610
        %1199 = vmatpush1.msra.mxu0 %v609
        %1200 = vmatprep.subr.mxu0 0.0
        %1201 = vmatpush2.msra.mxu0 0.0
        %1202 = vmatprep.subr.mxu0 0.0
        %1203 = vmatpush2.msra.mxu0 0.0
        %1204 = vmatprep.subr.mxu0 0.0
        %1205 = vmatpush2.msra.mxu0 0.0
        %1206 = vmatprep.subr.mxu0 0.0
        %1207 = vmatpush2.msra.mxu0 0.0
        %1208 = vmatprep.subr.mxu0 0.0
        %1209 = vmatpush2.msra.mxu0 0.0
        %1210 = vmatprep.subr.mxu0 0.0
        %1211 = vmatpush2.msra.mxu0 0.0
        %1212 = vmatprep.subr.mxu0 0.0
        %1213 = vmatpush2.msra.mxu0 0.0
        %1214 = vmatprep.subr.mxu0 0.0
        %1215 = vmatpush2.msra.mxu0 0.0
        %1216 = vmatprep.subr.mxu0 0.0
        %1217 = vmatpush2.msra.mxu0 0.0
        %1218 = vmatprep.subr.mxu0 0.0
        %1219 = vmatpush2.msra.mxu0 0.0
        %1220 = vmatprep.subr.mxu0 0.0
        %1221 = vmatpush2.msra.mxu0 0.0
        %1222 = vmatprep.subr.mxu0 0.0
        %1223 = vmatpush2.msra.mxu0 0.0
        %1224 = vmatprep.subr.mxu0 0.0
        %1225 = vmatpush2.msra.mxu0 0.0
        %1226 = vmatprep.subr.mxu0 0.0
        %1227 = vmatpush2.msra.mxu0 0.0
        %1228 = vmatprep.subr.mxu0 0.0
        %1229 = vmatpush2.msra.mxu0 0.0
        %1230 = vmatprep.subr.mxu0 0.0
        %1231 = vmatpush2.msra.mxu0 0.0
        %1232 = vmatprep.mubr.f32.mxu0 0.0
        %1233 = vmatmul.mubr.f32.gmra.mxu0 %v346
        %v1234 = vpop.f32.mrf.mxu0
        %v1235 = vadd.f32 %v1164, %v1234
        %v1236 = vpop.f32.mrf.mxu0
        %v1237 = vadd.f32 %v1166, %v1236
        %1238 = vdwg.mxu0
        %1239 = vmatprep.subr.mxu0 %v476
        %1240 = vmatpush1.msra.mxu0 %v475
        %1241 = vmatprep.subr.mxu0 %v468
        %1242 = vmatpush1.msra.mxu0 %v467
        %1243 = vmatprep.subr.mxu0 %v460
        %1244 = vmatpush1.msra.mxu0 %v459
        %1245 = vmatprep.subr.mxu0 %v452
        %1246 = vmatpush1.msra.mxu0 %v451
        %1247 = vmatprep.subr.mxu0 %v444
        %1248 = vmatpush1.msra.mxu0 %v443
        %1249 = vmatprep.subr.mxu0 %v436
        %1250 = vmatpush1.msra.mxu0 %v435
        %1251 = vmatprep.subr.mxu0 %v428
        %1252 = vmatpush1.msra.mxu0 %v427
        %1253 = vmatprep.subr.mxu0 %v420
        %1254 = vmatpush1.msra.mxu0 %v419
        %1255 = vmatprep.subr.mxu0 %v412
        %1256 = vmatpush1.msra.mxu0 %v411
        %1257 = vmatprep.subr.mxu0 %v404
        %1258 = vmatpush1.msra.mxu0 %v403
        %1259 = vmatprep.subr.mxu0 %v396
        %1260 = vmatpush1.msra.mxu0 %v395
        %1261 = vmatprep.subr.mxu0 %v388
        %1262 = vmatpush1.msra.mxu0 %v387
        %1263 = vmatprep.subr.mxu0 %v380
        %1264 = vmatpush1.msra.mxu0 %v379
        %1265 = vmatprep.subr.mxu0 %v372
        %1266 = vmatpush1.msra.mxu0 %v371
        %1267 = vmatprep.subr.mxu0 %v364
        %1268 = vmatpush1.msra.mxu0 %v363
        %1269 = vmatprep.subr.mxu0 %v356
        %1270 = vmatpush1.msra.mxu0 %v355
        %1271 = vmatprep.subr.mxu0 %v604
        %1272 = vmatpush2.msra.mxu0 %v603
        %1273 = vmatprep.subr.mxu0 %v596
        %1274 = vmatpush2.msra.mxu0 %v595
        %1275 = vmatprep.subr.mxu0 %v588
        %1276 = vmatpush2.msra.mxu0 %v587
        %1277 = vmatprep.subr.mxu0 %v580
        %1278 = vmatpush2.msra.mxu0 %v579
        %1279 = vmatprep.subr.mxu0 %v572
        %1280 = vmatpush2.msra.mxu0 %v571
        %1281 = vmatprep.subr.mxu0 %v564
        %1282 = vmatpush2.msra.mxu0 %v563
        %1283 = vmatprep.subr.mxu0 %v556
        %1284 = vmatpush2.msra.mxu0 %v555
        %1285 = vmatprep.subr.mxu0 %v548
        %1286 = vmatpush2.msra.mxu0 %v547
        %1287 = vmatprep.subr.mxu0 %v540
        %1288 = vmatpush2.msra.mxu0 %v539
        %1289 = vmatprep.subr.mxu0 %v532
        %1290 = vmatpush2.msra.mxu0 %v531
        %1291 = vmatprep.subr.mxu0 %v524
        %1292 = vmatpush2.msra.mxu0 %v523
        %1293 = vmatprep.subr.mxu0 %v516
        %1294 = vmatpush2.msra.mxu0 %v515
        %1295 = vmatprep.subr.mxu0 %v508
        %1296 = vmatpush2.msra.mxu0 %v507
        %1297 = vmatprep.subr.mxu0 %v500
        %1298 = vmatpush2.msra.mxu0 %v499
        %1299 = vmatprep.subr.mxu0 %v492
        %1300 = vmatpush2.msra.mxu0 %v491
        %1301 = vmatprep.subr.mxu0 %v484
        %1302 = vmatpush2.msra.mxu0 %v483
        %1303 = vmatprep.mubr.f32.mxu0 %v345
        %1304 = vmatmul.mubr.f32.gmra.mxu0 %v770
        %v1305 = vpop.f32.mrf.mxu0
        %v1306 = vadd.f32 %v800, %v1305
        %v1307 = vpop.f32.mrf.mxu0
        %v1308 = vadd.f32 %v804, %v1307
        %1309 = vdwg.mxu0
        %1310 = vmatprep.subr.mxu0 %v732
        %1311 = vmatpush1.msra.mxu0 %v731
        %1312 = vmatprep.subr.mxu0 %v724
        %1313 = vmatpush1.msra.mxu0 %v723
        %1314 = vmatprep.subr.mxu0 %v716
        %1315 = vmatpush1.msra.mxu0 %v715
        %1316 = vmatprep.subr.mxu0 %v708
        %1317 = vmatpush1.msra.mxu0 %v707
        %1318 = vmatprep.subr.mxu0 %v700
        %1319 = vmatpush1.msra.mxu0 %v699
        %1320 = vmatprep.subr.mxu0 %v692
        %1321 = vmatpush1.msra.mxu0 %v691
        %1322 = vmatprep.subr.mxu0 %v684
        %1323 = vmatpush1.msra.mxu0 %v683
        %1324 = vmatprep.subr.mxu0 %v676
        %1325 = vmatpush1.msra.mxu0 %v675
        %1326 = vmatprep.subr.mxu0 %v668
        %1327 = vmatpush1.msra.mxu0 %v667
        %1328 = vmatprep.subr.mxu0 %v660
        %1329 = vmatpush1.msra.mxu0 %v659
        %1330 = vmatprep.subr.mxu0 %v652
        %1331 = vmatpush1.msra.mxu0 %v651
        %1332 = vmatprep.subr.mxu0 %v644
        %1333 = vmatpush1.msra.mxu0 %v643
        %1334 = vmatprep.subr.mxu0 %v636
        %1335 = vmatpush1.msra.mxu0 %v635
        %1336 = vmatprep.subr.mxu0 %v628
        %1337 = vmatpush1.msra.mxu0 %v627
        %1338 = vmatprep.subr.mxu0 %v620
        %1339 = vmatpush1.msra.mxu0 %v619
        %1340 = vmatprep.subr.mxu0 %v612
        %1341 = vmatpush1.msra.mxu0 %v611
        %1342 = vmatprep.subr.mxu0 0.0
        %1343 = vmatpush2.msra.mxu0 0.0
        %1344 = vmatprep.subr.mxu0 0.0
        %1345 = vmatpush2.msra.mxu0 0.0
        %1346 = vmatprep.subr.mxu0 0.0
        %1347 = vmatpush2.msra.mxu0 0.0
        %1348 = vmatprep.subr.mxu0 0.0
        %1349 = vmatpush2.msra.mxu0 0.0
        %1350 = vmatprep.subr.mxu0 0.0
        %1351 = vmatpush2.msra.mxu0 0.0
        %1352 = vmatprep.subr.mxu0 0.0
        %1353 = vmatpush2.msra.mxu0 0.0
        %1354 = vmatprep.subr.mxu0 0.0
        %1355 = vmatpush2.msra.mxu0 0.0
        %1356 = vmatprep.subr.mxu0 0.0
        %1357 = vmatpush2.msra.mxu0 0.0
        %1358 = vmatprep.subr.mxu0 0.0
        %1359 = vmatpush2.msra.mxu0 0.0
        %1360 = vmatprep.subr.mxu0 0.0
        %1361 = vmatpush2.msra.mxu0 0.0
        %1362 = vmatprep.subr.mxu0 0.0
        %1363 = vmatpush2.msra.mxu0 0.0
        %1364 = vmatprep.subr.mxu0 0.0
        %1365 = vmatpush2.msra.mxu0 0.0
        %1366 = vmatprep.subr.mxu0 0.0
        %1367 = vmatpush2.msra.mxu0 0.0
        %1368 = vmatprep.subr.mxu0 0.0
        %1369 = vmatpush2.msra.mxu0 0.0
        %1370 = vmatprep.subr.mxu0 0.0
        %1371 = vmatpush2.msra.mxu0 0.0
        %1372 = vmatprep.subr.mxu0 0.0
        %1373 = vmatpush2.msra.mxu0 0.0
        %1374 = vmatprep.mubr.f32.mxu0 0.0
        %1375 = vmatmul.mubr.f32.gmra.mxu0 %v346
        %v1376 = vpop.f32.mrf.mxu0
        %v1377 = vadd.f32 %v1306, %v1376
        %v1378 = vpop.f32.mrf.mxu0
        %v1379 = vadd.f32 %v1308, %v1378
        %1380 = vdwg.mxu0
        %v1381 = vxor.u32 %v951, 2147483648
        %v1382 = vxor.u32 %v953, 2147483648
        %v1383 = vmul.f32 %v1381, 1.442695
        %v1384 = vpow.pop %v1383
        %v1385 = vmul.f32 %v1382, 1.442695
        %v1386 = vpow.pop %v1385
        %v1387 = vadd.f32 %v1384, 1.0
        %v1388 = vadd.f32 %v1386, 1.0
        %v1389 = vrcp.pop %v1387
        %v1390 = vmul.f32 1.0, %v1389
        %v1391 = vrcp.pop %v1388
        %v1392 = vmul.f32 1.0, %v1391
        %v1393 = vxor.u32 %v1093, 2147483648
        %v1394 = vxor.u32 %v1095, 2147483648
        %v1395 = vmul.f32 %v1393, 1.442695
        %v1396 = vpow.pop %v1395
        %v1397 = vmul.f32 %v1394, 1.442695
        %v1398 = vpow.pop %v1397
        %v1399 = vadd.f32 %v1396, 1.0
        %v1400 = vadd.f32 %v1398, 1.0
        %v1401 = vrcp.pop %v1399
        %v1402 = vmul.f32 1.0, %v1401
        %v1403 = vrcp.pop %v1400
        %v1404 = vmul.f32 1.0, %v1403
        %v1405 = vtanh.pop %v1235
        %v1406 = vtanh.pop %v1237
        %v1407 = vxor.u32 %v1377, 2147483648
        %v1408 = vxor.u32 %v1379, 2147483648
        %v1409 = vmul.f32 %v1407, 1.442695
        %v1410 = vpow.pop %v1409
        %v1411 = vmul.f32 %v1408, 1.442695
        %v1412 = vpow.pop %v1411
        %v1413 = vadd.f32 %v1410, 1.0
        %v1414 = vadd.f32 %v1412, 1.0
        %v1415 = vrcp.pop %v1413
        %v1416 = vmul.f32 1.0, %v1415
        %v1417 = vrcp.pop %v1414
        %v1418 = vmul.f32 1.0, %v1417
        %v1419 = vmul.f32 %v1402, %v347
        %v1420 = vmul.f32 %v1404, %v348
        %v1421 = vmul.f32 %v1390, %v1405
        %v1422 = vmul.f32 %v1392, %v1406
        %v1423 = vadd.f32 %v1419, %v1421
        %v1424 = vadd.f32 %v1420, %v1422
        %v1425 = vtanh.pop %v1423
        %v1426 = vtanh.pop %v1424
        %v1427 = vmul.f32 %v1416, %v1425
        %v1428 = vmul.f32 %v1418, %v1426
        %v1431 = vcombine.low %v1427, %v1428
        %v1432 = vcombine.high %v1427, %v1428
        %v1434 = vunpack.c.l.s4 1966171168
        %v1435 = vunpack.c.0.s8 %v1434
        %v1436 = vlaneseq
        %v1437 = vshrl.u32 %v1436, 7
        %v1438 = vsub.s32 %v1435, %v1437
        %v1439 = vrot.slane %v1431, %v1438
        %v1441 = vunpack.c.l.s4 1966171168
        %v1442 = vunpack.c.0.s8 %v1441
        %v1443 = vlaneseq
        %v1444 = vshrl.u32 %v1443, 7
        %v1445 = vsub.s32 %v1442, %v1444
        %v1446 = vrot.slane %v1432, %v1445
        %v1447 = vcombine.high %v1439, %v1439
        %v1448 = vcombine.high %v1446, %v1446
        %v1450 = vunpack.c.l.s4 1966171168
        %v1451 = vunpack.c.0.s8 %v1450
        %v1452 = vlaneseq
        %v1453 = vshrl.u32 %v1452, 7
        %v1454 = vsub.s32 %v1451, %v1453
        %v1455 = vrot.slane %v1439, %v1454
        %v1457 = vunpack.c.l.s4 1966171168
        %v1458 = vunpack.c.0.s8 %v1457
        %v1459 = vlaneseq
        %v1460 = vshrl.u32 %v1459, 7
        %v1461 = vsub.s32 %v1458, %v1460
        %v1462 = vrot.slane %v1446, %v1461
        %v1464 = vunpack.c.l.s4 1966171168
        %v1465 = vunpack.c.0.s8 %v1464
        %v1466 = vlaneseq
        %v1467 = vshrl.u32 %v1466, 7
        %v1468 = vsub.s32 %v1465, %v1467
        %v1469 = vrot.slane %v1447, %v1468
        %v1471 = vunpack.c.l.s4 1966171168
        %v1472 = vunpack.c.0.s8 %v1471
        %v1473 = vlaneseq
        %v1474 = vshrl.u32 %v1473, 7
        %v1475 = vsub.s32 %v1472, %v1474
        %v1476 = vrot.slane %v1448, %v1475
        %v1477 = vcombine.high %v1455, %v1455
        %v1478 = vcombine.high %v1462, %v1462
        %v1479 = vcombine.high %v1469, %v1469
        %v1480 = vcombine.high %v1476, %v1476
        %v1489 = vlaneseq
        %vm1490 = vcmp.ge.s32.totalorder %v1489, 0
        %vm1491 = vcmp.lt.s32.totalorder %v1489, 256
        %vm1492 = vmand %vm1490, %vm1491
        %1493 = vst.msk [vmem:[#allocation4] ss:$8 sm:$0x3] %vm1492, %v1455
        %1494 = vst.msk [vmem:[#allocation4] ss:$8 sm:$0x0] %vm1492, %v1455
        %s1495 = scalar_lea.vmem [#allocation4], 16
        %1496 = vst.msk [vmem:[%s1495] ss:$8 sm:$0x3] %vm1492, %v1469
        %1497 = vst.msk [vmem:[%s1495] ss:$8 sm:$0x0] %vm1492, %v1469
        %s1498 = scalar_lea.vmem [#allocation4], 32
        %1499 = vst.msk [vmem:[%s1498] ss:$8 sm:$0x3] %vm1492, %v1477
        %1500 = vst.msk [vmem:[%s1498] ss:$8 sm:$0x0] %vm1492, %v1477
        %s1501 = scalar_lea.vmem [#allocation4], 48
        %1502 = vst.msk [vmem:[%s1501] ss:$8 sm:$0x3] %vm1492, %v1479
        %1503 = vst.msk [vmem:[%s1501] ss:$8 sm:$0x0] %vm1492, %v1479
        %s1504 = scalar_lea.vmem [#allocation4], 64
        %1505 = vst.msk [vmem:[%s1504] ss:$8 sm:$0x3] %vm1492, %v1462
        %1506 = vst.msk [vmem:[%s1504] ss:$8 sm:$0x0] %vm1492, %v1462
        %s1507 = scalar_lea.vmem [#allocation4], 80
        %1508 = vst.msk [vmem:[%s1507] ss:$8 sm:$0x3] %vm1492, %v1476
        %1509 = vst.msk [vmem:[%s1507] ss:$8 sm:$0x0] %vm1492, %v1476
        %s1510 = scalar_lea.vmem [#allocation4], 96
        %1511 = vst.msk [vmem:[%s1510] ss:$8 sm:$0x3] %vm1492, %v1478
        %1512 = vst.msk [vmem:[%s1510] ss:$8 sm:$0x0] %vm1492, %v1478
        %s1513 = scalar_lea.vmem [#allocation4], 112
        %1514 = vst.msk [vmem:[%s1513] ss:$8 sm:$0x3] %vm1492, %v1480
        %1515 = vst.msk [vmem:[%s1513] ss:$8 sm:$0x0] %vm1492, %v1480
        %v1516 = vld [vmem:[%s297 + $0x1] sm:$0x1]
        %v1517 = vld [vmem:[%s297 + $0x9] sm:$0x1]
        %v1518 = vld [vmem:[%s297 + $0x11] sm:$0x1]
        %v1519 = vld [vmem:[%s297 + $0x19] sm:$0x1]
        %v1520 = vld [vmem:[%s297 + $0x21] sm:$0x1]
        %v1521 = vld [vmem:[%s297 + $0x29] sm:$0x1]
        %v1522 = vld [vmem:[%s297 + $0x31] sm:$0x1]
        %v1523 = vld [vmem:[%s297 + $0x39] sm:$0x1]
        %v1532 = vrot.slane %v1517, 7
        %v1533 = vsel %vm751, %v1532, %v1516
        %v1534 = vrot.slane %v1518, 6
        %v1535 = vsel %vm754, %v1534, %v1533
        %v1536 = vrot.slane %v1519, 5
        %v1537 = vsel %vm757, %v1536, %v1535
        %v1538 = vrot.slane %v1520, 4
        %v1539 = vsel %vm760, %v1538, %v1537
        %v1540 = vrot.slane %v1521, 3
        %v1541 = vsel %vm763, %v1540, %v1539
        %v1542 = vrot.slane %v1522, 2
        %v1543 = vsel %vm766, %v1542, %v1541
        %v1544 = vrot.slane %v1523, 1
        %v1545 = vsel %vm769, %v1544, %v1543
        %1547 = vmatprep.subr.mxu0 %v470
        %1548 = vmatpush1.msra.mxu0 %v469
        %1549 = vmatprep.subr.mxu0 %v462
        %1550 = vmatpush1.msra.mxu0 %v461
        %1551 = vmatprep.subr.mxu0 %v454
        %1552 = vmatpush1.msra.mxu0 %v453
        %1553 = vmatprep.subr.mxu0 %v446
        %1554 = vmatpush1.msra.mxu0 %v445
        %1555 = vmatprep.subr.mxu0 %v438
        %1556 = vmatpush1.msra.mxu0 %v437
        %1557 = vmatprep.subr.mxu0 %v430
        %1558 = vmatpush1.msra.mxu0 %v429
        %1559 = vmatprep.subr.mxu0 %v422
        %1560 = vmatpush1.msra.mxu0 %v421
        %1561 = vmatprep.subr.mxu0 %v414
        %1562 = vmatpush1.msra.mxu0 %v413
        %1563 = vmatprep.subr.mxu0 %v406
        %1564 = vmatpush1.msra.mxu0 %v405
        %1565 = vmatprep.subr.mxu0 %v398
        %1566 = vmatpush1.msra.mxu0 %v397
        %1567 = vmatprep.subr.mxu0 %v390
        %1568 = vmatpush1.msra.mxu0 %v389
        %1569 = vmatprep.subr.mxu0 %v382
        %1570 = vmatpush1.msra.mxu0 %v381
        %1571 = vmatprep.subr.mxu0 %v374
        %1572 = vmatpush1.msra.mxu0 %v373
        %1573 = vmatprep.subr.mxu0 %v366
        %1574 = vmatpush1.msra.mxu0 %v365
        %1575 = vmatprep.subr.mxu0 %v358
        %1576 = vmatpush1.msra.mxu0 %v357
        %1577 = vmatprep.subr.mxu0 %v350
        %1578 = vmatpush1.msra.mxu0 %v349
        %1579 = vmatprep.subr.mxu0 %v598
        %1580 = vmatpush2.msra.mxu0 %v597
        %1581 = vmatprep.subr.mxu0 %v590
        %1582 = vmatpush2.msra.mxu0 %v589
        %1583 = vmatprep.subr.mxu0 %v582
        %1584 = vmatpush2.msra.mxu0 %v581
        %1585 = vmatprep.subr.mxu0 %v574
        %1586 = vmatpush2.msra.mxu0 %v573
        %1587 = vmatprep.subr.mxu0 %v566
        %1588 = vmatpush2.msra.mxu0 %v565
        %1589 = vmatprep.subr.mxu0 %v558
        %1590 = vmatpush2.msra.mxu0 %v557
        %1591 = vmatprep.subr.mxu0 %v550
        %1592 = vmatpush2.msra.mxu0 %v549
        %1593 = vmatprep.subr.mxu0 %v542
        %1594 = vmatpush2.msra.mxu0 %v541
        %1595 = vmatprep.subr.mxu0 %v534
        %1596 = vmatpush2.msra.mxu0 %v533
        %1597 = vmatprep.subr.mxu0 %v526
        %1598 = vmatpush2.msra.mxu0 %v525
        %1599 = vmatprep.subr.mxu0 %v518
        %1600 = vmatpush2.msra.mxu0 %v517
        %1601 = vmatprep.subr.mxu0 %v510
        %1602 = vmatpush2.msra.mxu0 %v509
        %1603 = vmatprep.subr.mxu0 %v502
        %1604 = vmatpush2.msra.mxu0 %v501
        %1605 = vmatprep.subr.mxu0 %v494
        %1606 = vmatpush2.msra.mxu0 %v493
        %1607 = vmatprep.subr.mxu0 %v486
        %1608 = vmatpush2.msra.mxu0 %v485
        %1609 = vmatprep.subr.mxu0 %v478
        %1610 = vmatpush2.msra.mxu0 %v477
        %1611 = vmatprep.mubr.f32.mxu0 %v1427
        %1612 = vmatmul.mubr.f32.gmra.mxu0 %v1545
        %v1613 = vpop.f32.mrf.mxu0
        %v1614 = vadd.f32 %v776, %v1613
        %v1615 = vpop.f32.mrf.mxu0
        %v1616 = vadd.f32 %v780, %v1615
        %1617 = vdwg.mxu0
        %1618 = vmatprep.subr.mxu0 %v726
        %1619 = vmatpush1.msra.mxu0 %v725
        %1620 = vmatprep.subr.mxu0 %v718
        %1621 = vmatpush1.msra.mxu0 %v717
        %1622 = vmatprep.subr.mxu0 %v710
        %1623 = vmatpush1.msra.mxu0 %v709
        %1624 = vmatprep.subr.mxu0 %v702
        %1625 = vmatpush1.msra.mxu0 %v701
        %1626 = vmatprep.subr.mxu0 %v694
        %1627 = vmatpush1.msra.mxu0 %v693
        %1628 = vmatprep.subr.mxu0 %v686
        %1629 = vmatpush1.msra.mxu0 %v685
        %1630 = vmatprep.subr.mxu0 %v678
        %1631 = vmatpush1.msra.mxu0 %v677
        %1632 = vmatprep.subr.mxu0 %v670
        %1633 = vmatpush1.msra.mxu0 %v669
        %1634 = vmatprep.subr.mxu0 %v662
        %1635 = vmatpush1.msra.mxu0 %v661
        %1636 = vmatprep.subr.mxu0 %v654
        %1637 = vmatpush1.msra.mxu0 %v653
        %1638 = vmatprep.subr.mxu0 %v646
        %1639 = vmatpush1.msra.mxu0 %v645
        %1640 = vmatprep.subr.mxu0 %v638
        %1641 = vmatpush1.msra.mxu0 %v637
        %1642 = vmatprep.subr.mxu0 %v630
        %1643 = vmatpush1.msra.mxu0 %v629
        %1644 = vmatprep.subr.mxu0 %v622
        %1645 = vmatpush1.msra.mxu0 %v621
        %1646 = vmatprep.subr.mxu0 %v614
        %1647 = vmatpush1.msra.mxu0 %v613
        %1648 = vmatprep.subr.mxu0 %v606
        %1649 = vmatpush1.msra.mxu0 %v605
        %1650 = vmatprep.subr.mxu0 0.0
        %1651 = vmatpush2.msra.mxu0 0.0
        %1652 = vmatprep.subr.mxu0 0.0
        %1653 = vmatpush2.msra.mxu0 0.0
        %1654 = vmatprep.subr.mxu0 0.0
        %1655 = vmatpush2.msra.mxu0 0.0
        %1656 = vmatprep.subr.mxu0 0.0
        %1657 = vmatpush2.msra.mxu0 0.0
        %1658 = vmatprep.subr.mxu0 0.0
        %1659 = vmatpush2.msra.mxu0 0.0
        %1660 = vmatprep.subr.mxu0 0.0
        %1661 = vmatpush2.msra.mxu0 0.0
        %1662 = vmatprep.subr.mxu0 0.0
        %1663 = vmatpush2.msra.mxu0 0.0
        %1664 = vmatprep.subr.mxu0 0.0
        %1665 = vmatpush2.msra.mxu0 0.0
        %1666 = vmatprep.subr.mxu0 0.0
        %1667 = vmatpush2.msra.mxu0 0.0
        %1668 = vmatprep.subr.mxu0 0.0
        %1669 = vmatpush2.msra.mxu0 0.0
        %1670 = vmatprep.subr.mxu0 0.0
        %1671 = vmatpush2.msra.mxu0 0.0
        %1672 = vmatprep.subr.mxu0 0.0
        %1673 = vmatpush2.msra.mxu0 0.0
        %1674 = vmatprep.subr.mxu0 0.0
        %1675 = vmatpush2.msra.mxu0 0.0
        %1676 = vmatprep.subr.mxu0 0.0
        %1677 = vmatpush2.msra.mxu0 0.0
        %1678 = vmatprep.subr.mxu0 0.0
        %1679 = vmatpush2.msra.mxu0 0.0
        %1680 = vmatprep.subr.mxu0 0.0
        %1681 = vmatpush2.msra.mxu0 0.0
        %1682 = vmatprep.mubr.f32.mxu0 0.0
        %1683 = vmatmul.mubr.f32.gmra.mxu0 %v1428
        %v1684 = vpop.f32.mrf.mxu0
        %v1685 = vadd.f32 %v1614, %v1684
        %v1686 = vpop.f32.mrf.mxu0
        %v1687 = vadd.f32 %v1616, %v1686
        %1688 = vdwg.mxu0
        %1689 = vmatprep.subr.mxu0 %v472
        %1690 = vmatpush1.msra.mxu0 %v471
        %1691 = vmatprep.subr.mxu0 %v464
        %1692 = vmatpush1.msra.mxu0 %v463
        %1693 = vmatprep.subr.mxu0 %v456
        %1694 = vmatpush1.msra.mxu0 %v455
        %1695 = vmatprep.subr.mxu0 %v448
        %1696 = vmatpush1.msra.mxu0 %v447
        %1697 = vmatprep.subr.mxu0 %v440
        %1698 = vmatpush1.msra.mxu0 %v439
        %1699 = vmatprep.subr.mxu0 %v432
        %1700 = vmatpush1.msra.mxu0 %v431
        %1701 = vmatprep.subr.mxu0 %v424
        %1702 = vmatpush1.msra.mxu0 %v423
        %1703 = vmatprep.subr.mxu0 %v416
        %1704 = vmatpush1.msra.mxu0 %v415
        %1705 = vmatprep.subr.mxu0 %v408
        %1706 = vmatpush1.msra.mxu0 %v407
        %1707 = vmatprep.subr.mxu0 %v400
        %1708 = vmatpush1.msra.mxu0 %v399
        %1709 = vmatprep.subr.mxu0 %v392
        %1710 = vmatpush1.msra.mxu0 %v391
        %1711 = vmatprep.subr.mxu0 %v384
        %1712 = vmatpush1.msra.mxu0 %v383
        %1713 = vmatprep.subr.mxu0 %v376
        %1714 = vmatpush1.msra.mxu0 %v375
        %1715 = vmatprep.subr.mxu0 %v368
        %1716 = vmatpush1.msra.mxu0 %v367
        %1717 = vmatprep.subr.mxu0 %v360
        %1718 = vmatpush1.msra.mxu0 %v359
        %1719 = vmatprep.subr.mxu0 %v352
        %1720 = vmatpush1.msra.mxu0 %v351
        %1721 = vmatprep.subr.mxu0 %v600
        %1722 = vmatpush2.msra.mxu0 %v599
        %1723 = vmatprep.subr.mxu0 %v592
        %1724 = vmatpush2.msra.mxu0 %v591
        %1725 = vmatprep.subr.mxu0 %v584
        %1726 = vmatpush2.msra.mxu0 %v583
        %1727 = vmatprep.subr.mxu0 %v576
        %1728 = vmatpush2.msra.mxu0 %v575
        %1729 = vmatprep.subr.mxu0 %v568
        %1730 = vmatpush2.msra.mxu0 %v567
        %1731 = vmatprep.subr.mxu0 %v560
        %1732 = vmatpush2.msra.mxu0 %v559
        %1733 = vmatprep.subr.mxu0 %v552
        %1734 = vmatpush2.msra.mxu0 %v551
        %1735 = vmatprep.subr.mxu0 %v544
        %1736 = vmatpush2.msra.mxu0 %v543
        %1737 = vmatprep.subr.mxu0 %v536
        %1738 = vmatpush2.msra.mxu0 %v535
        %1739 = vmatprep.subr.mxu0 %v528
        %1740 = vmatpush2.msra.mxu0 %v527
        %1741 = vmatprep.subr.mxu0 %v520
        %1742 = vmatpush2.msra.mxu0 %v519
        %1743 = vmatprep.subr.mxu0 %v512
        %1744 = vmatpush2.msra.mxu0 %v511
        %1745 = vmatprep.subr.mxu0 %v504
        %1746 = vmatpush2.msra.mxu0 %v503
        %1747 = vmatprep.subr.mxu0 %v496
        %1748 = vmatpush2.msra.mxu0 %v495
        %1749 = vmatprep.subr.mxu0 %v488
        %1750 = vmatpush2.msra.mxu0 %v487
        %1751 = vmatprep.subr.mxu0 %v480
        %1752 = vmatpush2.msra.mxu0 %v479
        %1753 = vmatprep.mubr.f32.mxu0 %v1427
        %1754 = vmatmul.mubr.f32.gmra.mxu0 %v1545
        %v1755 = vpop.f32.mrf.mxu0
        %v1756 = vadd.f32 %v784, %v1755
        %v1757 = vpop.f32.mrf.mxu0
        %v1758 = vadd.f32 %v788, %v1757
        %1759 = vdwg.mxu0
        %1760 = vmatprep.subr.mxu0 %v728
        %1761 = vmatpush1.msra.mxu0 %v727
        %1762 = vmatprep.subr.mxu0 %v720
        %1763 = vmatpush1.msra.mxu0 %v719
        %1764 = vmatprep.subr.mxu0 %v712
        %1765 = vmatpush1.msra.mxu0 %v711
        %1766 = vmatprep.subr.mxu0 %v704
        %1767 = vmatpush1.msra.mxu0 %v703
        %1768 = vmatprep.subr.mxu0 %v696
        %1769 = vmatpush1.msra.mxu0 %v695
        %1770 = vmatprep.subr.mxu0 %v688
        %1771 = vmatpush1.msra.mxu0 %v687
        %1772 = vmatprep.subr.mxu0 %v680
        %1773 = vmatpush1.msra.mxu0 %v679
        %1774 = vmatprep.subr.mxu0 %v672
        %1775 = vmatpush1.msra.mxu0 %v671
        %1776 = vmatprep.subr.mxu0 %v664
        %1777 = vmatpush1.msra.mxu0 %v663
        %1778 = vmatprep.subr.mxu0 %v656
        %1779 = vmatpush1.msra.mxu0 %v655
        %1780 = vmatprep.subr.mxu0 %v648
        %1781 = vmatpush1.msra.mxu0 %v647
        %1782 = vmatprep.subr.mxu0 %v640
        %1783 = vmatpush1.msra.mxu0 %v639
        %1784 = vmatprep.subr.mxu0 %v632
        %1785 = vmatpush1.msra.mxu0 %v631
        %1786 = vmatprep.subr.mxu0 %v624
        %1787 = vmatpush1.msra.mxu0 %v623
        %1788 = vmatprep.subr.mxu0 %v616
        %1789 = vmatpush1.msra.mxu0 %v615
        %1790 = vmatprep.subr.mxu0 %v608
        %1791 = vmatpush1.msra.mxu0 %v607
        %1792 = vmatprep.subr.mxu0 0.0
        %1793 = vmatpush2.msra.mxu0 0.0
        %1794 = vmatprep.subr.mxu0 0.0
        %1795 = vmatpush2.msra.mxu0 0.0
        %1796 = vmatprep.subr.mxu0 0.0
        %1797 = vmatpush2.msra.mxu0 0.0
        %1798 = vmatprep.subr.mxu0 0.0
        %1799 = vmatpush2.msra.mxu0 0.0
        %1800 = vmatprep.subr.mxu0 0.0
        %1801 = vmatpush2.msra.mxu0 0.0
        %1802 = vmatprep.subr.mxu0 0.0
        %1803 = vmatpush2.msra.mxu0 0.0
        %1804 = vmatprep.subr.mxu0 0.0
        %1805 = vmatpush2.msra.mxu0 0.0
        %1806 = vmatprep.subr.mxu0 0.0
        %1807 = vmatpush2.msra.mxu0 0.0
        %1808 = vmatprep.subr.mxu0 0.0
        %1809 = vmatpush2.msra.mxu0 0.0
        %1810 = vmatprep.subr.mxu0 0.0
        %1811 = vmatpush2.msra.mxu0 0.0
        %1812 = vmatprep.subr.mxu0 0.0
        %1813 = vmatpush2.msra.mxu0 0.0
        %1814 = vmatprep.subr.mxu0 0.0
        %1815 = vmatpush2.msra.mxu0 0.0
        %1816 = vmatprep.subr.mxu0 0.0
        %1817 = vmatpush2.msra.mxu0 0.0
        %1818 = vmatprep.subr.mxu0 0.0
        %1819 = vmatpush2.msra.mxu0 0.0
        %1820 = vmatprep.subr.mxu0 0.0
        %1821 = vmatpush2.msra.mxu0 0.0
        %1822 = vmatprep.subr.mxu0 0.0
        %1823 = vmatpush2.msra.mxu0 0.0
        %1824 = vmatprep.mubr.f32.mxu0 0.0
        %1825 = vmatmul.mubr.f32.gmra.mxu0 %v1428
        %v1826 = vpop.f32.mrf.mxu0
        %v1827 = vadd.f32 %v1756, %v1826
        %v1828 = vpop.f32.mrf.mxu0
        %v1829 = vadd.f32 %v1758, %v1828
        %1830 = vdwg.mxu0
        %1831 = vmatprep.subr.mxu0 %v474
        %1832 = vmatpush1.msra.mxu0 %v473
        %1833 = vmatprep.subr.mxu0 %v466
        %1834 = vmatpush1.msra.mxu0 %v465
        %1835 = vmatprep.subr.mxu0 %v458
        %1836 = vmatpush1.msra.mxu0 %v457
        %1837 = vmatprep.subr.mxu0 %v450
        %1838 = vmatpush1.msra.mxu0 %v449
        %1839 = vmatprep.subr.mxu0 %v442
        %1840 = vmatpush1.msra.mxu0 %v441
        %1841 = vmatprep.subr.mxu0 %v434
        %1842 = vmatpush1.msra.mxu0 %v433
        %1843 = vmatprep.subr.mxu0 %v426
        %1844 = vmatpush1.msra.mxu0 %v425
        %1845 = vmatprep.subr.mxu0 %v418
        %1846 = vmatpush1.msra.mxu0 %v417
        %1847 = vmatprep.subr.mxu0 %v410
        %1848 = vmatpush1.msra.mxu0 %v409
        %1849 = vmatprep.subr.mxu0 %v402
        %1850 = vmatpush1.msra.mxu0 %v401
        %1851 = vmatprep.subr.mxu0 %v394
        %1852 = vmatpush1.msra.mxu0 %v393
        %1853 = vmatprep.subr.mxu0 %v386
        %1854 = vmatpush1.msra.mxu0 %v385
        %1855 = vmatprep.subr.mxu0 %v378
        %1856 = vmatpush1.msra.mxu0 %v377
        %1857 = vmatprep.subr.mxu0 %v370
        %1858 = vmatpush1.msra.mxu0 %v369
        %1859 = vmatprep.subr.mxu0 %v362
        %1860 = vmatpush1.msra.mxu0 %v361
        %1861 = vmatprep.subr.mxu0 %v354
        %1862 = vmatpush1.msra.mxu0 %v353
        %1863 = vmatprep.subr.mxu0 %v602
        %1864 = vmatpush2.msra.mxu0 %v601
        %1865 = vmatprep.subr.mxu0 %v594
        %1866 = vmatpush2.msra.mxu0 %v593
        %1867 = vmatprep.subr.mxu0 %v586
        %1868 = vmatpush2.msra.mxu0 %v585
        %1869 = vmatprep.subr.mxu0 %v578
        %1870 = vmatpush2.msra.mxu0 %v577
        %1871 = vmatprep.subr.mxu0 %v570
        %1872 = vmatpush2.msra.mxu0 %v569
        %1873 = vmatprep.subr.mxu0 %v562
        %1874 = vmatpush2.msra.mxu0 %v561
        %1875 = vmatprep.subr.mxu0 %v554
        %1876 = vmatpush2.msra.mxu0 %v553
        %1877 = vmatprep.subr.mxu0 %v546
        %1878 = vmatpush2.msra.mxu0 %v545
        %1879 = vmatprep.subr.mxu0 %v538
        %1880 = vmatpush2.msra.mxu0 %v537
        %1881 = vmatprep.subr.mxu0 %v530
        %1882 = vmatpush2.msra.mxu0 %v529
        %1883 = vmatprep.subr.mxu0 %v522
        %1884 = vmatpush2.msra.mxu0 %v521
        %1885 = vmatprep.subr.mxu0 %v514
        %1886 = vmatpush2.msra.mxu0 %v513
        %1887 = vmatprep.subr.mxu0 %v506
        %1888 = vmatpush2.msra.mxu0 %v505
        %1889 = vmatprep.subr.mxu0 %v498
        %1890 = vmatpush2.msra.mxu0 %v497
        %1891 = vmatprep.subr.mxu0 %v490
        %1892 = vmatpush2.msra.mxu0 %v489
        %1893 = vmatprep.subr.mxu0 %v482
        %1894 = vmatpush2.msra.mxu0 %v481
        %1895 = vmatprep.mubr.f32.mxu0 %v1427
        %1896 = vmatmul.mubr.f32.gmra.mxu0 %v1545
        %v1897 = vpop.f32.mrf.mxu0
        %v1898 = vadd.f32 %v792, %v1897
        %v1899 = vpop.f32.mrf.mxu0
        %v1900 = vadd.f32 %v796, %v1899
        %1901 = vdwg.mxu0
        %1902 = vmatprep.subr.mxu0 %v730
        %1903 = vmatpush1.msra.mxu0 %v729
        %1904 = vmatprep.subr.mxu0 %v722
        %1905 = vmatpush1.msra.mxu0 %v721
        %1906 = vmatprep.subr.mxu0 %v714
        %1907 = vmatpush1.msra.mxu0 %v713
        %1908 = vmatprep.subr.mxu0 %v706
        %1909 = vmatpush1.msra.mxu0 %v705
        %1910 = vmatprep.subr.mxu0 %v698
        %1911 = vmatpush1.msra.mxu0 %v697
        %1912 = vmatprep.subr.mxu0 %v690
        %1913 = vmatpush1.msra.mxu0 %v689
        %1914 = vmatprep.subr.mxu0 %v682
        %1915 = vmatpush1.msra.mxu0 %v681
        %1916 = vmatprep.subr.mxu0 %v674
        %1917 = vmatpush1.msra.mxu0 %v673
        %1918 = vmatprep.subr.mxu0 %v666
        %1919 = vmatpush1.msra.mxu0 %v665
        %1920 = vmatprep.subr.mxu0 %v658
        %1921 = vmatpush1.msra.mxu0 %v657
        %1922 = vmatprep.subr.mxu0 %v650
        %1923 = vmatpush1.msra.mxu0 %v649
        %1924 = vmatprep.subr.mxu0 %v642
        %1925 = vmatpush1.msra.mxu0 %v641
        %1926 = vmatprep.subr.mxu0 %v634
        %1927 = vmatpush1.msra.mxu0 %v633
        %1928 = vmatprep.subr.mxu0 %v626
        %1929 = vmatpush1.msra.mxu0 %v625
        %1930 = vmatprep.subr.mxu0 %v618
        %1931 = vmatpush1.msra.mxu0 %v617
        %1932 = vmatprep.subr.mxu0 %v610
        %1933 = vmatpush1.msra.mxu0 %v609
        %1934 = vmatprep.subr.mxu0 0.0
        %1935 = vmatpush2.msra.mxu0 0.0
        %1936 = vmatprep.subr.mxu0 0.0
        %1937 = vmatpush2.msra.mxu0 0.0
        %1938 = vmatprep.subr.mxu0 0.0
        %1939 = vmatpush2.msra.mxu0 0.0
        %1940 = vmatprep.subr.mxu0 0.0
        %1941 = vmatpush2.msra.mxu0 0.0
        %1942 = vmatprep.subr.mxu0 0.0
        %1943 = vmatpush2.msra.mxu0 0.0
        %1944 = vmatprep.subr.mxu0 0.0
        %1945 = vmatpush2.msra.mxu0 0.0
        %1946 = vmatprep.subr.mxu0 0.0
        %1947 = vmatpush2.msra.mxu0 0.0
        %1948 = vmatprep.subr.mxu0 0.0
        %1949 = vmatpush2.msra.mxu0 0.0
        %1950 = vmatprep.subr.mxu0 0.0
        %1951 = vmatpush2.msra.mxu0 0.0
        %1952 = vmatprep.subr.mxu0 0.0
        %1953 = vmatpush2.msra.mxu0 0.0
        %1954 = vmatprep.subr.mxu0 0.0
        %1955 = vmatpush2.msra.mxu0 0.0
        %1956 = vmatprep.subr.mxu0 0.0
        %1957 = vmatpush2.msra.mxu0 0.0
        %1958 = vmatprep.subr.mxu0 0.0
        %1959 = vmatpush2.msra.mxu0 0.0
        %1960 = vmatprep.subr.mxu0 0.0
        %1961 = vmatpush2.msra.mxu0 0.0
        %1962 = vmatprep.subr.mxu0 0.0
        %1963 = vmatpush2.msra.mxu0 0.0
        %1964 = vmatprep.subr.mxu0 0.0
        %1965 = vmatpush2.msra.mxu0 0.0
        %1966 = vmatprep.mubr.f32.mxu0 0.0
        %1967 = vmatmul.mubr.f32.gmra.mxu0 %v1428
        %v1968 = vpop.f32.mrf.mxu0
        %v1969 = vadd.f32 %v1898, %v1968
        %v1970 = vpop.f32.mrf.mxu0
        %v1971 = vadd.f32 %v1900, %v1970
        %1972 = vdwg.mxu0
        %1973 = vmatprep.subr.mxu0 %v476
        %1974 = vmatpush1.msra.mxu0 %v475
        %1975 = vmatprep.subr.mxu0 %v468
        %1976 = vmatpush1.msra.mxu0 %v467
        %1977 = vmatprep.subr.mxu0 %v460
        %1978 = vmatpush1.msra.mxu0 %v459
        %1979 = vmatprep.subr.mxu0 %v452
        %1980 = vmatpush1.msra.mxu0 %v451
        %1981 = vmatprep.subr.mxu0 %v444
        %1982 = vmatpush1.msra.mxu0 %v443
        %1983 = vmatprep.subr.mxu0 %v436
        %1984 = vmatpush1.msra.mxu0 %v435
        %1985 = vmatprep.subr.mxu0 %v428
        %1986 = vmatpush1.msra.mxu0 %v427
        %1987 = vmatprep.subr.mxu0 %v420
        %1988 = vmatpush1.msra.mxu0 %v419
        %1989 = vmatprep.subr.mxu0 %v412
        %1990 = vmatpush1.msra.mxu0 %v411
        %1991 = vmatprep.subr.mxu0 %v404
        %1992 = vmatpush1.msra.mxu0 %v403
        %1993 = vmatprep.subr.mxu0 %v396
        %1994 = vmatpush1.msra.mxu0 %v395
        %1995 = vmatprep.subr.mxu0 %v388
        %1996 = vmatpush1.msra.mxu0 %v387
        %1997 = vmatprep.subr.mxu0 %v380
        %1998 = vmatpush1.msra.mxu0 %v379
        %1999 = vmatprep.subr.mxu0 %v372
        %2000 = vmatpush1.msra.mxu0 %v371
        %2001 = vmatprep.subr.mxu0 %v364
        %2002 = vmatpush1.msra.mxu0 %v363
        %2003 = vmatprep.subr.mxu0 %v356
        %2004 = vmatpush1.msra.mxu0 %v355
        %2005 = vmatprep.subr.mxu0 %v604
        %2006 = vmatpush2.msra.mxu0 %v603
        %2007 = vmatprep.subr.mxu0 %v596
        %2008 = vmatpush2.msra.mxu0 %v595
        %2009 = vmatprep.subr.mxu0 %v588
        %2010 = vmatpush2.msra.mxu0 %v587
        %2011 = vmatprep.subr.mxu0 %v580
        %2012 = vmatpush2.msra.mxu0 %v579
        %2013 = vmatprep.subr.mxu0 %v572
        %2014 = vmatpush2.msra.mxu0 %v571
        %2015 = vmatprep.subr.mxu0 %v564
        %2016 = vmatpush2.msra.mxu0 %v563
        %2017 = vmatprep.subr.mxu0 %v556
        %2018 = vmatpush2.msra.mxu0 %v555
        %2019 = vmatprep.subr.mxu0 %v548
        %2020 = vmatpush2.msra.mxu0 %v547
        %2021 = vmatprep.subr.mxu0 %v540
        %2022 = vmatpush2.msra.mxu0 %v539
        %2023 = vmatprep.subr.mxu0 %v532
        %2024 = vmatpush2.msra.mxu0 %v531
        %2025 = vmatprep.subr.mxu0 %v524
        %2026 = vmatpush2.msra.mxu0 %v523
        %2027 = vmatprep.subr.mxu0 %v516
        %2028 = vmatpush2.msra.mxu0 %v515
        %2029 = vmatprep.subr.mxu0 %v508
        %2030 = vmatpush2.msra.mxu0 %v507
        %2031 = vmatprep.subr.mxu0 %v500
        %2032 = vmatpush2.msra.mxu0 %v499
        %2033 = vmatprep.subr.mxu0 %v492
        %2034 = vmatpush2.msra.mxu0 %v491
        %2035 = vmatprep.subr.mxu0 %v484
        %2036 = vmatpush2.msra.mxu0 %v483
        %2037 = vmatprep.mubr.f32.mxu0 %v1427
        %2038 = vmatmul.mubr.f32.gmra.mxu0 %v1545
        %v2039 = vpop.f32.mrf.mxu0
        %v2040 = vadd.f32 %v800, %v2039
        %v2041 = vpop.f32.mrf.mxu0
        %v2042 = vadd.f32 %v804, %v2041
        %2043 = vdwg.mxu0
        %2044 = vmatprep.subr.mxu0 %v732
        %2045 = vmatpush1.msra.mxu0 %v731
        %2046 = vmatprep.subr.mxu0 %v724
        %2047 = vmatpush1.msra.mxu0 %v723
        %2048 = vmatprep.subr.mxu0 %v716
        %2049 = vmatpush1.msra.mxu0 %v715
        %2050 = vmatprep.subr.mxu0 %v708
        %2051 = vmatpush1.msra.mxu0 %v707
        %2052 = vmatprep.subr.mxu0 %v700
        %2053 = vmatpush1.msra.mxu0 %v699
        %2054 = vmatprep.subr.mxu0 %v692
        %2055 = vmatpush1.msra.mxu0 %v691
        %2056 = vmatprep.subr.mxu0 %v684
        %2057 = vmatpush1.msra.mxu0 %v683
        %2058 = vmatprep.subr.mxu0 %v676
        %2059 = vmatpush1.msra.mxu0 %v675
        %2060 = vmatprep.subr.mxu0 %v668
        %2061 = vmatpush1.msra.mxu0 %v667
        %2062 = vmatprep.subr.mxu0 %v660
        %2063 = vmatpush1.msra.mxu0 %v659
        %2064 = vmatprep.subr.mxu0 %v652
        %2065 = vmatpush1.msra.mxu0 %v651
        %2066 = vmatprep.subr.mxu0 %v644
        %2067 = vmatpush1.msra.mxu0 %v643
        %2068 = vmatprep.subr.mxu0 %v636
        %2069 = vmatpush1.msra.mxu0 %v635
        %2070 = vmatprep.subr.mxu0 %v628
        %2071 = vmatpush1.msra.mxu0 %v627
        %2072 = vmatprep.subr.mxu0 %v620
        %2073 = vmatpush1.msra.mxu0 %v619
        %2074 = vmatprep.subr.mxu0 %v612
        %2075 = vmatpush1.msra.mxu0 %v611
        %2076 = vmatprep.subr.mxu0 0.0
        %2077 = vmatpush2.msra.mxu0 0.0
        %2078 = vmatprep.subr.mxu0 0.0
        %2079 = vmatpush2.msra.mxu0 0.0
        %2080 = vmatprep.subr.mxu0 0.0
        %2081 = vmatpush2.msra.mxu0 0.0
        %2082 = vmatprep.subr.mxu0 0.0
        %2083 = vmatpush2.msra.mxu0 0.0
        %2084 = vmatprep.subr.mxu0 0.0
        %2085 = vmatpush2.msra.mxu0 0.0
        %2086 = vmatprep.subr.mxu0 0.0
        %2087 = vmatpush2.msra.mxu0 0.0
        %2088 = vmatprep.subr.mxu0 0.0
        %2089 = vmatpush2.msra.mxu0 0.0
        %2090 = vmatprep.subr.mxu0 0.0
        %2091 = vmatpush2.msra.mxu0 0.0
        %2092 = vmatprep.subr.mxu0 0.0
        %2093 = vmatpush2.msra.mxu0 0.0
        %2094 = vmatprep.subr.mxu0 0.0
        %2095 = vmatpush2.msra.mxu0 0.0
        %2096 = vmatprep.subr.mxu0 0.0
        %2097 = vmatpush2.msra.mxu0 0.0
        %2098 = vmatprep.subr.mxu0 0.0
        %2099 = vmatpush2.msra.mxu0 0.0
        %2100 = vmatprep.subr.mxu0 0.0
        %2101 = vmatpush2.msra.mxu0 0.0
        %2102 = vmatprep.subr.mxu0 0.0
        %2103 = vmatpush2.msra.mxu0 0.0
        %2104 = vmatprep.subr.mxu0 0.0
        %2105 = vmatpush2.msra.mxu0 0.0
        %2106 = vmatprep.subr.mxu0 0.0
        %2107 = vmatpush2.msra.mxu0 0.0
        %2108 = vmatprep.mubr.f32.mxu0 0.0
        %2109 = vmatmul.mubr.f32.gmra.mxu0 %v1428
        %v2110 = vpop.f32.mrf.mxu0
        %v2111 = vadd.f32 %v2040, %v2110
        %v2112 = vpop.f32.mrf.mxu0
        %v2113 = vadd.f32 %v2042, %v2112
        %2114 = vdwg.mxu0
        %v2115 = vxor.u32 %v1685, 2147483648
        %v2116 = vxor.u32 %v1687, 2147483648
        %v2117 = vmul.f32 %v2115, 1.442695
        %v2118 = vpow.pop %v2117
        %v2119 = vmul.f32 %v2116, 1.442695
        %v2120 = vpow.pop %v2119
        %v2121 = vadd.f32 %v2118, 1.0
        %v2122 = vadd.f32 %v2120, 1.0
        %v2123 = vrcp.pop %v2121
        %v2124 = vmul.f32 1.0, %v2123
        %v2125 = vrcp.pop %v2122
        %v2126 = vmul.f32 1.0, %v2125
        %v2127 = vxor.u32 %v1827, 2147483648
        %v2128 = vxor.u32 %v1829, 2147483648
        %v2129 = vmul.f32 %v2127, 1.442695
        %v2130 = vpow.pop %v2129
        %v2131 = vmul.f32 %v2128, 1.442695
        %v2132 = vpow.pop %v2131
        %v2133 = vadd.f32 %v2130, 1.0
        %v2134 = vadd.f32 %v2132, 1.0
        %v2135 = vrcp.pop %v2133
        %v2136 = vmul.f32 1.0, %v2135
        %v2137 = vrcp.pop %v2134
        %v2138 = vmul.f32 1.0, %v2137
        %v2139 = vtanh.pop %v1969
        %v2140 = vtanh.pop %v1971
        %v2141 = vxor.u32 %v2111, 2147483648
        %v2142 = vxor.u32 %v2113, 2147483648
        %v2143 = vmul.f32 %v2141, 1.442695
        %v2144 = vpow.pop %v2143
        %v2145 = vmul.f32 %v2142, 1.442695
        %v2146 = vpow.pop %v2145
        %v2147 = vadd.f32 %v2144, 1.0
        %v2148 = vadd.f32 %v2146, 1.0
        %v2149 = vrcp.pop %v2147
        %v2150 = vmul.f32 1.0, %v2149
        %v2151 = vrcp.pop %v2148
        %v2152 = vmul.f32 1.0, %v2151
        %v2153 = vmul.f32 %v2136, %v1423
        %v2154 = vmul.f32 %v2138, %v1424
        %v2155 = vmul.f32 %v2124, %v2139
        %v2156 = vmul.f32 %v2126, %v2140
        %v2157 = vadd.f32 %v2153, %v2155
        %v2158 = vadd.f32 %v2154, %v2156
        %v2159 = vtanh.pop %v2157
        %v2160 = vtanh.pop %v2158
        %v2161 = vmul.f32 %v2150, %v2159
        %v2162 = vmul.f32 %v2152, %v2160
        %v2165 = vcombine.low %v2161, %v2162
        %v2166 = vcombine.high %v2161, %v2162
        %v2168 = vunpack.c.l.s4 1966171168
        %v2169 = vunpack.c.0.s8 %v2168
        %v2170 = vlaneseq
        %v2171 = vshrl.u32 %v2170, 7
        %v2172 = vsub.s32 %v2169, %v2171
        %v2173 = vrot.slane %v2165, %v2172
        %v2175 = vunpack.c.l.s4 1966171168
        %v2176 = vunpack.c.0.s8 %v2175
        %v2177 = vlaneseq
        %v2178 = vshrl.u32 %v2177, 7
        %v2179 = vsub.s32 %v2176, %v2178
        %v2180 = vrot.slane %v2166, %v2179
        %v2181 = vcombine.high %v2173, %v2173
        %v2182 = vcombine.high %v2180, %v2180
        %v2184 = vunpack.c.l.s4 1966171168
        %v2185 = vunpack.c.0.s8 %v2184
        %v2186 = vlaneseq
        %v2187 = vshrl.u32 %v2186, 7
        %v2188 = vsub.s32 %v2185, %v2187
        %v2189 = vrot.slane %v2173, %v2188
        %v2191 = vunpack.c.l.s4 1966171168
        %v2192 = vunpack.c.0.s8 %v2191
        %v2193 = vlaneseq
        %v2194 = vshrl.u32 %v2193, 7
        %v2195 = vsub.s32 %v2192, %v2194
        %v2196 = vrot.slane %v2180, %v2195
        %v2198 = vunpack.c.l.s4 1966171168
        %v2199 = vunpack.c.0.s8 %v2198
        %v2200 = vlaneseq
        %v2201 = vshrl.u32 %v2200, 7
        %v2202 = vsub.s32 %v2199, %v2201
        %v2203 = vrot.slane %v2181, %v2202
        %v2205 = vunpack.c.l.s4 1966171168
        %v2206 = vunpack.c.0.s8 %v2205
        %v2207 = vlaneseq
        %v2208 = vshrl.u32 %v2207, 7
        %v2209 = vsub.s32 %v2206, %v2208
        %v2210 = vrot.slane %v2182, %v2209
        %v2211 = vcombine.high %v2189, %v2189
        %v2212 = vcombine.high %v2196, %v2196
        %v2213 = vcombine.high %v2203, %v2203
        %v2214 = vcombine.high %v2210, %v2210
        %s2223 = scalar_lea.vmem [#allocation4], 1
        %2224 = vst.msk [vmem:[%s2223] ss:$8 sm:$0x3] %vm1492, %v2189
        %2225 = vst.msk [vmem:[%s2223] ss:$8 sm:$0x0] %vm1492, %v2189
        %s2226 = scalar_lea.vmem [#allocation4], 17
        %2227 = vst.msk [vmem:[%s2226] ss:$8 sm:$0x3] %vm1492, %v2203
        %2228 = vst.msk [vmem:[%s2226] ss:$8 sm:$0x0] %vm1492, %v2203
        %s2229 = scalar_lea.vmem [#allocation4], 33
        %2230 = vst.msk [vmem:[%s2229] ss:$8 sm:$0x3] %vm1492, %v2211
        %2231 = vst.msk [vmem:[%s2229] ss:$8 sm:$0x0] %vm1492, %v2211
        %s2232 = scalar_lea.vmem [#allocation4], 49
        %2233 = vst.msk [vmem:[%s2232] ss:$8 sm:$0x3] %vm1492, %v2213
        %2234 = vst.msk [vmem:[%s2232] ss:$8 sm:$0x0] %vm1492, %v2213
        %s2235 = scalar_lea.vmem [#allocation4], 65
        %2236 = vst.msk [vmem:[%s2235] ss:$8 sm:$0x3] %vm1492, %v2196
        %2237 = vst.msk [vmem:[%s2235] ss:$8 sm:$0x0] %vm1492, %v2196
        %s2238 = scalar_lea.vmem [#allocation4], 81
        %2239 = vst.msk [vmem:[%s2238] ss:$8 sm:$0x3] %vm1492, %v2210
        %2240 = vst.msk [vmem:[%s2238] ss:$8 sm:$0x0] %vm1492, %v2210
        %s2241 = scalar_lea.vmem [#allocation4], 97
        %2242 = vst.msk [vmem:[%s2241] ss:$8 sm:$0x3] %vm1492, %v2212
        %2243 = vst.msk [vmem:[%s2241] ss:$8 sm:$0x0] %vm1492, %v2212
        %s2244 = scalar_lea.vmem [#allocation4], 113
        %2245 = vst.msk [vmem:[%s2244] ss:$8 sm:$0x3] %vm1492, %v2214
        %2246 = vst.msk [vmem:[%s2244] ss:$8 sm:$0x0] %vm1492, %v2214
        %v2247 = vld [vmem:[%s297 + $0x2] sm:$0x1]
        %v2248 = vld [vmem:[%s297 + $0xa] sm:$0x1]
        %v2249 = vld [vmem:[%s297 + $0x12] sm:$0x1]
        %v2250 = vld [vmem:[%s297 + $0x1a] sm:$0x1]
        %v2251 = vld [vmem:[%s297 + $0x22] sm:$0x1]
        %v2252 = vld [vmem:[%s297 + $0x2a] sm:$0x1]
        %v2253 = vld [vmem:[%s297 + $0x32] sm:$0x1]
        %v2254 = vld [vmem:[%s297 + $0x3a] sm:$0x1]
        %v2263 = vrot.slane %v2248, 7
        %v2264 = vsel %vm751, %v2263, %v2247
        %v2265 = vrot.slane %v2249, 6
        %v2266 = vsel %vm754, %v2265, %v2264
        %v2267 = vrot.slane %v2250, 5
        %v2268 = vsel %vm757, %v2267, %v2266
        %v2269 = vrot.slane %v2251, 4
        %v2270 = vsel %vm760, %v2269, %v2268
        %v2271 = vrot.slane %v2252, 3
        %v2272 = vsel %vm763, %v2271, %v2270
        %v2273 = vrot.slane %v2253, 2
        %v2274 = vsel %vm766, %v2273, %v2272
        %v2275 = vrot.slane %v2254, 1
        %v2276 = vsel %vm769, %v2275, %v2274
        %2278 = vmatprep.subr.mxu0 %v470
        %2279 = vmatpush1.msra.mxu0 %v469
        %2280 = vmatprep.subr.mxu0 %v462
        %2281 = vmatpush1.msra.mxu0 %v461
        %2282 = vmatprep.subr.mxu0 %v454
        %2283 = vmatpush1.msra.mxu0 %v453
        %2284 = vmatprep.subr.mxu0 %v446
        %2285 = vmatpush1.msra.mxu0 %v445
        %2286 = vmatprep.subr.mxu0 %v438
        %2287 = vmatpush1.msra.mxu0 %v437
        %2288 = vmatprep.subr.mxu0 %v430
        %2289 = vmatpush1.msra.mxu0 %v429
        %2290 = vmatprep.subr.mxu0 %v422
        %2291 = vmatpush1.msra.mxu0 %v421
        %2292 = vmatprep.subr.mxu0 %v414
        %2293 = vmatpush1.msra.mxu0 %v413
        %2294 = vmatprep.subr.mxu0 %v406
        %2295 = vmatpush1.msra.mxu0 %v405
        %2296 = vmatprep.subr.mxu0 %v398
        %2297 = vmatpush1.msra.mxu0 %v397
        %2298 = vmatprep.subr.mxu0 %v390
        %2299 = vmatpush1.msra.mxu0 %v389
        %2300 = vmatprep.subr.mxu0 %v382
        %2301 = vmatpush1.msra.mxu0 %v381
        %2302 = vmatprep.subr.mxu0 %v374
        %2303 = vmatpush1.msra.mxu0 %v373
        %2304 = vmatprep.subr.mxu0 %v366
        %2305 = vmatpush1.msra.mxu0 %v365
        %2306 = vmatprep.subr.mxu0 %v358
        %2307 = vmatpush1.msra.mxu0 %v357
        %2308 = vmatprep.subr.mxu0 %v350
        %2309 = vmatpush1.msra.mxu0 %v349
        %2310 = vmatprep.subr.mxu0 %v598
        %2311 = vmatpush2.msra.mxu0 %v597
        %2312 = vmatprep.subr.mxu0 %v590
        %2313 = vmatpush2.msra.mxu0 %v589
        %2314 = vmatprep.subr.mxu0 %v582
        %2315 = vmatpush2.msra.mxu0 %v581
        %2316 = vmatprep.subr.mxu0 %v574
        %2317 = vmatpush2.msra.mxu0 %v573
        %2318 = vmatprep.subr.mxu0 %v566
        %2319 = vmatpush2.msra.mxu0 %v565
        %2320 = vmatprep.subr.mxu0 %v558
        %2321 = vmatpush2.msra.mxu0 %v557
        %2322 = vmatprep.subr.mxu0 %v550
        %2323 = vmatpush2.msra.mxu0 %v549
        %2324 = vmatprep.subr.mxu0 %v542
        %2325 = vmatpush2.msra.mxu0 %v541
        %2326 = vmatprep.subr.mxu0 %v534
        %2327 = vmatpush2.msra.mxu0 %v533
        %2328 = vmatprep.subr.mxu0 %v526
        %2329 = vmatpush2.msra.mxu0 %v525
        %2330 = vmatprep.subr.mxu0 %v518
        %2331 = vmatpush2.msra.mxu0 %v517
        %2332 = vmatprep.subr.mxu0 %v510
        %2333 = vmatpush2.msra.mxu0 %v509
        %2334 = vmatprep.subr.mxu0 %v502
        %2335 = vmatpush2.msra.mxu0 %v501
        %2336 = vmatprep.subr.mxu0 %v494
        %2337 = vmatpush2.msra.mxu0 %v493
        %2338 = vmatprep.subr.mxu0 %v486
        %2339 = vmatpush2.msra.mxu0 %v485
        %2340 = vmatprep.subr.mxu0 %v478
        %2341 = vmatpush2.msra.mxu0 %v477
        %2342 = vmatprep.mubr.f32.mxu0 %v2161
        %2343 = vmatmul.mubr.f32.gmra.mxu0 %v2276
        %v2344 = vpop.f32.mrf.mxu0
        %v2345 = vadd.f32 %v776, %v2344
        %v2346 = vpop.f32.mrf.mxu0
        %v2347 = vadd.f32 %v780, %v2346
        %2348 = vdwg.mxu0
        %2349 = vmatprep.subr.mxu0 %v726
        %2350 = vmatpush1.msra.mxu0 %v725
        %2351 = vmatprep.subr.mxu0 %v718
        %2352 = vmatpush1.msra.mxu0 %v717
        %2353 = vmatprep.subr.mxu0 %v710
        %2354 = vmatpush1.msra.mxu0 %v709
        %2355 = vmatprep.subr.mxu0 %v702
        %2356 = vmatpush1.msra.mxu0 %v701
        %2357 = vmatprep.subr.mxu0 %v694
        %2358 = vmatpush1.msra.mxu0 %v693
        %2359 = vmatprep.subr.mxu0 %v686
        %2360 = vmatpush1.msra.mxu0 %v685
        %2361 = vmatprep.subr.mxu0 %v678
        %2362 = vmatpush1.msra.mxu0 %v677
        %2363 = vmatprep.subr.mxu0 %v670
        %2364 = vmatpush1.msra.mxu0 %v669
        %2365 = vmatprep.subr.mxu0 %v662
        %2366 = vmatpush1.msra.mxu0 %v661
        %2367 = vmatprep.subr.mxu0 %v654
        %2368 = vmatpush1.msra.mxu0 %v653
        %2369 = vmatprep.subr.mxu0 %v646
        %2370 = vmatpush1.msra.mxu0 %v645
        %2371 = vmatprep.subr.mxu0 %v638
        %2372 = vmatpush1.msra.mxu0 %v637
        %2373 = vmatprep.subr.mxu0 %v630
        %2374 = vmatpush1.msra.mxu0 %v629
        %2375 = vmatprep.subr.mxu0 %v622
        %2376 = vmatpush1.msra.mxu0 %v621
        %2377 = vmatprep.subr.mxu0 %v614
        %2378 = vmatpush1.msra.mxu0 %v613
        %2379 = vmatprep.subr.mxu0 %v606
        %2380 = vmatpush1.msra.mxu0 %v605
        %2381 = vmatprep.subr.mxu0 0.0
        %2382 = vmatpush2.msra.mxu0 0.0
        %2383 = vmatprep.subr.mxu0 0.0
        %2384 = vmatpush2.msra.mxu0 0.0
        %2385 = vmatprep.subr.mxu0 0.0
        %2386 = vmatpush2.msra.mxu0 0.0
        %2387 = vmatprep.subr.mxu0 0.0
        %2388 = vmatpush2.msra.mxu0 0.0
        %2389 = vmatprep.subr.mxu0 0.0
        %2390 = vmatpush2.msra.mxu0 0.0
        %2391 = vmatprep.subr.mxu0 0.0
        %2392 = vmatpush2.msra.mxu0 0.0
        %2393 = vmatprep.subr.mxu0 0.0
        %2394 = vmatpush2.msra.mxu0 0.0
        %2395 = vmatprep.subr.mxu0 0.0
        %2396 = vmatpush2.msra.mxu0 0.0
        %2397 = vmatprep.subr.mxu0 0.0
        %2398 = vmatpush2.msra.mxu0 0.0
        %2399 = vmatprep.subr.mxu0 0.0
        %2400 = vmatpush2.msra.mxu0 0.0
        %2401 = vmatprep.subr.mxu0 0.0
        %2402 = vmatpush2.msra.mxu0 0.0
        %2403 = vmatprep.subr.mxu0 0.0
        %2404 = vmatpush2.msra.mxu0 0.0
        %2405 = vmatprep.subr.mxu0 0.0
        %2406 = vmatpush2.msra.mxu0 0.0
        %2407 = vmatprep.subr.mxu0 0.0
        %2408 = vmatpush2.msra.mxu0 0.0
        %2409 = vmatprep.subr.mxu0 0.0
        %2410 = vmatpush2.msra.mxu0 0.0
        %2411 = vmatprep.subr.mxu0 0.0
        %2412 = vmatpush2.msra.mxu0 0.0
        %2413 = vmatprep.mubr.f32.mxu0 0.0
        %2414 = vmatmul.mubr.f32.gmra.mxu0 %v2162
        %v2415 = vpop.f32.mrf.mxu0
        %v2416 = vadd.f32 %v2345, %v2415
        %v2417 = vpop.f32.mrf.mxu0
        %v2418 = vadd.f32 %v2347, %v2417
        %2419 = vdwg.mxu0
        %2420 = vmatprep.subr.mxu0 %v472
        %2421 = vmatpush1.msra.mxu0 %v471
        %2422 = vmatprep.subr.mxu0 %v464
        %2423 = vmatpush1.msra.mxu0 %v463
        %2424 = vmatprep.subr.mxu0 %v456
        %2425 = vmatpush1.msra.mxu0 %v455
        %2426 = vmatprep.subr.mxu0 %v448
        %2427 = vmatpush1.msra.mxu0 %v447
        %2428 = vmatprep.subr.mxu0 %v440
        %2429 = vmatpush1.msra.mxu0 %v439
        %2430 = vmatprep.subr.mxu0 %v432
        %2431 = vmatpush1.msra.mxu0 %v431
        %2432 = vmatprep.subr.mxu0 %v424
        %2433 = vmatpush1.msra.mxu0 %v423
        %2434 = vmatprep.subr.mxu0 %v416
        %2435 = vmatpush1.msra.mxu0 %v415
        %2436 = vmatprep.subr.mxu0 %v408
        %2437 = vmatpush1.msra.mxu0 %v407
        %2438 = vmatprep.subr.mxu0 %v400
        %2439 = vmatpush1.msra.mxu0 %v399
        %2440 = vmatprep.subr.mxu0 %v392
        %2441 = vmatpush1.msra.mxu0 %v391
        %2442 = vmatprep.subr.mxu0 %v384
        %2443 = vmatpush1.msra.mxu0 %v383
        %2444 = vmatprep.subr.mxu0 %v376
        %2445 = vmatpush1.msra.mxu0 %v375
        %2446 = vmatprep.subr.mxu0 %v368
        %2447 = vmatpush1.msra.mxu0 %v367
        %2448 = vmatprep.subr.mxu0 %v360
        %2449 = vmatpush1.msra.mxu0 %v359
        %2450 = vmatprep.subr.mxu0 %v352
        %2451 = vmatpush1.msra.mxu0 %v351
        %2452 = vmatprep.subr.mxu0 %v600
        %2453 = vmatpush2.msra.mxu0 %v599
        %2454 = vmatprep.subr.mxu0 %v592
        %2455 = vmatpush2.msra.mxu0 %v591
        %2456 = vmatprep.subr.mxu0 %v584
        %2457 = vmatpush2.msra.mxu0 %v583
        %2458 = vmatprep.subr.mxu0 %v576
        %2459 = vmatpush2.msra.mxu0 %v575
        %2460 = vmatprep.subr.mxu0 %v568
        %2461 = vmatpush2.msra.mxu0 %v567
        %2462 = vmatprep.subr.mxu0 %v560
        %2463 = vmatpush2.msra.mxu0 %v559
        %2464 = vmatprep.subr.mxu0 %v552
        %2465 = vmatpush2.msra.mxu0 %v551
        %2466 = vmatprep.subr.mxu0 %v544
        %2467 = vmatpush2.msra.mxu0 %v543
        %2468 = vmatprep.subr.mxu0 %v536
        %2469 = vmatpush2.msra.mxu0 %v535
        %2470 = vmatprep.subr.mxu0 %v528
        %2471 = vmatpush2.msra.mxu0 %v527
        %2472 = vmatprep.subr.mxu0 %v520
        %2473 = vmatpush2.msra.mxu0 %v519
        %2474 = vmatprep.subr.mxu0 %v512
        %2475 = vmatpush2.msra.mxu0 %v511
        %2476 = vmatprep.subr.mxu0 %v504
        %2477 = vmatpush2.msra.mxu0 %v503
        %2478 = vmatprep.subr.mxu0 %v496
        %2479 = vmatpush2.msra.mxu0 %v495
        %2480 = vmatprep.subr.mxu0 %v488
        %2481 = vmatpush2.msra.mxu0 %v487
        %2482 = vmatprep.subr.mxu0 %v480
        %2483 = vmatpush2.msra.mxu0 %v479
        %2484 = vmatprep.mubr.f32.mxu0 %v2161
        %2485 = vmatmul.mubr.f32.gmra.mxu0 %v2276
        %v2486 = vpop.f32.mrf.mxu0
        %v2487 = vadd.f32 %v784, %v2486
        %v2488 = vpop.f32.mrf.mxu0
        %v2489 = vadd.f32 %v788, %v2488
        %2490 = vdwg.mxu0
        %2491 = vmatprep.subr.mxu0 %v728
        %2492 = vmatpush1.msra.mxu0 %v727
        %2493 = vmatprep.subr.mxu0 %v720
        %2494 = vmatpush1.msra.mxu0 %v719
        %2495 = vmatprep.subr.mxu0 %v712
        %2496 = vmatpush1.msra.mxu0 %v711
        %2497 = vmatprep.subr.mxu0 %v704
        %2498 = vmatpush1.msra.mxu0 %v703
        %2499 = vmatprep.subr.mxu0 %v696
        %2500 = vmatpush1.msra.mxu0 %v695
        %2501 = vmatprep.subr.mxu0 %v688
        %2502 = vmatpush1.msra.mxu0 %v687
        %2503 = vmatprep.subr.mxu0 %v680
        %2504 = vmatpush1.msra.mxu0 %v679
        %2505 = vmatprep.subr.mxu0 %v672
        %2506 = vmatpush1.msra.mxu0 %v671
        %2507 = vmatprep.subr.mxu0 %v664
        %2508 = vmatpush1.msra.mxu0 %v663
        %2509 = vmatprep.subr.mxu0 %v656
        %2510 = vmatpush1.msra.mxu0 %v655
        %2511 = vmatprep.subr.mxu0 %v648
        %2512 = vmatpush1.msra.mxu0 %v647
        %2513 = vmatprep.subr.mxu0 %v640
        %2514 = vmatpush1.msra.mxu0 %v639
        %2515 = vmatprep.subr.mxu0 %v632
        %2516 = vmatpush1.msra.mxu0 %v631
        %2517 = vmatprep.subr.mxu0 %v624
        %2518 = vmatpush1.msra.mxu0 %v623
        %2519 = vmatprep.subr.mxu0 %v616
        %2520 = vmatpush1.msra.mxu0 %v615
        %2521 = vmatprep.subr.mxu0 %v608
        %2522 = vmatpush1.msra.mxu0 %v607
        %2523 = vmatprep.subr.mxu0 0.0
        %2524 = vmatpush2.msra.mxu0 0.0
        %2525 = vmatprep.subr.mxu0 0.0
        %2526 = vmatpush2.msra.mxu0 0.0
        %2527 = vmatprep.subr.mxu0 0.0
        %2528 = vmatpush2.msra.mxu0 0.0
        %2529 = vmatprep.subr.mxu0 0.0
        %2530 = vmatpush2.msra.mxu0 0.0
        %2531 = vmatprep.subr.mxu0 0.0
        %2532 = vmatpush2.msra.mxu0 0.0
        %2533 = vmatprep.subr.mxu0 0.0
        %2534 = vmatpush2.msra.mxu0 0.0
        %2535 = vmatprep.subr.mxu0 0.0
        %2536 = vmatpush2.msra.mxu0 0.0
        %2537 = vmatprep.subr.mxu0 0.0
        %2538 = vmatpush2.msra.mxu0 0.0
        %2539 = vmatprep.subr.mxu0 0.0
        %2540 = vmatpush2.msra.mxu0 0.0
        %2541 = vmatprep.subr.mxu0 0.0
        %2542 = vmatpush2.msra.mxu0 0.0
        %2543 = vmatprep.subr.mxu0 0.0
        %2544 = vmatpush2.msra.mxu0 0.0
        %2545 = vmatprep.subr.mxu0 0.0
        %2546 = vmatpush2.msra.mxu0 0.0
        %2547 = vmatprep.subr.mxu0 0.0
        %2548 = vmatpush2.msra.mxu0 0.0
        %2549 = vmatprep.subr.mxu0 0.0
        %2550 = vmatpush2.msra.mxu0 0.0
        %2551 = vmatprep.subr.mxu0 0.0
        %2552 = vmatpush2.msra.mxu0 0.0
        %2553 = vmatprep.subr.mxu0 0.0
        %2554 = vmatpush2.msra.mxu0 0.0
        %2555 = vmatprep.mubr.f32.mxu0 0.0
        %2556 = vmatmul.mubr.f32.gmra.mxu0 %v2162
        %v2557 = vpop.f32.mrf.mxu0
        %v2558 = vadd.f32 %v2487, %v2557
        %v2559 = vpop.f32.mrf.mxu0
        %v2560 = vadd.f32 %v2489, %v2559
        %2561 = vdwg.mxu0
        %2562 = vmatprep.subr.mxu0 %v474
        %2563 = vmatpush1.msra.mxu0 %v473
        %2564 = vmatprep.subr.mxu0 %v466
        %2565 = vmatpush1.msra.mxu0 %v465
        %2566 = vmatprep.subr.mxu0 %v458
        %2567 = vmatpush1.msra.mxu0 %v457
        %2568 = vmatprep.subr.mxu0 %v450
        %2569 = vmatpush1.msra.mxu0 %v449
        %2570 = vmatprep.subr.mxu0 %v442
        %2571 = vmatpush1.msra.mxu0 %v441
        %2572 = vmatprep.subr.mxu0 %v434
        %2573 = vmatpush1.msra.mxu0 %v433
        %2574 = vmatprep.subr.mxu0 %v426
        %2575 = vmatpush1.msra.mxu0 %v425
        %2576 = vmatprep.subr.mxu0 %v418
        %2577 = vmatpush1.msra.mxu0 %v417
        %2578 = vmatprep.subr.mxu0 %v410
        %2579 = vmatpush1.msra.mxu0 %v409
        %2580 = vmatprep.subr.mxu0 %v402
        %2581 = vmatpush1.msra.mxu0 %v401
        %2582 = vmatprep.subr.mxu0 %v394
        %2583 = vmatpush1.msra.mxu0 %v393
        %2584 = vmatprep.subr.mxu0 %v386
        %2585 = vmatpush1.msra.mxu0 %v385
        %2586 = vmatprep.subr.mxu0 %v378
        %2587 = vmatpush1.msra.mxu0 %v377
        %2588 = vmatprep.subr.mxu0 %v370
        %2589 = vmatpush1.msra.mxu0 %v369
        %2590 = vmatprep.subr.mxu0 %v362
        %2591 = vmatpush1.msra.mxu0 %v361
        %2592 = vmatprep.subr.mxu0 %v354
        %2593 = vmatpush1.msra.mxu0 %v353
        %2594 = vmatprep.subr.mxu0 %v602
        %2595 = vmatpush2.msra.mxu0 %v601
        %2596 = vmatprep.subr.mxu0 %v594
        %2597 = vmatpush2.msra.mxu0 %v593
        %2598 = vmatprep.subr.mxu0 %v586
        %2599 = vmatpush2.msra.mxu0 %v585
        %2600 = vmatprep.subr.mxu0 %v578
        %2601 = vmatpush2.msra.mxu0 %v577
        %2602 = vmatprep.subr.mxu0 %v570
        %2603 = vmatpush2.msra.mxu0 %v569
        %2604 = vmatprep.subr.mxu0 %v562
        %2605 = vmatpush2.msra.mxu0 %v561
        %2606 = vmatprep.subr.mxu0 %v554
        %2607 = vmatpush2.msra.mxu0 %v553
        %2608 = vmatprep.subr.mxu0 %v546
        %2609 = vmatpush2.msra.mxu0 %v545
        %2610 = vmatprep.subr.mxu0 %v538
        %2611 = vmatpush2.msra.mxu0 %v537
        %2612 = vmatprep.subr.mxu0 %v530
        %2613 = vmatpush2.msra.mxu0 %v529
        %2614 = vmatprep.subr.mxu0 %v522
        %2615 = vmatpush2.msra.mxu0 %v521
        %2616 = vmatprep.subr.mxu0 %v514
        %2617 = vmatpush2.msra.mxu0 %v513
        %2618 = vmatprep.subr.mxu0 %v506
        %2619 = vmatpush2.msra.mxu0 %v505
        %2620 = vmatprep.subr.mxu0 %v498
        %2621 = vmatpush2.msra.mxu0 %v497
        %2622 = vmatprep.subr.mxu0 %v490
        %2623 = vmatpush2.msra.mxu0 %v489
        %2624 = vmatprep.subr.mxu0 %v482
        %2625 = vmatpush2.msra.mxu0 %v481
        %2626 = vmatprep.mubr.f32.mxu0 %v2161
        %2627 = vmatmul.mubr.f32.gmra.mxu0 %v2276
        %v2628 = vpop.f32.mrf.mxu0
        %v2629 = vadd.f32 %v792, %v2628
        %v2630 = vpop.f32.mrf.mxu0
        %v2631 = vadd.f32 %v796, %v2630
        %2632 = vdwg.mxu0
        %2633 = vmatprep.subr.mxu0 %v730
        %2634 = vmatpush1.msra.mxu0 %v729
        %2635 = vmatprep.subr.mxu0 %v722
        %2636 = vmatpush1.msra.mxu0 %v721
        %2637 = vmatprep.subr.mxu0 %v714
        %2638 = vmatpush1.msra.mxu0 %v713
        %2639 = vmatprep.subr.mxu0 %v706
        %2640 = vmatpush1.msra.mxu0 %v705
        %2641 = vmatprep.subr.mxu0 %v698
        %2642 = vmatpush1.msra.mxu0 %v697
        %2643 = vmatprep.subr.mxu0 %v690
        %2644 = vmatpush1.msra.mxu0 %v689
        %2645 = vmatprep.subr.mxu0 %v682
        %2646 = vmatpush1.msra.mxu0 %v681
        %2647 = vmatprep.subr.mxu0 %v674
        %2648 = vmatpush1.msra.mxu0 %v673
        %2649 = vmatprep.subr.mxu0 %v666
        %2650 = vmatpush1.msra.mxu0 %v665
        %2651 = vmatprep.subr.mxu0 %v658
        %2652 = vmatpush1.msra.mxu0 %v657
        %2653 = vmatprep.subr.mxu0 %v650
        %2654 = vmatpush1.msra.mxu0 %v649
        %2655 = vmatprep.subr.mxu0 %v642
        %2656 = vmatpush1.msra.mxu0 %v641
        %2657 = vmatprep.subr.mxu0 %v634
        %2658 = vmatpush1.msra.mxu0 %v633
        %2659 = vmatprep.subr.mxu0 %v626
        %2660 = vmatpush1.msra.mxu0 %v625
        %2661 = vmatprep.subr.mxu0 %v618
        %2662 = vmatpush1.msra.mxu0 %v617
        %2663 = vmatprep.subr.mxu0 %v610
        %2664 = vmatpush1.msra.mxu0 %v609
        %2665 = vmatprep.subr.mxu0 0.0
        %2666 = vmatpush2.msra.mxu0 0.0
        %2667 = vmatprep.subr.mxu0 0.0
        %2668 = vmatpush2.msra.mxu0 0.0
        %2669 = vmatprep.subr.mxu0 0.0
        %2670 = vmatpush2.msra.mxu0 0.0
        %2671 = vmatprep.subr.mxu0 0.0
        %2672 = vmatpush2.msra.mxu0 0.0
        %2673 = vmatprep.subr.mxu0 0.0
        %2674 = vmatpush2.msra.mxu0 0.0
        %2675 = vmatprep.subr.mxu0 0.0
        %2676 = vmatpush2.msra.mxu0 0.0
        %2677 = vmatprep.subr.mxu0 0.0
        %2678 = vmatpush2.msra.mxu0 0.0
        %2679 = vmatprep.subr.mxu0 0.0
        %2680 = vmatpush2.msra.mxu0 0.0
        %2681 = vmatprep.subr.mxu0 0.0
        %2682 = vmatpush2.msra.mxu0 0.0
        %2683 = vmatprep.subr.mxu0 0.0
        %2684 = vmatpush2.msra.mxu0 0.0
        %2685 = vmatprep.subr.mxu0 0.0
        %2686 = vmatpush2.msra.mxu0 0.0
        %2687 = vmatprep.subr.mxu0 0.0
        %2688 = vmatpush2.msra.mxu0 0.0
        %2689 = vmatprep.subr.mxu0 0.0
        %2690 = vmatpush2.msra.mxu0 0.0
        %2691 = vmatprep.subr.mxu0 0.0
        %2692 = vmatpush2.msra.mxu0 0.0
        %2693 = vmatprep.subr.mxu0 0.0
        %2694 = vmatpush2.msra.mxu0 0.0
        %2695 = vmatprep.subr.mxu0 0.0
        %2696 = vmatpush2.msra.mxu0 0.0
        %2697 = vmatprep.mubr.f32.mxu0 0.0
        %2698 = vmatmul.mubr.f32.gmra.mxu0 %v2162
        %v2699 = vpop.f32.mrf.mxu0
        %v2700 = vadd.f32 %v2629, %v2699
        %v2701 = vpop.f32.mrf.mxu0
        %v2702 = vadd.f32 %v2631, %v2701
        %2703 = vdwg.mxu0
        %2704 = vmatprep.subr.mxu0 %v476
        %2705 = vmatpush1.msra.mxu0 %v475
        %2706 = vmatprep.subr.mxu0 %v468
        %2707 = vmatpush1.msra.mxu0 %v467
        %2708 = vmatprep.subr.mxu0 %v460
        %2709 = vmatpush1.msra.mxu0 %v459
        %2710 = vmatprep.subr.mxu0 %v452
        %2711 = vmatpush1.msra.mxu0 %v451
        %2712 = vmatprep.subr.mxu0 %v444
        %2713 = vmatpush1.msra.mxu0 %v443
        %2714 = vmatprep.subr.mxu0 %v436
        %2715 = vmatpush1.msra.mxu0 %v435
        %2716 = vmatprep.subr.mxu0 %v428
        %2717 = vmatpush1.msra.mxu0 %v427
        %2718 = vmatprep.subr.mxu0 %v420
        %2719 = vmatpush1.msra.mxu0 %v419
        %2720 = vmatprep.subr.mxu0 %v412
        %2721 = vmatpush1.msra.mxu0 %v411
        %2722 = vmatprep.subr.mxu0 %v404
        %2723 = vmatpush1.msra.mxu0 %v403
        %2724 = vmatprep.subr.mxu0 %v396
        %2725 = vmatpush1.msra.mxu0 %v395
        %2726 = vmatprep.subr.mxu0 %v388
        %2727 = vmatpush1.msra.mxu0 %v387
        %2728 = vmatprep.subr.mxu0 %v380
        %2729 = vmatpush1.msra.mxu0 %v379
        %2730 = vmatprep.subr.mxu0 %v372
        %2731 = vmatpush1.msra.mxu0 %v371
        %2732 = vmatprep.subr.mxu0 %v364
        %2733 = vmatpush1.msra.mxu0 %v363
        %2734 = vmatprep.subr.mxu0 %v356
        %2735 = vmatpush1.msra.mxu0 %v355
        %2736 = vmatprep.subr.mxu0 %v604
        %2737 = vmatpush2.msra.mxu0 %v603
        %2738 = vmatprep.subr.mxu0 %v596
        %2739 = vmatpush2.msra.mxu0 %v595
        %2740 = vmatprep.subr.mxu0 %v588
        %2741 = vmatpush2.msra.mxu0 %v587
        %2742 = vmatprep.subr.mxu0 %v580
        %2743 = vmatpush2.msra.mxu0 %v579
        %2744 = vmatprep.subr.mxu0 %v572
        %2745 = vmatpush2.msra.mxu0 %v571
        %2746 = vmatprep.subr.mxu0 %v564
        %2747 = vmatpush2.msra.mxu0 %v563
        %2748 = vmatprep.subr.mxu0 %v556
        %2749 = vmatpush2.msra.mxu0 %v555
        %2750 = vmatprep.subr.mxu0 %v548
        %2751 = vmatpush2.msra.mxu0 %v547
        %2752 = vmatprep.subr.mxu0 %v540
        %2753 = vmatpush2.msra.mxu0 %v539
        %2754 = vmatprep.subr.mxu0 %v532
        %2755 = vmatpush2.msra.mxu0 %v531
        %2756 = vmatprep.subr.mxu0 %v524
        %2757 = vmatpush2.msra.mxu0 %v523
        %2758 = vmatprep.subr.mxu0 %v516
        %2759 = vmatpush2.msra.mxu0 %v515
        %2760 = vmatprep.subr.mxu0 %v508
        %2761 = vmatpush2.msra.mxu0 %v507
        %2762 = vmatprep.subr.mxu0 %v500
        %2763 = vmatpush2.msra.mxu0 %v499
        %2764 = vmatprep.subr.mxu0 %v492
        %2765 = vmatpush2.msra.mxu0 %v491
        %2766 = vmatprep.subr.mxu0 %v484
        %2767 = vmatpush2.msra.mxu0 %v483
        %2768 = vmatprep.mubr.f32.mxu0 %v2161
        %2769 = vmatmul.mubr.f32.gmra.mxu0 %v2276
        %v2770 = vpop.f32.mrf.mxu0
        %v2771 = vadd.f32 %v800, %v2770
        %v2772 = vpop.f32.mrf.mxu0
        %v2773 = vadd.f32 %v804, %v2772
        %2774 = vdwg.mxu0
        %2775 = vmatprep.subr.mxu0 %v732
        %2776 = vmatpush1.msra.mxu0 %v731
        %2777 = vmatprep.subr.mxu0 %v724
        %2778 = vmatpush1.msra.mxu0 %v723
        %2779 = vmatprep.subr.mxu0 %v716
        %2780 = vmatpush1.msra.mxu0 %v715
        %2781 = vmatprep.subr.mxu0 %v708
        %2782 = vmatpush1.msra.mxu0 %v707
        %2783 = vmatprep.subr.mxu0 %v700
        %2784 = vmatpush1.msra.mxu0 %v699
        %2785 = vmatprep.subr.mxu0 %v692
        %2786 = vmatpush1.msra.mxu0 %v691
        %2787 = vmatprep.subr.mxu0 %v684
        %2788 = vmatpush1.msra.mxu0 %v683
        %2789 = vmatprep.subr.mxu0 %v676
        %2790 = vmatpush1.msra.mxu0 %v675
        %2791 = vmatprep.subr.mxu0 %v668
        %2792 = vmatpush1.msra.mxu0 %v667
        %2793 = vmatprep.subr.mxu0 %v660
        %2794 = vmatpush1.msra.mxu0 %v659
        %2795 = vmatprep.subr.mxu0 %v652
        %2796 = vmatpush1.msra.mxu0 %v651
        %2797 = vmatprep.subr.mxu0 %v644
        %2798 = vmatpush1.msra.mxu0 %v643
        %2799 = vmatprep.subr.mxu0 %v636
        %2800 = vmatpush1.msra.mxu0 %v635
        %2801 = vmatprep.subr.mxu0 %v628
        %2802 = vmatpush1.msra.mxu0 %v627
        %2803 = vmatprep.subr.mxu0 %v620
        %2804 = vmatpush1.msra.mxu0 %v619
        %2805 = vmatprep.subr.mxu0 %v612
        %2806 = vmatpush1.msra.mxu0 %v611
        %2807 = vmatprep.subr.mxu0 0.0
        %2808 = vmatpush2.msra.mxu0 0.0
        %2809 = vmatprep.subr.mxu0 0.0
        %2810 = vmatpush2.msra.mxu0 0.0
        %2811 = vmatprep.subr.mxu0 0.0
        %2812 = vmatpush2.msra.mxu0 0.0
        %2813 = vmatprep.subr.mxu0 0.0
        %2814 = vmatpush2.msra.mxu0 0.0
        %2815 = vmatprep.subr.mxu0 0.0
        %2816 = vmatpush2.msra.mxu0 0.0
        %2817 = vmatprep.subr.mxu0 0.0
        %2818 = vmatpush2.msra.mxu0 0.0
        %2819 = vmatprep.subr.mxu0 0.0
        %2820 = vmatpush2.msra.mxu0 0.0
        %2821 = vmatprep.subr.mxu0 0.0
        %2822 = vmatpush2.msra.mxu0 0.0
        %2823 = vmatprep.subr.mxu0 0.0
        %2824 = vmatpush2.msra.mxu0 0.0
        %2825 = vmatprep.subr.mxu0 0.0
        %2826 = vmatpush2.msra.mxu0 0.0
        %2827 = vmatprep.subr.mxu0 0.0
        %2828 = vmatpush2.msra.mxu0 0.0
        %2829 = vmatprep.subr.mxu0 0.0
        %2830 = vmatpush2.msra.mxu0 0.0
        %2831 = vmatprep.subr.mxu0 0.0
        %2832 = vmatpush2.msra.mxu0 0.0
        %2833 = vmatprep.subr.mxu0 0.0
        %2834 = vmatpush2.msra.mxu0 0.0
        %2835 = vmatprep.subr.mxu0 0.0
        %2836 = vmatpush2.msra.mxu0 0.0
        %2837 = vmatprep.subr.mxu0 0.0
        %2838 = vmatpush2.msra.mxu0 0.0
        %2839 = vmatprep.mubr.f32.mxu0 0.0
        %2840 = vmatmul.mubr.f32.gmra.mxu0 %v2162
        %v2841 = vpop.f32.mrf.mxu0
        %v2842 = vadd.f32 %v2771, %v2841
        %v2843 = vpop.f32.mrf.mxu0
        %v2844 = vadd.f32 %v2773, %v2843
        %2845 = vdwg.mxu0
        %v2846 = vxor.u32 %v2416, 2147483648
        %v2847 = vxor.u32 %v2418, 2147483648
        %v2848 = vmul.f32 %v2846, 1.442695
        %v2849 = vpow.pop %v2848
        %v2850 = vmul.f32 %v2847, 1.442695
        %v2851 = vpow.pop %v2850
        %v2852 = vadd.f32 %v2849, 1.0
        %v2853 = vadd.f32 %v2851, 1.0
        %v2854 = vrcp.pop %v2852
        %v2855 = vmul.f32 1.0, %v2854
        %v2856 = vrcp.pop %v2853
        %v2857 = vmul.f32 1.0, %v2856
        %v2858 = vxor.u32 %v2558, 2147483648
        %v2859 = vxor.u32 %v2560, 2147483648
        %v2860 = vmul.f32 %v2858, 1.442695
        %v2861 = vpow.pop %v2860
        %v2862 = vmul.f32 %v2859, 1.442695
        %v2863 = vpow.pop %v2862
        %v2864 = vadd.f32 %v2861, 1.0
        %v2865 = vadd.f32 %v2863, 1.0
        %v2866 = vrcp.pop %v2864
        %v2867 = vmul.f32 1.0, %v2866
        %v2868 = vrcp.pop %v2865
        %v2869 = vmul.f32 1.0, %v2868
        %v2870 = vtanh.pop %v2700
        %v2871 = vtanh.pop %v2702
        %v2872 = vxor.u32 %v2842, 2147483648
        %v2873 = vxor.u32 %v2844, 2147483648
        %v2874 = vmul.f32 %v2872, 1.442695
        %v2875 = vpow.pop %v2874
        %v2876 = vmul.f32 %v2873, 1.442695
        %v2877 = vpow.pop %v2876
        %v2878 = vadd.f32 %v2875, 1.0
        %v2879 = vadd.f32 %v2877, 1.0
        %v2880 = vrcp.pop %v2878
        %v2881 = vmul.f32 1.0, %v2880
        %v2882 = vrcp.pop %v2879
        %v2883 = vmul.f32 1.0, %v2882
        %v2884 = vmul.f32 %v2867, %v2157
        %v2885 = vmul.f32 %v2869, %v2158
        %v2886 = vmul.f32 %v2855, %v2870
        %v2887 = vmul.f32 %v2857, %v2871
        %v2888 = vadd.f32 %v2884, %v2886
        %v2889 = vadd.f32 %v2885, %v2887
        %v2890 = vtanh.pop %v2888
        %v2891 = vtanh.pop %v2889
        %v2892 = vmul.f32 %v2881, %v2890
        %v2893 = vmul.f32 %v2883, %v2891
        %v2896 = vcombine.low %v2892, %v2893
        %v2897 = vcombine.high %v2892, %v2893
        %v2899 = vunpack.c.l.s4 1966171168
        %v2900 = vunpack.c.0.s8 %v2899
        %v2901 = vlaneseq
        %v2902 = vshrl.u32 %v2901, 7
        %v2903 = vsub.s32 %v2900, %v2902
        %v2904 = vrot.slane %v2896, %v2903
        %v2906 = vunpack.c.l.s4 1966171168
        %v2907 = vunpack.c.0.s8 %v2906
        %v2908 = vlaneseq
        %v2909 = vshrl.u32 %v2908, 7
        %v2910 = vsub.s32 %v2907, %v2909
        %v2911 = vrot.slane %v2897, %v2910
        %v2912 = vcombine.high %v2904, %v2904
        %v2913 = vcombine.high %v2911, %v2911
        %v2915 = vunpack.c.l.s4 1966171168
        %v2916 = vunpack.c.0.s8 %v2915
        %v2917 = vlaneseq
        %v2918 = vshrl.u32 %v2917, 7
        %v2919 = vsub.s32 %v2916, %v2918
        %v2920 = vrot.slane %v2904, %v2919
        %v2922 = vunpack.c.l.s4 1966171168
        %v2923 = vunpack.c.0.s8 %v2922
        %v2924 = vlaneseq
        %v2925 = vshrl.u32 %v2924, 7
        %v2926 = vsub.s32 %v2923, %v2925
        %v2927 = vrot.slane %v2911, %v2926
        %v2929 = vunpack.c.l.s4 1966171168
        %v2930 = vunpack.c.0.s8 %v2929
        %v2931 = vlaneseq
        %v2932 = vshrl.u32 %v2931, 7
        %v2933 = vsub.s32 %v2930, %v2932
        %v2934 = vrot.slane %v2912, %v2933
        %v2936 = vunpack.c.l.s4 1966171168
        %v2937 = vunpack.c.0.s8 %v2936
        %v2938 = vlaneseq
        %v2939 = vshrl.u32 %v2938, 7
        %v2940 = vsub.s32 %v2937, %v2939
        %v2941 = vrot.slane %v2913, %v2940
        %v2942 = vcombine.high %v2920, %v2920
        %v2943 = vcombine.high %v2927, %v2927
        %v2944 = vcombine.high %v2934, %v2934
        %v2945 = vcombine.high %v2941, %v2941
        %s2954 = scalar_lea.vmem [#allocation4], 2
        %2955 = vst.msk [vmem:[%s2954] ss:$8 sm:$0x3] %vm1492, %v2920
        %2956 = vst.msk [vmem:[%s2954] ss:$8 sm:$0x0] %vm1492, %v2920
        %s2957 = scalar_lea.vmem [#allocation4], 18
        %2958 = vst.msk [vmem:[%s2957] ss:$8 sm:$0x3] %vm1492, %v2934
        %2959 = vst.msk [vmem:[%s2957] ss:$8 sm:$0x0] %vm1492, %v2934
        %s2960 = scalar_lea.vmem [#allocation4], 34
        %2961 = vst.msk [vmem:[%s2960] ss:$8 sm:$0x3] %vm1492, %v2942
        %2962 = vst.msk [vmem:[%s2960] ss:$8 sm:$0x0] %vm1492, %v2942
        %s2963 = scalar_lea.vmem [#allocation4], 50
        %2964 = vst.msk [vmem:[%s2963] ss:$8 sm:$0x3] %vm1492, %v2944
        %2965 = vst.msk [vmem:[%s2963] ss:$8 sm:$0x0] %vm1492, %v2944
        %s2966 = scalar_lea.vmem [#allocation4], 66
        %2967 = vst.msk [vmem:[%s2966] ss:$8 sm:$0x3] %vm1492, %v2927
        %2968 = vst.msk [vmem:[%s2966] ss:$8 sm:$0x0] %vm1492, %v2927
        %s2969 = scalar_lea.vmem [#allocation4], 82
        %2970 = vst.msk [vmem:[%s2969] ss:$8 sm:$0x3] %vm1492, %v2941
        %2971 = vst.msk [vmem:[%s2969] ss:$8 sm:$0x0] %vm1492, %v2941
        %s2972 = scalar_lea.vmem [#allocation4], 98
        %2973 = vst.msk [vmem:[%s2972] ss:$8 sm:$0x3] %vm1492, %v2943
        %2974 = vst.msk [vmem:[%s2972] ss:$8 sm:$0x0] %vm1492, %v2943
        %s2975 = scalar_lea.vmem [#allocation4], 114
        %2976 = vst.msk [vmem:[%s2975] ss:$8 sm:$0x3] %vm1492, %v2945
        %2977 = vst.msk [vmem:[%s2975] ss:$8 sm:$0x0] %vm1492, %v2945
        %v2978 = vld [vmem:[%s297 + $0x3] sm:$0x1]
        %v2979 = vld [vmem:[%s297 + $0xb] sm:$0x1]
        %v2980 = vld [vmem:[%s297 + $0x13] sm:$0x1]
        %v2981 = vld [vmem:[%s297 + $0x1b] sm:$0x1]
        %v2982 = vld [vmem:[%s297 + $0x23] sm:$0x1]
        %v2983 = vld [vmem:[%s297 + $0x2b] sm:$0x1]
        %v2984 = vld [vmem:[%s297 + $0x33] sm:$0x1]
        %v2985 = vld [vmem:[%s297 + $0x3b] sm:$0x1]
        %v2994 = vrot.slane %v2979, 7
        %v2995 = vsel %vm751, %v2994, %v2978
        %v2996 = vrot.slane %v2980, 6
        %v2997 = vsel %vm754, %v2996, %v2995
        %v2998 = vrot.slane %v2981, 5
        %v2999 = vsel %vm757, %v2998, %v2997
        %v3000 = vrot.slane %v2982, 4
        %v3001 = vsel %vm760, %v3000, %v2999
        %v3002 = vrot.slane %v2983, 3
        %v3003 = vsel %vm763, %v3002, %v3001
        %v3004 = vrot.slane %v2984, 2
        %v3005 = vsel %vm766, %v3004, %v3003
        %v3006 = vrot.slane %v2985, 1
        %v3007 = vsel %vm769, %v3006, %v3005
        %3009 = vmatprep.subr.mxu0 %v470
        %3010 = vmatpush1.msra.mxu0 %v469
        %3011 = vmatprep.subr.mxu0 %v462
        %3012 = vmatpush1.msra.mxu0 %v461
        %3013 = vmatprep.subr.mxu0 %v454
        %3014 = vmatpush1.msra.mxu0 %v453
        %3015 = vmatprep.subr.mxu0 %v446
        %3016 = vmatpush1.msra.mxu0 %v445
        %3017 = vmatprep.subr.mxu0 %v438
        %3018 = vmatpush1.msra.mxu0 %v437
        %3019 = vmatprep.subr.mxu0 %v430
        %3020 = vmatpush1.msra.mxu0 %v429
        %3021 = vmatprep.subr.mxu0 %v422
        %3022 = vmatpush1.msra.mxu0 %v421
        %3023 = vmatprep.subr.mxu0 %v414
        %3024 = vmatpush1.msra.mxu0 %v413
        %3025 = vmatprep.subr.mxu0 %v406
        %3026 = vmatpush1.msra.mxu0 %v405
        %3027 = vmatprep.subr.mxu0 %v398
        %3028 = vmatpush1.msra.mxu0 %v397
        %3029 = vmatprep.subr.mxu0 %v390
        %3030 = vmatpush1.msra.mxu0 %v389
        %3031 = vmatprep.subr.mxu0 %v382
        %3032 = vmatpush1.msra.mxu0 %v381
        %3033 = vmatprep.subr.mxu0 %v374
        %3034 = vmatpush1.msra.mxu0 %v373
        %3035 = vmatprep.subr.mxu0 %v366
        %3036 = vmatpush1.msra.mxu0 %v365
        %3037 = vmatprep.subr.mxu0 %v358
        %3038 = vmatpush1.msra.mxu0 %v357
        %3039 = vmatprep.subr.mxu0 %v350
        %3040 = vmatpush1.msra.mxu0 %v349
        %3041 = vmatprep.subr.mxu0 %v598
        %3042 = vmatpush2.msra.mxu0 %v597
        %3043 = vmatprep.subr.mxu0 %v590
        %3044 = vmatpush2.msra.mxu0 %v589
        %3045 = vmatprep.subr.mxu0 %v582
        %3046 = vmatpush2.msra.mxu0 %v581
        %3047 = vmatprep.subr.mxu0 %v574
        %3048 = vmatpush2.msra.mxu0 %v573
        %3049 = vmatprep.subr.mxu0 %v566
        %3050 = vmatpush2.msra.mxu0 %v565
        %3051 = vmatprep.subr.mxu0 %v558
        %3052 = vmatpush2.msra.mxu0 %v557
        %3053 = vmatprep.subr.mxu0 %v550
        %3054 = vmatpush2.msra.mxu0 %v549
        %3055 = vmatprep.subr.mxu0 %v542
        %3056 = vmatpush2.msra.mxu0 %v541
        %3057 = vmatprep.subr.mxu0 %v534
        %3058 = vmatpush2.msra.mxu0 %v533
        %3059 = vmatprep.subr.mxu0 %v526
        %3060 = vmatpush2.msra.mxu0 %v525
        %3061 = vmatprep.subr.mxu0 %v518
        %3062 = vmatpush2.msra.mxu0 %v517
        %3063 = vmatprep.subr.mxu0 %v510
        %3064 = vmatpush2.msra.mxu0 %v509
        %3065 = vmatprep.subr.mxu0 %v502
        %3066 = vmatpush2.msra.mxu0 %v501
        %3067 = vmatprep.subr.mxu0 %v494
        %3068 = vmatpush2.msra.mxu0 %v493
        %3069 = vmatprep.subr.mxu0 %v486
        %3070 = vmatpush2.msra.mxu0 %v485
        %3071 = vmatprep.subr.mxu0 %v478
        %3072 = vmatpush2.msra.mxu0 %v477
        %3073 = vmatprep.mubr.f32.mxu0 %v2892
        %3074 = vmatmul.mubr.f32.gmra.mxu0 %v3007
        %v3075 = vpop.f32.mrf.mxu0
        %v3076 = vadd.f32 %v776, %v3075
        %v3077 = vpop.f32.mrf.mxu0
        %v3078 = vadd.f32 %v780, %v3077
        %3079 = vdwg.mxu0
        %3080 = vmatprep.subr.mxu0 %v726
        %3081 = vmatpush1.msra.mxu0 %v725
        %3082 = vmatprep.subr.mxu0 %v718
        %3083 = vmatpush1.msra.mxu0 %v717
        %3084 = vmatprep.subr.mxu0 %v710
        %3085 = vmatpush1.msra.mxu0 %v709
        %3086 = vmatprep.subr.mxu0 %v702
        %3087 = vmatpush1.msra.mxu0 %v701
        %3088 = vmatprep.subr.mxu0 %v694
        %3089 = vmatpush1.msra.mxu0 %v693
        %3090 = vmatprep.subr.mxu0 %v686
        %3091 = vmatpush1.msra.mxu0 %v685
        %3092 = vmatprep.subr.mxu0 %v678
        %3093 = vmatpush1.msra.mxu0 %v677
        %3094 = vmatprep.subr.mxu0 %v670
        %3095 = vmatpush1.msra.mxu0 %v669
        %3096 = vmatprep.subr.mxu0 %v662
        %3097 = vmatpush1.msra.mxu0 %v661
        %3098 = vmatprep.subr.mxu0 %v654
        %3099 = vmatpush1.msra.mxu0 %v653
        %3100 = vmatprep.subr.mxu0 %v646
        %3101 = vmatpush1.msra.mxu0 %v645
        %3102 = vmatprep.subr.mxu0 %v638
        %3103 = vmatpush1.msra.mxu0 %v637
        %3104 = vmatprep.subr.mxu0 %v630
        %3105 = vmatpush1.msra.mxu0 %v629
        %3106 = vmatprep.subr.mxu0 %v622
        %3107 = vmatpush1.msra.mxu0 %v621
        %3108 = vmatprep.subr.mxu0 %v614
        %3109 = vmatpush1.msra.mxu0 %v613
        %3110 = vmatprep.subr.mxu0 %v606
        %3111 = vmatpush1.msra.mxu0 %v605
        %3112 = vmatprep.subr.mxu0 0.0
        %3113 = vmatpush2.msra.mxu0 0.0
        %3114 = vmatprep.subr.mxu0 0.0
        %3115 = vmatpush2.msra.mxu0 0.0
        %3116 = vmatprep.subr.mxu0 0.0
        %3117 = vmatpush2.msra.mxu0 0.0
        %3118 = vmatprep.subr.mxu0 0.0
        %3119 = vmatpush2.msra.mxu0 0.0
        %3120 = vmatprep.subr.mxu0 0.0
        %3121 = vmatpush2.msra.mxu0 0.0
        %3122 = vmatprep.subr.mxu0 0.0
        %3123 = vmatpush2.msra.mxu0 0.0
        %3124 = vmatprep.subr.mxu0 0.0
        %3125 = vmatpush2.msra.mxu0 0.0
        %3126 = vmatprep.subr.mxu0 0.0
        %3127 = vmatpush2.msra.mxu0 0.0
        %3128 = vmatprep.subr.mxu0 0.0
        %3129 = vmatpush2.msra.mxu0 0.0
        %3130 = vmatprep.subr.mxu0 0.0
        %3131 = vmatpush2.msra.mxu0 0.0
        %3132 = vmatprep.subr.mxu0 0.0
        %3133 = vmatpush2.msra.mxu0 0.0
        %3134 = vmatprep.subr.mxu0 0.0
        %3135 = vmatpush2.msra.mxu0 0.0
        %3136 = vmatprep.subr.mxu0 0.0
        %3137 = vmatpush2.msra.mxu0 0.0
        %3138 = vmatprep.subr.mxu0 0.0
        %3139 = vmatpush2.msra.mxu0 0.0
        %3140 = vmatprep.subr.mxu0 0.0
        %3141 = vmatpush2.msra.mxu0 0.0
        %3142 = vmatprep.subr.mxu0 0.0
        %3143 = vmatpush2.msra.mxu0 0.0
        %3144 = vmatprep.mubr.f32.mxu0 0.0
        %3145 = vmatmul.mubr.f32.gmra.mxu0 %v2893
        %v3146 = vpop.f32.mrf.mxu0
        %v3147 = vadd.f32 %v3076, %v3146
        %v3148 = vpop.f32.mrf.mxu0
        %v3149 = vadd.f32 %v3078, %v3148
        %3150 = vdwg.mxu0
        %3151 = vmatprep.subr.mxu0 %v472
        %3152 = vmatpush1.msra.mxu0 %v471
        %3153 = vmatprep.subr.mxu0 %v464
        %3154 = vmatpush1.msra.mxu0 %v463
        %3155 = vmatprep.subr.mxu0 %v456
        %3156 = vmatpush1.msra.mxu0 %v455
        %3157 = vmatprep.subr.mxu0 %v448
        %3158 = vmatpush1.msra.mxu0 %v447
        %3159 = vmatprep.subr.mxu0 %v440
        %3160 = vmatpush1.msra.mxu0 %v439
        %3161 = vmatprep.subr.mxu0 %v432
        %3162 = vmatpush1.msra.mxu0 %v431
        %3163 = vmatprep.subr.mxu0 %v424
        %3164 = vmatpush1.msra.mxu0 %v423
        %3165 = vmatprep.subr.mxu0 %v416
        %3166 = vmatpush1.msra.mxu0 %v415
        %3167 = vmatprep.subr.mxu0 %v408
        %3168 = vmatpush1.msra.mxu0 %v407
        %3169 = vmatprep.subr.mxu0 %v400
        %3170 = vmatpush1.msra.mxu0 %v399
        %3171 = vmatprep.subr.mxu0 %v392
        %3172 = vmatpush1.msra.mxu0 %v391
        %3173 = vmatprep.subr.mxu0 %v384
        %3174 = vmatpush1.msra.mxu0 %v383
        %3175 = vmatprep.subr.mxu0 %v376
        %3176 = vmatpush1.msra.mxu0 %v375
        %3177 = vmatprep.subr.mxu0 %v368
        %3178 = vmatpush1.msra.mxu0 %v367
        %3179 = vmatprep.subr.mxu0 %v360
        %3180 = vmatpush1.msra.mxu0 %v359
        %3181 = vmatprep.subr.mxu0 %v352
        %3182 = vmatpush1.msra.mxu0 %v351
        %3183 = vmatprep.subr.mxu0 %v600
        %3184 = vmatpush2.msra.mxu0 %v599
        %3185 = vmatprep.subr.mxu0 %v592
        %3186 = vmatpush2.msra.mxu0 %v591
        %3187 = vmatprep.subr.mxu0 %v584
        %3188 = vmatpush2.msra.mxu0 %v583
        %3189 = vmatprep.subr.mxu0 %v576
        %3190 = vmatpush2.msra.mxu0 %v575
        %3191 = vmatprep.subr.mxu0 %v568
        %3192 = vmatpush2.msra.mxu0 %v567
        %3193 = vmatprep.subr.mxu0 %v560
        %3194 = vmatpush2.msra.mxu0 %v559
        %3195 = vmatprep.subr.mxu0 %v552
        %3196 = vmatpush2.msra.mxu0 %v551
        %3197 = vmatprep.subr.mxu0 %v544
        %3198 = vmatpush2.msra.mxu0 %v543
        %3199 = vmatprep.subr.mxu0 %v536
        %3200 = vmatpush2.msra.mxu0 %v535
        %3201 = vmatprep.subr.mxu0 %v528
        %3202 = vmatpush2.msra.mxu0 %v527
        %3203 = vmatprep.subr.mxu0 %v520
        %3204 = vmatpush2.msra.mxu0 %v519
        %3205 = vmatprep.subr.mxu0 %v512
        %3206 = vmatpush2.msra.mxu0 %v511
        %3207 = vmatprep.subr.mxu0 %v504
        %3208 = vmatpush2.msra.mxu0 %v503
        %3209 = vmatprep.subr.mxu0 %v496
        %3210 = vmatpush2.msra.mxu0 %v495
        %3211 = vmatprep.subr.mxu0 %v488
        %3212 = vmatpush2.msra.mxu0 %v487
        %3213 = vmatprep.subr.mxu0 %v480
        %3214 = vmatpush2.msra.mxu0 %v479
        %3215 = vmatprep.mubr.f32.mxu0 %v2892
        %3216 = vmatmul.mubr.f32.gmra.mxu0 %v3007
        %v3217 = vpop.f32.mrf.mxu0
        %v3218 = vadd.f32 %v784, %v3217
        %v3219 = vpop.f32.mrf.mxu0
        %v3220 = vadd.f32 %v788, %v3219
        %3221 = vdwg.mxu0
        %3222 = vmatprep.subr.mxu0 %v728
        %3223 = vmatpush1.msra.mxu0 %v727
        %3224 = vmatprep.subr.mxu0 %v720
        %3225 = vmatpush1.msra.mxu0 %v719
        %3226 = vmatprep.subr.mxu0 %v712
        %3227 = vmatpush1.msra.mxu0 %v711
        %3228 = vmatprep.subr.mxu0 %v704
        %3229 = vmatpush1.msra.mxu0 %v703
        %3230 = vmatprep.subr.mxu0 %v696
        %3231 = vmatpush1.msra.mxu0 %v695
        %3232 = vmatprep.subr.mxu0 %v688
        %3233 = vmatpush1.msra.mxu0 %v687
        %3234 = vmatprep.subr.mxu0 %v680
        %3235 = vmatpush1.msra.mxu0 %v679
        %3236 = vmatprep.subr.mxu0 %v672
        %3237 = vmatpush1.msra.mxu0 %v671
        %3238 = vmatprep.subr.mxu0 %v664
        %3239 = vmatpush1.msra.mxu0 %v663
        %3240 = vmatprep.subr.mxu0 %v656
        %3241 = vmatpush1.msra.mxu0 %v655
        %3242 = vmatprep.subr.mxu0 %v648
        %3243 = vmatpush1.msra.mxu0 %v647
        %3244 = vmatprep.subr.mxu0 %v640
        %3245 = vmatpush1.msra.mxu0 %v639
        %3246 = vmatprep.subr.mxu0 %v632
        %3247 = vmatpush1.msra.mxu0 %v631
        %3248 = vmatprep.subr.mxu0 %v624
        %3249 = vmatpush1.msra.mxu0 %v623
        %3250 = vmatprep.subr.mxu0 %v616
        %3251 = vmatpush1.msra.mxu0 %v615
        %3252 = vmatprep.subr.mxu0 %v608
        %3253 = vmatpush1.msra.mxu0 %v607
        %3254 = vmatprep.subr.mxu0 0.0
        %3255 = vmatpush2.msra.mxu0 0.0
        %3256 = vmatprep.subr.mxu0 0.0
        %3257 = vmatpush2.msra.mxu0 0.0
        %3258 = vmatprep.subr.mxu0 0.0
        %3259 = vmatpush2.msra.mxu0 0.0
        %3260 = vmatprep.subr.mxu0 0.0
        %3261 = vmatpush2.msra.mxu0 0.0
        %3262 = vmatprep.subr.mxu0 0.0
        %3263 = vmatpush2.msra.mxu0 0.0
        %3264 = vmatprep.subr.mxu0 0.0
        %3265 = vmatpush2.msra.mxu0 0.0
        %3266 = vmatprep.subr.mxu0 0.0
        %3267 = vmatpush2.msra.mxu0 0.0
        %3268 = vmatprep.subr.mxu0 0.0
        %3269 = vmatpush2.msra.mxu0 0.0
        %3270 = vmatprep.subr.mxu0 0.0
        %3271 = vmatpush2.msra.mxu0 0.0
        %3272 = vmatprep.subr.mxu0 0.0
        %3273 = vmatpush2.msra.mxu0 0.0
        %3274 = vmatprep.subr.mxu0 0.0
        %3275 = vmatpush2.msra.mxu0 0.0
        %3276 = vmatprep.subr.mxu0 0.0
        %3277 = vmatpush2.msra.mxu0 0.0
        %3278 = vmatprep.subr.mxu0 0.0
        %3279 = vmatpush2.msra.mxu0 0.0
        %3280 = vmatprep.subr.mxu0 0.0
        %3281 = vmatpush2.msra.mxu0 0.0
        %3282 = vmatprep.subr.mxu0 0.0
        %3283 = vmatpush2.msra.mxu0 0.0
        %3284 = vmatprep.subr.mxu0 0.0
        %3285 = vmatpush2.msra.mxu0 0.0
        %3286 = vmatprep.mubr.f32.mxu0 0.0
        %3287 = vmatmul.mubr.f32.gmra.mxu0 %v2893
        %v3288 = vpop.f32.mrf.mxu0
        %v3289 = vadd.f32 %v3218, %v3288
        %v3290 = vpop.f32.mrf.mxu0
        %v3291 = vadd.f32 %v3220, %v3290
        %3292 = vdwg.mxu0
        %3293 = vmatprep.subr.mxu0 %v474
        %3294 = vmatpush1.msra.mxu0 %v473
        %3295 = vmatprep.subr.mxu0 %v466
        %3296 = vmatpush1.msra.mxu0 %v465
        %3297 = vmatprep.subr.mxu0 %v458
        %3298 = vmatpush1.msra.mxu0 %v457
        %3299 = vmatprep.subr.mxu0 %v450
        %3300 = vmatpush1.msra.mxu0 %v449
        %3301 = vmatprep.subr.mxu0 %v442
        %3302 = vmatpush1.msra.mxu0 %v441
        %3303 = vmatprep.subr.mxu0 %v434
        %3304 = vmatpush1.msra.mxu0 %v433
        %3305 = vmatprep.subr.mxu0 %v426
        %3306 = vmatpush1.msra.mxu0 %v425
        %3307 = vmatprep.subr.mxu0 %v418
        %3308 = vmatpush1.msra.mxu0 %v417
        %3309 = vmatprep.subr.mxu0 %v410
        %3310 = vmatpush1.msra.mxu0 %v409
        %3311 = vmatprep.subr.mxu0 %v402
        %3312 = vmatpush1.msra.mxu0 %v401
        %3313 = vmatprep.subr.mxu0 %v394
        %3314 = vmatpush1.msra.mxu0 %v393
        %3315 = vmatprep.subr.mxu0 %v386
        %3316 = vmatpush1.msra.mxu0 %v385
        %3317 = vmatprep.subr.mxu0 %v378
        %3318 = vmatpush1.msra.mxu0 %v377
        %3319 = vmatprep.subr.mxu0 %v370
        %3320 = vmatpush1.msra.mxu0 %v369
        %3321 = vmatprep.subr.mxu0 %v362
        %3322 = vmatpush1.msra.mxu0 %v361
        %3323 = vmatprep.subr.mxu0 %v354
        %3324 = vmatpush1.msra.mxu0 %v353
        %3325 = vmatprep.subr.mxu0 %v602
        %3326 = vmatpush2.msra.mxu0 %v601
        %3327 = vmatprep.subr.mxu0 %v594
        %3328 = vmatpush2.msra.mxu0 %v593
        %3329 = vmatprep.subr.mxu0 %v586
        %3330 = vmatpush2.msra.mxu0 %v585
        %3331 = vmatprep.subr.mxu0 %v578
        %3332 = vmatpush2.msra.mxu0 %v577
        %3333 = vmatprep.subr.mxu0 %v570
        %3334 = vmatpush2.msra.mxu0 %v569
        %3335 = vmatprep.subr.mxu0 %v562
        %3336 = vmatpush2.msra.mxu0 %v561
        %3337 = vmatprep.subr.mxu0 %v554
        %3338 = vmatpush2.msra.mxu0 %v553
        %3339 = vmatprep.subr.mxu0 %v546
        %3340 = vmatpush2.msra.mxu0 %v545
        %3341 = vmatprep.subr.mxu0 %v538
        %3342 = vmatpush2.msra.mxu0 %v537
        %3343 = vmatprep.subr.mxu0 %v530
        %3344 = vmatpush2.msra.mxu0 %v529
        %3345 = vmatprep.subr.mxu0 %v522
        %3346 = vmatpush2.msra.mxu0 %v521
        %3347 = vmatprep.subr.mxu0 %v514
        %3348 = vmatpush2.msra.mxu0 %v513
        %3349 = vmatprep.subr.mxu0 %v506
        %3350 = vmatpush2.msra.mxu0 %v505
        %3351 = vmatprep.subr.mxu0 %v498
        %3352 = vmatpush2.msra.mxu0 %v497
        %3353 = vmatprep.subr.mxu0 %v490
        %3354 = vmatpush2.msra.mxu0 %v489
        %3355 = vmatprep.subr.mxu0 %v482
        %3356 = vmatpush2.msra.mxu0 %v481
        %3357 = vmatprep.mubr.f32.mxu0 %v2892
        %3358 = vmatmul.mubr.f32.gmra.mxu0 %v3007
        %v3359 = vpop.f32.mrf.mxu0
        %v3360 = vadd.f32 %v792, %v3359
        %v3361 = vpop.f32.mrf.mxu0
        %v3362 = vadd.f32 %v796, %v3361
        %3363 = vdwg.mxu0
        %3364 = vmatprep.subr.mxu0 %v730
        %3365 = vmatpush1.msra.mxu0 %v729
        %3366 = vmatprep.subr.mxu0 %v722
        %3367 = vmatpush1.msra.mxu0 %v721
        %3368 = vmatprep.subr.mxu0 %v714
        %3369 = vmatpush1.msra.mxu0 %v713
        %3370 = vmatprep.subr.mxu0 %v706
        %3371 = vmatpush1.msra.mxu0 %v705
        %3372 = vmatprep.subr.mxu0 %v698
        %3373 = vmatpush1.msra.mxu0 %v697
        %3374 = vmatprep.subr.mxu0 %v690
        %3375 = vmatpush1.msra.mxu0 %v689
        %3376 = vmatprep.subr.mxu0 %v682
        %3377 = vmatpush1.msra.mxu0 %v681
        %3378 = vmatprep.subr.mxu0 %v674
        %3379 = vmatpush1.msra.mxu0 %v673
        %3380 = vmatprep.subr.mxu0 %v666
        %3381 = vmatpush1.msra.mxu0 %v665
        %3382 = vmatprep.subr.mxu0 %v658
        %3383 = vmatpush1.msra.mxu0 %v657
        %3384 = vmatprep.subr.mxu0 %v650
        %3385 = vmatpush1.msra.mxu0 %v649
        %3386 = vmatprep.subr.mxu0 %v642
        %3387 = vmatpush1.msra.mxu0 %v641
        %3388 = vmatprep.subr.mxu0 %v634
        %3389 = vmatpush1.msra.mxu0 %v633
        %3390 = vmatprep.subr.mxu0 %v626
        %3391 = vmatpush1.msra.mxu0 %v625
        %3392 = vmatprep.subr.mxu0 %v618
        %3393 = vmatpush1.msra.mxu0 %v617
        %3394 = vmatprep.subr.mxu0 %v610
        %3395 = vmatpush1.msra.mxu0 %v609
        %3396 = vmatprep.subr.mxu0 0.0
        %3397 = vmatpush2.msra.mxu0 0.0
        %3398 = vmatprep.subr.mxu0 0.0
        %3399 = vmatpush2.msra.mxu0 0.0
        %3400 = vmatprep.subr.mxu0 0.0
        %3401 = vmatpush2.msra.mxu0 0.0
        %3402 = vmatprep.subr.mxu0 0.0
        %3403 = vmatpush2.msra.mxu0 0.0
        %3404 = vmatprep.subr.mxu0 0.0
        %3405 = vmatpush2.msra.mxu0 0.0
        %3406 = vmatprep.subr.mxu0 0.0
        %3407 = vmatpush2.msra.mxu0 0.0
        %3408 = vmatprep.subr.mxu0 0.0
        %3409 = vmatpush2.msra.mxu0 0.0
        %3410 = vmatprep.subr.mxu0 0.0
        %3411 = vmatpush2.msra.mxu0 0.0
        %3412 = vmatprep.subr.mxu0 0.0
        %3413 = vmatpush2.msra.mxu0 0.0
        %3414 = vmatprep.subr.mxu0 0.0
        %3415 = vmatpush2.msra.mxu0 0.0
        %3416 = vmatprep.subr.mxu0 0.0
        %3417 = vmatpush2.msra.mxu0 0.0
        %3418 = vmatprep.subr.mxu0 0.0
        %3419 = vmatpush2.msra.mxu0 0.0
        %3420 = vmatprep.subr.mxu0 0.0
        %3421 = vmatpush2.msra.mxu0 0.0
        %3422 = vmatprep.subr.mxu0 0.0
        %3423 = vmatpush2.msra.mxu0 0.0
        %3424 = vmatprep.subr.mxu0 0.0
        %3425 = vmatpush2.msra.mxu0 0.0
        %3426 = vmatprep.subr.mxu0 0.0
        %3427 = vmatpush2.msra.mxu0 0.0
        %3428 = vmatprep.mubr.f32.mxu0 0.0
        %3429 = vmatmul.mubr.f32.gmra.mxu0 %v2893
        %v3430 = vpop.f32.mrf.mxu0
        %v3431 = vadd.f32 %v3360, %v3430
        %v3432 = vpop.f32.mrf.mxu0
        %v3433 = vadd.f32 %v3362, %v3432
        %3434 = vdwg.mxu0
        %3435 = vmatprep.subr.mxu0 %v476
        %3436 = vmatpush1.msra.mxu0 %v475
        %3437 = vmatprep.subr.mxu0 %v468
        %3438 = vmatpush1.msra.mxu0 %v467
        %3439 = vmatprep.subr.mxu0 %v460
        %3440 = vmatpush1.msra.mxu0 %v459
        %3441 = vmatprep.subr.mxu0 %v452
        %3442 = vmatpush1.msra.mxu0 %v451
        %3443 = vmatprep.subr.mxu0 %v444
        %3444 = vmatpush1.msra.mxu0 %v443
        %3445 = vmatprep.subr.mxu0 %v436
        %3446 = vmatpush1.msra.mxu0 %v435
        %3447 = vmatprep.subr.mxu0 %v428
        %3448 = vmatpush1.msra.mxu0 %v427
        %3449 = vmatprep.subr.mxu0 %v420
        %3450 = vmatpush1.msra.mxu0 %v419
        %3451 = vmatprep.subr.mxu0 %v412
        %3452 = vmatpush1.msra.mxu0 %v411
        %3453 = vmatprep.subr.mxu0 %v404
        %3454 = vmatpush1.msra.mxu0 %v403
        %3455 = vmatprep.subr.mxu0 %v396
        %3456 = vmatpush1.msra.mxu0 %v395
        %3457 = vmatprep.subr.mxu0 %v388
        %3458 = vmatpush1.msra.mxu0 %v387
        %3459 = vmatprep.subr.mxu0 %v380
        %3460 = vmatpush1.msra.mxu0 %v379
        %3461 = vmatprep.subr.mxu0 %v372
        %3462 = vmatpush1.msra.mxu0 %v371
        %3463 = vmatprep.subr.mxu0 %v364
        %3464 = vmatpush1.msra.mxu0 %v363
        %3465 = vmatprep.subr.mxu0 %v356
        %3466 = vmatpush1.msra.mxu0 %v355
        %3467 = vmatprep.subr.mxu0 %v604
        %3468 = vmatpush2.msra.mxu0 %v603
        %3469 = vmatprep.subr.mxu0 %v596
        %3470 = vmatpush2.msra.mxu0 %v595
        %3471 = vmatprep.subr.mxu0 %v588
        %3472 = vmatpush2.msra.mxu0 %v587
        %3473 = vmatprep.subr.mxu0 %v580
        %3474 = vmatpush2.msra.mxu0 %v579
        %3475 = vmatprep.subr.mxu0 %v572
        %3476 = vmatpush2.msra.mxu0 %v571
        %3477 = vmatprep.subr.mxu0 %v564
        %3478 = vmatpush2.msra.mxu0 %v563
        %3479 = vmatprep.subr.mxu0 %v556
        %3480 = vmatpush2.msra.mxu0 %v555
        %3481 = vmatprep.subr.mxu0 %v548
        %3482 = vmatpush2.msra.mxu0 %v547
        %3483 = vmatprep.subr.mxu0 %v540
        %3484 = vmatpush2.msra.mxu0 %v539
        %3485 = vmatprep.subr.mxu0 %v532
        %3486 = vmatpush2.msra.mxu0 %v531
        %3487 = vmatprep.subr.mxu0 %v524
        %3488 = vmatpush2.msra.mxu0 %v523
        %3489 = vmatprep.subr.mxu0 %v516
        %3490 = vmatpush2.msra.mxu0 %v515
        %3491 = vmatprep.subr.mxu0 %v508
        %3492 = vmatpush2.msra.mxu0 %v507
        %3493 = vmatprep.subr.mxu0 %v500
        %3494 = vmatpush2.msra.mxu0 %v499
        %3495 = vmatprep.subr.mxu0 %v492
        %3496 = vmatpush2.msra.mxu0 %v491
        %3497 = vmatprep.subr.mxu0 %v484
        %3498 = vmatpush2.msra.mxu0 %v483
        %3499 = vmatprep.mubr.f32.mxu0 %v2892
        %3500 = vmatmul.mubr.f32.gmra.mxu0 %v3007
        %v3501 = vpop.f32.mrf.mxu0
        %v3502 = vadd.f32 %v800, %v3501
        %v3503 = vpop.f32.mrf.mxu0
        %v3504 = vadd.f32 %v804, %v3503
        %3505 = vdwg.mxu0
        %3506 = vmatprep.subr.mxu0 %v732
        %3507 = vmatpush1.msra.mxu0 %v731
        %3508 = vmatprep.subr.mxu0 %v724
        %3509 = vmatpush1.msra.mxu0 %v723
        %3510 = vmatprep.subr.mxu0 %v716
        %3511 = vmatpush1.msra.mxu0 %v715
        %3512 = vmatprep.subr.mxu0 %v708
        %3513 = vmatpush1.msra.mxu0 %v707
        %3514 = vmatprep.subr.mxu0 %v700
        %3515 = vmatpush1.msra.mxu0 %v699
        %3516 = vmatprep.subr.mxu0 %v692
        %3517 = vmatpush1.msra.mxu0 %v691
        %3518 = vmatprep.subr.mxu0 %v684
        %3519 = vmatpush1.msra.mxu0 %v683
        %3520 = vmatprep.subr.mxu0 %v676
        %3521 = vmatpush1.msra.mxu0 %v675
        %3522 = vmatprep.subr.mxu0 %v668
        %3523 = vmatpush1.msra.mxu0 %v667
        %3524 = vmatprep.subr.mxu0 %v660
        %3525 = vmatpush1.msra.mxu0 %v659
        %3526 = vmatprep.subr.mxu0 %v652
        %3527 = vmatpush1.msra.mxu0 %v651
        %3528 = vmatprep.subr.mxu0 %v644
        %3529 = vmatpush1.msra.mxu0 %v643
        %3530 = vmatprep.subr.mxu0 %v636
        %3531 = vmatpush1.msra.mxu0 %v635
        %3532 = vmatprep.subr.mxu0 %v628
        %3533 = vmatpush1.msra.mxu0 %v627
        %3534 = vmatprep.subr.mxu0 %v620
        %3535 = vmatpush1.msra.mxu0 %v619
        %3536 = vmatprep.subr.mxu0 %v612
        %3537 = vmatpush1.msra.mxu0 %v611
        %3538 = vmatprep.subr.mxu0 0.0
        %3539 = vmatpush2.msra.mxu0 0.0
        %3540 = vmatprep.subr.mxu0 0.0
        %3541 = vmatpush2.msra.mxu0 0.0
        %3542 = vmatprep.subr.mxu0 0.0
        %3543 = vmatpush2.msra.mxu0 0.0
        %3544 = vmatprep.subr.mxu0 0.0
        %3545 = vmatpush2.msra.mxu0 0.0
        %3546 = vmatprep.subr.mxu0 0.0
        %3547 = vmatpush2.msra.mxu0 0.0
        %3548 = vmatprep.subr.mxu0 0.0
        %3549 = vmatpush2.msra.mxu0 0.0
        %3550 = vmatprep.subr.mxu0 0.0
        %3551 = vmatpush2.msra.mxu0 0.0
        %3552 = vmatprep.subr.mxu0 0.0
        %3553 = vmatpush2.msra.mxu0 0.0
        %3554 = vmatprep.subr.mxu0 0.0
        %3555 = vmatpush2.msra.mxu0 0.0
        %3556 = vmatprep.subr.mxu0 0.0
        %3557 = vmatpush2.msra.mxu0 0.0
        %3558 = vmatprep.subr.mxu0 0.0
        %3559 = vmatpush2.msra.mxu0 0.0
        %3560 = vmatprep.subr.mxu0 0.0
        %3561 = vmatpush2.msra.mxu0 0.0
        %3562 = vmatprep.subr.mxu0 0.0
        %3563 = vmatpush2.msra.mxu0 0.0
        %3564 = vmatprep.subr.mxu0 0.0
        %3565 = vmatpush2.msra.mxu0 0.0
        %3566 = vmatprep.subr.mxu0 0.0
        %3567 = vmatpush2.msra.mxu0 0.0
        %3568 = vmatprep.subr.mxu0 0.0
        %3569 = vmatpush2.msra.mxu0 0.0
        %3570 = vmatprep.mubr.f32.mxu0 0.0
        %3571 = vmatmul.mubr.f32.gmra.mxu0 %v2893
        %v3572 = vpop.f32.mrf.mxu0
        %v3573 = vadd.f32 %v3502, %v3572
        %v3574 = vpop.f32.mrf.mxu0
        %v3575 = vadd.f32 %v3504, %v3574
        %3576 = vdwg.mxu0
        %v3577 = vxor.u32 %v3147, 2147483648
        %v3578 = vxor.u32 %v3149, 2147483648
        %v3579 = vmul.f32 %v3577, 1.442695
        %v3580 = vpow.pop %v3579
        %v3581 = vmul.f32 %v3578, 1.442695
        %v3582 = vpow.pop %v3581
        %v3583 = vadd.f32 %v3580, 1.0
        %v3584 = vadd.f32 %v3582, 1.0
        %v3585 = vrcp.pop %v3583
        %v3586 = vmul.f32 1.0, %v3585
        %v3587 = vrcp.pop %v3584
        %v3588 = vmul.f32 1.0, %v3587
        %v3589 = vxor.u32 %v3289, 2147483648
        %v3590 = vxor.u32 %v3291, 2147483648
        %v3591 = vmul.f32 %v3589, 1.442695
        %v3592 = vpow.pop %v3591
        %v3593 = vmul.f32 %v3590, 1.442695
        %v3594 = vpow.pop %v3593
        %v3595 = vadd.f32 %v3592, 1.0
        %v3596 = vadd.f32 %v3594, 1.0
        %v3597 = vrcp.pop %v3595
        %v3598 = vmul.f32 1.0, %v3597
        %v3599 = vrcp.pop %v3596
        %v3600 = vmul.f32 1.0, %v3599
        %v3601 = vtanh.pop %v3431
        %v3602 = vtanh.pop %v3433
        %v3603 = vxor.u32 %v3573, 2147483648
        %v3604 = vxor.u32 %v3575, 2147483648
        %v3605 = vmul.f32 %v3603, 1.442695
        %v3606 = vpow.pop %v3605
        %v3607 = vmul.f32 %v3604, 1.442695
        %v3608 = vpow.pop %v3607
        %v3609 = vadd.f32 %v3606, 1.0
        %v3610 = vadd.f32 %v3608, 1.0
        %v3611 = vrcp.pop %v3609
        %v3612 = vmul.f32 1.0, %v3611
        %v3613 = vrcp.pop %v3610
        %v3614 = vmul.f32 1.0, %v3613
        %v3615 = vmul.f32 %v3598, %v2888
        %v3616 = vmul.f32 %v3600, %v2889
        %v3617 = vmul.f32 %v3586, %v3601
        %v3618 = vmul.f32 %v3588, %v3602
        %v3619 = vadd.f32 %v3615, %v3617
        %v3620 = vadd.f32 %v3616, %v3618
        %v3621 = vtanh.pop %v3619
        %v3622 = vtanh.pop %v3620
        %v3623 = vmul.f32 %v3612, %v3621
        %v3624 = vmul.f32 %v3614, %v3622
        %v3627 = vcombine.low %v3623, %v3624
        %v3628 = vcombine.high %v3623, %v3624
        %v3630 = vunpack.c.l.s4 1966171168
        %v3631 = vunpack.c.0.s8 %v3630
        %v3632 = vlaneseq
        %v3633 = vshrl.u32 %v3632, 7
        %v3634 = vsub.s32 %v3631, %v3633
        %v3635 = vrot.slane %v3627, %v3634
        %v3637 = vunpack.c.l.s4 1966171168
        %v3638 = vunpack.c.0.s8 %v3637
        %v3639 = vlaneseq
        %v3640 = vshrl.u32 %v3639, 7
        %v3641 = vsub.s32 %v3638, %v3640
        %v3642 = vrot.slane %v3628, %v3641
        %v3643 = vcombine.high %v3635, %v3635
        %v3644 = vcombine.high %v3642, %v3642
        %v3646 = vunpack.c.l.s4 1966171168
        %v3647 = vunpack.c.0.s8 %v3646
        %v3648 = vlaneseq
        %v3649 = vshrl.u32 %v3648, 7
        %v3650 = vsub.s32 %v3647, %v3649
        %v3651 = vrot.slane %v3635, %v3650
        %v3653 = vunpack.c.l.s4 1966171168
        %v3654 = vunpack.c.0.s8 %v3653
        %v3655 = vlaneseq
        %v3656 = vshrl.u32 %v3655, 7
        %v3657 = vsub.s32 %v3654, %v3656
        %v3658 = vrot.slane %v3642, %v3657
        %v3660 = vunpack.c.l.s4 1966171168
        %v3661 = vunpack.c.0.s8 %v3660
        %v3662 = vlaneseq
        %v3663 = vshrl.u32 %v3662, 7
        %v3664 = vsub.s32 %v3661, %v3663
        %v3665 = vrot.slane %v3643, %v3664
        %v3667 = vunpack.c.l.s4 1966171168
        %v3668 = vunpack.c.0.s8 %v3667
        %v3669 = vlaneseq
        %v3670 = vshrl.u32 %v3669, 7
        %v3671 = vsub.s32 %v3668, %v3670
        %v3672 = vrot.slane %v3644, %v3671
        %v3673 = vcombine.high %v3651, %v3651
        %v3674 = vcombine.high %v3658, %v3658
        %v3675 = vcombine.high %v3665, %v3665
        %v3676 = vcombine.high %v3672, %v3672
        %s3685 = scalar_lea.vmem [#allocation4], 3
        %3686 = vst.msk [vmem:[%s3685] ss:$8 sm:$0x3] %vm1492, %v3651
        %3687 = vst.msk [vmem:[%s3685] ss:$8 sm:$0x0] %vm1492, %v3651
        %s3688 = scalar_lea.vmem [#allocation4], 19
        %3689 = vst.msk [vmem:[%s3688] ss:$8 sm:$0x3] %vm1492, %v3665
        %3690 = vst.msk [vmem:[%s3688] ss:$8 sm:$0x0] %vm1492, %v3665
        %s3691 = scalar_lea.vmem [#allocation4], 35
        %3692 = vst.msk [vmem:[%s3691] ss:$8 sm:$0x3] %vm1492, %v3673
        %3693 = vst.msk [vmem:[%s3691] ss:$8 sm:$0x0] %vm1492, %v3673
        %s3694 = scalar_lea.vmem [#allocation4], 51
        %3695 = vst.msk [vmem:[%s3694] ss:$8 sm:$0x3] %vm1492, %v3675
        %3696 = vst.msk [vmem:[%s3694] ss:$8 sm:$0x0] %vm1492, %v3675
        %s3697 = scalar_lea.vmem [#allocation4], 67
        %3698 = vst.msk [vmem:[%s3697] ss:$8 sm:$0x3] %vm1492, %v3658
        %3699 = vst.msk [vmem:[%s3697] ss:$8 sm:$0x0] %vm1492, %v3658
        %s3700 = scalar_lea.vmem [#allocation4], 83
        %3701 = vst.msk [vmem:[%s3700] ss:$8 sm:$0x3] %vm1492, %v3672
        %3702 = vst.msk [vmem:[%s3700] ss:$8 sm:$0x0] %vm1492, %v3672
        %s3703 = scalar_lea.vmem [#allocation4], 99
        %3704 = vst.msk [vmem:[%s3703] ss:$8 sm:$0x3] %vm1492, %v3674
        %3705 = vst.msk [vmem:[%s3703] ss:$8 sm:$0x0] %vm1492, %v3674
        %s3706 = scalar_lea.vmem [#allocation4], 115
        %3707 = vst.msk [vmem:[%s3706] ss:$8 sm:$0x3] %vm1492, %v3676
        %3708 = vst.msk [vmem:[%s3706] ss:$8 sm:$0x0] %vm1492, %v3676
        %v3709 = vld [vmem:[%s297 + $0x4] sm:$0x1]
        %v3710 = vld [vmem:[%s297 + $0xc] sm:$0x1]
        %v3711 = vld [vmem:[%s297 + $0x14] sm:$0x1]
        %v3712 = vld [vmem:[%s297 + $0x1c] sm:$0x1]
        %v3713 = vld [vmem:[%s297 + $0x24] sm:$0x1]
        %v3714 = vld [vmem:[%s297 + $0x2c] sm:$0x1]
        %v3715 = vld [vmem:[%s297 + $0x34] sm:$0x1]
        %v3716 = vld [vmem:[%s297 + $0x3c] sm:$0x1]
        %v3725 = vrot.slane %v3710, 7
        %v3726 = vsel %vm751, %v3725, %v3709
        %v3727 = vrot.slane %v3711, 6
        %v3728 = vsel %vm754, %v3727, %v3726
        %v3729 = vrot.slane %v3712, 5
        %v3730 = vsel %vm757, %v3729, %v3728
        %v3731 = vrot.slane %v3713, 4
        %v3732 = vsel %vm760, %v3731, %v3730
        %v3733 = vrot.slane %v3714, 3
        %v3734 = vsel %vm763, %v3733, %v3732
        %v3735 = vrot.slane %v3715, 2
        %v3736 = vsel %vm766, %v3735, %v3734
        %v3737 = vrot.slane %v3716, 1
        %v3738 = vsel %vm769, %v3737, %v3736
        %3740 = vmatprep.subr.mxu0 %v470
        %3741 = vmatpush1.msra.mxu0 %v469
        %3742 = vmatprep.subr.mxu0 %v462
        %3743 = vmatpush1.msra.mxu0 %v461
        %3744 = vmatprep.subr.mxu0 %v454
        %3745 = vmatpush1.msra.mxu0 %v453
        %3746 = vmatprep.subr.mxu0 %v446
        %3747 = vmatpush1.msra.mxu0 %v445
        %3748 = vmatprep.subr.mxu0 %v438
        %3749 = vmatpush1.msra.mxu0 %v437
        %3750 = vmatprep.subr.mxu0 %v430
        %3751 = vmatpush1.msra.mxu0 %v429
        %3752 = vmatprep.subr.mxu0 %v422
        %3753 = vmatpush1.msra.mxu0 %v421
        %3754 = vmatprep.subr.mxu0 %v414
        %3755 = vmatpush1.msra.mxu0 %v413
        %3756 = vmatprep.subr.mxu0 %v406
        %3757 = vmatpush1.msra.mxu0 %v405
        %3758 = vmatprep.subr.mxu0 %v398
        %3759 = vmatpush1.msra.mxu0 %v397
        %3760 = vmatprep.subr.mxu0 %v390
        %3761 = vmatpush1.msra.mxu0 %v389
        %3762 = vmatprep.subr.mxu0 %v382
        %3763 = vmatpush1.msra.mxu0 %v381
        %3764 = vmatprep.subr.mxu0 %v374
        %3765 = vmatpush1.msra.mxu0 %v373
        %3766 = vmatprep.subr.mxu0 %v366
        %3767 = vmatpush1.msra.mxu0 %v365
        %3768 = vmatprep.subr.mxu0 %v358
        %3769 = vmatpush1.msra.mxu0 %v357
        %3770 = vmatprep.subr.mxu0 %v350
        %3771 = vmatpush1.msra.mxu0 %v349
        %3772 = vmatprep.subr.mxu0 %v598
        %3773 = vmatpush2.msra.mxu0 %v597
        %3774 = vmatprep.subr.mxu0 %v590
        %3775 = vmatpush2.msra.mxu0 %v589
        %3776 = vmatprep.subr.mxu0 %v582
        %3777 = vmatpush2.msra.mxu0 %v581
        %3778 = vmatprep.subr.mxu0 %v574
        %3779 = vmatpush2.msra.mxu0 %v573
        %3780 = vmatprep.subr.mxu0 %v566
        %3781 = vmatpush2.msra.mxu0 %v565
        %3782 = vmatprep.subr.mxu0 %v558
        %3783 = vmatpush2.msra.mxu0 %v557
        %3784 = vmatprep.subr.mxu0 %v550
        %3785 = vmatpush2.msra.mxu0 %v549
        %3786 = vmatprep.subr.mxu0 %v542
        %3787 = vmatpush2.msra.mxu0 %v541
        %3788 = vmatprep.subr.mxu0 %v534
        %3789 = vmatpush2.msra.mxu0 %v533
        %3790 = vmatprep.subr.mxu0 %v526
        %3791 = vmatpush2.msra.mxu0 %v525
        %3792 = vmatprep.subr.mxu0 %v518
        %3793 = vmatpush2.msra.mxu0 %v517
        %3794 = vmatprep.subr.mxu0 %v510
        %3795 = vmatpush2.msra.mxu0 %v509
        %3796 = vmatprep.subr.mxu0 %v502
        %3797 = vmatpush2.msra.mxu0 %v501
        %3798 = vmatprep.subr.mxu0 %v494
        %3799 = vmatpush2.msra.mxu0 %v493
        %3800 = vmatprep.subr.mxu0 %v486
        %3801 = vmatpush2.msra.mxu0 %v485
        %3802 = vmatprep.subr.mxu0 %v478
        %3803 = vmatpush2.msra.mxu0 %v477
        %3804 = vmatprep.mubr.f32.mxu0 %v3623
        %3805 = vmatmul.mubr.f32.gmra.mxu0 %v3738
        %v3806 = vpop.f32.mrf.mxu0
        %v3807 = vadd.f32 %v776, %v3806
        %v3808 = vpop.f32.mrf.mxu0
        %v3809 = vadd.f32 %v780, %v3808
        %3810 = vdwg.mxu0
        %3811 = vmatprep.subr.mxu0 %v726
        %3812 = vmatpush1.msra.mxu0 %v725
        %3813 = vmatprep.subr.mxu0 %v718
        %3814 = vmatpush1.msra.mxu0 %v717
        %3815 = vmatprep.subr.mxu0 %v710
        %3816 = vmatpush1.msra.mxu0 %v709
        %3817 = vmatprep.subr.mxu0 %v702
        %3818 = vmatpush1.msra.mxu0 %v701
        %3819 = vmatprep.subr.mxu0 %v694
        %3820 = vmatpush1.msra.mxu0 %v693
        %3821 = vmatprep.subr.mxu0 %v686
        %3822 = vmatpush1.msra.mxu0 %v685
        %3823 = vmatprep.subr.mxu0 %v678
        %3824 = vmatpush1.msra.mxu0 %v677
        %3825 = vmatprep.subr.mxu0 %v670
        %3826 = vmatpush1.msra.mxu0 %v669
        %3827 = vmatprep.subr.mxu0 %v662
        %3828 = vmatpush1.msra.mxu0 %v661
        %3829 = vmatprep.subr.mxu0 %v654
        %3830 = vmatpush1.msra.mxu0 %v653
        %3831 = vmatprep.subr.mxu0 %v646
        %3832 = vmatpush1.msra.mxu0 %v645
        %3833 = vmatprep.subr.mxu0 %v638
        %3834 = vmatpush1.msra.mxu0 %v637
        %3835 = vmatprep.subr.mxu0 %v630
        %3836 = vmatpush1.msra.mxu0 %v629
        %3837 = vmatprep.subr.mxu0 %v622
        %3838 = vmatpush1.msra.mxu0 %v621
        %3839 = vmatprep.subr.mxu0 %v614
        %3840 = vmatpush1.msra.mxu0 %v613
        %3841 = vmatprep.subr.mxu0 %v606
        %3842 = vmatpush1.msra.mxu0 %v605
        %3843 = vmatprep.subr.mxu0 0.0
        %3844 = vmatpush2.msra.mxu0 0.0
        %3845 = vmatprep.subr.mxu0 0.0
        %3846 = vmatpush2.msra.mxu0 0.0
        %3847 = vmatprep.subr.mxu0 0.0
        %3848 = vmatpush2.msra.mxu0 0.0
        %3849 = vmatprep.subr.mxu0 0.0
        %3850 = vmatpush2.msra.mxu0 0.0
        %3851 = vmatprep.subr.mxu0 0.0
        %3852 = vmatpush2.msra.mxu0 0.0
        %3853 = vmatprep.subr.mxu0 0.0
        %3854 = vmatpush2.msra.mxu0 0.0
        %3855 = vmatprep.subr.mxu0 0.0
        %3856 = vmatpush2.msra.mxu0 0.0
        %3857 = vmatprep.subr.mxu0 0.0
        %3858 = vmatpush2.msra.mxu0 0.0
        %3859 = vmatprep.subr.mxu0 0.0
        %3860 = vmatpush2.msra.mxu0 0.0
        %3861 = vmatprep.subr.mxu0 0.0
        %3862 = vmatpush2.msra.mxu0 0.0
        %3863 = vmatprep.subr.mxu0 0.0
        %3864 = vmatpush2.msra.mxu0 0.0
        %3865 = vmatprep.subr.mxu0 0.0
        %3866 = vmatpush2.msra.mxu0 0.0
        %3867 = vmatprep.subr.mxu0 0.0
        %3868 = vmatpush2.msra.mxu0 0.0
        %3869 = vmatprep.subr.mxu0 0.0
        %3870 = vmatpush2.msra.mxu0 0.0
        %3871 = vmatprep.subr.mxu0 0.0
        %3872 = vmatpush2.msra.mxu0 0.0
        %3873 = vmatprep.subr.mxu0 0.0
        %3874 = vmatpush2.msra.mxu0 0.0
        %3875 = vmatprep.mubr.f32.mxu0 0.0
        %3876 = vmatmul.mubr.f32.gmra.mxu0 %v3624
        %v3877 = vpop.f32.mrf.mxu0
        %v3878 = vadd.f32 %v3807, %v3877
        %v3879 = vpop.f32.mrf.mxu0
        %v3880 = vadd.f32 %v3809, %v3879
        %3881 = vdwg.mxu0
        %3882 = vmatprep.subr.mxu0 %v472
        %3883 = vmatpush1.msra.mxu0 %v471
        %3884 = vmatprep.subr.mxu0 %v464
        %3885 = vmatpush1.msra.mxu0 %v463
        %3886 = vmatprep.subr.mxu0 %v456
        %3887 = vmatpush1.msra.mxu0 %v455
        %3888 = vmatprep.subr.mxu0 %v448
        %3889 = vmatpush1.msra.mxu0 %v447
        %3890 = vmatprep.subr.mxu0 %v440
        %3891 = vmatpush1.msra.mxu0 %v439
        %3892 = vmatprep.subr.mxu0 %v432
        %3893 = vmatpush1.msra.mxu0 %v431
        %3894 = vmatprep.subr.mxu0 %v424
        %3895 = vmatpush1.msra.mxu0 %v423
        %3896 = vmatprep.subr.mxu0 %v416
        %3897 = vmatpush1.msra.mxu0 %v415
        %3898 = vmatprep.subr.mxu0 %v408
        %3899 = vmatpush1.msra.mxu0 %v407
        %3900 = vmatprep.subr.mxu0 %v400
        %3901 = vmatpush1.msra.mxu0 %v399
        %3902 = vmatprep.subr.mxu0 %v392
        %3903 = vmatpush1.msra.mxu0 %v391
        %3904 = vmatprep.subr.mxu0 %v384
        %3905 = vmatpush1.msra.mxu0 %v383
        %3906 = vmatprep.subr.mxu0 %v376
        %3907 = vmatpush1.msra.mxu0 %v375
        %3908 = vmatprep.subr.mxu0 %v368
        %3909 = vmatpush1.msra.mxu0 %v367
        %3910 = vmatprep.subr.mxu0 %v360
        %3911 = vmatpush1.msra.mxu0 %v359
        %3912 = vmatprep.subr.mxu0 %v352
        %3913 = vmatpush1.msra.mxu0 %v351
        %3914 = vmatprep.subr.mxu0 %v600
        %3915 = vmatpush2.msra.mxu0 %v599
        %3916 = vmatprep.subr.mxu0 %v592
        %3917 = vmatpush2.msra.mxu0 %v591
        %3918 = vmatprep.subr.mxu0 %v584
        %3919 = vmatpush2.msra.mxu0 %v583
        %3920 = vmatprep.subr.mxu0 %v576
        %3921 = vmatpush2.msra.mxu0 %v575
        %3922 = vmatprep.subr.mxu0 %v568
        %3923 = vmatpush2.msra.mxu0 %v567
        %3924 = vmatprep.subr.mxu0 %v560
        %3925 = vmatpush2.msra.mxu0 %v559
        %3926 = vmatprep.subr.mxu0 %v552
        %3927 = vmatpush2.msra.mxu0 %v551
        %3928 = vmatprep.subr.mxu0 %v544
        %3929 = vmatpush2.msra.mxu0 %v543
        %3930 = vmatprep.subr.mxu0 %v536
        %3931 = vmatpush2.msra.mxu0 %v535
        %3932 = vmatprep.subr.mxu0 %v528
        %3933 = vmatpush2.msra.mxu0 %v527
        %3934 = vmatprep.subr.mxu0 %v520
        %3935 = vmatpush2.msra.mxu0 %v519
        %3936 = vmatprep.subr.mxu0 %v512
        %3937 = vmatpush2.msra.mxu0 %v511
        %3938 = vmatprep.subr.mxu0 %v504
        %3939 = vmatpush2.msra.mxu0 %v503
        %3940 = vmatprep.subr.mxu0 %v496
        %3941 = vmatpush2.msra.mxu0 %v495
        %3942 = vmatprep.subr.mxu0 %v488
        %3943 = vmatpush2.msra.mxu0 %v487
        %3944 = vmatprep.subr.mxu0 %v480
        %3945 = vmatpush2.msra.mxu0 %v479
        %3946 = vmatprep.mubr.f32.mxu0 %v3623
        %3947 = vmatmul.mubr.f32.gmra.mxu0 %v3738
        %v3948 = vpop.f32.mrf.mxu0
        %v3949 = vadd.f32 %v784, %v3948
        %v3950 = vpop.f32.mrf.mxu0
        %v3951 = vadd.f32 %v788, %v3950
        %3952 = vdwg.mxu0
        %3953 = vmatprep.subr.mxu0 %v728
        %3954 = vmatpush1.msra.mxu0 %v727
        %3955 = vmatprep.subr.mxu0 %v720
        %3956 = vmatpush1.msra.mxu0 %v719
        %3957 = vmatprep.subr.mxu0 %v712
        %3958 = vmatpush1.msra.mxu0 %v711
        %3959 = vmatprep.subr.mxu0 %v704
        %3960 = vmatpush1.msra.mxu0 %v703
        %3961 = vmatprep.subr.mxu0 %v696
        %3962 = vmatpush1.msra.mxu0 %v695
        %3963 = vmatprep.subr.mxu0 %v688
        %3964 = vmatpush1.msra.mxu0 %v687
        %3965 = vmatprep.subr.mxu0 %v680
        %3966 = vmatpush1.msra.mxu0 %v679
        %3967 = vmatprep.subr.mxu0 %v672
        %3968 = vmatpush1.msra.mxu0 %v671
        %3969 = vmatprep.subr.mxu0 %v664
        %3970 = vmatpush1.msra.mxu0 %v663
        %3971 = vmatprep.subr.mxu0 %v656
        %3972 = vmatpush1.msra.mxu0 %v655
        %3973 = vmatprep.subr.mxu0 %v648
        %3974 = vmatpush1.msra.mxu0 %v647
        %3975 = vmatprep.subr.mxu0 %v640
        %3976 = vmatpush1.msra.mxu0 %v639
        %3977 = vmatprep.subr.mxu0 %v632
        %3978 = vmatpush1.msra.mxu0 %v631
        %3979 = vmatprep.subr.mxu0 %v624
        %3980 = vmatpush1.msra.mxu0 %v623
        %3981 = vmatprep.subr.mxu0 %v616
        %3982 = vmatpush1.msra.mxu0 %v615
        %3983 = vmatprep.subr.mxu0 %v608
        %3984 = vmatpush1.msra.mxu0 %v607
        %3985 = vmatprep.subr.mxu0 0.0
        %3986 = vmatpush2.msra.mxu0 0.0
        %3987 = vmatprep.subr.mxu0 0.0
        %3988 = vmatpush2.msra.mxu0 0.0
        %3989 = vmatprep.subr.mxu0 0.0
        %3990 = vmatpush2.msra.mxu0 0.0
        %3991 = vmatprep.subr.mxu0 0.0
        %3992 = vmatpush2.msra.mxu0 0.0
        %3993 = vmatprep.subr.mxu0 0.0
        %3994 = vmatpush2.msra.mxu0 0.0
        %3995 = vmatprep.subr.mxu0 0.0
        %3996 = vmatpush2.msra.mxu0 0.0
        %3997 = vmatprep.subr.mxu0 0.0
        %3998 = vmatpush2.msra.mxu0 0.0
        %3999 = vmatprep.subr.mxu0 0.0
        %4000 = vmatpush2.msra.mxu0 0.0
        %4001 = vmatprep.subr.mxu0 0.0
        %4002 = vmatpush2.msra.mxu0 0.0
        %4003 = vmatprep.subr.mxu0 0.0
        %4004 = vmatpush2.msra.mxu0 0.0
        %4005 = vmatprep.subr.mxu0 0.0
        %4006 = vmatpush2.msra.mxu0 0.0
        %4007 = vmatprep.subr.mxu0 0.0
        %4008 = vmatpush2.msra.mxu0 0.0
        %4009 = vmatprep.subr.mxu0 0.0
        %4010 = vmatpush2.msra.mxu0 0.0
        %4011 = vmatprep.subr.mxu0 0.0
        %4012 = vmatpush2.msra.mxu0 0.0
        %4013 = vmatprep.subr.mxu0 0.0
        %4014 = vmatpush2.msra.mxu0 0.0
        %4015 = vmatprep.subr.mxu0 0.0
        %4016 = vmatpush2.msra.mxu0 0.0
        %4017 = vmatprep.mubr.f32.mxu0 0.0
        %4018 = vmatmul.mubr.f32.gmra.mxu0 %v3624
        %v4019 = vpop.f32.mrf.mxu0
        %v4020 = vadd.f32 %v3949, %v4019
        %v4021 = vpop.f32.mrf.mxu0
        %v4022 = vadd.f32 %v3951, %v4021
        %4023 = vdwg.mxu0
        %4024 = vmatprep.subr.mxu0 %v474
        %4025 = vmatpush1.msra.mxu0 %v473
        %4026 = vmatprep.subr.mxu0 %v466
        %4027 = vmatpush1.msra.mxu0 %v465
        %4028 = vmatprep.subr.mxu0 %v458
        %4029 = vmatpush1.msra.mxu0 %v457
        %4030 = vmatprep.subr.mxu0 %v450
        %4031 = vmatpush1.msra.mxu0 %v449
        %4032 = vmatprep.subr.mxu0 %v442
        %4033 = vmatpush1.msra.mxu0 %v441
        %4034 = vmatprep.subr.mxu0 %v434
        %4035 = vmatpush1.msra.mxu0 %v433
        %4036 = vmatprep.subr.mxu0 %v426
        %4037 = vmatpush1.msra.mxu0 %v425
        %4038 = vmatprep.subr.mxu0 %v418
        %4039 = vmatpush1.msra.mxu0 %v417
        %4040 = vmatprep.subr.mxu0 %v410
        %4041 = vmatpush1.msra.mxu0 %v409
        %4042 = vmatprep.subr.mxu0 %v402
        %4043 = vmatpush1.msra.mxu0 %v401
        %4044 = vmatprep.subr.mxu0 %v394
        %4045 = vmatpush1.msra.mxu0 %v393
        %4046 = vmatprep.subr.mxu0 %v386
        %4047 = vmatpush1.msra.mxu0 %v385
        %4048 = vmatprep.subr.mxu0 %v378
        %4049 = vmatpush1.msra.mxu0 %v377
        %4050 = vmatprep.subr.mxu0 %v370
        %4051 = vmatpush1.msra.mxu0 %v369
        %4052 = vmatprep.subr.mxu0 %v362
        %4053 = vmatpush1.msra.mxu0 %v361
        %4054 = vmatprep.subr.mxu0 %v354
        %4055 = vmatpush1.msra.mxu0 %v353
        %4056 = vmatprep.subr.mxu0 %v602
        %4057 = vmatpush2.msra.mxu0 %v601
        %4058 = vmatprep.subr.mxu0 %v594
        %4059 = vmatpush2.msra.mxu0 %v593
        %4060 = vmatprep.subr.mxu0 %v586
        %4061 = vmatpush2.msra.mxu0 %v585
        %4062 = vmatprep.subr.mxu0 %v578
        %4063 = vmatpush2.msra.mxu0 %v577
        %4064 = vmatprep.subr.mxu0 %v570
        %4065 = vmatpush2.msra.mxu0 %v569
        %4066 = vmatprep.subr.mxu0 %v562
        %4067 = vmatpush2.msra.mxu0 %v561
        %4068 = vmatprep.subr.mxu0 %v554
        %4069 = vmatpush2.msra.mxu0 %v553
        %4070 = vmatprep.subr.mxu0 %v546
        %4071 = vmatpush2.msra.mxu0 %v545
        %4072 = vmatprep.subr.mxu0 %v538
        %4073 = vmatpush2.msra.mxu0 %v537
        %4074 = vmatprep.subr.mxu0 %v530
        %4075 = vmatpush2.msra.mxu0 %v529
        %4076 = vmatprep.subr.mxu0 %v522
        %4077 = vmatpush2.msra.mxu0 %v521
        %4078 = vmatprep.subr.mxu0 %v514
        %4079 = vmatpush2.msra.mxu0 %v513
        %4080 = vmatprep.subr.mxu0 %v506
        %4081 = vmatpush2.msra.mxu0 %v505
        %4082 = vmatprep.subr.mxu0 %v498
        %4083 = vmatpush2.msra.mxu0 %v497
        %4084 = vmatprep.subr.mxu0 %v490
        %4085 = vmatpush2.msra.mxu0 %v489
        %4086 = vmatprep.subr.mxu0 %v482
        %4087 = vmatpush2.msra.mxu0 %v481
        %4088 = vmatprep.mubr.f32.mxu0 %v3623
        %4089 = vmatmul.mubr.f32.gmra.mxu0 %v3738
        %v4090 = vpop.f32.mrf.mxu0
        %v4091 = vadd.f32 %v792, %v4090
        %v4092 = vpop.f32.mrf.mxu0
        %v4093 = vadd.f32 %v796, %v4092
        %4094 = vdwg.mxu0
        %4095 = vmatprep.subr.mxu0 %v730
        %4096 = vmatpush1.msra.mxu0 %v729
        %4097 = vmatprep.subr.mxu0 %v722
        %4098 = vmatpush1.msra.mxu0 %v721
        %4099 = vmatprep.subr.mxu0 %v714
        %4100 = vmatpush1.msra.mxu0 %v713
        %4101 = vmatprep.subr.mxu0 %v706
        %4102 = vmatpush1.msra.mxu0 %v705
        %4103 = vmatprep.subr.mxu0 %v698
        %4104 = vmatpush1.msra.mxu0 %v697
        %4105 = vmatprep.subr.mxu0 %v690
        %4106 = vmatpush1.msra.mxu0 %v689
        %4107 = vmatprep.subr.mxu0 %v682
        %4108 = vmatpush1.msra.mxu0 %v681
        %4109 = vmatprep.subr.mxu0 %v674
        %4110 = vmatpush1.msra.mxu0 %v673
        %4111 = vmatprep.subr.mxu0 %v666
        %4112 = vmatpush1.msra.mxu0 %v665
        %4113 = vmatprep.subr.mxu0 %v658
        %4114 = vmatpush1.msra.mxu0 %v657
        %4115 = vmatprep.subr.mxu0 %v650
        %4116 = vmatpush1.msra.mxu0 %v649
        %4117 = vmatprep.subr.mxu0 %v642
        %4118 = vmatpush1.msra.mxu0 %v641
        %4119 = vmatprep.subr.mxu0 %v634
        %4120 = vmatpush1.msra.mxu0 %v633
        %4121 = vmatprep.subr.mxu0 %v626
        %4122 = vmatpush1.msra.mxu0 %v625
        %4123 = vmatprep.subr.mxu0 %v618
        %4124 = vmatpush1.msra.mxu0 %v617
        %4125 = vmatprep.subr.mxu0 %v610
        %4126 = vmatpush1.msra.mxu0 %v609
        %4127 = vmatprep.subr.mxu0 0.0
        %4128 = vmatpush2.msra.mxu0 0.0
        %4129 = vmatprep.subr.mxu0 0.0
        %4130 = vmatpush2.msra.mxu0 0.0
        %4131 = vmatprep.subr.mxu0 0.0
        %4132 = vmatpush2.msra.mxu0 0.0
        %4133 = vmatprep.subr.mxu0 0.0
        %4134 = vmatpush2.msra.mxu0 0.0
        %4135 = vmatprep.subr.mxu0 0.0
        %4136 = vmatpush2.msra.mxu0 0.0
        %4137 = vmatprep.subr.mxu0 0.0
        %4138 = vmatpush2.msra.mxu0 0.0
        %4139 = vmatprep.subr.mxu0 0.0
        %4140 = vmatpush2.msra.mxu0 0.0
        %4141 = vmatprep.subr.mxu0 0.0
        %4142 = vmatpush2.msra.mxu0 0.0
        %4143 = vmatprep.subr.mxu0 0.0
        %4144 = vmatpush2.msra.mxu0 0.0
        %4145 = vmatprep.subr.mxu0 0.0
        %4146 = vmatpush2.msra.mxu0 0.0
        %4147 = vmatprep.subr.mxu0 0.0
        %4148 = vmatpush2.msra.mxu0 0.0
        %4149 = vmatprep.subr.mxu0 0.0
        %4150 = vmatpush2.msra.mxu0 0.0
        %4151 = vmatprep.subr.mxu0 0.0
        %4152 = vmatpush2.msra.mxu0 0.0
        %4153 = vmatprep.subr.mxu0 0.0
        %4154 = vmatpush2.msra.mxu0 0.0
        %4155 = vmatprep.subr.mxu0 0.0
        %4156 = vmatpush2.msra.mxu0 0.0
        %4157 = vmatprep.subr.mxu0 0.0
        %4158 = vmatpush2.msra.mxu0 0.0
        %4159 = vmatprep.mubr.f32.mxu0 0.0
        %4160 = vmatmul.mubr.f32.gmra.mxu0 %v3624
        %v4161 = vpop.f32.mrf.mxu0
        %v4162 = vadd.f32 %v4091, %v4161
        %v4163 = vpop.f32.mrf.mxu0
        %v4164 = vadd.f32 %v4093, %v4163
        %4165 = vdwg.mxu0
        %4166 = vmatprep.subr.mxu0 %v476
        %4167 = vmatpush1.msra.mxu0 %v475
        %4168 = vmatprep.subr.mxu0 %v468
        %4169 = vmatpush1.msra.mxu0 %v467
        %4170 = vmatprep.subr.mxu0 %v460
        %4171 = vmatpush1.msra.mxu0 %v459
        %4172 = vmatprep.subr.mxu0 %v452
        %4173 = vmatpush1.msra.mxu0 %v451
        %4174 = vmatprep.subr.mxu0 %v444
        %4175 = vmatpush1.msra.mxu0 %v443
        %4176 = vmatprep.subr.mxu0 %v436
        %4177 = vmatpush1.msra.mxu0 %v435
        %4178 = vmatprep.subr.mxu0 %v428
        %4179 = vmatpush1.msra.mxu0 %v427
        %4180 = vmatprep.subr.mxu0 %v420
        %4181 = vmatpush1.msra.mxu0 %v419
        %4182 = vmatprep.subr.mxu0 %v412
        %4183 = vmatpush1.msra.mxu0 %v411
        %4184 = vmatprep.subr.mxu0 %v404
        %4185 = vmatpush1.msra.mxu0 %v403
        %4186 = vmatprep.subr.mxu0 %v396
        %4187 = vmatpush1.msra.mxu0 %v395
        %4188 = vmatprep.subr.mxu0 %v388
        %4189 = vmatpush1.msra.mxu0 %v387
        %4190 = vmatprep.subr.mxu0 %v380
        %4191 = vmatpush1.msra.mxu0 %v379
        %4192 = vmatprep.subr.mxu0 %v372
        %4193 = vmatpush1.msra.mxu0 %v371
        %4194 = vmatprep.subr.mxu0 %v364
        %4195 = vmatpush1.msra.mxu0 %v363
        %4196 = vmatprep.subr.mxu0 %v356
        %4197 = vmatpush1.msra.mxu0 %v355
        %4198 = vmatprep.subr.mxu0 %v604
        %4199 = vmatpush2.msra.mxu0 %v603
        %4200 = vmatprep.subr.mxu0 %v596
        %4201 = vmatpush2.msra.mxu0 %v595
        %4202 = vmatprep.subr.mxu0 %v588
        %4203 = vmatpush2.msra.mxu0 %v587
        %4204 = vmatprep.subr.mxu0 %v580
        %4205 = vmatpush2.msra.mxu0 %v579
        %4206 = vmatprep.subr.mxu0 %v572
        %4207 = vmatpush2.msra.mxu0 %v571
        %4208 = vmatprep.subr.mxu0 %v564
        %4209 = vmatpush2.msra.mxu0 %v563
        %4210 = vmatprep.subr.mxu0 %v556
        %4211 = vmatpush2.msra.mxu0 %v555
        %4212 = vmatprep.subr.mxu0 %v548
        %4213 = vmatpush2.msra.mxu0 %v547
        %4214 = vmatprep.subr.mxu0 %v540
        %4215 = vmatpush2.msra.mxu0 %v539
        %4216 = vmatprep.subr.mxu0 %v532
        %4217 = vmatpush2.msra.mxu0 %v531
        %4218 = vmatprep.subr.mxu0 %v524
        %4219 = vmatpush2.msra.mxu0 %v523
        %4220 = vmatprep.subr.mxu0 %v516
        %4221 = vmatpush2.msra.mxu0 %v515
        %4222 = vmatprep.subr.mxu0 %v508
        %4223 = vmatpush2.msra.mxu0 %v507
        %4224 = vmatprep.subr.mxu0 %v500
        %4225 = vmatpush2.msra.mxu0 %v499
        %4226 = vmatprep.subr.mxu0 %v492
        %4227 = vmatpush2.msra.mxu0 %v491
        %4228 = vmatprep.subr.mxu0 %v484
        %4229 = vmatpush2.msra.mxu0 %v483
        %4230 = vmatprep.mubr.f32.mxu0 %v3623
        %4231 = vmatmul.mubr.f32.gmra.mxu0 %v3738
        %v4232 = vpop.f32.mrf.mxu0
        %v4233 = vadd.f32 %v800, %v4232
        %v4234 = vpop.f32.mrf.mxu0
        %v4235 = vadd.f32 %v804, %v4234
        %4236 = vdwg.mxu0
        %4237 = vmatprep.subr.mxu0 %v732
        %4238 = vmatpush1.msra.mxu0 %v731
        %4239 = vmatprep.subr.mxu0 %v724
        %4240 = vmatpush1.msra.mxu0 %v723
        %4241 = vmatprep.subr.mxu0 %v716
        %4242 = vmatpush1.msra.mxu0 %v715
        %4243 = vmatprep.subr.mxu0 %v708
        %4244 = vmatpush1.msra.mxu0 %v707
        %4245 = vmatprep.subr.mxu0 %v700
        %4246 = vmatpush1.msra.mxu0 %v699
        %4247 = vmatprep.subr.mxu0 %v692
        %4248 = vmatpush1.msra.mxu0 %v691
        %4249 = vmatprep.subr.mxu0 %v684
        %4250 = vmatpush1.msra.mxu0 %v683
        %4251 = vmatprep.subr.mxu0 %v676
        %4252 = vmatpush1.msra.mxu0 %v675
        %4253 = vmatprep.subr.mxu0 %v668
        %4254 = vmatpush1.msra.mxu0 %v667
        %4255 = vmatprep.subr.mxu0 %v660
        %4256 = vmatpush1.msra.mxu0 %v659
        %4257 = vmatprep.subr.mxu0 %v652
        %4258 = vmatpush1.msra.mxu0 %v651
        %4259 = vmatprep.subr.mxu0 %v644
        %4260 = vmatpush1.msra.mxu0 %v643
        %4261 = vmatprep.subr.mxu0 %v636
        %4262 = vmatpush1.msra.mxu0 %v635
        %4263 = vmatprep.subr.mxu0 %v628
        %4264 = vmatpush1.msra.mxu0 %v627
        %4265 = vmatprep.subr.mxu0 %v620
        %4266 = vmatpush1.msra.mxu0 %v619
        %4267 = vmatprep.subr.mxu0 %v612
        %4268 = vmatpush1.msra.mxu0 %v611
        %4269 = vmatprep.subr.mxu0 0.0
        %4270 = vmatpush2.msra.mxu0 0.0
        %4271 = vmatprep.subr.mxu0 0.0
        %4272 = vmatpush2.msra.mxu0 0.0
        %4273 = vmatprep.subr.mxu0 0.0
        %4274 = vmatpush2.msra.mxu0 0.0
        %4275 = vmatprep.subr.mxu0 0.0
        %4276 = vmatpush2.msra.mxu0 0.0
        %4277 = vmatprep.subr.mxu0 0.0
        %4278 = vmatpush2.msra.mxu0 0.0
        %4279 = vmatprep.subr.mxu0 0.0
        %4280 = vmatpush2.msra.mxu0 0.0
        %4281 = vmatprep.subr.mxu0 0.0
        %4282 = vmatpush2.msra.mxu0 0.0
        %4283 = vmatprep.subr.mxu0 0.0
        %4284 = vmatpush2.msra.mxu0 0.0
        %4285 = vmatprep.subr.mxu0 0.0
        %4286 = vmatpush2.msra.mxu0 0.0
        %4287 = vmatprep.subr.mxu0 0.0
        %4288 = vmatpush2.msra.mxu0 0.0
        %4289 = vmatprep.subr.mxu0 0.0
        %4290 = vmatpush2.msra.mxu0 0.0
        %4291 = vmatprep.subr.mxu0 0.0
        %4292 = vmatpush2.msra.mxu0 0.0
        %4293 = vmatprep.subr.mxu0 0.0
        %4294 = vmatpush2.msra.mxu0 0.0
        %4295 = vmatprep.subr.mxu0 0.0
        %4296 = vmatpush2.msra.mxu0 0.0
        %4297 = vmatprep.subr.mxu0 0.0
        %4298 = vmatpush2.msra.mxu0 0.0
        %4299 = vmatprep.subr.mxu0 0.0
        %4300 = vmatpush2.msra.mxu0 0.0
        %4301 = vmatprep.mubr.f32.mxu0 0.0
        %4302 = vmatmul.mubr.f32.gmra.mxu0 %v3624
        %v4303 = vpop.f32.mrf.mxu0
        %v4304 = vadd.f32 %v4233, %v4303
        %v4305 = vpop.f32.mrf.mxu0
        %v4306 = vadd.f32 %v4235, %v4305
        %4307 = vdwg.mxu0
        %v4308 = vxor.u32 %v3878, 2147483648
        %v4309 = vxor.u32 %v3880, 2147483648
        %v4310 = vmul.f32 %v4308, 1.442695
        %v4311 = vpow.pop %v4310
        %v4312 = vmul.f32 %v4309, 1.442695
        %v4313 = vpow.pop %v4312
        %v4314 = vadd.f32 %v4311, 1.0
        %v4315 = vadd.f32 %v4313, 1.0
        %v4316 = vrcp.pop %v4314
        %v4317 = vmul.f32 1.0, %v4316
        %v4318 = vrcp.pop %v4315
        %v4319 = vmul.f32 1.0, %v4318
        %v4320 = vxor.u32 %v4020, 2147483648
        %v4321 = vxor.u32 %v4022, 2147483648
        %v4322 = vmul.f32 %v4320, 1.442695
        %v4323 = vpow.pop %v4322
        %v4324 = vmul.f32 %v4321, 1.442695
        %v4325 = vpow.pop %v4324
        %v4326 = vadd.f32 %v4323, 1.0
        %v4327 = vadd.f32 %v4325, 1.0
        %v4328 = vrcp.pop %v4326
        %v4329 = vmul.f32 1.0, %v4328
        %v4330 = vrcp.pop %v4327
        %v4331 = vmul.f32 1.0, %v4330
        %v4332 = vtanh.pop %v4162
        %v4333 = vtanh.pop %v4164
        %v4334 = vxor.u32 %v4304, 2147483648
        %v4335 = vxor.u32 %v4306, 2147483648
        %v4336 = vmul.f32 %v4334, 1.442695
        %v4337 = vpow.pop %v4336
        %v4338 = vmul.f32 %v4335, 1.442695
        %v4339 = vpow.pop %v4338
        %v4340 = vadd.f32 %v4337, 1.0
        %v4341 = vadd.f32 %v4339, 1.0
        %v4342 = vrcp.pop %v4340
        %v4343 = vmul.f32 1.0, %v4342
        %v4344 = vrcp.pop %v4341
        %v4345 = vmul.f32 1.0, %v4344
        %v4346 = vmul.f32 %v4329, %v3619
        %v4347 = vmul.f32 %v4331, %v3620
        %v4348 = vmul.f32 %v4317, %v4332
        %v4349 = vmul.f32 %v4319, %v4333
        %v4350 = vadd.f32 %v4346, %v4348
        %v4351 = vadd.f32 %v4347, %v4349
        %v4352 = vtanh.pop %v4350
        %v4353 = vtanh.pop %v4351
        %v4354 = vmul.f32 %v4343, %v4352
        %v4355 = vmul.f32 %v4345, %v4353
        %v4358 = vcombine.low %v4354, %v4355
        %v4359 = vcombine.high %v4354, %v4355
        %v4361 = vunpack.c.l.s4 1966171168
        %v4362 = vunpack.c.0.s8 %v4361
        %v4363 = vlaneseq
        %v4364 = vshrl.u32 %v4363, 7
        %v4365 = vsub.s32 %v4362, %v4364
        %v4366 = vrot.slane %v4358, %v4365
        %v4368 = vunpack.c.l.s4 1966171168
        %v4369 = vunpack.c.0.s8 %v4368
        %v4370 = vlaneseq
        %v4371 = vshrl.u32 %v4370, 7
        %v4372 = vsub.s32 %v4369, %v4371
        %v4373 = vrot.slane %v4359, %v4372
        %v4374 = vcombine.high %v4366, %v4366
        %v4375 = vcombine.high %v4373, %v4373
        %v4377 = vunpack.c.l.s4 1966171168
        %v4378 = vunpack.c.0.s8 %v4377
        %v4379 = vlaneseq
        %v4380 = vshrl.u32 %v4379, 7
        %v4381 = vsub.s32 %v4378, %v4380
        %v4382 = vrot.slane %v4366, %v4381
        %v4384 = vunpack.c.l.s4 1966171168
        %v4385 = vunpack.c.0.s8 %v4384
        %v4386 = vlaneseq
        %v4387 = vshrl.u32 %v4386, 7
        %v4388 = vsub.s32 %v4385, %v4387
        %v4389 = vrot.slane %v4373, %v4388
        %v4391 = vunpack.c.l.s4 1966171168
        %v4392 = vunpack.c.0.s8 %v4391
        %v4393 = vlaneseq
        %v4394 = vshrl.u32 %v4393, 7
        %v4395 = vsub.s32 %v4392, %v4394
        %v4396 = vrot.slane %v4374, %v4395
        %v4398 = vunpack.c.l.s4 1966171168
        %v4399 = vunpack.c.0.s8 %v4398
        %v4400 = vlaneseq
        %v4401 = vshrl.u32 %v4400, 7
        %v4402 = vsub.s32 %v4399, %v4401
        %v4403 = vrot.slane %v4375, %v4402
        %v4404 = vcombine.high %v4382, %v4382
        %v4405 = vcombine.high %v4389, %v4389
        %v4406 = vcombine.high %v4396, %v4396
        %v4407 = vcombine.high %v4403, %v4403
        %s4416 = scalar_lea.vmem [#allocation4], 4
        %4417 = vst.msk [vmem:[%s4416] ss:$8 sm:$0x3] %vm1492, %v4382
        %4418 = vst.msk [vmem:[%s4416] ss:$8 sm:$0x0] %vm1492, %v4382
        %s4419 = scalar_lea.vmem [#allocation4], 20
        %4420 = vst.msk [vmem:[%s4419] ss:$8 sm:$0x3] %vm1492, %v4396
        %4421 = vst.msk [vmem:[%s4419] ss:$8 sm:$0x0] %vm1492, %v4396
        %s4422 = scalar_lea.vmem [#allocation4], 36
        %4423 = vst.msk [vmem:[%s4422] ss:$8 sm:$0x3] %vm1492, %v4404
        %4424 = vst.msk [vmem:[%s4422] ss:$8 sm:$0x0] %vm1492, %v4404
        %s4425 = scalar_lea.vmem [#allocation4], 52
        %4426 = vst.msk [vmem:[%s4425] ss:$8 sm:$0x3] %vm1492, %v4406
        %4427 = vst.msk [vmem:[%s4425] ss:$8 sm:$0x0] %vm1492, %v4406
        %s4428 = scalar_lea.vmem [#allocation4], 68
        %4429 = vst.msk [vmem:[%s4428] ss:$8 sm:$0x3] %vm1492, %v4389
        %4430 = vst.msk [vmem:[%s4428] ss:$8 sm:$0x0] %vm1492, %v4389
        %s4431 = scalar_lea.vmem [#allocation4], 84
        %4432 = vst.msk [vmem:[%s4431] ss:$8 sm:$0x3] %vm1492, %v4403
        %4433 = vst.msk [vmem:[%s4431] ss:$8 sm:$0x0] %vm1492, %v4403
        %s4434 = scalar_lea.vmem [#allocation4], 100
        %4435 = vst.msk [vmem:[%s4434] ss:$8 sm:$0x3] %vm1492, %v4405
        %4436 = vst.msk [vmem:[%s4434] ss:$8 sm:$0x0] %vm1492, %v4405
        %s4437 = scalar_lea.vmem [#allocation4], 116
        %4438 = vst.msk [vmem:[%s4437] ss:$8 sm:$0x3] %vm1492, %v4407
        %4439 = vst.msk [vmem:[%s4437] ss:$8 sm:$0x0] %vm1492, %v4407
        %v4440 = vld [vmem:[%s297 + $0x5] sm:$0x1]
        %v4441 = vld [vmem:[%s297 + $0xd] sm:$0x1]
        %v4442 = vld [vmem:[%s297 + $0x15] sm:$0x1]
        %v4443 = vld [vmem:[%s297 + $0x1d] sm:$0x1]
        %v4444 = vld [vmem:[%s297 + $0x25] sm:$0x1]
        %v4445 = vld [vmem:[%s297 + $0x2d] sm:$0x1]
        %v4446 = vld [vmem:[%s297 + $0x35] sm:$0x1]
        %v4447 = vld [vmem:[%s297 + $0x3d] sm:$0x1]
        %v4456 = vrot.slane %v4441, 7
        %v4457 = vsel %vm751, %v4456, %v4440
        %v4458 = vrot.slane %v4442, 6
        %v4459 = vsel %vm754, %v4458, %v4457
        %v4460 = vrot.slane %v4443, 5
        %v4461 = vsel %vm757, %v4460, %v4459
        %v4462 = vrot.slane %v4444, 4
        %v4463 = vsel %vm760, %v4462, %v4461
        %v4464 = vrot.slane %v4445, 3
        %v4465 = vsel %vm763, %v4464, %v4463
        %v4466 = vrot.slane %v4446, 2
        %v4467 = vsel %vm766, %v4466, %v4465
        %v4468 = vrot.slane %v4447, 1
        %v4469 = vsel %vm769, %v4468, %v4467
        %4471 = vmatprep.subr.mxu0 %v470
        %4472 = vmatpush1.msra.mxu0 %v469
        %4473 = vmatprep.subr.mxu0 %v462
        %4474 = vmatpush1.msra.mxu0 %v461
        %4475 = vmatprep.subr.mxu0 %v454
        %4476 = vmatpush1.msra.mxu0 %v453
        %4477 = vmatprep.subr.mxu0 %v446
        %4478 = vmatpush1.msra.mxu0 %v445
        %4479 = vmatprep.subr.mxu0 %v438
        %4480 = vmatpush1.msra.mxu0 %v437
        %4481 = vmatprep.subr.mxu0 %v430
        %4482 = vmatpush1.msra.mxu0 %v429
        %4483 = vmatprep.subr.mxu0 %v422
        %4484 = vmatpush1.msra.mxu0 %v421
        %4485 = vmatprep.subr.mxu0 %v414
        %4486 = vmatpush1.msra.mxu0 %v413
        %4487 = vmatprep.subr.mxu0 %v406
        %4488 = vmatpush1.msra.mxu0 %v405
        %4489 = vmatprep.subr.mxu0 %v398
        %4490 = vmatpush1.msra.mxu0 %v397
        %4491 = vmatprep.subr.mxu0 %v390
        %4492 = vmatpush1.msra.mxu0 %v389
        %4493 = vmatprep.subr.mxu0 %v382
        %4494 = vmatpush1.msra.mxu0 %v381
        %4495 = vmatprep.subr.mxu0 %v374
        %4496 = vmatpush1.msra.mxu0 %v373
        %4497 = vmatprep.subr.mxu0 %v366
        %4498 = vmatpush1.msra.mxu0 %v365
        %4499 = vmatprep.subr.mxu0 %v358
        %4500 = vmatpush1.msra.mxu0 %v357
        %4501 = vmatprep.subr.mxu0 %v350
        %4502 = vmatpush1.msra.mxu0 %v349
        %4503 = vmatprep.subr.mxu0 %v598
        %4504 = vmatpush2.msra.mxu0 %v597
        %4505 = vmatprep.subr.mxu0 %v590
        %4506 = vmatpush2.msra.mxu0 %v589
        %4507 = vmatprep.subr.mxu0 %v582
        %4508 = vmatpush2.msra.mxu0 %v581
        %4509 = vmatprep.subr.mxu0 %v574
        %4510 = vmatpush2.msra.mxu0 %v573
        %4511 = vmatprep.subr.mxu0 %v566
        %4512 = vmatpush2.msra.mxu0 %v565
        %4513 = vmatprep.subr.mxu0 %v558
        %4514 = vmatpush2.msra.mxu0 %v557
        %4515 = vmatprep.subr.mxu0 %v550
        %4516 = vmatpush2.msra.mxu0 %v549
        %4517 = vmatprep.subr.mxu0 %v542
        %4518 = vmatpush2.msra.mxu0 %v541
        %4519 = vmatprep.subr.mxu0 %v534
        %4520 = vmatpush2.msra.mxu0 %v533
        %4521 = vmatprep.subr.mxu0 %v526
        %4522 = vmatpush2.msra.mxu0 %v525
        %4523 = vmatprep.subr.mxu0 %v518
        %4524 = vmatpush2.msra.mxu0 %v517
        %4525 = vmatprep.subr.mxu0 %v510
        %4526 = vmatpush2.msra.mxu0 %v509
        %4527 = vmatprep.subr.mxu0 %v502
        %4528 = vmatpush2.msra.mxu0 %v501
        %4529 = vmatprep.subr.mxu0 %v494
        %4530 = vmatpush2.msra.mxu0 %v493
        %4531 = vmatprep.subr.mxu0 %v486
        %4532 = vmatpush2.msra.mxu0 %v485
        %4533 = vmatprep.subr.mxu0 %v478
        %4534 = vmatpush2.msra.mxu0 %v477
        %4535 = vmatprep.mubr.f32.mxu0 %v4354
        %4536 = vmatmul.mubr.f32.gmra.mxu0 %v4469
        %v4537 = vpop.f32.mrf.mxu0
        %v4538 = vadd.f32 %v776, %v4537
        %v4539 = vpop.f32.mrf.mxu0
        %v4540 = vadd.f32 %v780, %v4539
        %4541 = vdwg.mxu0
        %4542 = vmatprep.subr.mxu0 %v726
        %4543 = vmatpush1.msra.mxu0 %v725
        %4544 = vmatprep.subr.mxu0 %v718
        %4545 = vmatpush1.msra.mxu0 %v717
        %4546 = vmatprep.subr.mxu0 %v710
        %4547 = vmatpush1.msra.mxu0 %v709
        %4548 = vmatprep.subr.mxu0 %v702
        %4549 = vmatpush1.msra.mxu0 %v701
        %4550 = vmatprep.subr.mxu0 %v694
        %4551 = vmatpush1.msra.mxu0 %v693
        %4552 = vmatprep.subr.mxu0 %v686
        %4553 = vmatpush1.msra.mxu0 %v685
        %4554 = vmatprep.subr.mxu0 %v678
        %4555 = vmatpush1.msra.mxu0 %v677
        %4556 = vmatprep.subr.mxu0 %v670
        %4557 = vmatpush1.msra.mxu0 %v669
        %4558 = vmatprep.subr.mxu0 %v662
        %4559 = vmatpush1.msra.mxu0 %v661
        %4560 = vmatprep.subr.mxu0 %v654
        %4561 = vmatpush1.msra.mxu0 %v653
        %4562 = vmatprep.subr.mxu0 %v646
        %4563 = vmatpush1.msra.mxu0 %v645
        %4564 = vmatprep.subr.mxu0 %v638
        %4565 = vmatpush1.msra.mxu0 %v637
        %4566 = vmatprep.subr.mxu0 %v630
        %4567 = vmatpush1.msra.mxu0 %v629
        %4568 = vmatprep.subr.mxu0 %v622
        %4569 = vmatpush1.msra.mxu0 %v621
        %4570 = vmatprep.subr.mxu0 %v614
        %4571 = vmatpush1.msra.mxu0 %v613
        %4572 = vmatprep.subr.mxu0 %v606
        %4573 = vmatpush1.msra.mxu0 %v605
        %4574 = vmatprep.subr.mxu0 0.0
        %4575 = vmatpush2.msra.mxu0 0.0
        %4576 = vmatprep.subr.mxu0 0.0
        %4577 = vmatpush2.msra.mxu0 0.0
        %4578 = vmatprep.subr.mxu0 0.0
        %4579 = vmatpush2.msra.mxu0 0.0
        %4580 = vmatprep.subr.mxu0 0.0
        %4581 = vmatpush2.msra.mxu0 0.0
        %4582 = vmatprep.subr.mxu0 0.0
        %4583 = vmatpush2.msra.mxu0 0.0
        %4584 = vmatprep.subr.mxu0 0.0
        %4585 = vmatpush2.msra.mxu0 0.0
        %4586 = vmatprep.subr.mxu0 0.0
        %4587 = vmatpush2.msra.mxu0 0.0
        %4588 = vmatprep.subr.mxu0 0.0
        %4589 = vmatpush2.msra.mxu0 0.0
        %4590 = vmatprep.subr.mxu0 0.0
        %4591 = vmatpush2.msra.mxu0 0.0
        %4592 = vmatprep.subr.mxu0 0.0
        %4593 = vmatpush2.msra.mxu0 0.0
        %4594 = vmatprep.subr.mxu0 0.0
        %4595 = vmatpush2.msra.mxu0 0.0
        %4596 = vmatprep.subr.mxu0 0.0
        %4597 = vmatpush2.msra.mxu0 0.0
        %4598 = vmatprep.subr.mxu0 0.0
        %4599 = vmatpush2.msra.mxu0 0.0
        %4600 = vmatprep.subr.mxu0 0.0
        %4601 = vmatpush2.msra.mxu0 0.0
        %4602 = vmatprep.subr.mxu0 0.0
        %4603 = vmatpush2.msra.mxu0 0.0
        %4604 = vmatprep.subr.mxu0 0.0
        %4605 = vmatpush2.msra.mxu0 0.0
        %4606 = vmatprep.mubr.f32.mxu0 0.0
        %4607 = vmatmul.mubr.f32.gmra.mxu0 %v4355
        %v4608 = vpop.f32.mrf.mxu0
        %v4609 = vadd.f32 %v4538, %v4608
        %v4610 = vpop.f32.mrf.mxu0
        %v4611 = vadd.f32 %v4540, %v4610
        %4612 = vdwg.mxu0
        %4613 = vmatprep.subr.mxu0 %v472
        %4614 = vmatpush1.msra.mxu0 %v471
        %4615 = vmatprep.subr.mxu0 %v464
        %4616 = vmatpush1.msra.mxu0 %v463
        %4617 = vmatprep.subr.mxu0 %v456
        %4618 = vmatpush1.msra.mxu0 %v455
        %4619 = vmatprep.subr.mxu0 %v448
        %4620 = vmatpush1.msra.mxu0 %v447
        %4621 = vmatprep.subr.mxu0 %v440
        %4622 = vmatpush1.msra.mxu0 %v439
        %4623 = vmatprep.subr.mxu0 %v432
        %4624 = vmatpush1.msra.mxu0 %v431
        %4625 = vmatprep.subr.mxu0 %v424
        %4626 = vmatpush1.msra.mxu0 %v423
        %4627 = vmatprep.subr.mxu0 %v416
        %4628 = vmatpush1.msra.mxu0 %v415
        %4629 = vmatprep.subr.mxu0 %v408
        %4630 = vmatpush1.msra.mxu0 %v407
        %4631 = vmatprep.subr.mxu0 %v400
        %4632 = vmatpush1.msra.mxu0 %v399
        %4633 = vmatprep.subr.mxu0 %v392
        %4634 = vmatpush1.msra.mxu0 %v391
        %4635 = vmatprep.subr.mxu0 %v384
        %4636 = vmatpush1.msra.mxu0 %v383
        %4637 = vmatprep.subr.mxu0 %v376
        %4638 = vmatpush1.msra.mxu0 %v375
        %4639 = vmatprep.subr.mxu0 %v368
        %4640 = vmatpush1.msra.mxu0 %v367
        %4641 = vmatprep.subr.mxu0 %v360
        %4642 = vmatpush1.msra.mxu0 %v359
        %4643 = vmatprep.subr.mxu0 %v352
        %4644 = vmatpush1.msra.mxu0 %v351
        %4645 = vmatprep.subr.mxu0 %v600
        %4646 = vmatpush2.msra.mxu0 %v599
        %4647 = vmatprep.subr.mxu0 %v592
        %4648 = vmatpush2.msra.mxu0 %v591
        %4649 = vmatprep.subr.mxu0 %v584
        %4650 = vmatpush2.msra.mxu0 %v583
        %4651 = vmatprep.subr.mxu0 %v576
        %4652 = vmatpush2.msra.mxu0 %v575
        %4653 = vmatprep.subr.mxu0 %v568
        %4654 = vmatpush2.msra.mxu0 %v567
        %4655 = vmatprep.subr.mxu0 %v560
        %4656 = vmatpush2.msra.mxu0 %v559
        %4657 = vmatprep.subr.mxu0 %v552
        %4658 = vmatpush2.msra.mxu0 %v551
        %4659 = vmatprep.subr.mxu0 %v544
        %4660 = vmatpush2.msra.mxu0 %v543
        %4661 = vmatprep.subr.mxu0 %v536
        %4662 = vmatpush2.msra.mxu0 %v535
        %4663 = vmatprep.subr.mxu0 %v528
        %4664 = vmatpush2.msra.mxu0 %v527
        %4665 = vmatprep.subr.mxu0 %v520
        %4666 = vmatpush2.msra.mxu0 %v519
        %4667 = vmatprep.subr.mxu0 %v512
        %4668 = vmatpush2.msra.mxu0 %v511
        %4669 = vmatprep.subr.mxu0 %v504
        %4670 = vmatpush2.msra.mxu0 %v503
        %4671 = vmatprep.subr.mxu0 %v496
        %4672 = vmatpush2.msra.mxu0 %v495
        %4673 = vmatprep.subr.mxu0 %v488
        %4674 = vmatpush2.msra.mxu0 %v487
        %4675 = vmatprep.subr.mxu0 %v480
        %4676 = vmatpush2.msra.mxu0 %v479
        %4677 = vmatprep.mubr.f32.mxu0 %v4354
        %4678 = vmatmul.mubr.f32.gmra.mxu0 %v4469
        %v4679 = vpop.f32.mrf.mxu0
        %v4680 = vadd.f32 %v784, %v4679
        %v4681 = vpop.f32.mrf.mxu0
        %v4682 = vadd.f32 %v788, %v4681
        %4683 = vdwg.mxu0
        %4684 = vmatprep.subr.mxu0 %v728
        %4685 = vmatpush1.msra.mxu0 %v727
        %4686 = vmatprep.subr.mxu0 %v720
        %4687 = vmatpush1.msra.mxu0 %v719
        %4688 = vmatprep.subr.mxu0 %v712
        %4689 = vmatpush1.msra.mxu0 %v711
        %4690 = vmatprep.subr.mxu0 %v704
        %4691 = vmatpush1.msra.mxu0 %v703
        %4692 = vmatprep.subr.mxu0 %v696
        %4693 = vmatpush1.msra.mxu0 %v695
        %4694 = vmatprep.subr.mxu0 %v688
        %4695 = vmatpush1.msra.mxu0 %v687
        %4696 = vmatprep.subr.mxu0 %v680
        %4697 = vmatpush1.msra.mxu0 %v679
        %4698 = vmatprep.subr.mxu0 %v672
        %4699 = vmatpush1.msra.mxu0 %v671
        %4700 = vmatprep.subr.mxu0 %v664
        %4701 = vmatpush1.msra.mxu0 %v663
        %4702 = vmatprep.subr.mxu0 %v656
        %4703 = vmatpush1.msra.mxu0 %v655
        %4704 = vmatprep.subr.mxu0 %v648
        %4705 = vmatpush1.msra.mxu0 %v647
        %4706 = vmatprep.subr.mxu0 %v640
        %4707 = vmatpush1.msra.mxu0 %v639
        %4708 = vmatprep.subr.mxu0 %v632
        %4709 = vmatpush1.msra.mxu0 %v631
        %4710 = vmatprep.subr.mxu0 %v624
        %4711 = vmatpush1.msra.mxu0 %v623
        %4712 = vmatprep.subr.mxu0 %v616
        %4713 = vmatpush1.msra.mxu0 %v615
        %4714 = vmatprep.subr.mxu0 %v608
        %4715 = vmatpush1.msra.mxu0 %v607
        %4716 = vmatprep.subr.mxu0 0.0
        %4717 = vmatpush2.msra.mxu0 0.0
        %4718 = vmatprep.subr.mxu0 0.0
        %4719 = vmatpush2.msra.mxu0 0.0
        %4720 = vmatprep.subr.mxu0 0.0
        %4721 = vmatpush2.msra.mxu0 0.0
        %4722 = vmatprep.subr.mxu0 0.0
        %4723 = vmatpush2.msra.mxu0 0.0
        %4724 = vmatprep.subr.mxu0 0.0
        %4725 = vmatpush2.msra.mxu0 0.0
        %4726 = vmatprep.subr.mxu0 0.0
        %4727 = vmatpush2.msra.mxu0 0.0
        %4728 = vmatprep.subr.mxu0 0.0
        %4729 = vmatpush2.msra.mxu0 0.0
        %4730 = vmatprep.subr.mxu0 0.0
        %4731 = vmatpush2.msra.mxu0 0.0
        %4732 = vmatprep.subr.mxu0 0.0
        %4733 = vmatpush2.msra.mxu0 0.0
        %4734 = vmatprep.subr.mxu0 0.0
        %4735 = vmatpush2.msra.mxu0 0.0
        %4736 = vmatprep.subr.mxu0 0.0
        %4737 = vmatpush2.msra.mxu0 0.0
        %4738 = vmatprep.subr.mxu0 0.0
        %4739 = vmatpush2.msra.mxu0 0.0
        %4740 = vmatprep.subr.mxu0 0.0
        %4741 = vmatpush2.msra.mxu0 0.0
        %4742 = vmatprep.subr.mxu0 0.0
        %4743 = vmatpush2.msra.mxu0 0.0
        %4744 = vmatprep.subr.mxu0 0.0
        %4745 = vmatpush2.msra.mxu0 0.0
        %4746 = vmatprep.subr.mxu0 0.0
        %4747 = vmatpush2.msra.mxu0 0.0
        %4748 = vmatprep.mubr.f32.mxu0 0.0
        %4749 = vmatmul.mubr.f32.gmra.mxu0 %v4355
        %v4750 = vpop.f32.mrf.mxu0
        %v4751 = vadd.f32 %v4680, %v4750
        %v4752 = vpop.f32.mrf.mxu0
        %v4753 = vadd.f32 %v4682, %v4752
        %4754 = vdwg.mxu0
        %4755 = vmatprep.subr.mxu0 %v474
        %4756 = vmatpush1.msra.mxu0 %v473
        %4757 = vmatprep.subr.mxu0 %v466
        %4758 = vmatpush1.msra.mxu0 %v465
        %4759 = vmatprep.subr.mxu0 %v458
        %4760 = vmatpush1.msra.mxu0 %v457
        %4761 = vmatprep.subr.mxu0 %v450
        %4762 = vmatpush1.msra.mxu0 %v449
        %4763 = vmatprep.subr.mxu0 %v442
        %4764 = vmatpush1.msra.mxu0 %v441
        %4765 = vmatprep.subr.mxu0 %v434
        %4766 = vmatpush1.msra.mxu0 %v433
        %4767 = vmatprep.subr.mxu0 %v426
        %4768 = vmatpush1.msra.mxu0 %v425
        %4769 = vmatprep.subr.mxu0 %v418
        %4770 = vmatpush1.msra.mxu0 %v417
        %4771 = vmatprep.subr.mxu0 %v410
        %4772 = vmatpush1.msra.mxu0 %v409
        %4773 = vmatprep.subr.mxu0 %v402
        %4774 = vmatpush1.msra.mxu0 %v401
        %4775 = vmatprep.subr.mxu0 %v394
        %4776 = vmatpush1.msra.mxu0 %v393
        %4777 = vmatprep.subr.mxu0 %v386
        %4778 = vmatpush1.msra.mxu0 %v385
        %4779 = vmatprep.subr.mxu0 %v378
        %4780 = vmatpush1.msra.mxu0 %v377
        %4781 = vmatprep.subr.mxu0 %v370
        %4782 = vmatpush1.msra.mxu0 %v369
        %4783 = vmatprep.subr.mxu0 %v362
        %4784 = vmatpush1.msra.mxu0 %v361
        %4785 = vmatprep.subr.mxu0 %v354
        %4786 = vmatpush1.msra.mxu0 %v353
        %4787 = vmatprep.subr.mxu0 %v602
        %4788 = vmatpush2.msra.mxu0 %v601
        %4789 = vmatprep.subr.mxu0 %v594
        %4790 = vmatpush2.msra.mxu0 %v593
        %4791 = vmatprep.subr.mxu0 %v586
        %4792 = vmatpush2.msra.mxu0 %v585
        %4793 = vmatprep.subr.mxu0 %v578
        %4794 = vmatpush2.msra.mxu0 %v577
        %4795 = vmatprep.subr.mxu0 %v570
        %4796 = vmatpush2.msra.mxu0 %v569
        %4797 = vmatprep.subr.mxu0 %v562
        %4798 = vmatpush2.msra.mxu0 %v561
        %4799 = vmatprep.subr.mxu0 %v554
        %4800 = vmatpush2.msra.mxu0 %v553
        %4801 = vmatprep.subr.mxu0 %v546
        %4802 = vmatpush2.msra.mxu0 %v545
        %4803 = vmatprep.subr.mxu0 %v538
        %4804 = vmatpush2.msra.mxu0 %v537
        %4805 = vmatprep.subr.mxu0 %v530
        %4806 = vmatpush2.msra.mxu0 %v529
        %4807 = vmatprep.subr.mxu0 %v522
        %4808 = vmatpush2.msra.mxu0 %v521
        %4809 = vmatprep.subr.mxu0 %v514
        %4810 = vmatpush2.msra.mxu0 %v513
        %4811 = vmatprep.subr.mxu0 %v506
        %4812 = vmatpush2.msra.mxu0 %v505
        %4813 = vmatprep.subr.mxu0 %v498
        %4814 = vmatpush2.msra.mxu0 %v497
        %4815 = vmatprep.subr.mxu0 %v490
        %4816 = vmatpush2.msra.mxu0 %v489
        %4817 = vmatprep.subr.mxu0 %v482
        %4818 = vmatpush2.msra.mxu0 %v481
        %4819 = vmatprep.mubr.f32.mxu0 %v4354
        %4820 = vmatmul.mubr.f32.gmra.mxu0 %v4469
        %v4821 = vpop.f32.mrf.mxu0
        %v4822 = vadd.f32 %v792, %v4821
        %v4823 = vpop.f32.mrf.mxu0
        %v4824 = vadd.f32 %v796, %v4823
        %4825 = vdwg.mxu0
        %4826 = vmatprep.subr.mxu0 %v730
        %4827 = vmatpush1.msra.mxu0 %v729
        %4828 = vmatprep.subr.mxu0 %v722
        %4829 = vmatpush1.msra.mxu0 %v721
        %4830 = vmatprep.subr.mxu0 %v714
        %4831 = vmatpush1.msra.mxu0 %v713
        %4832 = vmatprep.subr.mxu0 %v706
        %4833 = vmatpush1.msra.mxu0 %v705
        %4834 = vmatprep.subr.mxu0 %v698
        %4835 = vmatpush1.msra.mxu0 %v697
        %4836 = vmatprep.subr.mxu0 %v690
        %4837 = vmatpush1.msra.mxu0 %v689
        %4838 = vmatprep.subr.mxu0 %v682
        %4839 = vmatpush1.msra.mxu0 %v681
        %4840 = vmatprep.subr.mxu0 %v674
        %4841 = vmatpush1.msra.mxu0 %v673
        %4842 = vmatprep.subr.mxu0 %v666
        %4843 = vmatpush1.msra.mxu0 %v665
        %4844 = vmatprep.subr.mxu0 %v658
        %4845 = vmatpush1.msra.mxu0 %v657
        %4846 = vmatprep.subr.mxu0 %v650
        %4847 = vmatpush1.msra.mxu0 %v649
        %4848 = vmatprep.subr.mxu0 %v642
        %4849 = vmatpush1.msra.mxu0 %v641
        %4850 = vmatprep.subr.mxu0 %v634
        %4851 = vmatpush1.msra.mxu0 %v633
        %4852 = vmatprep.subr.mxu0 %v626
        %4853 = vmatpush1.msra.mxu0 %v625
        %4854 = vmatprep.subr.mxu0 %v618
        %4855 = vmatpush1.msra.mxu0 %v617
        %4856 = vmatprep.subr.mxu0 %v610
        %4857 = vmatpush1.msra.mxu0 %v609
        %4858 = vmatprep.subr.mxu0 0.0
        %4859 = vmatpush2.msra.mxu0 0.0
        %4860 = vmatprep.subr.mxu0 0.0
        %4861 = vmatpush2.msra.mxu0 0.0
        %4862 = vmatprep.subr.mxu0 0.0
        %4863 = vmatpush2.msra.mxu0 0.0
        %4864 = vmatprep.subr.mxu0 0.0
        %4865 = vmatpush2.msra.mxu0 0.0
        %4866 = vmatprep.subr.mxu0 0.0
        %4867 = vmatpush2.msra.mxu0 0.0
        %4868 = vmatprep.subr.mxu0 0.0
        %4869 = vmatpush2.msra.mxu0 0.0
        %4870 = vmatprep.subr.mxu0 0.0
        %4871 = vmatpush2.msra.mxu0 0.0
        %4872 = vmatprep.subr.mxu0 0.0
        %4873 = vmatpush2.msra.mxu0 0.0
        %4874 = vmatprep.subr.mxu0 0.0
        %4875 = vmatpush2.msra.mxu0 0.0
        %4876 = vmatprep.subr.mxu0 0.0
        %4877 = vmatpush2.msra.mxu0 0.0
        %4878 = vmatprep.subr.mxu0 0.0
        %4879 = vmatpush2.msra.mxu0 0.0
        %4880 = vmatprep.subr.mxu0 0.0
        %4881 = vmatpush2.msra.mxu0 0.0
        %4882 = vmatprep.subr.mxu0 0.0
        %4883 = vmatpush2.msra.mxu0 0.0
        %4884 = vmatprep.subr.mxu0 0.0
        %4885 = vmatpush2.msra.mxu0 0.0
        %4886 = vmatprep.subr.mxu0 0.0
        %4887 = vmatpush2.msra.mxu0 0.0
        %4888 = vmatprep.subr.mxu0 0.0
        %4889 = vmatpush2.msra.mxu0 0.0
        %4890 = vmatprep.mubr.f32.mxu0 0.0
        %4891 = vmatmul.mubr.f32.gmra.mxu0 %v4355
        %v4892 = vpop.f32.mrf.mxu0
        %v4893 = vadd.f32 %v4822, %v4892
        %v4894 = vpop.f32.mrf.mxu0
        %v4895 = vadd.f32 %v4824, %v4894
        %4896 = vdwg.mxu0
        %4897 = vmatprep.subr.mxu0 %v476
        %4898 = vmatpush1.msra.mxu0 %v475
        %4899 = vmatprep.subr.mxu0 %v468
        %4900 = vmatpush1.msra.mxu0 %v467
        %4901 = vmatprep.subr.mxu0 %v460
        %4902 = vmatpush1.msra.mxu0 %v459
        %4903 = vmatprep.subr.mxu0 %v452
        %4904 = vmatpush1.msra.mxu0 %v451
        %4905 = vmatprep.subr.mxu0 %v444
        %4906 = vmatpush1.msra.mxu0 %v443
        %4907 = vmatprep.subr.mxu0 %v436
        %4908 = vmatpush1.msra.mxu0 %v435
        %4909 = vmatprep.subr.mxu0 %v428
        %4910 = vmatpush1.msra.mxu0 %v427
        %4911 = vmatprep.subr.mxu0 %v420
        %4912 = vmatpush1.msra.mxu0 %v419
        %4913 = vmatprep.subr.mxu0 %v412
        %4914 = vmatpush1.msra.mxu0 %v411
        %4915 = vmatprep.subr.mxu0 %v404
        %4916 = vmatpush1.msra.mxu0 %v403
        %4917 = vmatprep.subr.mxu0 %v396
        %4918 = vmatpush1.msra.mxu0 %v395
        %4919 = vmatprep.subr.mxu0 %v388
        %4920 = vmatpush1.msra.mxu0 %v387
        %4921 = vmatprep.subr.mxu0 %v380
        %4922 = vmatpush1.msra.mxu0 %v379
        %4923 = vmatprep.subr.mxu0 %v372
        %4924 = vmatpush1.msra.mxu0 %v371
        %4925 = vmatprep.subr.mxu0 %v364
        %4926 = vmatpush1.msra.mxu0 %v363
        %4927 = vmatprep.subr.mxu0 %v356
        %4928 = vmatpush1.msra.mxu0 %v355
        %4929 = vmatprep.subr.mxu0 %v604
        %4930 = vmatpush2.msra.mxu0 %v603
        %4931 = vmatprep.subr.mxu0 %v596
        %4932 = vmatpush2.msra.mxu0 %v595
        %4933 = vmatprep.subr.mxu0 %v588
        %4934 = vmatpush2.msra.mxu0 %v587
        %4935 = vmatprep.subr.mxu0 %v580
        %4936 = vmatpush2.msra.mxu0 %v579
        %4937 = vmatprep.subr.mxu0 %v572
        %4938 = vmatpush2.msra.mxu0 %v571
        %4939 = vmatprep.subr.mxu0 %v564
        %4940 = vmatpush2.msra.mxu0 %v563
        %4941 = vmatprep.subr.mxu0 %v556
        %4942 = vmatpush2.msra.mxu0 %v555
        %4943 = vmatprep.subr.mxu0 %v548
        %4944 = vmatpush2.msra.mxu0 %v547
        %4945 = vmatprep.subr.mxu0 %v540
        %4946 = vmatpush2.msra.mxu0 %v539
        %4947 = vmatprep.subr.mxu0 %v532
        %4948 = vmatpush2.msra.mxu0 %v531
        %4949 = vmatprep.subr.mxu0 %v524
        %4950 = vmatpush2.msra.mxu0 %v523
        %4951 = vmatprep.subr.mxu0 %v516
        %4952 = vmatpush2.msra.mxu0 %v515
        %4953 = vmatprep.subr.mxu0 %v508
        %4954 = vmatpush2.msra.mxu0 %v507
        %4955 = vmatprep.subr.mxu0 %v500
        %4956 = vmatpush2.msra.mxu0 %v499
        %4957 = vmatprep.subr.mxu0 %v492
        %4958 = vmatpush2.msra.mxu0 %v491
        %4959 = vmatprep.subr.mxu0 %v484
        %4960 = vmatpush2.msra.mxu0 %v483
        %4961 = vmatprep.mubr.f32.mxu0 %v4354
        %4962 = vmatmul.mubr.f32.gmra.mxu0 %v4469
        %v4963 = vpop.f32.mrf.mxu0
        %v4964 = vadd.f32 %v800, %v4963
        %v4965 = vpop.f32.mrf.mxu0
        %v4966 = vadd.f32 %v804, %v4965
        %4967 = vdwg.mxu0
        %4968 = vmatprep.subr.mxu0 %v732
        %4969 = vmatpush1.msra.mxu0 %v731
        %4970 = vmatprep.subr.mxu0 %v724
        %4971 = vmatpush1.msra.mxu0 %v723
        %4972 = vmatprep.subr.mxu0 %v716
        %4973 = vmatpush1.msra.mxu0 %v715
        %4974 = vmatprep.subr.mxu0 %v708
        %4975 = vmatpush1.msra.mxu0 %v707
        %4976 = vmatprep.subr.mxu0 %v700
        %4977 = vmatpush1.msra.mxu0 %v699
        %4978 = vmatprep.subr.mxu0 %v692
        %4979 = vmatpush1.msra.mxu0 %v691
        %4980 = vmatprep.subr.mxu0 %v684
        %4981 = vmatpush1.msra.mxu0 %v683
        %4982 = vmatprep.subr.mxu0 %v676
        %4983 = vmatpush1.msra.mxu0 %v675
        %4984 = vmatprep.subr.mxu0 %v668
        %4985 = vmatpush1.msra.mxu0 %v667
        %4986 = vmatprep.subr.mxu0 %v660
        %4987 = vmatpush1.msra.mxu0 %v659
        %4988 = vmatprep.subr.mxu0 %v652
        %4989 = vmatpush1.msra.mxu0 %v651
        %4990 = vmatprep.subr.mxu0 %v644
        %4991 = vmatpush1.msra.mxu0 %v643
        %4992 = vmatprep.subr.mxu0 %v636
        %4993 = vmatpush1.msra.mxu0 %v635
        %4994 = vmatprep.subr.mxu0 %v628
        %4995 = vmatpush1.msra.mxu0 %v627
        %4996 = vmatprep.subr.mxu0 %v620
        %4997 = vmatpush1.msra.mxu0 %v619
        %4998 = vmatprep.subr.mxu0 %v612
        %4999 = vmatpush1.msra.mxu0 %v611
        %5000 = vmatprep.subr.mxu0 0.0
        %5001 = vmatpush2.msra.mxu0 0.0
        %5002 = vmatprep.subr.mxu0 0.0
        %5003 = vmatpush2.msra.mxu0 0.0
        %5004 = vmatprep.subr.mxu0 0.0
        %5005 = vmatpush2.msra.mxu0 0.0
        %5006 = vmatprep.subr.mxu0 0.0
        %5007 = vmatpush2.msra.mxu0 0.0
        %5008 = vmatprep.subr.mxu0 0.0
        %5009 = vmatpush2.msra.mxu0 0.0
        %5010 = vmatprep.subr.mxu0 0.0
        %5011 = vmatpush2.msra.mxu0 0.0
        %5012 = vmatprep.subr.mxu0 0.0
        %5013 = vmatpush2.msra.mxu0 0.0
        %5014 = vmatprep.subr.mxu0 0.0
        %5015 = vmatpush2.msra.mxu0 0.0
        %5016 = vmatprep.subr.mxu0 0.0
        %5017 = vmatpush2.msra.mxu0 0.0
        %5018 = vmatprep.subr.mxu0 0.0
        %5019 = vmatpush2.msra.mxu0 0.0
        %5020 = vmatprep.subr.mxu0 0.0
        %5021 = vmatpush2.msra.mxu0 0.0
        %5022 = vmatprep.subr.mxu0 0.0
        %5023 = vmatpush2.msra.mxu0 0.0
        %5024 = vmatprep.subr.mxu0 0.0
        %5025 = vmatpush2.msra.mxu0 0.0
        %5026 = vmatprep.subr.mxu0 0.0
        %5027 = vmatpush2.msra.mxu0 0.0
        %5028 = vmatprep.subr.mxu0 0.0
        %5029 = vmatpush2.msra.mxu0 0.0
        %5030 = vmatprep.subr.mxu0 0.0
        %5031 = vmatpush2.msra.mxu0 0.0
        %5032 = vmatprep.mubr.f32.mxu0 0.0
        %5033 = vmatmul.mubr.f32.gmra.mxu0 %v4355
        %v5034 = vpop.f32.mrf.mxu0
        %v5035 = vadd.f32 %v4964, %v5034
        %v5036 = vpop.f32.mrf.mxu0
        %v5037 = vadd.f32 %v4966, %v5036
        %5038 = vdwg.mxu0
        %v5039 = vxor.u32 %v4609, 2147483648
        %v5040 = vxor.u32 %v4611, 2147483648
        %v5041 = vmul.f32 %v5039, 1.442695
        %v5042 = vpow.pop %v5041
        %v5043 = vmul.f32 %v5040, 1.442695
        %v5044 = vpow.pop %v5043
        %v5045 = vadd.f32 %v5042, 1.0
        %v5046 = vadd.f32 %v5044, 1.0
        %v5047 = vrcp.pop %v5045
        %v5048 = vmul.f32 1.0, %v5047
        %v5049 = vrcp.pop %v5046
        %v5050 = vmul.f32 1.0, %v5049
        %v5051 = vxor.u32 %v4751, 2147483648
        %v5052 = vxor.u32 %v4753, 2147483648
        %v5053 = vmul.f32 %v5051, 1.442695
        %v5054 = vpow.pop %v5053
        %v5055 = vmul.f32 %v5052, 1.442695
        %v5056 = vpow.pop %v5055
        %v5057 = vadd.f32 %v5054, 1.0
        %v5058 = vadd.f32 %v5056, 1.0
        %v5059 = vrcp.pop %v5057
        %v5060 = vmul.f32 1.0, %v5059
        %v5061 = vrcp.pop %v5058
        %v5062 = vmul.f32 1.0, %v5061
        %v5063 = vtanh.pop %v4893
        %v5064 = vtanh.pop %v4895
        %v5065 = vxor.u32 %v5035, 2147483648
        %v5066 = vxor.u32 %v5037, 2147483648
        %v5067 = vmul.f32 %v5065, 1.442695
        %v5068 = vpow.pop %v5067
        %v5069 = vmul.f32 %v5066, 1.442695
        %v5070 = vpow.pop %v5069
        %v5071 = vadd.f32 %v5068, 1.0
        %v5072 = vadd.f32 %v5070, 1.0
        %v5073 = vrcp.pop %v5071
        %v5074 = vmul.f32 1.0, %v5073
        %v5075 = vrcp.pop %v5072
        %v5076 = vmul.f32 1.0, %v5075
        %v5077 = vmul.f32 %v5060, %v4350
        %v5078 = vmul.f32 %v5062, %v4351
        %v5079 = vmul.f32 %v5048, %v5063
        %v5080 = vmul.f32 %v5050, %v5064
        %v5081 = vadd.f32 %v5077, %v5079
        %v5082 = vadd.f32 %v5078, %v5080
        %v5083 = vtanh.pop %v5081
        %v5084 = vtanh.pop %v5082
        %v5085 = vmul.f32 %v5074, %v5083
        %v5086 = vmul.f32 %v5076, %v5084
        %v5089 = vcombine.low %v5085, %v5086
        %v5090 = vcombine.high %v5085, %v5086
        %v5092 = vunpack.c.l.s4 1966171168
        %v5093 = vunpack.c.0.s8 %v5092
        %v5094 = vlaneseq
        %v5095 = vshrl.u32 %v5094, 7
        %v5096 = vsub.s32 %v5093, %v5095
        %v5097 = vrot.slane %v5089, %v5096
        %v5099 = vunpack.c.l.s4 1966171168
        %v5100 = vunpack.c.0.s8 %v5099
        %v5101 = vlaneseq
        %v5102 = vshrl.u32 %v5101, 7
        %v5103 = vsub.s32 %v5100, %v5102
        %v5104 = vrot.slane %v5090, %v5103
        %v5105 = vcombine.high %v5097, %v5097
        %v5106 = vcombine.high %v5104, %v5104
        %v5108 = vunpack.c.l.s4 1966171168
        %v5109 = vunpack.c.0.s8 %v5108
        %v5110 = vlaneseq
        %v5111 = vshrl.u32 %v5110, 7
        %v5112 = vsub.s32 %v5109, %v5111
        %v5113 = vrot.slane %v5097, %v5112
        %v5115 = vunpack.c.l.s4 1966171168
        %v5116 = vunpack.c.0.s8 %v5115
        %v5117 = vlaneseq
        %v5118 = vshrl.u32 %v5117, 7
        %v5119 = vsub.s32 %v5116, %v5118
        %v5120 = vrot.slane %v5104, %v5119
        %v5122 = vunpack.c.l.s4 1966171168
        %v5123 = vunpack.c.0.s8 %v5122
        %v5124 = vlaneseq
        %v5125 = vshrl.u32 %v5124, 7
        %v5126 = vsub.s32 %v5123, %v5125
        %v5127 = vrot.slane %v5105, %v5126
        %v5129 = vunpack.c.l.s4 1966171168
        %v5130 = vunpack.c.0.s8 %v5129
        %v5131 = vlaneseq
        %v5132 = vshrl.u32 %v5131, 7
        %v5133 = vsub.s32 %v5130, %v5132
        %v5134 = vrot.slane %v5106, %v5133
        %v5135 = vcombine.high %v5113, %v5113
        %v5136 = vcombine.high %v5120, %v5120
        %v5137 = vcombine.high %v5127, %v5127
        %v5138 = vcombine.high %v5134, %v5134
        %s5147 = scalar_lea.vmem [#allocation4], 5
        %5148 = vst.msk [vmem:[%s5147] ss:$8 sm:$0x3] %vm1492, %v5113
        %5149 = vst.msk [vmem:[%s5147] ss:$8 sm:$0x0] %vm1492, %v5113
        %s5150 = scalar_lea.vmem [#allocation4], 21
        %5151 = vst.msk [vmem:[%s5150] ss:$8 sm:$0x3] %vm1492, %v5127
        %5152 = vst.msk [vmem:[%s5150] ss:$8 sm:$0x0] %vm1492, %v5127
        %s5153 = scalar_lea.vmem [#allocation4], 37
        %5154 = vst.msk [vmem:[%s5153] ss:$8 sm:$0x3] %vm1492, %v5135
        %5155 = vst.msk [vmem:[%s5153] ss:$8 sm:$0x0] %vm1492, %v5135
        %s5156 = scalar_lea.vmem [#allocation4], 53
        %5157 = vst.msk [vmem:[%s5156] ss:$8 sm:$0x3] %vm1492, %v5137
        %5158 = vst.msk [vmem:[%s5156] ss:$8 sm:$0x0] %vm1492, %v5137
        %s5159 = scalar_lea.vmem [#allocation4], 69
        %5160 = vst.msk [vmem:[%s5159] ss:$8 sm:$0x3] %vm1492, %v5120
        %5161 = vst.msk [vmem:[%s5159] ss:$8 sm:$0x0] %vm1492, %v5120
        %s5162 = scalar_lea.vmem [#allocation4], 85
        %5163 = vst.msk [vmem:[%s5162] ss:$8 sm:$0x3] %vm1492, %v5134
        %5164 = vst.msk [vmem:[%s5162] ss:$8 sm:$0x0] %vm1492, %v5134
        %s5165 = scalar_lea.vmem [#allocation4], 101
        %5166 = vst.msk [vmem:[%s5165] ss:$8 sm:$0x3] %vm1492, %v5136
        %5167 = vst.msk [vmem:[%s5165] ss:$8 sm:$0x0] %vm1492, %v5136
        %s5168 = scalar_lea.vmem [#allocation4], 117
        %5169 = vst.msk [vmem:[%s5168] ss:$8 sm:$0x3] %vm1492, %v5138
        %5170 = vst.msk [vmem:[%s5168] ss:$8 sm:$0x0] %vm1492, %v5138
        %v5171 = vld [vmem:[%s297 + $0x6] sm:$0x1]
        %v5172 = vld [vmem:[%s297 + $0xe] sm:$0x1]
        %v5173 = vld [vmem:[%s297 + $0x16] sm:$0x1]
        %v5174 = vld [vmem:[%s297 + $0x1e] sm:$0x1]
        %v5175 = vld [vmem:[%s297 + $0x26] sm:$0x1]
        %v5176 = vld [vmem:[%s297 + $0x2e] sm:$0x1]
        %v5177 = vld [vmem:[%s297 + $0x36] sm:$0x1]
        %v5178 = vld [vmem:[%s297 + $0x3e] sm:$0x1]
        %v5187 = vrot.slane %v5172, 7
        %v5188 = vsel %vm751, %v5187, %v5171
        %v5189 = vrot.slane %v5173, 6
        %v5190 = vsel %vm754, %v5189, %v5188
        %v5191 = vrot.slane %v5174, 5
        %v5192 = vsel %vm757, %v5191, %v5190
        %v5193 = vrot.slane %v5175, 4
        %v5194 = vsel %vm760, %v5193, %v5192
        %v5195 = vrot.slane %v5176, 3
        %v5196 = vsel %vm763, %v5195, %v5194
        %v5197 = vrot.slane %v5177, 2
        %v5198 = vsel %vm766, %v5197, %v5196
        %v5199 = vrot.slane %v5178, 1
        %v5200 = vsel %vm769, %v5199, %v5198
        %5202 = vmatprep.subr.mxu0 %v470
        %5203 = vmatpush1.msra.mxu0 %v469
        %5204 = vmatprep.subr.mxu0 %v462
        %5205 = vmatpush1.msra.mxu0 %v461
        %5206 = vmatprep.subr.mxu0 %v454
        %5207 = vmatpush1.msra.mxu0 %v453
        %5208 = vmatprep.subr.mxu0 %v446
        %5209 = vmatpush1.msra.mxu0 %v445
        %5210 = vmatprep.subr.mxu0 %v438
        %5211 = vmatpush1.msra.mxu0 %v437
        %5212 = vmatprep.subr.mxu0 %v430
        %5213 = vmatpush1.msra.mxu0 %v429
        %5214 = vmatprep.subr.mxu0 %v422
        %5215 = vmatpush1.msra.mxu0 %v421
        %5216 = vmatprep.subr.mxu0 %v414
        %5217 = vmatpush1.msra.mxu0 %v413
        %5218 = vmatprep.subr.mxu0 %v406
        %5219 = vmatpush1.msra.mxu0 %v405
        %5220 = vmatprep.subr.mxu0 %v398
        %5221 = vmatpush1.msra.mxu0 %v397
        %5222 = vmatprep.subr.mxu0 %v390
        %5223 = vmatpush1.msra.mxu0 %v389
        %5224 = vmatprep.subr.mxu0 %v382
        %5225 = vmatpush1.msra.mxu0 %v381
        %5226 = vmatprep.subr.mxu0 %v374
        %5227 = vmatpush1.msra.mxu0 %v373
        %5228 = vmatprep.subr.mxu0 %v366
        %5229 = vmatpush1.msra.mxu0 %v365
        %5230 = vmatprep.subr.mxu0 %v358
        %5231 = vmatpush1.msra.mxu0 %v357
        %5232 = vmatprep.subr.mxu0 %v350
        %5233 = vmatpush1.msra.mxu0 %v349
        %5234 = vmatprep.subr.mxu0 %v598
        %5235 = vmatpush2.msra.mxu0 %v597
        %5236 = vmatprep.subr.mxu0 %v590
        %5237 = vmatpush2.msra.mxu0 %v589
        %5238 = vmatprep.subr.mxu0 %v582
        %5239 = vmatpush2.msra.mxu0 %v581
        %5240 = vmatprep.subr.mxu0 %v574
        %5241 = vmatpush2.msra.mxu0 %v573
        %5242 = vmatprep.subr.mxu0 %v566
        %5243 = vmatpush2.msra.mxu0 %v565
        %5244 = vmatprep.subr.mxu0 %v558
        %5245 = vmatpush2.msra.mxu0 %v557
        %5246 = vmatprep.subr.mxu0 %v550
        %5247 = vmatpush2.msra.mxu0 %v549
        %5248 = vmatprep.subr.mxu0 %v542
        %5249 = vmatpush2.msra.mxu0 %v541
        %5250 = vmatprep.subr.mxu0 %v534
        %5251 = vmatpush2.msra.mxu0 %v533
        %5252 = vmatprep.subr.mxu0 %v526
        %5253 = vmatpush2.msra.mxu0 %v525
        %5254 = vmatprep.subr.mxu0 %v518
        %5255 = vmatpush2.msra.mxu0 %v517
        %5256 = vmatprep.subr.mxu0 %v510
        %5257 = vmatpush2.msra.mxu0 %v509
        %5258 = vmatprep.subr.mxu0 %v502
        %5259 = vmatpush2.msra.mxu0 %v501
        %5260 = vmatprep.subr.mxu0 %v494
        %5261 = vmatpush2.msra.mxu0 %v493
        %5262 = vmatprep.subr.mxu0 %v486
        %5263 = vmatpush2.msra.mxu0 %v485
        %5264 = vmatprep.subr.mxu0 %v478
        %5265 = vmatpush2.msra.mxu0 %v477
        %5266 = vmatprep.mubr.f32.mxu0 %v5085
        %5267 = vmatmul.mubr.f32.gmra.mxu0 %v5200
        %v5268 = vpop.f32.mrf.mxu0
        %v5269 = vadd.f32 %v776, %v5268
        %v5270 = vpop.f32.mrf.mxu0
        %v5271 = vadd.f32 %v780, %v5270
        %5272 = vdwg.mxu0
        %5273 = vmatprep.subr.mxu0 %v726
        %5274 = vmatpush1.msra.mxu0 %v725
        %5275 = vmatprep.subr.mxu0 %v718
        %5276 = vmatpush1.msra.mxu0 %v717
        %5277 = vmatprep.subr.mxu0 %v710
        %5278 = vmatpush1.msra.mxu0 %v709
        %5279 = vmatprep.subr.mxu0 %v702
        %5280 = vmatpush1.msra.mxu0 %v701
        %5281 = vmatprep.subr.mxu0 %v694
        %5282 = vmatpush1.msra.mxu0 %v693
        %5283 = vmatprep.subr.mxu0 %v686
        %5284 = vmatpush1.msra.mxu0 %v685
        %5285 = vmatprep.subr.mxu0 %v678
        %5286 = vmatpush1.msra.mxu0 %v677
        %5287 = vmatprep.subr.mxu0 %v670
        %5288 = vmatpush1.msra.mxu0 %v669
        %5289 = vmatprep.subr.mxu0 %v662
        %5290 = vmatpush1.msra.mxu0 %v661
        %5291 = vmatprep.subr.mxu0 %v654
        %5292 = vmatpush1.msra.mxu0 %v653
        %5293 = vmatprep.subr.mxu0 %v646
        %5294 = vmatpush1.msra.mxu0 %v645
        %5295 = vmatprep.subr.mxu0 %v638
        %5296 = vmatpush1.msra.mxu0 %v637
        %5297 = vmatprep.subr.mxu0 %v630
        %5298 = vmatpush1.msra.mxu0 %v629
        %5299 = vmatprep.subr.mxu0 %v622
        %5300 = vmatpush1.msra.mxu0 %v621
        %5301 = vmatprep.subr.mxu0 %v614
        %5302 = vmatpush1.msra.mxu0 %v613
        %5303 = vmatprep.subr.mxu0 %v606
        %5304 = vmatpush1.msra.mxu0 %v605
        %5305 = vmatprep.subr.mxu0 0.0
        %5306 = vmatpush2.msra.mxu0 0.0
        %5307 = vmatprep.subr.mxu0 0.0
        %5308 = vmatpush2.msra.mxu0 0.0
        %5309 = vmatprep.subr.mxu0 0.0
        %5310 = vmatpush2.msra.mxu0 0.0
        %5311 = vmatprep.subr.mxu0 0.0
        %5312 = vmatpush2.msra.mxu0 0.0
        %5313 = vmatprep.subr.mxu0 0.0
        %5314 = vmatpush2.msra.mxu0 0.0
        %5315 = vmatprep.subr.mxu0 0.0
        %5316 = vmatpush2.msra.mxu0 0.0
        %5317 = vmatprep.subr.mxu0 0.0
        %5318 = vmatpush2.msra.mxu0 0.0
        %5319 = vmatprep.subr.mxu0 0.0
        %5320 = vmatpush2.msra.mxu0 0.0
        %5321 = vmatprep.subr.mxu0 0.0
        %5322 = vmatpush2.msra.mxu0 0.0
        %5323 = vmatprep.subr.mxu0 0.0
        %5324 = vmatpush2.msra.mxu0 0.0
        %5325 = vmatprep.subr.mxu0 0.0
        %5326 = vmatpush2.msra.mxu0 0.0
        %5327 = vmatprep.subr.mxu0 0.0
        %5328 = vmatpush2.msra.mxu0 0.0
        %5329 = vmatprep.subr.mxu0 0.0
        %5330 = vmatpush2.msra.mxu0 0.0
        %5331 = vmatprep.subr.mxu0 0.0
        %5332 = vmatpush2.msra.mxu0 0.0
        %5333 = vmatprep.subr.mxu0 0.0
        %5334 = vmatpush2.msra.mxu0 0.0
        %5335 = vmatprep.subr.mxu0 0.0
        %5336 = vmatpush2.msra.mxu0 0.0
        %5337 = vmatprep.mubr.f32.mxu0 0.0
        %5338 = vmatmul.mubr.f32.gmra.mxu0 %v5086
        %v5339 = vpop.f32.mrf.mxu0
        %v5340 = vadd.f32 %v5269, %v5339
        %v5341 = vpop.f32.mrf.mxu0
        %v5342 = vadd.f32 %v5271, %v5341
        %5343 = vdwg.mxu0
        %5344 = vmatprep.subr.mxu0 %v472
        %5345 = vmatpush1.msra.mxu0 %v471
        %5346 = vmatprep.subr.mxu0 %v464
        %5347 = vmatpush1.msra.mxu0 %v463
        %5348 = vmatprep.subr.mxu0 %v456
        %5349 = vmatpush1.msra.mxu0 %v455
        %5350 = vmatprep.subr.mxu0 %v448
        %5351 = vmatpush1.msra.mxu0 %v447
        %5352 = vmatprep.subr.mxu0 %v440
        %5353 = vmatpush1.msra.mxu0 %v439
        %5354 = vmatprep.subr.mxu0 %v432
        %5355 = vmatpush1.msra.mxu0 %v431
        %5356 = vmatprep.subr.mxu0 %v424
        %5357 = vmatpush1.msra.mxu0 %v423
        %5358 = vmatprep.subr.mxu0 %v416
        %5359 = vmatpush1.msra.mxu0 %v415
        %5360 = vmatprep.subr.mxu0 %v408
        %5361 = vmatpush1.msra.mxu0 %v407
        %5362 = vmatprep.subr.mxu0 %v400
        %5363 = vmatpush1.msra.mxu0 %v399
        %5364 = vmatprep.subr.mxu0 %v392
        %5365 = vmatpush1.msra.mxu0 %v391
        %5366 = vmatprep.subr.mxu0 %v384
        %5367 = vmatpush1.msra.mxu0 %v383
        %5368 = vmatprep.subr.mxu0 %v376
        %5369 = vmatpush1.msra.mxu0 %v375
        %5370 = vmatprep.subr.mxu0 %v368
        %5371 = vmatpush1.msra.mxu0 %v367
        %5372 = vmatprep.subr.mxu0 %v360
        %5373 = vmatpush1.msra.mxu0 %v359
        %5374 = vmatprep.subr.mxu0 %v352
        %5375 = vmatpush1.msra.mxu0 %v351
        %5376 = vmatprep.subr.mxu0 %v600
        %5377 = vmatpush2.msra.mxu0 %v599
        %5378 = vmatprep.subr.mxu0 %v592
        %5379 = vmatpush2.msra.mxu0 %v591
        %5380 = vmatprep.subr.mxu0 %v584
        %5381 = vmatpush2.msra.mxu0 %v583
        %5382 = vmatprep.subr.mxu0 %v576
        %5383 = vmatpush2.msra.mxu0 %v575
        %5384 = vmatprep.subr.mxu0 %v568
        %5385 = vmatpush2.msra.mxu0 %v567
        %5386 = vmatprep.subr.mxu0 %v560
        %5387 = vmatpush2.msra.mxu0 %v559
        %5388 = vmatprep.subr.mxu0 %v552
        %5389 = vmatpush2.msra.mxu0 %v551
        %5390 = vmatprep.subr.mxu0 %v544
        %5391 = vmatpush2.msra.mxu0 %v543
        %5392 = vmatprep.subr.mxu0 %v536
        %5393 = vmatpush2.msra.mxu0 %v535
        %5394 = vmatprep.subr.mxu0 %v528
        %5395 = vmatpush2.msra.mxu0 %v527
        %5396 = vmatprep.subr.mxu0 %v520
        %5397 = vmatpush2.msra.mxu0 %v519
        %5398 = vmatprep.subr.mxu0 %v512
        %5399 = vmatpush2.msra.mxu0 %v511
        %5400 = vmatprep.subr.mxu0 %v504
        %5401 = vmatpush2.msra.mxu0 %v503
        %5402 = vmatprep.subr.mxu0 %v496
        %5403 = vmatpush2.msra.mxu0 %v495
        %5404 = vmatprep.subr.mxu0 %v488
        %5405 = vmatpush2.msra.mxu0 %v487
        %5406 = vmatprep.subr.mxu0 %v480
        %5407 = vmatpush2.msra.mxu0 %v479
        %5408 = vmatprep.mubr.f32.mxu0 %v5085
        %5409 = vmatmul.mubr.f32.gmra.mxu0 %v5200
        %v5410 = vpop.f32.mrf.mxu0
        %v5411 = vadd.f32 %v784, %v5410
        %v5412 = vpop.f32.mrf.mxu0
        %v5413 = vadd.f32 %v788, %v5412
        %5414 = vdwg.mxu0
        %5415 = vmatprep.subr.mxu0 %v728
        %5416 = vmatpush1.msra.mxu0 %v727
        %5417 = vmatprep.subr.mxu0 %v720
        %5418 = vmatpush1.msra.mxu0 %v719
        %5419 = vmatprep.subr.mxu0 %v712
        %5420 = vmatpush1.msra.mxu0 %v711
        %5421 = vmatprep.subr.mxu0 %v704
        %5422 = vmatpush1.msra.mxu0 %v703
        %5423 = vmatprep.subr.mxu0 %v696
        %5424 = vmatpush1.msra.mxu0 %v695
        %5425 = vmatprep.subr.mxu0 %v688
        %5426 = vmatpush1.msra.mxu0 %v687
        %5427 = vmatprep.subr.mxu0 %v680
        %5428 = vmatpush1.msra.mxu0 %v679
        %5429 = vmatprep.subr.mxu0 %v672
        %5430 = vmatpush1.msra.mxu0 %v671
        %5431 = vmatprep.subr.mxu0 %v664
        %5432 = vmatpush1.msra.mxu0 %v663
        %5433 = vmatprep.subr.mxu0 %v656
        %5434 = vmatpush1.msra.mxu0 %v655
        %5435 = vmatprep.subr.mxu0 %v648
        %5436 = vmatpush1.msra.mxu0 %v647
        %5437 = vmatprep.subr.mxu0 %v640
        %5438 = vmatpush1.msra.mxu0 %v639
        %5439 = vmatprep.subr.mxu0 %v632
        %5440 = vmatpush1.msra.mxu0 %v631
        %5441 = vmatprep.subr.mxu0 %v624
        %5442 = vmatpush1.msra.mxu0 %v623
        %5443 = vmatprep.subr.mxu0 %v616
        %5444 = vmatpush1.msra.mxu0 %v615
        %5445 = vmatprep.subr.mxu0 %v608
        %5446 = vmatpush1.msra.mxu0 %v607
        %5447 = vmatprep.subr.mxu0 0.0
        %5448 = vmatpush2.msra.mxu0 0.0
        %5449 = vmatprep.subr.mxu0 0.0
        %5450 = vmatpush2.msra.mxu0 0.0
        %5451 = vmatprep.subr.mxu0 0.0
        %5452 = vmatpush2.msra.mxu0 0.0
        %5453 = vmatprep.subr.mxu0 0.0
        %5454 = vmatpush2.msra.mxu0 0.0
        %5455 = vmatprep.subr.mxu0 0.0
        %5456 = vmatpush2.msra.mxu0 0.0
        %5457 = vmatprep.subr.mxu0 0.0
        %5458 = vmatpush2.msra.mxu0 0.0
        %5459 = vmatprep.subr.mxu0 0.0
        %5460 = vmatpush2.msra.mxu0 0.0
        %5461 = vmatprep.subr.mxu0 0.0
        %5462 = vmatpush2.msra.mxu0 0.0
        %5463 = vmatprep.subr.mxu0 0.0
        %5464 = vmatpush2.msra.mxu0 0.0
        %5465 = vmatprep.subr.mxu0 0.0
        %5466 = vmatpush2.msra.mxu0 0.0
        %5467 = vmatprep.subr.mxu0 0.0
        %5468 = vmatpush2.msra.mxu0 0.0
        %5469 = vmatprep.subr.mxu0 0.0
        %5470 = vmatpush2.msra.mxu0 0.0
        %5471 = vmatprep.subr.mxu0 0.0
        %5472 = vmatpush2.msra.mxu0 0.0
        %5473 = vmatprep.subr.mxu0 0.0
        %5474 = vmatpush2.msra.mxu0 0.0
        %5475 = vmatprep.subr.mxu0 0.0
        %5476 = vmatpush2.msra.mxu0 0.0
        %5477 = vmatprep.subr.mxu0 0.0
        %5478 = vmatpush2.msra.mxu0 0.0
        %5479 = vmatprep.mubr.f32.mxu0 0.0
        %5480 = vmatmul.mubr.f32.gmra.mxu0 %v5086
        %v5481 = vpop.f32.mrf.mxu0
        %v5482 = vadd.f32 %v5411, %v5481
        %v5483 = vpop.f32.mrf.mxu0
        %v5484 = vadd.f32 %v5413, %v5483
        %5485 = vdwg.mxu0
        %5486 = vmatprep.subr.mxu0 %v474
        %5487 = vmatpush1.msra.mxu0 %v473
        %5488 = vmatprep.subr.mxu0 %v466
        %5489 = vmatpush1.msra.mxu0 %v465
        %5490 = vmatprep.subr.mxu0 %v458
        %5491 = vmatpush1.msra.mxu0 %v457
        %5492 = vmatprep.subr.mxu0 %v450
        %5493 = vmatpush1.msra.mxu0 %v449
        %5494 = vmatprep.subr.mxu0 %v442
        %5495 = vmatpush1.msra.mxu0 %v441
        %5496 = vmatprep.subr.mxu0 %v434
        %5497 = vmatpush1.msra.mxu0 %v433
        %5498 = vmatprep.subr.mxu0 %v426
        %5499 = vmatpush1.msra.mxu0 %v425
        %5500 = vmatprep.subr.mxu0 %v418
        %5501 = vmatpush1.msra.mxu0 %v417
        %5502 = vmatprep.subr.mxu0 %v410
        %5503 = vmatpush1.msra.mxu0 %v409
        %5504 = vmatprep.subr.mxu0 %v402
        %5505 = vmatpush1.msra.mxu0 %v401
        %5506 = vmatprep.subr.mxu0 %v394
        %5507 = vmatpush1.msra.mxu0 %v393
        %5508 = vmatprep.subr.mxu0 %v386
        %5509 = vmatpush1.msra.mxu0 %v385
        %5510 = vmatprep.subr.mxu0 %v378
        %5511 = vmatpush1.msra.mxu0 %v377
        %5512 = vmatprep.subr.mxu0 %v370
        %5513 = vmatpush1.msra.mxu0 %v369
        %5514 = vmatprep.subr.mxu0 %v362
        %5515 = vmatpush1.msra.mxu0 %v361
        %5516 = vmatprep.subr.mxu0 %v354
        %5517 = vmatpush1.msra.mxu0 %v353
        %5518 = vmatprep.subr.mxu0 %v602
        %5519 = vmatpush2.msra.mxu0 %v601
        %5520 = vmatprep.subr.mxu0 %v594
        %5521 = vmatpush2.msra.mxu0 %v593
        %5522 = vmatprep.subr.mxu0 %v586
        %5523 = vmatpush2.msra.mxu0 %v585
        %5524 = vmatprep.subr.mxu0 %v578
        %5525 = vmatpush2.msra.mxu0 %v577
        %5526 = vmatprep.subr.mxu0 %v570
        %5527 = vmatpush2.msra.mxu0 %v569
        %5528 = vmatprep.subr.mxu0 %v562
        %5529 = vmatpush2.msra.mxu0 %v561
        %5530 = vmatprep.subr.mxu0 %v554
        %5531 = vmatpush2.msra.mxu0 %v553
        %5532 = vmatprep.subr.mxu0 %v546
        %5533 = vmatpush2.msra.mxu0 %v545
        %5534 = vmatprep.subr.mxu0 %v538
        %5535 = vmatpush2.msra.mxu0 %v537
        %5536 = vmatprep.subr.mxu0 %v530
        %5537 = vmatpush2.msra.mxu0 %v529
        %5538 = vmatprep.subr.mxu0 %v522
        %5539 = vmatpush2.msra.mxu0 %v521
        %5540 = vmatprep.subr.mxu0 %v514
        %5541 = vmatpush2.msra.mxu0 %v513
        %5542 = vmatprep.subr.mxu0 %v506
        %5543 = vmatpush2.msra.mxu0 %v505
        %5544 = vmatprep.subr.mxu0 %v498
        %5545 = vmatpush2.msra.mxu0 %v497
        %5546 = vmatprep.subr.mxu0 %v490
        %5547 = vmatpush2.msra.mxu0 %v489
        %5548 = vmatprep.subr.mxu0 %v482
        %5549 = vmatpush2.msra.mxu0 %v481
        %5550 = vmatprep.mubr.f32.mxu0 %v5085
        %5551 = vmatmul.mubr.f32.gmra.mxu0 %v5200
        %v5552 = vpop.f32.mrf.mxu0
        %v5553 = vadd.f32 %v792, %v5552
        %v5554 = vpop.f32.mrf.mxu0
        %v5555 = vadd.f32 %v796, %v5554
        %5556 = vdwg.mxu0
        %5557 = vmatprep.subr.mxu0 %v730
        %5558 = vmatpush1.msra.mxu0 %v729
        %5559 = vmatprep.subr.mxu0 %v722
        %5560 = vmatpush1.msra.mxu0 %v721
        %5561 = vmatprep.subr.mxu0 %v714
        %5562 = vmatpush1.msra.mxu0 %v713
        %5563 = vmatprep.subr.mxu0 %v706
        %5564 = vmatpush1.msra.mxu0 %v705
        %5565 = vmatprep.subr.mxu0 %v698
        %5566 = vmatpush1.msra.mxu0 %v697
        %5567 = vmatprep.subr.mxu0 %v690
        %5568 = vmatpush1.msra.mxu0 %v689
        %5569 = vmatprep.subr.mxu0 %v682
        %5570 = vmatpush1.msra.mxu0 %v681
        %5571 = vmatprep.subr.mxu0 %v674
        %5572 = vmatpush1.msra.mxu0 %v673
        %5573 = vmatprep.subr.mxu0 %v666
        %5574 = vmatpush1.msra.mxu0 %v665
        %5575 = vmatprep.subr.mxu0 %v658
        %5576 = vmatpush1.msra.mxu0 %v657
        %5577 = vmatprep.subr.mxu0 %v650
        %5578 = vmatpush1.msra.mxu0 %v649
        %5579 = vmatprep.subr.mxu0 %v642
        %5580 = vmatpush1.msra.mxu0 %v641
        %5581 = vmatprep.subr.mxu0 %v634
        %5582 = vmatpush1.msra.mxu0 %v633
        %5583 = vmatprep.subr.mxu0 %v626
        %5584 = vmatpush1.msra.mxu0 %v625
        %5585 = vmatprep.subr.mxu0 %v618
        %5586 = vmatpush1.msra.mxu0 %v617
        %5587 = vmatprep.subr.mxu0 %v610
        %5588 = vmatpush1.msra.mxu0 %v609
        %5589 = vmatprep.subr.mxu0 0.0
        %5590 = vmatpush2.msra.mxu0 0.0
        %5591 = vmatprep.subr.mxu0 0.0
        %5592 = vmatpush2.msra.mxu0 0.0
        %5593 = vmatprep.subr.mxu0 0.0
        %5594 = vmatpush2.msra.mxu0 0.0
        %5595 = vmatprep.subr.mxu0 0.0
        %5596 = vmatpush2.msra.mxu0 0.0
        %5597 = vmatprep.subr.mxu0 0.0
        %5598 = vmatpush2.msra.mxu0 0.0
        %5599 = vmatprep.subr.mxu0 0.0
        %5600 = vmatpush2.msra.mxu0 0.0
        %5601 = vmatprep.subr.mxu0 0.0
        %5602 = vmatpush2.msra.mxu0 0.0
        %5603 = vmatprep.subr.mxu0 0.0
        %5604 = vmatpush2.msra.mxu0 0.0
        %5605 = vmatprep.subr.mxu0 0.0
        %5606 = vmatpush2.msra.mxu0 0.0
        %5607 = vmatprep.subr.mxu0 0.0
        %5608 = vmatpush2.msra.mxu0 0.0
        %5609 = vmatprep.subr.mxu0 0.0
        %5610 = vmatpush2.msra.mxu0 0.0
        %5611 = vmatprep.subr.mxu0 0.0
        %5612 = vmatpush2.msra.mxu0 0.0
        %5613 = vmatprep.subr.mxu0 0.0
        %5614 = vmatpush2.msra.mxu0 0.0
        %5615 = vmatprep.subr.mxu0 0.0
        %5616 = vmatpush2.msra.mxu0 0.0
        %5617 = vmatprep.subr.mxu0 0.0
        %5618 = vmatpush2.msra.mxu0 0.0
        %5619 = vmatprep.subr.mxu0 0.0
        %5620 = vmatpush2.msra.mxu0 0.0
        %5621 = vmatprep.mubr.f32.mxu0 0.0
        %5622 = vmatmul.mubr.f32.gmra.mxu0 %v5086
        %v5623 = vpop.f32.mrf.mxu0
        %v5624 = vadd.f32 %v5553, %v5623
        %v5625 = vpop.f32.mrf.mxu0
        %v5626 = vadd.f32 %v5555, %v5625
        %5627 = vdwg.mxu0
        %5628 = vmatprep.subr.mxu0 %v476
        %5629 = vmatpush1.msra.mxu0 %v475
        %5630 = vmatprep.subr.mxu0 %v468
        %5631 = vmatpush1.msra.mxu0 %v467
        %5632 = vmatprep.subr.mxu0 %v460
        %5633 = vmatpush1.msra.mxu0 %v459
        %5634 = vmatprep.subr.mxu0 %v452
        %5635 = vmatpush1.msra.mxu0 %v451
        %5636 = vmatprep.subr.mxu0 %v444
        %5637 = vmatpush1.msra.mxu0 %v443
        %5638 = vmatprep.subr.mxu0 %v436
        %5639 = vmatpush1.msra.mxu0 %v435
        %5640 = vmatprep.subr.mxu0 %v428
        %5641 = vmatpush1.msra.mxu0 %v427
        %5642 = vmatprep.subr.mxu0 %v420
        %5643 = vmatpush1.msra.mxu0 %v419
        %5644 = vmatprep.subr.mxu0 %v412
        %5645 = vmatpush1.msra.mxu0 %v411
        %5646 = vmatprep.subr.mxu0 %v404
        %5647 = vmatpush1.msra.mxu0 %v403
        %5648 = vmatprep.subr.mxu0 %v396
        %5649 = vmatpush1.msra.mxu0 %v395
        %5650 = vmatprep.subr.mxu0 %v388
        %5651 = vmatpush1.msra.mxu0 %v387
        %5652 = vmatprep.subr.mxu0 %v380
        %5653 = vmatpush1.msra.mxu0 %v379
        %5654 = vmatprep.subr.mxu0 %v372
        %5655 = vmatpush1.msra.mxu0 %v371
        %5656 = vmatprep.subr.mxu0 %v364
        %5657 = vmatpush1.msra.mxu0 %v363
        %5658 = vmatprep.subr.mxu0 %v356
        %5659 = vmatpush1.msra.mxu0 %v355
        %5660 = vmatprep.subr.mxu0 %v604
        %5661 = vmatpush2.msra.mxu0 %v603
        %5662 = vmatprep.subr.mxu0 %v596
        %5663 = vmatpush2.msra.mxu0 %v595
        %5664 = vmatprep.subr.mxu0 %v588
        %5665 = vmatpush2.msra.mxu0 %v587
        %5666 = vmatprep.subr.mxu0 %v580
        %5667 = vmatpush2.msra.mxu0 %v579
        %5668 = vmatprep.subr.mxu0 %v572
        %5669 = vmatpush2.msra.mxu0 %v571
        %5670 = vmatprep.subr.mxu0 %v564
        %5671 = vmatpush2.msra.mxu0 %v563
        %5672 = vmatprep.subr.mxu0 %v556
        %5673 = vmatpush2.msra.mxu0 %v555
        %5674 = vmatprep.subr.mxu0 %v548
        %5675 = vmatpush2.msra.mxu0 %v547
        %5676 = vmatprep.subr.mxu0 %v540
        %5677 = vmatpush2.msra.mxu0 %v539
        %5678 = vmatprep.subr.mxu0 %v532
        %5679 = vmatpush2.msra.mxu0 %v531
        %5680 = vmatprep.subr.mxu0 %v524
        %5681 = vmatpush2.msra.mxu0 %v523
        %5682 = vmatprep.subr.mxu0 %v516
        %5683 = vmatpush2.msra.mxu0 %v515
        %5684 = vmatprep.subr.mxu0 %v508
        %5685 = vmatpush2.msra.mxu0 %v507
        %5686 = vmatprep.subr.mxu0 %v500
        %5687 = vmatpush2.msra.mxu0 %v499
        %5688 = vmatprep.subr.mxu0 %v492
        %5689 = vmatpush2.msra.mxu0 %v491
        %5690 = vmatprep.subr.mxu0 %v484
        %5691 = vmatpush2.msra.mxu0 %v483
        %5692 = vmatprep.mubr.f32.mxu0 %v5085
        %5693 = vmatmul.mubr.f32.gmra.mxu0 %v5200
        %v5694 = vpop.f32.mrf.mxu0
        %v5695 = vadd.f32 %v800, %v5694
        %v5696 = vpop.f32.mrf.mxu0
        %v5697 = vadd.f32 %v804, %v5696
        %5698 = vdwg.mxu0
        %5699 = vmatprep.subr.mxu0 %v732
        %5700 = vmatpush1.msra.mxu0 %v731
        %5701 = vmatprep.subr.mxu0 %v724
        %5702 = vmatpush1.msra.mxu0 %v723
        %5703 = vmatprep.subr.mxu0 %v716
        %5704 = vmatpush1.msra.mxu0 %v715
        %5705 = vmatprep.subr.mxu0 %v708
        %5706 = vmatpush1.msra.mxu0 %v707
        %5707 = vmatprep.subr.mxu0 %v700
        %5708 = vmatpush1.msra.mxu0 %v699
        %5709 = vmatprep.subr.mxu0 %v692
        %5710 = vmatpush1.msra.mxu0 %v691
        %5711 = vmatprep.subr.mxu0 %v684
        %5712 = vmatpush1.msra.mxu0 %v683
        %5713 = vmatprep.subr.mxu0 %v676
        %5714 = vmatpush1.msra.mxu0 %v675
        %5715 = vmatprep.subr.mxu0 %v668
        %5716 = vmatpush1.msra.mxu0 %v667
        %5717 = vmatprep.subr.mxu0 %v660
        %5718 = vmatpush1.msra.mxu0 %v659
        %5719 = vmatprep.subr.mxu0 %v652
        %5720 = vmatpush1.msra.mxu0 %v651
        %5721 = vmatprep.subr.mxu0 %v644
        %5722 = vmatpush1.msra.mxu0 %v643
        %5723 = vmatprep.subr.mxu0 %v636
        %5724 = vmatpush1.msra.mxu0 %v635
        %5725 = vmatprep.subr.mxu0 %v628
        %5726 = vmatpush1.msra.mxu0 %v627
        %5727 = vmatprep.subr.mxu0 %v620
        %5728 = vmatpush1.msra.mxu0 %v619
        %5729 = vmatprep.subr.mxu0 %v612
        %5730 = vmatpush1.msra.mxu0 %v611
        %5731 = vmatprep.subr.mxu0 0.0
        %5732 = vmatpush2.msra.mxu0 0.0
        %5733 = vmatprep.subr.mxu0 0.0
        %5734 = vmatpush2.msra.mxu0 0.0
        %5735 = vmatprep.subr.mxu0 0.0
        %5736 = vmatpush2.msra.mxu0 0.0
        %5737 = vmatprep.subr.mxu0 0.0
        %5738 = vmatpush2.msra.mxu0 0.0
        %5739 = vmatprep.subr.mxu0 0.0
        %5740 = vmatpush2.msra.mxu0 0.0
        %5741 = vmatprep.subr.mxu0 0.0
        %5742 = vmatpush2.msra.mxu0 0.0
        %5743 = vmatprep.subr.mxu0 0.0
        %5744 = vmatpush2.msra.mxu0 0.0
        %5745 = vmatprep.subr.mxu0 0.0
        %5746 = vmatpush2.msra.mxu0 0.0
        %5747 = vmatprep.subr.mxu0 0.0
        %5748 = vmatpush2.msra.mxu0 0.0
        %5749 = vmatprep.subr.mxu0 0.0
        %5750 = vmatpush2.msra.mxu0 0.0
        %5751 = vmatprep.subr.mxu0 0.0
        %5752 = vmatpush2.msra.mxu0 0.0
        %5753 = vmatprep.subr.mxu0 0.0
        %5754 = vmatpush2.msra.mxu0 0.0
        %5755 = vmatprep.subr.mxu0 0.0
        %5756 = vmatpush2.msra.mxu0 0.0
        %5757 = vmatprep.subr.mxu0 0.0
        %5758 = vmatpush2.msra.mxu0 0.0
        %5759 = vmatprep.subr.mxu0 0.0
        %5760 = vmatpush2.msra.mxu0 0.0
        %5761 = vmatprep.subr.mxu0 0.0
        %5762 = vmatpush2.msra.mxu0 0.0
        %5763 = vmatprep.mubr.f32.mxu0 0.0
        %5764 = vmatmul.mubr.f32.gmra.mxu0 %v5086
        %v5765 = vpop.f32.mrf.mxu0
        %v5766 = vadd.f32 %v5695, %v5765
        %v5767 = vpop.f32.mrf.mxu0
        %v5768 = vadd.f32 %v5697, %v5767
        %5769 = vdwg.mxu0
        %v5770 = vxor.u32 %v5340, 2147483648
        %v5771 = vxor.u32 %v5342, 2147483648
        %v5772 = vmul.f32 %v5770, 1.442695
        %v5773 = vpow.pop %v5772
        %v5774 = vmul.f32 %v5771, 1.442695
        %v5775 = vpow.pop %v5774
        %v5776 = vadd.f32 %v5773, 1.0
        %v5777 = vadd.f32 %v5775, 1.0
        %v5778 = vrcp.pop %v5776
        %v5779 = vmul.f32 1.0, %v5778
        %v5780 = vrcp.pop %v5777
        %v5781 = vmul.f32 1.0, %v5780
        %v5782 = vxor.u32 %v5482, 2147483648
        %v5783 = vxor.u32 %v5484, 2147483648
        %v5784 = vmul.f32 %v5782, 1.442695
        %v5785 = vpow.pop %v5784
        %v5786 = vmul.f32 %v5783, 1.442695
        %v5787 = vpow.pop %v5786
        %v5788 = vadd.f32 %v5785, 1.0
        %v5789 = vadd.f32 %v5787, 1.0
        %v5790 = vrcp.pop %v5788
        %v5791 = vmul.f32 1.0, %v5790
        %v5792 = vrcp.pop %v5789
        %v5793 = vmul.f32 1.0, %v5792
        %v5794 = vtanh.pop %v5624
        %v5795 = vtanh.pop %v5626
        %v5796 = vxor.u32 %v5766, 2147483648
        %v5797 = vxor.u32 %v5768, 2147483648
        %v5798 = vmul.f32 %v5796, 1.442695
        %v5799 = vpow.pop %v5798
        %v5800 = vmul.f32 %v5797, 1.442695
        %v5801 = vpow.pop %v5800
        %v5802 = vadd.f32 %v5799, 1.0
        %v5803 = vadd.f32 %v5801, 1.0
        %v5804 = vrcp.pop %v5802
        %v5805 = vmul.f32 1.0, %v5804
        %v5806 = vrcp.pop %v5803
        %v5807 = vmul.f32 1.0, %v5806
        %v5808 = vmul.f32 %v5791, %v5081
        %v5809 = vmul.f32 %v5793, %v5082
        %v5810 = vmul.f32 %v5779, %v5794
        %v5811 = vmul.f32 %v5781, %v5795
        %v5812 = vadd.f32 %v5808, %v5810
        %v5813 = vadd.f32 %v5809, %v5811
        %v5814 = vtanh.pop %v5812
        %v5815 = vtanh.pop %v5813
        %v5816 = vmul.f32 %v5805, %v5814
        %v5817 = vmul.f32 %v5807, %v5815
        %v5820 = vcombine.low %v5816, %v5817
        %v5821 = vcombine.high %v5816, %v5817
        %v5823 = vunpack.c.l.s4 1966171168
        %v5824 = vunpack.c.0.s8 %v5823
        %v5825 = vlaneseq
        %v5826 = vshrl.u32 %v5825, 7
        %v5827 = vsub.s32 %v5824, %v5826
        %v5828 = vrot.slane %v5820, %v5827
        %v5830 = vunpack.c.l.s4 1966171168
        %v5831 = vunpack.c.0.s8 %v5830
        %v5832 = vlaneseq
        %v5833 = vshrl.u32 %v5832, 7
        %v5834 = vsub.s32 %v5831, %v5833
        %v5835 = vrot.slane %v5821, %v5834
        %v5836 = vcombine.high %v5828, %v5828
        %v5837 = vcombine.high %v5835, %v5835
        %v5839 = vunpack.c.l.s4 1966171168
        %v5840 = vunpack.c.0.s8 %v5839
        %v5841 = vlaneseq
        %v5842 = vshrl.u32 %v5841, 7
        %v5843 = vsub.s32 %v5840, %v5842
        %v5844 = vrot.slane %v5828, %v5843
        %v5846 = vunpack.c.l.s4 1966171168
        %v5847 = vunpack.c.0.s8 %v5846
        %v5848 = vlaneseq
        %v5849 = vshrl.u32 %v5848, 7
        %v5850 = vsub.s32 %v5847, %v5849
        %v5851 = vrot.slane %v5835, %v5850
        %v5853 = vunpack.c.l.s4 1966171168
        %v5854 = vunpack.c.0.s8 %v5853
        %v5855 = vlaneseq
        %v5856 = vshrl.u32 %v5855, 7
        %v5857 = vsub.s32 %v5854, %v5856
        %v5858 = vrot.slane %v5836, %v5857
        %v5860 = vunpack.c.l.s4 1966171168
        %v5861 = vunpack.c.0.s8 %v5860
        %v5862 = vlaneseq
        %v5863 = vshrl.u32 %v5862, 7
        %v5864 = vsub.s32 %v5861, %v5863
        %v5865 = vrot.slane %v5837, %v5864
        %v5866 = vcombine.high %v5844, %v5844
        %v5867 = vcombine.high %v5851, %v5851
        %v5868 = vcombine.high %v5858, %v5858
        %v5869 = vcombine.high %v5865, %v5865
        %s5878 = scalar_lea.vmem [#allocation4], 6
        %5879 = vst.msk [vmem:[%s5878] ss:$8 sm:$0x3] %vm1492, %v5844
        %5880 = vst.msk [vmem:[%s5878] ss:$8 sm:$0x0] %vm1492, %v5844
        %s5881 = scalar_lea.vmem [#allocation4], 22
        %5882 = vst.msk [vmem:[%s5881] ss:$8 sm:$0x3] %vm1492, %v5858
        %5883 = vst.msk [vmem:[%s5881] ss:$8 sm:$0x0] %vm1492, %v5858
        %s5884 = scalar_lea.vmem [#allocation4], 38
        %5885 = vst.msk [vmem:[%s5884] ss:$8 sm:$0x3] %vm1492, %v5866
        %5886 = vst.msk [vmem:[%s5884] ss:$8 sm:$0x0] %vm1492, %v5866
        %s5887 = scalar_lea.vmem [#allocation4], 54
        %5888 = vst.msk [vmem:[%s5887] ss:$8 sm:$0x3] %vm1492, %v5868
        %5889 = vst.msk [vmem:[%s5887] ss:$8 sm:$0x0] %vm1492, %v5868
        %s5890 = scalar_lea.vmem [#allocation4], 70
        %5891 = vst.msk [vmem:[%s5890] ss:$8 sm:$0x3] %vm1492, %v5851
        %5892 = vst.msk [vmem:[%s5890] ss:$8 sm:$0x0] %vm1492, %v5851
        %s5893 = scalar_lea.vmem [#allocation4], 86
        %5894 = vst.msk [vmem:[%s5893] ss:$8 sm:$0x3] %vm1492, %v5865
        %5895 = vst.msk [vmem:[%s5893] ss:$8 sm:$0x0] %vm1492, %v5865
        %s5896 = scalar_lea.vmem [#allocation4], 102
        %5897 = vst.msk [vmem:[%s5896] ss:$8 sm:$0x3] %vm1492, %v5867
        %5898 = vst.msk [vmem:[%s5896] ss:$8 sm:$0x0] %vm1492, %v5867
        %s5899 = scalar_lea.vmem [#allocation4], 118
        %5900 = vst.msk [vmem:[%s5899] ss:$8 sm:$0x3] %vm1492, %v5869
        %5901 = vst.msk [vmem:[%s5899] ss:$8 sm:$0x0] %vm1492, %v5869
        %v5902 = vld [vmem:[%s297 + $0x7] sm:$0x1]
        %v5903 = vld [vmem:[%s297 + $0xf] sm:$0x1]
        %v5904 = vld [vmem:[%s297 + $0x17] sm:$0x1]
        %v5905 = vld [vmem:[%s297 + $0x1f] sm:$0x1]
        %v5906 = vld [vmem:[%s297 + $0x27] sm:$0x1]
        %v5907 = vld [vmem:[%s297 + $0x2f] sm:$0x1]
        %v5908 = vld [vmem:[%s297 + $0x37] sm:$0x1]
        %v5909 = vld [vmem:[%s297 + $0x3f] sm:$0x1]
        %v5918 = vrot.slane %v5903, 7
        %v5919 = vsel %vm751, %v5918, %v5902
        %v5920 = vrot.slane %v5904, 6
        %v5921 = vsel %vm754, %v5920, %v5919
        %v5922 = vrot.slane %v5905, 5
        %v5923 = vsel %vm757, %v5922, %v5921
        %v5924 = vrot.slane %v5906, 4
        %v5925 = vsel %vm760, %v5924, %v5923
        %v5926 = vrot.slane %v5907, 3
        %v5927 = vsel %vm763, %v5926, %v5925
        %v5928 = vrot.slane %v5908, 2
        %v5929 = vsel %vm766, %v5928, %v5927
        %v5930 = vrot.slane %v5909, 1
        %v5931 = vsel %vm769, %v5930, %v5929
        %5933 = vmatprep.subr.mxu0 %v470
        %5934 = vmatpush1.msra.mxu0 %v469
        %5935 = vmatprep.subr.mxu0 %v462
        %5936 = vmatpush1.msra.mxu0 %v461
        %5937 = vmatprep.subr.mxu0 %v454
        %5938 = vmatpush1.msra.mxu0 %v453
        %5939 = vmatprep.subr.mxu0 %v446
        %5940 = vmatpush1.msra.mxu0 %v445
        %5941 = vmatprep.subr.mxu0 %v438
        %5942 = vmatpush1.msra.mxu0 %v437
        %5943 = vmatprep.subr.mxu0 %v430
        %5944 = vmatpush1.msra.mxu0 %v429
        %5945 = vmatprep.subr.mxu0 %v422
        %5946 = vmatpush1.msra.mxu0 %v421
        %5947 = vmatprep.subr.mxu0 %v414
        %5948 = vmatpush1.msra.mxu0 %v413
        %5949 = vmatprep.subr.mxu0 %v406
        %5950 = vmatpush1.msra.mxu0 %v405
        %5951 = vmatprep.subr.mxu0 %v398
        %5952 = vmatpush1.msra.mxu0 %v397
        %5953 = vmatprep.subr.mxu0 %v390
        %5954 = vmatpush1.msra.mxu0 %v389
        %5955 = vmatprep.subr.mxu0 %v382
        %5956 = vmatpush1.msra.mxu0 %v381
        %5957 = vmatprep.subr.mxu0 %v374
        %5958 = vmatpush1.msra.mxu0 %v373
        %5959 = vmatprep.subr.mxu0 %v366
        %5960 = vmatpush1.msra.mxu0 %v365
        %5961 = vmatprep.subr.mxu0 %v358
        %5962 = vmatpush1.msra.mxu0 %v357
        %5963 = vmatprep.subr.mxu0 %v350
        %5964 = vmatpush1.msra.mxu0 %v349
        %5965 = vmatprep.subr.mxu0 %v598
        %5966 = vmatpush2.msra.mxu0 %v597
        %5967 = vmatprep.subr.mxu0 %v590
        %5968 = vmatpush2.msra.mxu0 %v589
        %5969 = vmatprep.subr.mxu0 %v582
        %5970 = vmatpush2.msra.mxu0 %v581
        %5971 = vmatprep.subr.mxu0 %v574
        %5972 = vmatpush2.msra.mxu0 %v573
        %5973 = vmatprep.subr.mxu0 %v566
        %5974 = vmatpush2.msra.mxu0 %v565
        %5975 = vmatprep.subr.mxu0 %v558
        %5976 = vmatpush2.msra.mxu0 %v557
        %5977 = vmatprep.subr.mxu0 %v550
        %5978 = vmatpush2.msra.mxu0 %v549
        %5979 = vmatprep.subr.mxu0 %v542
        %5980 = vmatpush2.msra.mxu0 %v541
        %5981 = vmatprep.subr.mxu0 %v534
        %5982 = vmatpush2.msra.mxu0 %v533
        %5983 = vmatprep.subr.mxu0 %v526
        %5984 = vmatpush2.msra.mxu0 %v525
        %5985 = vmatprep.subr.mxu0 %v518
        %5986 = vmatpush2.msra.mxu0 %v517
        %5987 = vmatprep.subr.mxu0 %v510
        %5988 = vmatpush2.msra.mxu0 %v509
        %5989 = vmatprep.subr.mxu0 %v502
        %5990 = vmatpush2.msra.mxu0 %v501
        %5991 = vmatprep.subr.mxu0 %v494
        %5992 = vmatpush2.msra.mxu0 %v493
        %5993 = vmatprep.subr.mxu0 %v486
        %5994 = vmatpush2.msra.mxu0 %v485
        %5995 = vmatprep.subr.mxu0 %v478
        %5996 = vmatpush2.msra.mxu0 %v477
        %5997 = vmatprep.mubr.f32.mxu0 %v5816
        %5998 = vmatmul.mubr.f32.gmra.mxu0 %v5931
        %v5999 = vpop.f32.mrf.mxu0
        %v6000 = vadd.f32 %v776, %v5999
        %v6001 = vpop.f32.mrf.mxu0
        %v6002 = vadd.f32 %v780, %v6001
        %6003 = vdwg.mxu0
        %6004 = vmatprep.subr.mxu0 %v726
        %6005 = vmatpush1.msra.mxu0 %v725
        %6006 = vmatprep.subr.mxu0 %v718
        %6007 = vmatpush1.msra.mxu0 %v717
        %6008 = vmatprep.subr.mxu0 %v710
        %6009 = vmatpush1.msra.mxu0 %v709
        %6010 = vmatprep.subr.mxu0 %v702
        %6011 = vmatpush1.msra.mxu0 %v701
        %6012 = vmatprep.subr.mxu0 %v694
        %6013 = vmatpush1.msra.mxu0 %v693
        %6014 = vmatprep.subr.mxu0 %v686
        %6015 = vmatpush1.msra.mxu0 %v685
        %6016 = vmatprep.subr.mxu0 %v678
        %6017 = vmatpush1.msra.mxu0 %v677
        %6018 = vmatprep.subr.mxu0 %v670
        %6019 = vmatpush1.msra.mxu0 %v669
        %6020 = vmatprep.subr.mxu0 %v662
        %6021 = vmatpush1.msra.mxu0 %v661
        %6022 = vmatprep.subr.mxu0 %v654
        %6023 = vmatpush1.msra.mxu0 %v653
        %6024 = vmatprep.subr.mxu0 %v646
        %6025 = vmatpush1.msra.mxu0 %v645
        %6026 = vmatprep.subr.mxu0 %v638
        %6027 = vmatpush1.msra.mxu0 %v637
        %6028 = vmatprep.subr.mxu0 %v630
        %6029 = vmatpush1.msra.mxu0 %v629
        %6030 = vmatprep.subr.mxu0 %v622
        %6031 = vmatpush1.msra.mxu0 %v621
        %6032 = vmatprep.subr.mxu0 %v614
        %6033 = vmatpush1.msra.mxu0 %v613
        %6034 = vmatprep.subr.mxu0 %v606
        %6035 = vmatpush1.msra.mxu0 %v605
        %6036 = vmatprep.subr.mxu0 0.0
        %6037 = vmatpush2.msra.mxu0 0.0
        %6038 = vmatprep.subr.mxu0 0.0
        %6039 = vmatpush2.msra.mxu0 0.0
        %6040 = vmatprep.subr.mxu0 0.0
        %6041 = vmatpush2.msra.mxu0 0.0
        %6042 = vmatprep.subr.mxu0 0.0
        %6043 = vmatpush2.msra.mxu0 0.0
        %6044 = vmatprep.subr.mxu0 0.0
        %6045 = vmatpush2.msra.mxu0 0.0
        %6046 = vmatprep.subr.mxu0 0.0
        %6047 = vmatpush2.msra.mxu0 0.0
        %6048 = vmatprep.subr.mxu0 0.0
        %6049 = vmatpush2.msra.mxu0 0.0
        %6050 = vmatprep.subr.mxu0 0.0
        %6051 = vmatpush2.msra.mxu0 0.0
        %6052 = vmatprep.subr.mxu0 0.0
        %6053 = vmatpush2.msra.mxu0 0.0
        %6054 = vmatprep.subr.mxu0 0.0
        %6055 = vmatpush2.msra.mxu0 0.0
        %6056 = vmatprep.subr.mxu0 0.0
        %6057 = vmatpush2.msra.mxu0 0.0
        %6058 = vmatprep.subr.mxu0 0.0
        %6059 = vmatpush2.msra.mxu0 0.0
        %6060 = vmatprep.subr.mxu0 0.0
        %6061 = vmatpush2.msra.mxu0 0.0
        %6062 = vmatprep.subr.mxu0 0.0
        %6063 = vmatpush2.msra.mxu0 0.0
        %6064 = vmatprep.subr.mxu0 0.0
        %6065 = vmatpush2.msra.mxu0 0.0
        %6066 = vmatprep.subr.mxu0 0.0
        %6067 = vmatpush2.msra.mxu0 0.0
        %6068 = vmatprep.mubr.f32.mxu0 0.0
        %6069 = vmatmul.mubr.f32.gmra.mxu0 %v5817
        %v6070 = vpop.f32.mrf.mxu0
        %v6071 = vadd.f32 %v6000, %v6070
        %v6072 = vpop.f32.mrf.mxu0
        %v6073 = vadd.f32 %v6002, %v6072
        %6074 = vdwg.mxu0
        %6075 = vmatprep.subr.mxu0 %v472
        %6076 = vmatpush1.msra.mxu0 %v471
        %6077 = vmatprep.subr.mxu0 %v464
        %6078 = vmatpush1.msra.mxu0 %v463
        %6079 = vmatprep.subr.mxu0 %v456
        %6080 = vmatpush1.msra.mxu0 %v455
        %6081 = vmatprep.subr.mxu0 %v448
        %6082 = vmatpush1.msra.mxu0 %v447
        %6083 = vmatprep.subr.mxu0 %v440
        %6084 = vmatpush1.msra.mxu0 %v439
        %6085 = vmatprep.subr.mxu0 %v432
        %6086 = vmatpush1.msra.mxu0 %v431
        %6087 = vmatprep.subr.mxu0 %v424
        %6088 = vmatpush1.msra.mxu0 %v423
        %6089 = vmatprep.subr.mxu0 %v416
        %6090 = vmatpush1.msra.mxu0 %v415
        %6091 = vmatprep.subr.mxu0 %v408
        %6092 = vmatpush1.msra.mxu0 %v407
        %6093 = vmatprep.subr.mxu0 %v400
        %6094 = vmatpush1.msra.mxu0 %v399
        %6095 = vmatprep.subr.mxu0 %v392
        %6096 = vmatpush1.msra.mxu0 %v391
        %6097 = vmatprep.subr.mxu0 %v384
        %6098 = vmatpush1.msra.mxu0 %v383
        %6099 = vmatprep.subr.mxu0 %v376
        %6100 = vmatpush1.msra.mxu0 %v375
        %6101 = vmatprep.subr.mxu0 %v368
        %6102 = vmatpush1.msra.mxu0 %v367
        %6103 = vmatprep.subr.mxu0 %v360
        %6104 = vmatpush1.msra.mxu0 %v359
        %6105 = vmatprep.subr.mxu0 %v352
        %6106 = vmatpush1.msra.mxu0 %v351
        %6107 = vmatprep.subr.mxu0 %v600
        %6108 = vmatpush2.msra.mxu0 %v599
        %6109 = vmatprep.subr.mxu0 %v592
        %6110 = vmatpush2.msra.mxu0 %v591
        %6111 = vmatprep.subr.mxu0 %v584
        %6112 = vmatpush2.msra.mxu0 %v583
        %6113 = vmatprep.subr.mxu0 %v576
        %6114 = vmatpush2.msra.mxu0 %v575
        %6115 = vmatprep.subr.mxu0 %v568
        %6116 = vmatpush2.msra.mxu0 %v567
        %6117 = vmatprep.subr.mxu0 %v560
        %6118 = vmatpush2.msra.mxu0 %v559
        %6119 = vmatprep.subr.mxu0 %v552
        %6120 = vmatpush2.msra.mxu0 %v551
        %6121 = vmatprep.subr.mxu0 %v544
        %6122 = vmatpush2.msra.mxu0 %v543
        %6123 = vmatprep.subr.mxu0 %v536
        %6124 = vmatpush2.msra.mxu0 %v535
        %6125 = vmatprep.subr.mxu0 %v528
        %6126 = vmatpush2.msra.mxu0 %v527
        %6127 = vmatprep.subr.mxu0 %v520
        %6128 = vmatpush2.msra.mxu0 %v519
        %6129 = vmatprep.subr.mxu0 %v512
        %6130 = vmatpush2.msra.mxu0 %v511
        %6131 = vmatprep.subr.mxu0 %v504
        %6132 = vmatpush2.msra.mxu0 %v503
        %6133 = vmatprep.subr.mxu0 %v496
        %6134 = vmatpush2.msra.mxu0 %v495
        %6135 = vmatprep.subr.mxu0 %v488
        %6136 = vmatpush2.msra.mxu0 %v487
        %6137 = vmatprep.subr.mxu0 %v480
        %6138 = vmatpush2.msra.mxu0 %v479
        %6139 = vmatprep.mubr.f32.mxu0 %v5816
        %6140 = vmatmul.mubr.f32.gmra.mxu0 %v5931
        %v6141 = vpop.f32.mrf.mxu0
        %v6142 = vadd.f32 %v784, %v6141
        %v6143 = vpop.f32.mrf.mxu0
        %v6144 = vadd.f32 %v788, %v6143
        %6145 = vdwg.mxu0
        %6146 = vmatprep.subr.mxu0 %v728
        %6147 = vmatpush1.msra.mxu0 %v727
        %6148 = vmatprep.subr.mxu0 %v720
        %6149 = vmatpush1.msra.mxu0 %v719
        %6150 = vmatprep.subr.mxu0 %v712
        %6151 = vmatpush1.msra.mxu0 %v711
        %6152 = vmatprep.subr.mxu0 %v704
        %6153 = vmatpush1.msra.mxu0 %v703
        %6154 = vmatprep.subr.mxu0 %v696
        %6155 = vmatpush1.msra.mxu0 %v695
        %6156 = vmatprep.subr.mxu0 %v688
        %6157 = vmatpush1.msra.mxu0 %v687
        %6158 = vmatprep.subr.mxu0 %v680
        %6159 = vmatpush1.msra.mxu0 %v679
        %6160 = vmatprep.subr.mxu0 %v672
        %6161 = vmatpush1.msra.mxu0 %v671
        %6162 = vmatprep.subr.mxu0 %v664
        %6163 = vmatpush1.msra.mxu0 %v663
        %6164 = vmatprep.subr.mxu0 %v656
        %6165 = vmatpush1.msra.mxu0 %v655
        %6166 = vmatprep.subr.mxu0 %v648
        %6167 = vmatpush1.msra.mxu0 %v647
        %6168 = vmatprep.subr.mxu0 %v640
        %6169 = vmatpush1.msra.mxu0 %v639
        %6170 = vmatprep.subr.mxu0 %v632
        %6171 = vmatpush1.msra.mxu0 %v631
        %6172 = vmatprep.subr.mxu0 %v624
        %6173 = vmatpush1.msra.mxu0 %v623
        %6174 = vmatprep.subr.mxu0 %v616
        %6175 = vmatpush1.msra.mxu0 %v615
        %6176 = vmatprep.subr.mxu0 %v608
        %6177 = vmatpush1.msra.mxu0 %v607
        %6178 = vmatprep.subr.mxu0 0.0
        %6179 = vmatpush2.msra.mxu0 0.0
        %6180 = vmatprep.subr.mxu0 0.0
        %6181 = vmatpush2.msra.mxu0 0.0
        %6182 = vmatprep.subr.mxu0 0.0
        %6183 = vmatpush2.msra.mxu0 0.0
        %6184 = vmatprep.subr.mxu0 0.0
        %6185 = vmatpush2.msra.mxu0 0.0
        %6186 = vmatprep.subr.mxu0 0.0
        %6187 = vmatpush2.msra.mxu0 0.0
        %6188 = vmatprep.subr.mxu0 0.0
        %6189 = vmatpush2.msra.mxu0 0.0
        %6190 = vmatprep.subr.mxu0 0.0
        %6191 = vmatpush2.msra.mxu0 0.0
        %6192 = vmatprep.subr.mxu0 0.0
        %6193 = vmatpush2.msra.mxu0 0.0
        %6194 = vmatprep.subr.mxu0 0.0
        %6195 = vmatpush2.msra.mxu0 0.0
        %6196 = vmatprep.subr.mxu0 0.0
        %6197 = vmatpush2.msra.mxu0 0.0
        %6198 = vmatprep.subr.mxu0 0.0
        %6199 = vmatpush2.msra.mxu0 0.0
        %6200 = vmatprep.subr.mxu0 0.0
        %6201 = vmatpush2.msra.mxu0 0.0
        %6202 = vmatprep.subr.mxu0 0.0
        %6203 = vmatpush2.msra.mxu0 0.0
        %6204 = vmatprep.subr.mxu0 0.0
        %6205 = vmatpush2.msra.mxu0 0.0
        %6206 = vmatprep.subr.mxu0 0.0
        %6207 = vmatpush2.msra.mxu0 0.0
        %6208 = vmatprep.subr.mxu0 0.0
        %6209 = vmatpush2.msra.mxu0 0.0
        %6210 = vmatprep.mubr.f32.mxu0 0.0
        %6211 = vmatmul.mubr.f32.gmra.mxu0 %v5817
        %v6212 = vpop.f32.mrf.mxu0
        %v6213 = vadd.f32 %v6142, %v6212
        %v6214 = vpop.f32.mrf.mxu0
        %v6215 = vadd.f32 %v6144, %v6214
        %6216 = vdwg.mxu0
        %6217 = vmatprep.subr.mxu0 %v474
        %6218 = vmatpush1.msra.mxu0 %v473
        %6219 = vmatprep.subr.mxu0 %v466
        %6220 = vmatpush1.msra.mxu0 %v465
        %6221 = vmatprep.subr.mxu0 %v458
        %6222 = vmatpush1.msra.mxu0 %v457
        %6223 = vmatprep.subr.mxu0 %v450
        %6224 = vmatpush1.msra.mxu0 %v449
        %6225 = vmatprep.subr.mxu0 %v442
        %6226 = vmatpush1.msra.mxu0 %v441
        %6227 = vmatprep.subr.mxu0 %v434
        %6228 = vmatpush1.msra.mxu0 %v433
        %6229 = vmatprep.subr.mxu0 %v426
        %6230 = vmatpush1.msra.mxu0 %v425
        %6231 = vmatprep.subr.mxu0 %v418
        %6232 = vmatpush1.msra.mxu0 %v417
        %6233 = vmatprep.subr.mxu0 %v410
        %6234 = vmatpush1.msra.mxu0 %v409
        %6235 = vmatprep.subr.mxu0 %v402
        %6236 = vmatpush1.msra.mxu0 %v401
        %6237 = vmatprep.subr.mxu0 %v394
        %6238 = vmatpush1.msra.mxu0 %v393
        %6239 = vmatprep.subr.mxu0 %v386
        %6240 = vmatpush1.msra.mxu0 %v385
        %6241 = vmatprep.subr.mxu0 %v378
        %6242 = vmatpush1.msra.mxu0 %v377
        %6243 = vmatprep.subr.mxu0 %v370
        %6244 = vmatpush1.msra.mxu0 %v369
        %6245 = vmatprep.subr.mxu0 %v362
        %6246 = vmatpush1.msra.mxu0 %v361
        %6247 = vmatprep.subr.mxu0 %v354
        %6248 = vmatpush1.msra.mxu0 %v353
        %6249 = vmatprep.subr.mxu0 %v602
        %6250 = vmatpush2.msra.mxu0 %v601
        %6251 = vmatprep.subr.mxu0 %v594
        %6252 = vmatpush2.msra.mxu0 %v593
        %6253 = vmatprep.subr.mxu0 %v586
        %6254 = vmatpush2.msra.mxu0 %v585
        %6255 = vmatprep.subr.mxu0 %v578
        %6256 = vmatpush2.msra.mxu0 %v577
        %6257 = vmatprep.subr.mxu0 %v570
        %6258 = vmatpush2.msra.mxu0 %v569
        %6259 = vmatprep.subr.mxu0 %v562
        %6260 = vmatpush2.msra.mxu0 %v561
        %6261 = vmatprep.subr.mxu0 %v554
        %6262 = vmatpush2.msra.mxu0 %v553
        %6263 = vmatprep.subr.mxu0 %v546
        %6264 = vmatpush2.msra.mxu0 %v545
        %6265 = vmatprep.subr.mxu0 %v538
        %6266 = vmatpush2.msra.mxu0 %v537
        %6267 = vmatprep.subr.mxu0 %v530
        %6268 = vmatpush2.msra.mxu0 %v529
        %6269 = vmatprep.subr.mxu0 %v522
        %6270 = vmatpush2.msra.mxu0 %v521
        %6271 = vmatprep.subr.mxu0 %v514
        %6272 = vmatpush2.msra.mxu0 %v513
        %6273 = vmatprep.subr.mxu0 %v506
        %6274 = vmatpush2.msra.mxu0 %v505
        %6275 = vmatprep.subr.mxu0 %v498
        %6276 = vmatpush2.msra.mxu0 %v497
        %6277 = vmatprep.subr.mxu0 %v490
        %6278 = vmatpush2.msra.mxu0 %v489
        %6279 = vmatprep.subr.mxu0 %v482
        %6280 = vmatpush2.msra.mxu0 %v481
        %6281 = vmatprep.mubr.f32.mxu0 %v5816
        %6282 = vmatmul.mubr.f32.gmra.mxu0 %v5931
        %v6283 = vpop.f32.mrf.mxu0
        %v6284 = vadd.f32 %v792, %v6283
        %v6285 = vpop.f32.mrf.mxu0
        %v6286 = vadd.f32 %v796, %v6285
        %6287 = vdwg.mxu0
        %6288 = vmatprep.subr.mxu0 %v730
        %6289 = vmatpush1.msra.mxu0 %v729
        %6290 = vmatprep.subr.mxu0 %v722
        %6291 = vmatpush1.msra.mxu0 %v721
        %6292 = vmatprep.subr.mxu0 %v714
        %6293 = vmatpush1.msra.mxu0 %v713
        %6294 = vmatprep.subr.mxu0 %v706
        %6295 = vmatpush1.msra.mxu0 %v705
        %6296 = vmatprep.subr.mxu0 %v698
        %6297 = vmatpush1.msra.mxu0 %v697
        %6298 = vmatprep.subr.mxu0 %v690
        %6299 = vmatpush1.msra.mxu0 %v689
        %6300 = vmatprep.subr.mxu0 %v682
        %6301 = vmatpush1.msra.mxu0 %v681
        %6302 = vmatprep.subr.mxu0 %v674
        %6303 = vmatpush1.msra.mxu0 %v673
        %6304 = vmatprep.subr.mxu0 %v666
        %6305 = vmatpush1.msra.mxu0 %v665
        %6306 = vmatprep.subr.mxu0 %v658
        %6307 = vmatpush1.msra.mxu0 %v657
        %6308 = vmatprep.subr.mxu0 %v650
        %6309 = vmatpush1.msra.mxu0 %v649
        %6310 = vmatprep.subr.mxu0 %v642
        %6311 = vmatpush1.msra.mxu0 %v641
        %6312 = vmatprep.subr.mxu0 %v634
        %6313 = vmatpush1.msra.mxu0 %v633
        %6314 = vmatprep.subr.mxu0 %v626
        %6315 = vmatpush1.msra.mxu0 %v625
        %6316 = vmatprep.subr.mxu0 %v618
        %6317 = vmatpush1.msra.mxu0 %v617
        %6318 = vmatprep.subr.mxu0 %v610
        %6319 = vmatpush1.msra.mxu0 %v609
        %6320 = vmatprep.subr.mxu0 0.0
        %6321 = vmatpush2.msra.mxu0 0.0
        %6322 = vmatprep.subr.mxu0 0.0
        %6323 = vmatpush2.msra.mxu0 0.0
        %6324 = vmatprep.subr.mxu0 0.0
        %6325 = vmatpush2.msra.mxu0 0.0
        %6326 = vmatprep.subr.mxu0 0.0
        %6327 = vmatpush2.msra.mxu0 0.0
        %6328 = vmatprep.subr.mxu0 0.0
        %6329 = vmatpush2.msra.mxu0 0.0
        %6330 = vmatprep.subr.mxu0 0.0
        %6331 = vmatpush2.msra.mxu0 0.0
        %6332 = vmatprep.subr.mxu0 0.0
        %6333 = vmatpush2.msra.mxu0 0.0
        %6334 = vmatprep.subr.mxu0 0.0
        %6335 = vmatpush2.msra.mxu0 0.0
        %6336 = vmatprep.subr.mxu0 0.0
        %6337 = vmatpush2.msra.mxu0 0.0
        %6338 = vmatprep.subr.mxu0 0.0
        %6339 = vmatpush2.msra.mxu0 0.0
        %6340 = vmatprep.subr.mxu0 0.0
        %6341 = vmatpush2.msra.mxu0 0.0
        %6342 = vmatprep.subr.mxu0 0.0
        %6343 = vmatpush2.msra.mxu0 0.0
        %6344 = vmatprep.subr.mxu0 0.0
        %6345 = vmatpush2.msra.mxu0 0.0
        %6346 = vmatprep.subr.mxu0 0.0
        %6347 = vmatpush2.msra.mxu0 0.0
        %6348 = vmatprep.subr.mxu0 0.0
        %6349 = vmatpush2.msra.mxu0 0.0
        %6350 = vmatprep.subr.mxu0 0.0
        %6351 = vmatpush2.msra.mxu0 0.0
        %6352 = vmatprep.mubr.f32.mxu0 0.0
        %6353 = vmatmul.mubr.f32.gmra.mxu0 %v5817
        %v6354 = vpop.f32.mrf.mxu0
        %v6355 = vadd.f32 %v6284, %v6354
        %v6356 = vpop.f32.mrf.mxu0
        %v6357 = vadd.f32 %v6286, %v6356
        %6358 = vdwg.mxu0
        %6359 = vmatprep.subr.mxu0 %v476
        %6360 = vmatpush1.msra.mxu0 %v475
        %6361 = vmatprep.subr.mxu0 %v468
        %6362 = vmatpush1.msra.mxu0 %v467
        %6363 = vmatprep.subr.mxu0 %v460
        %6364 = vmatpush1.msra.mxu0 %v459
        %6365 = vmatprep.subr.mxu0 %v452
        %6366 = vmatpush1.msra.mxu0 %v451
        %6367 = vmatprep.subr.mxu0 %v444
        %6368 = vmatpush1.msra.mxu0 %v443
        %6369 = vmatprep.subr.mxu0 %v436
        %6370 = vmatpush1.msra.mxu0 %v435
        %6371 = vmatprep.subr.mxu0 %v428
        %6372 = vmatpush1.msra.mxu0 %v427
        %6373 = vmatprep.subr.mxu0 %v420
        %6374 = vmatpush1.msra.mxu0 %v419
        %6375 = vmatprep.subr.mxu0 %v412
        %6376 = vmatpush1.msra.mxu0 %v411
        %6377 = vmatprep.subr.mxu0 %v404
        %6378 = vmatpush1.msra.mxu0 %v403
        %6379 = vmatprep.subr.mxu0 %v396
        %6380 = vmatpush1.msra.mxu0 %v395
        %6381 = vmatprep.subr.mxu0 %v388
        %6382 = vmatpush1.msra.mxu0 %v387
        %6383 = vmatprep.subr.mxu0 %v380
        %6384 = vmatpush1.msra.mxu0 %v379
        %6385 = vmatprep.subr.mxu0 %v372
        %6386 = vmatpush1.msra.mxu0 %v371
        %6387 = vmatprep.subr.mxu0 %v364
        %6388 = vmatpush1.msra.mxu0 %v363
        %6389 = vmatprep.subr.mxu0 %v356
        %6390 = vmatpush1.msra.mxu0 %v355
        %6391 = vmatprep.subr.mxu0 %v604
        %6392 = vmatpush2.msra.mxu0 %v603
        %6393 = vmatprep.subr.mxu0 %v596
        %6394 = vmatpush2.msra.mxu0 %v595
        %6395 = vmatprep.subr.mxu0 %v588
        %6396 = vmatpush2.msra.mxu0 %v587
        %6397 = vmatprep.subr.mxu0 %v580
        %6398 = vmatpush2.msra.mxu0 %v579
        %6399 = vmatprep.subr.mxu0 %v572
        %6400 = vmatpush2.msra.mxu0 %v571
        %6401 = vmatprep.subr.mxu0 %v564
        %6402 = vmatpush2.msra.mxu0 %v563
        %6403 = vmatprep.subr.mxu0 %v556
        %6404 = vmatpush2.msra.mxu0 %v555
        %6405 = vmatprep.subr.mxu0 %v548
        %6406 = vmatpush2.msra.mxu0 %v547
        %6407 = vmatprep.subr.mxu0 %v540
        %6408 = vmatpush2.msra.mxu0 %v539
        %6409 = vmatprep.subr.mxu0 %v532
        %6410 = vmatpush2.msra.mxu0 %v531
        %6411 = vmatprep.subr.mxu0 %v524
        %6412 = vmatpush2.msra.mxu0 %v523
        %6413 = vmatprep.subr.mxu0 %v516
        %6414 = vmatpush2.msra.mxu0 %v515
        %6415 = vmatprep.subr.mxu0 %v508
        %6416 = vmatpush2.msra.mxu0 %v507
        %6417 = vmatprep.subr.mxu0 %v500
        %6418 = vmatpush2.msra.mxu0 %v499
        %6419 = vmatprep.subr.mxu0 %v492
        %6420 = vmatpush2.msra.mxu0 %v491
        %6421 = vmatprep.subr.mxu0 %v484
        %6422 = vmatpush2.msra.mxu0 %v483
        %6423 = vmatprep.mubr.f32.mxu0 %v5816
        %6424 = vmatmul.mubr.f32.gmra.mxu0 %v5931
        %v6425 = vpop.f32.mrf.mxu0
        %v6426 = vadd.f32 %v800, %v6425
        %v6427 = vpop.f32.mrf.mxu0
        %v6428 = vadd.f32 %v804, %v6427
        %6429 = vdwg.mxu0
        %6430 = vmatprep.subr.mxu0 %v732
        %6431 = vmatpush1.msra.mxu0 %v731
        %6432 = vmatprep.subr.mxu0 %v724
        %6433 = vmatpush1.msra.mxu0 %v723
        %6434 = vmatprep.subr.mxu0 %v716
        %6435 = vmatpush1.msra.mxu0 %v715
        %6436 = vmatprep.subr.mxu0 %v708
        %6437 = vmatpush1.msra.mxu0 %v707
        %6438 = vmatprep.subr.mxu0 %v700
        %6439 = vmatpush1.msra.mxu0 %v699
        %6440 = vmatprep.subr.mxu0 %v692
        %6441 = vmatpush1.msra.mxu0 %v691
        %6442 = vmatprep.subr.mxu0 %v684
        %6443 = vmatpush1.msra.mxu0 %v683
        %6444 = vmatprep.subr.mxu0 %v676
        %6445 = vmatpush1.msra.mxu0 %v675
        %6446 = vmatprep.subr.mxu0 %v668
        %6447 = vmatpush1.msra.mxu0 %v667
        %6448 = vmatprep.subr.mxu0 %v660
        %6449 = vmatpush1.msra.mxu0 %v659
        %6450 = vmatprep.subr.mxu0 %v652
        %6451 = vmatpush1.msra.mxu0 %v651
        %6452 = vmatprep.subr.mxu0 %v644
        %6453 = vmatpush1.msra.mxu0 %v643
        %6454 = vmatprep.subr.mxu0 %v636
        %6455 = vmatpush1.msra.mxu0 %v635
        %6456 = vmatprep.subr.mxu0 %v628
        %6457 = vmatpush1.msra.mxu0 %v627
        %6458 = vmatprep.subr.mxu0 %v620
        %6459 = vmatpush1.msra.mxu0 %v619
        %6460 = vmatprep.subr.mxu0 %v612
        %6461 = vmatpush1.msra.mxu0 %v611
        %6462 = vmatprep.subr.mxu0 0.0
        %6463 = vmatpush2.msra.mxu0 0.0
        %6464 = vmatprep.subr.mxu0 0.0
        %6465 = vmatpush2.msra.mxu0 0.0
        %6466 = vmatprep.subr.mxu0 0.0
        %6467 = vmatpush2.msra.mxu0 0.0
        %6468 = vmatprep.subr.mxu0 0.0
        %6469 = vmatpush2.msra.mxu0 0.0
        %6470 = vmatprep.subr.mxu0 0.0
        %6471 = vmatpush2.msra.mxu0 0.0
        %6472 = vmatprep.subr.mxu0 0.0
        %6473 = vmatpush2.msra.mxu0 0.0
        %6474 = vmatprep.subr.mxu0 0.0
        %6475 = vmatpush2.msra.mxu0 0.0
        %6476 = vmatprep.subr.mxu0 0.0
        %6477 = vmatpush2.msra.mxu0 0.0
        %6478 = vmatprep.subr.mxu0 0.0
        %6479 = vmatpush2.msra.mxu0 0.0
        %6480 = vmatprep.subr.mxu0 0.0
        %6481 = vmatpush2.msra.mxu0 0.0
        %6482 = vmatprep.subr.mxu0 0.0
        %6483 = vmatpush2.msra.mxu0 0.0
        %6484 = vmatprep.subr.mxu0 0.0
        %6485 = vmatpush2.msra.mxu0 0.0
        %6486 = vmatprep.subr.mxu0 0.0
        %6487 = vmatpush2.msra.mxu0 0.0
        %6488 = vmatprep.subr.mxu0 0.0
        %6489 = vmatpush2.msra.mxu0 0.0
        %6490 = vmatprep.subr.mxu0 0.0
        %6491 = vmatpush2.msra.mxu0 0.0
        %6492 = vmatprep.subr.mxu0 0.0
        %6493 = vmatpush2.msra.mxu0 0.0
        %6494 = vmatprep.mubr.f32.mxu0 0.0
        %6495 = vmatmul.mubr.f32.gmra.mxu0 %v5817
        %v6496 = vpop.f32.mrf.mxu0
        %v6497 = vadd.f32 %v6426, %v6496
        %v6498 = vpop.f32.mrf.mxu0
        %v6499 = vadd.f32 %v6428, %v6498
        %6500 = vdwg.mxu0
        %v6501 = vxor.u32 %v6071, 2147483648
        %v6502 = vxor.u32 %v6073, 2147483648
        %v6503 = vmul.f32 %v6501, 1.442695
        %v6504 = vpow.pop %v6503
        %v6505 = vmul.f32 %v6502, 1.442695
        %v6506 = vpow.pop %v6505
        %v6507 = vadd.f32 %v6504, 1.0
        %v6508 = vadd.f32 %v6506, 1.0
        %v6509 = vrcp.pop %v6507
        %v6510 = vmul.f32 1.0, %v6509
        %v6511 = vrcp.pop %v6508
        %v6512 = vmul.f32 1.0, %v6511
        %v6513 = vxor.u32 %v6213, 2147483648
        %v6514 = vxor.u32 %v6215, 2147483648
        %v6515 = vmul.f32 %v6513, 1.442695
        %v6516 = vpow.pop %v6515
        %v6517 = vmul.f32 %v6514, 1.442695
        %v6518 = vpow.pop %v6517
        %v6519 = vadd.f32 %v6516, 1.0
        %v6520 = vadd.f32 %v6518, 1.0
        %v6521 = vrcp.pop %v6519
        %v6522 = vmul.f32 1.0, %v6521
        %v6523 = vrcp.pop %v6520
        %v6524 = vmul.f32 1.0, %v6523
        %v6525 = vtanh.pop %v6355
        %v6526 = vtanh.pop %v6357
        %v6527 = vxor.u32 %v6497, 2147483648
        %v6528 = vxor.u32 %v6499, 2147483648
        %v6529 = vmul.f32 %v6527, 1.442695
        %v6530 = vpow.pop %v6529
        %v6531 = vmul.f32 %v6528, 1.442695
        %v6532 = vpow.pop %v6531
        %v6533 = vadd.f32 %v6530, 1.0
        %v6534 = vadd.f32 %v6532, 1.0
        %v6535 = vrcp.pop %v6533
        %v6536 = vmul.f32 1.0, %v6535
        %v6537 = vrcp.pop %v6534
        %v6538 = vmul.f32 1.0, %v6537
        %v6539 = vmul.f32 %v6522, %v5812
        %v6540 = vmul.f32 %v6524, %v5813
        %v6541 = vmul.f32 %v6510, %v6525
        %v6542 = vmul.f32 %v6512, %v6526
        %v6543 = vadd.f32 %v6539, %v6541
        %v6544 = vadd.f32 %v6540, %v6542
        %v6545 = vtanh.pop %v6543
        %v6546 = vtanh.pop %v6544
        %v6547 = vmul.f32 %v6536, %v6545
        %v6548 = vmul.f32 %v6538, %v6546
        %v6551 = vcombine.low %v6547, %v6548
        %v6552 = vcombine.high %v6547, %v6548
        %v6554 = vunpack.c.l.s4 1966171168
        %v6555 = vunpack.c.0.s8 %v6554
        %v6556 = vlaneseq
        %v6557 = vshrl.u32 %v6556, 7
        %v6558 = vsub.s32 %v6555, %v6557
        %v6559 = vrot.slane %v6551, %v6558
        %v6561 = vunpack.c.l.s4 1966171168
        %v6562 = vunpack.c.0.s8 %v6561
        %v6563 = vlaneseq
        %v6564 = vshrl.u32 %v6563, 7
        %v6565 = vsub.s32 %v6562, %v6564
        %v6566 = vrot.slane %v6552, %v6565
        %v6567 = vcombine.high %v6559, %v6559
        %v6568 = vcombine.high %v6566, %v6566
        %v6570 = vunpack.c.l.s4 1966171168
        %v6571 = vunpack.c.0.s8 %v6570
        %v6572 = vlaneseq
        %v6573 = vshrl.u32 %v6572, 7
        %v6574 = vsub.s32 %v6571, %v6573
        %v6575 = vrot.slane %v6559, %v6574
        %v6577 = vunpack.c.l.s4 1966171168
        %v6578 = vunpack.c.0.s8 %v6577
        %v6579 = vlaneseq
        %v6580 = vshrl.u32 %v6579, 7
        %v6581 = vsub.s32 %v6578, %v6580
        %v6582 = vrot.slane %v6566, %v6581
        %v6584 = vunpack.c.l.s4 1966171168
        %v6585 = vunpack.c.0.s8 %v6584
        %v6586 = vlaneseq
        %v6587 = vshrl.u32 %v6586, 7
        %v6588 = vsub.s32 %v6585, %v6587
        %v6589 = vrot.slane %v6567, %v6588
        %v6591 = vunpack.c.l.s4 1966171168
        %v6592 = vunpack.c.0.s8 %v6591
        %v6593 = vlaneseq
        %v6594 = vshrl.u32 %v6593, 7
        %v6595 = vsub.s32 %v6592, %v6594
        %v6596 = vrot.slane %v6568, %v6595
        %v6597 = vcombine.high %v6575, %v6575
        %v6598 = vcombine.high %v6582, %v6582
        %v6599 = vcombine.high %v6589, %v6589
        %v6600 = vcombine.high %v6596, %v6596
        %s6609 = scalar_lea.vmem [#allocation4], 7
        %6610 = vst.msk [vmem:[%s6609] ss:$8 sm:$0x3] %vm1492, %v6575
        %6611 = vst.msk [vmem:[%s6609] ss:$8 sm:$0x0] %vm1492, %v6575
        %s6612 = scalar_lea.vmem [#allocation4], 23
        %6613 = vst.msk [vmem:[%s6612] ss:$8 sm:$0x3] %vm1492, %v6589
        %6614 = vst.msk [vmem:[%s6612] ss:$8 sm:$0x0] %vm1492, %v6589
        %s6615 = scalar_lea.vmem [#allocation4], 39
        %6616 = vst.msk [vmem:[%s6615] ss:$8 sm:$0x3] %vm1492, %v6597
        %6617 = vst.msk [vmem:[%s6615] ss:$8 sm:$0x0] %vm1492, %v6597
        %s6618 = scalar_lea.vmem [#allocation4], 55
        %6619 = vst.msk [vmem:[%s6618] ss:$8 sm:$0x3] %vm1492, %v6599
        %6620 = vst.msk [vmem:[%s6618] ss:$8 sm:$0x0] %vm1492, %v6599
        %s6621 = scalar_lea.vmem [#allocation4], 71
        %6622 = vst.msk [vmem:[%s6621] ss:$8 sm:$0x3] %vm1492, %v6582
        %6623 = vst.msk [vmem:[%s6621] ss:$8 sm:$0x0] %vm1492, %v6582
        %s6624 = scalar_lea.vmem [#allocation4], 87
        %6625 = vst.msk [vmem:[%s6624] ss:$8 sm:$0x3] %vm1492, %v6596
        %6626 = vst.msk [vmem:[%s6624] ss:$8 sm:$0x0] %vm1492, %v6596
        %s6627 = scalar_lea.vmem [#allocation4], 103
        %6628 = vst.msk [vmem:[%s6627] ss:$8 sm:$0x3] %vm1492, %v6598
        %6629 = vst.msk [vmem:[%s6627] ss:$8 sm:$0x0] %vm1492, %v6598
        %s6630 = scalar_lea.vmem [#allocation4], 119
        %6631 = vst.msk [vmem:[%s6630] ss:$8 sm:$0x3] %vm1492, %v6600
        %6632 = vst.msk [vmem:[%s6630] ss:$8 sm:$0x0] %vm1492, %v6600
        %6633 = vst [vmem:[#allocation2] sm:$0xff] %v6547
        %6634 = vst [vmem:[#allocation2 + $0x8] sm:$0xff] %v6548
        %6635 = vst [vmem:[#allocation3] sm:$0xff] %v6543
        %6636 = vst [vmem:[#allocation3 + $0x8] sm:$0xff] %v6544
        %v6637 = vld [vmem:[#allocation4] sm:$0xff]
        %v6638 = vld [vmem:[#allocation4 + $0x8] sm:$0xff]
        %v6639 = vld [vmem:[#allocation4 + $0x10] sm:$0xff]
        %v6640 = vld [vmem:[#allocation4 + $0x18] sm:$0xff]
        %v6641 = vld [vmem:[#allocation4 + $0x20] sm:$0xff]
        %v6642 = vld [vmem:[#allocation4 + $0x28] sm:$0xff]
        %v6643 = vld [vmem:[#allocation4 + $0x30] sm:$0xff]
        %v6644 = vld [vmem:[#allocation4 + $0x38] sm:$0xff]
        %v6645 = vld [vmem:[#allocation4 + $0x40] sm:$0xff]
        %v6646 = vld [vmem:[#allocation4 + $0x48] sm:$0xff]
        %v6647 = vld [vmem:[#allocation4 + $0x50] sm:$0xff]
        %v6648 = vld [vmem:[#allocation4 + $0x58] sm:$0xff]
        %v6649 = vld [vmem:[#allocation4 + $0x60] sm:$0xff]
        %v6650 = vld [vmem:[#allocation4 + $0x68] sm:$0xff]
        %v6651 = vld [vmem:[#allocation4 + $0x70] sm:$0xff]
        %v6652 = vld [vmem:[#allocation4 + $0x78] sm:$0xff]
        %v6653 = vld [vmem:[#allocation10] sm:$0xff]
        %v6654 = vld [vmem:[#allocation10 + $0x8] sm:$0xff]
        %v6655 = vld [vmem:[#allocation10 + $0x10] sm:$0xff]
        %v6656 = vld [vmem:[#allocation10 + $0x18] sm:$0xff]
        %v6657 = vld [vmem:[#allocation10 + $0x20] sm:$0xff]
        %v6658 = vld [vmem:[#allocation10 + $0x28] sm:$0xff]
        %v6659 = vld [vmem:[#allocation10 + $0x30] sm:$0xff]
        %v6660 = vld [vmem:[#allocation10 + $0x38] sm:$0xff]
        %v6661 = vld [vmem:[#allocation10 + $0x40] sm:$0xff]
        %v6662 = vld [vmem:[#allocation10 + $0x48] sm:$0xff]
        %v6663 = vld [vmem:[#allocation10 + $0x50] sm:$0xff]
        %v6664 = vld [vmem:[#allocation10 + $0x58] sm:$0xff]
        %v6665 = vld [vmem:[#allocation10 + $0x60] sm:$0xff]
        %v6666 = vld [vmem:[#allocation10 + $0x68] sm:$0xff]
        %v6667 = vld [vmem:[#allocation10 + $0x70] sm:$0xff]
        %v6668 = vld [vmem:[#allocation10 + $0x78] sm:$0xff]
        %v6669 = vld [vmem:[#allocation10 + $0x80] sm:$0xff]
        %v6670 = vld [vmem:[#allocation10 + $0x88] sm:$0xff]
        %v6671 = vld [vmem:[#allocation10 + $0x90] sm:$0xff]
        %v6672 = vld [vmem:[#allocation10 + $0x98] sm:$0xff]
        %v6673 = vld [vmem:[#allocation10 + $0xa0] sm:$0xff]
        %v6674 = vld [vmem:[#allocation10 + $0xa8] sm:$0xff]
        %v6675 = vld [vmem:[#allocation10 + $0xb0] sm:$0xff]
        %v6676 = vld [vmem:[#allocation10 + $0xb8] sm:$0xff]
        %v6677 = vld [vmem:[#allocation10 + $0xc0] sm:$0xff]
        %v6678 = vld [vmem:[#allocation10 + $0xc8] sm:$0xff]
        %v6679 = vld [vmem:[#allocation10 + $0xd0] sm:$0xff]
        %v6680 = vld [vmem:[#allocation10 + $0xd8] sm:$0xff]
        %v6681 = vld [vmem:[#allocation10 + $0xe0] sm:$0xff]
        %v6682 = vld [vmem:[#allocation10 + $0xe8] sm:$0xff]
        %v6683 = vld [vmem:[#allocation10 + $0xf0] sm:$0xff]
        %v6684 = vld [vmem:[#allocation10 + $0xf8] sm:$0xff]
        %v6685 = vld [vmem:[#allocation10 + $0x100] sm:$0xff]
        %v6686 = vld [vmem:[#allocation10 + $0x108] sm:$0xff]
        %v6687 = vld [vmem:[#allocation10 + $0x110] sm:$0xff]
        %v6688 = vld [vmem:[#allocation10 + $0x118] sm:$0xff]
        %v6689 = vld [vmem:[#allocation10 + $0x120] sm:$0xff]
        %v6690 = vld [vmem:[#allocation10 + $0x128] sm:$0xff]
        %v6691 = vld [vmem:[#allocation10 + $0x130] sm:$0xff]
        %v6692 = vld [vmem:[#allocation10 + $0x138] sm:$0xff]
        %v6693 = vld [vmem:[#allocation10 + $0x140] sm:$0xff]
        %v6694 = vld [vmem:[#allocation10 + $0x148] sm:$0xff]
        %v6695 = vld [vmem:[#allocation10 + $0x150] sm:$0xff]
        %v6696 = vld [vmem:[#allocation10 + $0x158] sm:$0xff]
        %v6697 = vld [vmem:[#allocation10 + $0x160] sm:$0xff]
        %v6698 = vld [vmem:[#allocation10 + $0x168] sm:$0xff]
        %v6699 = vld [vmem:[#allocation10 + $0x170] sm:$0xff]
        %v6700 = vld [vmem:[#allocation10 + $0x178] sm:$0xff]
        %v6701 = vld [vmem:[#allocation10 + $0x180] sm:$0xff]
        %v6702 = vld [vmem:[#allocation10 + $0x188] sm:$0xff]
        %v6703 = vld [vmem:[#allocation10 + $0x190] sm:$0xff]
        %v6704 = vld [vmem:[#allocation10 + $0x198] sm:$0xff]
        %v6705 = vld [vmem:[#allocation10 + $0x1a0] sm:$0xff]
        %v6706 = vld [vmem:[#allocation10 + $0x1a8] sm:$0xff]
        %v6707 = vld [vmem:[#allocation10 + $0x1b0] sm:$0xff]
        %v6708 = vld [vmem:[#allocation10 + $0x1b8] sm:$0xff]
        %v6709 = vld [vmem:[#allocation10 + $0x1c0] sm:$0xff]
        %v6710 = vld [vmem:[#allocation10 + $0x1c8] sm:$0xff]
        %v6711 = vld [vmem:[#allocation10 + $0x1d0] sm:$0xff]
        %v6712 = vld [vmem:[#allocation10 + $0x1d8] sm:$0xff]
        %v6713 = vld [vmem:[#allocation10 + $0x1e0] sm:$0xff]
        %v6714 = vld [vmem:[#allocation10 + $0x1e8] sm:$0xff]
        %v6715 = vld [vmem:[#allocation10 + $0x1f0] sm:$0xff]
        %v6716 = vld [vmem:[#allocation10 + $0x1f8] sm:$0xff]
        %v6717 = vld [vmem:[#allocation11] sm:$0x3]
        %v6719 = vlaneseq
        %v6720 = vshrl.u32 %v6719, 7
        %v6721 = vsub.s32 0, %v6720
        %v6722 = vrot.slane %v6717, %v6721
        %v6723 = vlaneseq
        %v6724 = vshrl.u32 %v6723, 7
        %v6725 = vsub.s32 1, %v6724
        %v6726 = vrot.slane %v6717, %v6725
        %6729 = vmatprep.subr.mxu0 %v6684
        %6730 = vmatpush1.msra.mxu0 %v6683
        %6731 = vmatprep.subr.mxu0 %v6682
        %6732 = vmatpush1.msra.mxu0 %v6681
        %6733 = vmatprep.subr.mxu0 %v6680
        %6734 = vmatpush1.msra.mxu0 %v6679
        %6735 = vmatprep.subr.mxu0 %v6678
        %6736 = vmatpush1.msra.mxu0 %v6677
        %6737 = vmatprep.subr.mxu0 %v6676
        %6738 = vmatpush1.msra.mxu0 %v6675
        %6739 = vmatprep.subr.mxu0 %v6674
        %6740 = vmatpush1.msra.mxu0 %v6673
        %6741 = vmatprep.subr.mxu0 %v6672
        %6742 = vmatpush1.msra.mxu0 %v6671
        %6743 = vmatprep.subr.mxu0 %v6670
        %6744 = vmatpush1.msra.mxu0 %v6669
        %6745 = vmatprep.subr.mxu0 %v6668
        %6746 = vmatpush1.msra.mxu0 %v6667
        %6747 = vmatprep.subr.mxu0 %v6666
        %6748 = vmatpush1.msra.mxu0 %v6665
        %6749 = vmatprep.subr.mxu0 %v6664
        %6750 = vmatpush1.msra.mxu0 %v6663
        %6751 = vmatprep.subr.mxu0 %v6662
        %6752 = vmatpush1.msra.mxu0 %v6661
        %6753 = vmatprep.subr.mxu0 %v6660
        %6754 = vmatpush1.msra.mxu0 %v6659
        %6755 = vmatprep.subr.mxu0 %v6658
        %6756 = vmatpush1.msra.mxu0 %v6657
        %6757 = vmatprep.subr.mxu0 %v6656
        %6758 = vmatpush1.msra.mxu0 %v6655
        %6759 = vmatprep.subr.mxu0 %v6654
        %6760 = vmatpush1.msra.mxu0 %v6653
        %6761 = vmatprep.subr.mxu0 %v6716
        %6762 = vmatpush2.msra.mxu0 %v6715
        %6763 = vmatprep.subr.mxu0 %v6714
        %6764 = vmatpush2.msra.mxu0 %v6713
        %6765 = vmatprep.subr.mxu0 %v6712
        %6766 = vmatpush2.msra.mxu0 %v6711
        %6767 = vmatprep.subr.mxu0 %v6710
        %6768 = vmatpush2.msra.mxu0 %v6709
        %6769 = vmatprep.subr.mxu0 %v6708
        %6770 = vmatpush2.msra.mxu0 %v6707
        %6771 = vmatprep.subr.mxu0 %v6706
        %6772 = vmatpush2.msra.mxu0 %v6705
        %6773 = vmatprep.subr.mxu0 %v6704
        %6774 = vmatpush2.msra.mxu0 %v6703
        %6775 = vmatprep.subr.mxu0 %v6702
        %6776 = vmatpush2.msra.mxu0 %v6701
        %6777 = vmatprep.subr.mxu0 %v6700
        %6778 = vmatpush2.msra.mxu0 %v6699
        %6779 = vmatprep.subr.mxu0 %v6698
        %6780 = vmatpush2.msra.mxu0 %v6697
        %6781 = vmatprep.subr.mxu0 %v6696
        %6782 = vmatpush2.msra.mxu0 %v6695
        %6783 = vmatprep.subr.mxu0 %v6694
        %6784 = vmatpush2.msra.mxu0 %v6693
        %6785 = vmatprep.subr.mxu0 %v6692
        %6786 = vmatpush2.msra.mxu0 %v6691
        %6787 = vmatprep.subr.mxu0 %v6690
        %6788 = vmatpush2.msra.mxu0 %v6689
        %6789 = vmatprep.subr.mxu0 %v6688
        %6790 = vmatpush2.msra.mxu0 %v6687
        %6791 = vmatprep.subr.mxu0 %v6686
        %6792 = vmatpush2.msra.mxu0 %v6685
        %6793 = vmatprep.mubr.f32.mxu0 %v6638
        %6794 = vmatmul.mubr.f32.gmra.mxu0 %v6637
        %v6795 = vpop.f32.mrf.mxu0
        %v6796 = vadd.f32 %v6722, %v6795
        %v6797 = vpop.f32.mrf.mxu0
        %v6798 = vadd.f32 %v6726, %v6797
        %6799 = vmatprep.mubr.f32.mxu0 %v6640
        %6800 = vmatmul.mubr.f32.gmra.mxu0 %v6639
        %v6801 = vpop.f32.mrf.mxu0
        %v6802 = vadd.f32 %v6722, %v6801
        %v6803 = vpop.f32.mrf.mxu0
        %v6804 = vadd.f32 %v6726, %v6803
        %6805 = vmatprep.mubr.f32.mxu0 %v6642
        %6806 = vmatmul.mubr.f32.gmra.mxu0 %v6641
        %v6807 = vpop.f32.mrf.mxu0
        %v6808 = vadd.f32 %v6722, %v6807
        %v6809 = vpop.f32.mrf.mxu0
        %v6810 = vadd.f32 %v6726, %v6809
        %6811 = vmatprep.mubr.f32.mxu0 %v6644
        %6812 = vmatmul.mubr.f32.gmra.mxu0 %v6643
        %v6813 = vpop.f32.mrf.mxu0
        %v6814 = vadd.f32 %v6722, %v6813
        %v6815 = vpop.f32.mrf.mxu0
        %v6816 = vadd.f32 %v6726, %v6815
        %6817 = vmatprep.mubr.f32.mxu0 %v6646
        %6818 = vmatmul.mubr.f32.gmra.mxu0 %v6645
        %v6819 = vpop.f32.mrf.mxu0
        %v6820 = vadd.f32 %v6722, %v6819
        %v6821 = vpop.f32.mrf.mxu0
        %v6822 = vadd.f32 %v6726, %v6821
        %6823 = vmatprep.mubr.f32.mxu0 %v6648
        %6824 = vmatmul.mubr.f32.gmra.mxu0 %v6647
        %v6825 = vpop.f32.mrf.mxu0
        %v6826 = vadd.f32 %v6722, %v6825
        %v6827 = vpop.f32.mrf.mxu0
        %v6828 = vadd.f32 %v6726, %v6827
        %6829 = vmatprep.mubr.f32.mxu0 %v6650
        %6830 = vmatmul.mubr.f32.gmra.mxu0 %v6649
        %v6831 = vpop.f32.mrf.mxu0
        %v6832 = vadd.f32 %v6722, %v6831
        %v6833 = vpop.f32.mrf.mxu0
        %v6834 = vadd.f32 %v6726, %v6833
        %6835 = vmatprep.mubr.f32.mxu0 %v6652
        %6836 = vmatmul.mubr.f32.gmra.mxu0 %v6651
        %v6837 = vpop.f32.mrf.mxu0
        %v6838 = vadd.f32 %v6722, %v6837
        %v6839 = vpop.f32.mrf.mxu0
        %v6840 = vadd.f32 %v6726, %v6839
        %6841 = vdwg.mxu0
        %6842 = vst [vmem:[%s336] sm:$0xff] %v6796
        %6843 = vst [vmem:[%s336 + $0x8] sm:$0xff] %v6798
        %6844 = vst [vmem:[%s336 + $0x10] sm:$0xff] %v6802
        %6845 = vst [vmem:[%s336 + $0x18] sm:$0xff] %v6804
        %6846 = vst [vmem:[%s336 + $0x20] sm:$0xff] %v6808
        %6847 = vst [vmem:[%s336 + $0x28] sm:$0xff] %v6810
        %6848 = vst [vmem:[%s336 + $0x30] sm:$0xff] %v6814
        %6849 = vst [vmem:[%s336 + $0x38] sm:$0xff] %v6816
        %6850 = vst [vmem:[%s336 + $0x40] sm:$0xff] %v6820
        %6851 = vst [vmem:[%s336 + $0x48] sm:$0xff] %v6822
        %6852 = vst [vmem:[%s336 + $0x50] sm:$0xff] %v6826
        %6853 = vst [vmem:[%s336 + $0x58] sm:$0xff] %v6828
        %6854 = vst [vmem:[%s336 + $0x60] sm:$0xff] %v6832
        %6855 = vst [vmem:[%s336 + $0x68] sm:$0xff] %v6834
        %6856 = vst [vmem:[%s336 + $0x70] sm:$0xff] %v6838
        %6857 = vst [vmem:[%s336 + $0x78] sm:$0xff] %v6840
        %s6858 = sand.u32 %s137, 1
        %s6859 = sand.u32 %s137, 1
        %s6860 = smul.addr %s6859, 128
        %s6861 = scalar_lea.vmem [#allocation13], %s6860
        // Predicated region
        $region99: #{resume_model_forward.1} parent=73 // pred_check
          %p6862 = pneg %p147
        $region100: #{resume_model_forward.1} parent=73 // pred_check_branch
          %6864 = sbr.rel (%p6862) target = $region102
        $region101: #{resume_model_forward.1} parent=73 // pred_region
          %s6865 = smul.addr %s19, 2
          %s6866 = smul.addr %s6865, 8
          %s6867 = scalar_lea.vmem %s5, %s6866
          // Predicated region
          $region103: #{resume_model_forward.1} parent=101 // pred_check
            _
          $region104: #{resume_model_forward.1} parent=101 // pred_check_branch
            %6869 = sbr.rel (0) target = $region106
          $region105: #{resume_model_forward.1} parent=101 // pred_region
            // Predicated region
            $region107: #{resume_model_forward.1} parent=105 // pred_check
              _
            $region108: #{resume_model_forward.1} parent=105 // pred_check_branch
              %6871 = sbr.rel (0) target = $region110
            $region109: #{resume_model_forward.1} parent=105 // pred_region
              loop: start=0, step=1, limit=1
              $region111: #{resume_model_forward.1} parent=109 // loop_pre_header
                _
              $region112: #{resume_model_forward.1} parent=109 // loop_header
                %s6873 = sphi 0, %s6877
                %p6874 = scmp.ge.s32.totalorder %s6873, 1
                %s6878 = sphi %s6861, %s6861
                %s6879 = sphi %s6867, %s6867
              $region113: #{resume_model_forward.1} parent=109 // loop_header_branch
                %6876 = sbr.rel (%p6874) target = $region117
              $region114: #{resume_model_forward.1} parent=109 // loop_body
                %v6880 = vld [vmem:[%s6878] sm:$0xff]
                %6881 = vst [vmem:[%s6879] sm:$0xff] %v6880
                %v6882 = vld [vmem:[%s6878 + $0x8] sm:$0xff]
                %6883 = vst [vmem:[%s6879 + $0x8] sm:$0xff] %v6882
                %v6884 = vld [vmem:[%s6878 + $0x10] sm:$0xff]
                %6885 = vst [vmem:[%s6879 + $0x20] sm:$0xff] %v6884
                %v6886 = vld [vmem:[%s6878 + $0x18] sm:$0xff]
                %6887 = vst [vmem:[%s6879 + $0x28] sm:$0xff] %v6886
                %v6888 = vld [vmem:[%s6878 + $0x20] sm:$0xff]
                %6889 = vst [vmem:[%s6879 + $0x40] sm:$0xff] %v6888
                %v6890 = vld [vmem:[%s6878 + $0x28] sm:$0xff]
                %6891 = vst [vmem:[%s6879 + $0x48] sm:$0xff] %v6890
                %v6892 = vld [vmem:[%s6878 + $0x30] sm:$0xff]
                %6893 = vst [vmem:[%s6879 + $0x60] sm:$0xff] %v6892
                %v6894 = vld [vmem:[%s6878 + $0x38] sm:$0xff]
                %6895 = vst [vmem:[%s6879 + $0x68] sm:$0xff] %v6894
                %v6896 = vld [vmem:[%s6878 + $0x40] sm:$0xff]
                %6897 = vst [vmem:[%s6879 + $0x80] sm:$0xff] %v6896
                %v6898 = vld [vmem:[%s6878 + $0x48] sm:$0xff]
                %6899 = vst [vmem:[%s6879 + $0x88] sm:$0xff] %v6898
                %v6900 = vld [vmem:[%s6878 + $0x50] sm:$0xff]
                %6901 = vst [vmem:[%s6879 + $0xa0] sm:$0xff] %v6900
                %v6902 = vld [vmem:[%s6878 + $0x58] sm:$0xff]
                %6903 = vst [vmem:[%s6879 + $0xa8] sm:$0xff] %v6902
                %v6904 = vld [vmem:[%s6878 + $0x60] sm:$0xff]
                %6905 = vst [vmem:[%s6879 + $0xc0] sm:$0xff] %v6904
                %v6906 = vld [vmem:[%s6878 + $0x68] sm:$0xff]
                %6907 = vst [vmem:[%s6879 + $0xc8] sm:$0xff] %v6906
                %v6908 = vld [vmem:[%s6878 + $0x70] sm:$0xff]
                %6909 = vst [vmem:[%s6879 + $0xe0] sm:$0xff] %v6908
                %v6910 = vld [vmem:[%s6878 + $0x78] sm:$0xff]
                %6911 = vst [vmem:[%s6879 + $0xe8] sm:$0xff] %v6910
              $region115: #{resume_model_forward.1} parent=109 // loop_footer
                %s6877 = sadd.s32 1, %s6873
              $region116: #{resume_model_forward.1} parent=109 // loop_footer_branch
                %6872 = sbr.rel target = $region112
              $region117: #{resume_model_forward.1} parent=109 // loop_exit
                _
            $region110: #{resume_model_forward.1} parent=105 // pred_fallthru
              _
            // Predicated region
            $region118: #{resume_model_forward.1} parent=105 // pred_check
              _
            $region119: #{resume_model_forward.1} parent=105 // pred_check_branch
              %6913 = sbr.rel target = $region121
            $region120: #{resume_model_forward.1} parent=105 // pred_region
              _
            $region121: #{resume_model_forward.1} parent=105 // pred_fallthru
              _
          $region106: #{resume_model_forward.1} parent=101 // pred_fallthru
            _
          %6914 = vnop
        $region102: #{resume_model_forward.1} parent=73 // pred_fallthru
          _
      $region74: #{resume_model_forward.1} parent=5 // pred_fallthru
        _
      %p6915 = scmp.le.s32.totalorder 2, %s14
      // Predicated region
      $region122: #{resume_model_forward.1} parent=5 // pred_check
        %p6916 = pneg %p6915
      $region123: #{resume_model_forward.1} parent=5 // pred_check_branch
        %6918 = sbr.rel (%p6916) target = $region125
      $region124: #{resume_model_forward.1} parent=5 // pred_region
        %s6919 = ssub.s32 %s14, 2
        // Predicated region
        $region126: #{resume_model_forward.1} parent=124 // pred_check
          %p6920 = pneg %p153
        $region127: #{resume_model_forward.1} parent=124 // pred_check_branch
          %6922 = sbr.rel (%p6920) target = $region129
        $region128: #{resume_model_forward.1} parent=124 // pred_region
          %s6923 = sand.u32 %s138, 1
          %s6924 = sand.u32 %s138, 1
          %s6925 = smul.addr %s6924, 128
          %s6926 = scalar_lea.vmem [#allocation13], %s6925
        $region129: #{resume_model_forward.1} parent=124 // pred_fallthru
          _
      $region125: #{resume_model_forward.1} parent=5 // pred_fallthru
        _
    $region6: #{resume_model_forward.1} parent=1 // loop_footer
      %s18 = sadd.s32 1, %s14
    $region7: #{resume_model_forward.1} parent=1 // loop_footer_branch
      %13 = sbr.rel target = $region3
    $region8: #{resume_model_forward.1} parent=1 // loop_exit
      _
    %6927 = vsyncpa [#allocation7], 1
    %s6928 = scalar_lea.sflag [#allocation7], 1
    %6929 = vsyncpa %s6928, 1
    %6930 = vsyncpa [#allocation9], 1
    %6931 = vsyncpa [#allocation12], 1

</llo_original>
